<compile_context>
chip_gen: v6e
topology: v6e:2x2x1
jax: 0.10.0
libtpu: 0.0.40
codegen_flags: <defaults>
</compile_context>

<pallas_src>
import functools

import jax
import jax.numpy as jnp
from jax import lax
from jax.experimental import pallas as pl
from jax.experimental.pallas import tpu as pltpu


def _round_up(x, m):
    return (x + m - 1) // m * m


# --------------------------------------------------------------------------
# Generic tiled matmul + bias (+ optional ReLU)
# --------------------------------------------------------------------------
def _matmul_bias_kernel(x_ref, w_ref, b_ref, o_ref, *, relu):
    acc = jnp.dot(x_ref[...], w_ref[...], preferred_element_type=jnp.float32)
    acc = acc + b_ref[...]
    if relu:
        acc = jnp.maximum(acc, 0.0)
    o_ref[...] = acc.astype(o_ref.dtype)


def matmul_bias(x, w, b, relu=False, out_dtype=jnp.float32, tile_m=256):
    """x: (M, K) @ w: (K, N) + b.  Grid over M, N padded to 128 lanes."""
    M, K = x.shape
    K2, N = w.shape
    assert K == K2
    Np = _round_up(N, 128)                 # lane-dense stores
    tm = min(_round_up(M, 8), tile_m)      # M tile (multiple of 8 sublanes)
    Mp = _round_up(M, tm)

    xc = x.astype(jnp.bfloat16)
    wc = w.astype(jnp.bfloat16)
    if Mp != M:
        xc = jnp.pad(xc, ((0, Mp - M), (0, 0)))
    if Np != N:
        wc = jnp.pad(wc, ((0, 0), (0, Np - N)))
    bp = jnp.pad(b.astype(jnp.float32), (0, Np - N)).reshape(1, Np)

    out = pl.pallas_call(
        functools.partial(_matmul_bias_kernel, relu=relu),
        out_shape=jax.ShapeDtypeStruct((Mp, Np), out_dtype),
        grid_spec=pltpu.PrefetchScalarGridSpec(
            num_scalar_prefetch=0,
            grid=(Mp // tm,),
            in_specs=[
                pl.BlockSpec((tm, K), lambda i: (i, 0)),
                pl.BlockSpec((K, Np), lambda i: (0, 0)),
                pl.BlockSpec((1, Np), lambda i: (0, 0)),
            ],
            out_specs=pl.BlockSpec((tm, Np), lambda i: (i, 0)),
        ),
        compiler_params=pltpu.CompilerParams(
            dimension_semantics=("parallel",)),
    )(xc, wc, bp)
    return out[:M, :N]


# --------------------------------------------------------------------------
# Fused Conv3x3 (pad 1) + ReLU + 2x2 MaxPool.
#   * one grid step per image (grid=(bs,), "parallel" -> megacore split)
#   * zero-padded halo built in a VMEM scratch (no jnp.pad HBM round trip)
#   * 9-tap static loop, bf16 MXU operands, f32 accumulation (value-held)
#   * bias + ReLU + pool fused in the epilogue -> pre-pool activation never
#     written to HBM, conv output writeback shrinks 4x.
# --------------------------------------------------------------------------
def _conv_relu_pool_kernel(x_ref, w_ref, b_ref, o_ref, xp_ref, *, H, W, Cin, Cout):
    Ho, Wo = H // 2, W // 2

    # halo padding in VMEM (f32 scratch: unaligned-offset stores are cheap/safe)
    xp_ref[...] = jnp.zeros_like(xp_ref)
    xp_ref[pl.ds(1, H), pl.ds(1, W), :] = x_ref[0].astype(xp_ref.dtype)

    # 9-tap accumulation.
    # TODO(synk): the per-tap slice+reshape costs a small VMEM relayout; a
    #             pltpu.roll / W-shift-copy variant (or K=27 im2col for Cin=3)
    #             would move it off the load/store slots at real geometry.
    acc = jnp.zeros((H * W, Cout), jnp.float32)
    for kh in range(3):
        for kw in range(3):
            xt = xp_ref[pl.ds(kh, H), pl.ds(kw, W), :].astype(jnp.bfloat16)
            xt = xt.reshape(H * W, Cin)
            acc = acc + jnp.dot(xt, w_ref[kh * 3 + kw],
                                preferred_element_type=jnp.float32)

    # bias + ReLU + fused 2x2 max-pool epilogue (slice-only, no reshapes).
    # TODO(synk): for real geometry pack two W-adjacent pixels per row
    #             (2*Cout lanes) so the pooled store is a single dense slab.
    y = jnp.maximum(acc + b_ref[...], 0.0)               # (H*W, Cout) f32
    for a in range(Ho):
        r0 = y[(2 * a) * W:(2 * a + 1) * W]              # even image row
        r1 = y[(2 * a + 1) * W:(2 * a + 2) * W]          # odd image row
        rm = jnp.maximum(r0, r1)                         # (W, Cout)
        for d in range(Wo):
            col = jnp.maximum(rm[2 * d:2 * d + 1], rm[2 * d + 1:2 * d + 2])
            o_ref[0, a, d:d + 1, :] = col.astype(o_ref.dtype)


def conv3x3_relu_pool(x_nhwc, w_oihw, b):
    bs, H, W, Cin = x_nhwc.shape
    assert H % 2 == 0 and W % 2 == 0
    Cout = w_oihw.shape[0]
    Ho, Wo = H // 2, W // 2
    # (Cout, Cin, 3, 3) -> (9, Cin, Cout), tap index = kh*3 + kw
    w9 = jnp.transpose(w_oihw, (2, 3, 1, 0)).reshape(9, Cin, Cout)
    w9 = w9.astype(jnp.bfloat16)
    bb = b.astype(jnp.float32).reshape(1, Cout)

    return pl.pallas_call(
        functools.partial(_conv_relu_pool_kernel, H=H, W=W, Cin=Cin, Cout=Cout),
        out_shape=jax.ShapeDtypeStruct((bs, Ho, Wo, Cout), jnp.bfloat16),
        grid_spec=pltpu.PrefetchScalarGridSpec(
            num_scalar_prefetch=0,
            grid=(bs,),
            in_specs=[
                pl.BlockSpec((1, H, W, Cin), lambda bi: (bi, 0, 0, 0)),
                pl.BlockSpec((9, Cin, Cout), lambda bi: (0, 0, 0)),
                pl.BlockSpec((1, Cout), lambda bi: (0, 0)),
            ],
            out_specs=pl.BlockSpec((1, Ho, Wo, Cout), lambda bi: (bi, 0, 0, 0)),
            scratch_shapes=[pltpu.VMEM((H + 2, W + 2, Cin), jnp.float32)],
        ),
        compiler_params=pltpu.CompilerParams(
            dimension_semantics=("parallel",)),
        # TODO(synk): real geometry needs spatial row tiling + explicit
        #             vmem_limit_bytes (v7x has 64 MiB physical VMEM).
    )(x_nhwc, w9, bb)


# --------------------------------------------------------------------------
# Fused bidirectional GRU layer.  Input gates (with folded b_hh[r,z]) are
# precomputed outside for all timesteps / both directions; inside, one
# block-diagonal (B,2H)@(2H,6H) bf16 matmul per step covers both directions.
# --------------------------------------------------------------------------
def _bigru_kernel(gi_f_ref, gi_b_ref, whh_ref, bhn_ref,
                  out_f_ref, out_b_ref, *, T, Hh):
    B = gi_f_ref.shape[1]
    whh = whh_ref[...]                                    # (2Hh, 6Hh) bf16
    bhn = jnp.broadcast_to(bhn_ref[...], (B, 2 * Hh))     # hoisted broadcast

    def cell(gi, gh, bn, h):
        # gi already contains b_ih + b_hh[r,z]; b_hh[n] stays inside r*( ).
        r = jax.nn.sigmoid(gi[:, 0 * Hh:1 * Hh] + gh[:, 0 * Hh:1 * Hh])
        z = jax.nn.sigmoid(gi[:, 1 * Hh:2 * Hh] + gh[:, 1 * Hh:2 * Hh])
        n = jnp.tanh(gi[:, 2 * Hh:3 * Hh] + r * (gh[:, 2 * Hh:3 * Hh] + bn))
        return (1.0 - z) * n + z * h

    def step(t, h_cat):
        tb = T - 1 - t
        gh = jnp.dot(h_cat.astype(jnp.bfloat16), whh,
                     preferred_element_type=jnp.float32)  # (B, 6Hh) both dirs
        h_f = cell(gi_f_ref[t], gh[:, :3 * Hh], bhn[:, :Hh], h_cat[:, :Hh])
        h_b = cell(gi_b_ref[tb], gh[:, 3 * Hh:], bhn[:, Hh:], h_cat[:, Hh:])
        out_f_ref[t] = h_f.astype(out_f_ref.dtype)
        out_b_ref[tb] = h_b.astype(out_b_ref.dtype)
        return jnp.concatenate([h_f, h_b], axis=1)

    h0 = jnp.zeros((B, 2 * Hh), jnp.float32)
    lax.fori_loop(0, T, step, h0, unroll=min(T, 4))       # bounded unroll


def bigru_layer_apply(xt, layer):
    """xt: (T, B, D) time-major -> (T, B, 2*Hh) bf16."""
    T, B, D = xt.shape
    wih_f, whh_f, bih_f, bhh_f = layer["fwd"]
    wih_b, whh_b, bih_b, bhh_b = layer["bwd"]
    Hh = whh_f.shape[0]

    # Hoisted input projection for BOTH directions in one matmul; fold the
    # recurrent r/z biases into it (b_hh[n] must stay inside the r*(.) term).
    wih_cat = jnp.concatenate([wih_f, wih_b], axis=1)                 # (D, 6Hh)
    zeros_n = jnp.zeros((Hh,), bih_f.dtype)
    bih_cat = jnp.concatenate([
        bih_f + jnp.concatenate([bhh_f[:2 * Hh], zeros_n]),
        bih_b + jnp.concatenate([bhh_b[:2 * Hh], zeros_n]),
    ])
    gi = matmul_bias(xt.reshape(T * B, D), wih_cat, bih_cat, tile_m=512)
    gi_f = gi[:, :3 * Hh].reshape(T, B, 3 * Hh)
    gi_b = gi[:, 3 * Hh:].reshape(T, B, 3 * Hh)

    # Block-diagonal recurrent weight: one lane-dense MXU push per timestep.
    whh_cat = jnp.zeros((2 * Hh, 6 * Hh), jnp.float32)
    whh_cat = whh_cat.at[:Hh, :3 * Hh].set(whh_f)
    whh_cat = whh_cat.at[Hh:, 3 * Hh:].set(whh_b)
    bhn = jnp.concatenate([bhh_f[2 * Hh:], bhh_b[2 * Hh:]]).reshape(1, 2 * Hh)

    # TODO(synk): spec-less call keeps gi/out whole-array VMEM-resident;
    #             chunk T (and split directions over grid=(2,) for v7x's two
    #             TensorCores) for long sequences / large batch.
    out_f, out_b = pl.pallas_call(
        functools.partial(_bigru_kernel, T=T, Hh=Hh),
        out_shape=(jax.ShapeDtypeStruct((T, B, Hh), jnp.bfloat16),
                   jax.ShapeDtypeStruct((T, B, Hh), jnp.bfloat16)),
    )(gi_f, gi_b, whh_cat.astype(jnp.bfloat16), bhn.astype(jnp.float32))
    return jnp.concatenate([out_f, out_b], axis=-1)                   # (T,B,2Hh)


# --------------------------------------------------------------------------
# Parameters (deterministic, shapes mirror the PyTorch module)
# --------------------------------------------------------------------------
def init_params(key, num_chars, h_img):
    keys = iter(jax.random.split(key, 32))

    def u(shape, fan_in):
        s = 1.0 / (fan_in ** 0.5)
        return jax.random.uniform(next(keys), shape, jnp.float32, -s, s)

    params = {}
    params["conv1_w"] = u((128, 3, 3, 3), 3 * 9)        # (Cout, Cin, kH, kW)
    params["conv1_b"] = u((128,), 3 * 9)
    params["conv2_w"] = u((64, 128, 3, 3), 128 * 9)
    params["conv2_b"] = u((64,), 128 * 9)

    lin1_in = 64 * (h_img // 4)                         # 1600 in the original (h=100)
    params["lin1_w"] = u((lin1_in, 64), lin1_in)        # stored as (in, out)
    params["lin1_b"] = u((64,), lin1_in)

    Hh = 32
    gru = []
    for _layer in range(2):
        din = 64                                        # 2*Hh for layer 1 as well
        layer = {}
        for d in ("fwd", "bwd"):
            layer[d] = (
                u((din, 3 * Hh), Hh),                   # W_ih^T  (gate order r,z,n)
                u((Hh, 3 * Hh), Hh),                    # W_hh^T
                u((3 * Hh,), Hh),                       # b_ih
                u((3 * Hh,), Hh),                       # b_hh
            )
        gru.append(layer)
    params["gru"] = gru

    params["out_w"] = u((64, num_chars + 1), 64)        # stored as (in, out)
    params["out_b"] = u((num_chars + 1,), 64)
    return params


# --------------------------------------------------------------------------
# Forward pass (== CaptchaModel.forward with targets=None)
# --------------------------------------------------------------------------
def captcha_forward(params, images_nchw, lens=None, targets=None):
    bs, c, h, w = images_nchw.shape
    assert h % 4 == 0 and w % 4 == 0

    x = jnp.transpose(images_nchw, (0, 2, 3, 1))        # NCHW -> NHWC (f32)
    x = conv3x3_relu_pool(x, params["conv1_w"], params["conv1_b"])  # (bs,h/2,w/2,128)
    x = conv3x3_relu_pool(x, params["conv2_w"], params["conv2_b"])  # (bs,h/4,w/4,64)

    h4, w4, C = x.shape[1], x.shape[2], x.shape[3]
    # PyTorch: permute(0,3,1,2) on NCHW -> (bs, w4, C, h4) then flatten (C outer, h inner)
    x = jnp.transpose(x, (0, 2, 3, 1)).reshape(bs, w4, C * h4)

    # linear1 (+ drop_1 identity in eval mode) -- bf16 out (consumer recasts)
    x = matmul_bias(x.reshape(bs * w4, C * h4), params["lin1_w"],
                    params["lin1_b"], out_dtype=jnp.bfloat16)
    T = w4
    xt = x.reshape(bs, w4, 64).transpose(1, 0, 2)       # (T, bs, 64) time-major

    # bidirectional 2-layer GRU (inter-layer dropout = identity, eval mode)
    for layer in params["gru"]:
        xt = bigru_layer_apply(xt, layer)               # (T, bs, 64) bf16

    logits = matmul_bias(xt.reshape(T * bs, 64), params["out_w"], params["out_b"])
    logits = logits.reshape(T, bs, -1)                  # == PyTorch x.permute(1,0,2)
    return logits, None                                 # targets is None -> no CTC loss


# --------------------------------------------------------------------------
if __name__ == "__main__":
    key = jax.random.PRNGKey(0)
    k_img, k_par = jax.random.split(key)

    num_chars = 19
    bs, C, Himg, Wimg = 2, 3, 16, 16

    images = jax.random.normal(k_img, (bs, C, Himg, Wimg), jnp.float32)
    lens = jnp.array([4, 4], jnp.int32)                 # unused when targets is None
    params = init_params(k_par, num_chars, Himg)

    logits, loss = jax.jit(captcha_forward)(params, images, lens)
    logits = jax.block_until_ready(logits)

    assert logits.shape == (Wimg // 4, bs, num_chars + 1), logits.shape
    assert loss is None
    assert bool(jnp.all(jnp.isfinite(logits)))
    print("KERNEL_OK")
</pallas_src>

<mosaic_0001>
module attributes {stable_mosaic.version = 11 : i64} {
  func.func @_conv_relu_pool_kernel(%arg0: i32, %arg1: memref<1x16x16x3xf32, #tpu.memory_space<vmem>>, %arg2: memref<9x3x128xbf16, #tpu.memory_space<vmem>>, %arg3: memref<1x128xf32, #tpu.memory_space<vmem>>, %arg4: memref<1x8x8x128xbf16, #tpu.memory_space<vmem>>, %arg5: memref<18x18x3xf32, #tpu.memory_space<vmem>>) attributes {dimension_semantics = [#tpu.dimension_semantics<parallel>], iteration_bounds = array<i64: 2>, scalar_prefetch = 0 : i64, scratch_operands = 1 : i64, tpu.core_type = #tpu.core_type<tc>, window_params = [{transform_indices = @transform_0, window_bounds = array<i64: 1, 16, 16, 3>}, {pipeline_mode = #tpu.pipeline_mode<synchronous>, transform_indices = @transform_1, window_bounds = array<i64: 9, 3, 128>}, {pipeline_mode = #tpu.pipeline_mode<synchronous>, transform_indices = @transform_2, window_bounds = array<i64: 1, 128>}, {transform_indices = @transform_3, window_bounds = array<i64: 1, 8, 8, 128>}]} {
    %cst = arith.constant 0.000000e+00 : f32
    %0 = vector.broadcast %cst : f32 to vector<18x18x3xf32>
    %c0 = arith.constant 0 : index
    %c0_0 = arith.constant 0 : index
    %c0_1 = arith.constant 0 : index
    %1 = vector.load %arg5[%c0, %c0_0, %c0_1] : memref<18x18x3xf32, #tpu.memory_space<vmem>>, vector<18x18x3xf32>
    tpu.vector_store %arg5[%c0, %c0_0, %c0_1], %0 {strides = array<i32>} : memref<18x18x3xf32, #tpu.memory_space<vmem>>, vector<18x18x3xf32>,
    %c0_2 = arith.constant 0 : index
    %c0_3 = arith.constant 0 : index
    %c0_4 = arith.constant 0 : index
    %c0_5 = arith.constant 0 : index
    %2 = vector.load %arg1[%c0_2, %c0_3, %c0_4, %c0_5] : memref<1x16x16x3xf32, #tpu.memory_space<vmem>>, vector<1x16x16x3xf32>
    %3 = vector.shape_cast %2 : vector<1x16x16x3xf32> to vector<16x16x3xf32>
    %c1 = arith.constant 1 : index
    %c1_6 = arith.constant 1 : index
    %c0_7 = arith.constant 0 : index
    %4 = vector.load %arg5[%c1, %c1_6, %c0_7] : memref<18x18x3xf32, #tpu.memory_space<vmem>>, vector<16x16x3xf32>
    tpu.vector_store %arg5[%c1, %c1_6, %c0_7], %3 {strides = array<i32>} : memref<18x18x3xf32, #tpu.memory_space<vmem>>, vector<16x16x3xf32>,
    %cst_8 = arith.constant 0.000000e+00 : f32
    %5 = vector.broadcast %cst_8 : f32 to vector<256x128xf32>
    %c0_9 = arith.constant 0 : index
    %c0_10 = arith.constant 0 : index
    %c0_11 = arith.constant 0 : index
    %6 = vector.load %arg5[%c0_9, %c0_10, %c0_11] : memref<18x18x3xf32, #tpu.memory_space<vmem>>, vector<16x16x3xf32>
    %7 = arith.truncf %6 : vector<16x16x3xf32> to vector<16x16x3xbf16>
    %8 = vector.shape_cast %7 : vector<16x16x3xbf16> to vector<256x3xbf16>
    %c0_12 = arith.constant 0 : index
    %c0_13 = arith.constant 0 : index
    %c0_14 = arith.constant 0 : index
    %9 = vector.load %arg2[%c0_12, %c0_13, %c0_14] : memref<9x3x128xbf16, #tpu.memory_space<vmem>>, vector<1x3x128xbf16>
    %10 = vector.shape_cast %9 : vector<1x3x128xbf16> to vector<3x128xbf16>
    %cst_15 = arith.constant dense<0.000000e+00> : vector<256x128xf32>
    %11 = tpu.matmul %8, %10, %cst_15 {dimension_numbers = #tpu.dot_dimension_numbers<[1], [0], [0], [1], [0, 0, 1, 1], [], []>} : vector<256x3xbf16>, vector<3x128xbf16>, vector<256x128xf32> -> vector<256x128xf32>
    %12 = arith.addf %5, %11 : vector<256x128xf32>
    %c0_16 = arith.constant 0 : index
    %c1_17 = arith.constant 1 : index
    %c0_18 = arith.constant 0 : index
    %13 = vector.load %arg5[%c0_16, %c1_17, %c0_18] : memref<18x18x3xf32, #tpu.memory_space<vmem>>, vector<16x16x3xf32>
    %14 = arith.truncf %13 : vector<16x16x3xf32> to vector<16x16x3xbf16>
    %15 = vector.shape_cast %14 : vector<16x16x3xbf16> to vector<256x3xbf16>
    %c1_19 = arith.constant 1 : index
    %c0_20 = arith.constant 0 : index
    %c0_21 = arith.constant 0 : index
    %16 = vector.load %arg2[%c1_19, %c0_20, %c0_21] : memref<9x3x128xbf16, #tpu.memory_space<vmem>>, vector<1x3x128xbf16>
    %17 = vector.shape_cast %16 : vector<1x3x128xbf16> to vector<3x128xbf16>
    %cst_22 = arith.constant dense<0.000000e+00> : vector<256x128xf32>
    %18 = tpu.matmul %15, %17, %cst_22 {dimension_numbers = #tpu.dot_dimension_numbers<[1], [0], [0], [1], [0, 0, 1, 1], [], []>} : vector<256x3xbf16>, vector<3x128xbf16>, vector<256x128xf32> -> vector<256x128xf32>
    %19 = arith.addf %12, %18 : vector<256x128xf32>
    %c0_23 = arith.constant 0 : index
    %c2 = arith.constant 2 : index
    %c0_24 = arith.constant 0 : index
    %20 = vector.load %arg5[%c0_23, %c2, %c0_24] : memref<18x18x3xf32, #tpu.memory_space<vmem>>, vector<16x16x3xf32>
    %21 = arith.truncf %20 : vector<16x16x3xf32> to vector<16x16x3xbf16>
    %22 = vector.shape_cast %21 : vector<16x16x3xbf16> to vector<256x3xbf16>
    %c2_25 = arith.constant 2 : index
    %c0_26 = arith.constant 0 : index
    %c0_27 = arith.constant 0 : index
    %23 = vector.load %arg2[%c2_25, %c0_26, %c0_27] : memref<9x3x128xbf16, #tpu.memory_space<vmem>>, vector<1x3x128xbf16>
    %24 = vector.shape_cast %23 : vector<1x3x128xbf16> to vector<3x128xbf16>
    %cst_28 = arith.constant dense<0.000000e+00> : vector<256x128xf32>
    %25 = tpu.matmul %22, %24, %cst_28 {dimension_numbers = #tpu.dot_dimension_numbers<[1], [0], [0], [1], [0, 0, 1, 1], [], []>} : vector<256x3xbf16>, vector<3x128xbf16>, vector<256x128xf32> -> vector<256x128xf32>
    %26 = arith.addf %19, %25 : vector<256x128xf32>
    %c1_29 = arith.constant 1 : index
    %c0_30 = arith.constant 0 : index
    %c0_31 = arith.constant 0 : index
    %27 = vector.load %arg5[%c1_29, %c0_30, %c0_31] : memref<18x18x3xf32, #tpu.memory_space<vmem>>, vector<16x16x3xf32>
    %28 = arith.truncf %27 : vector<16x16x3xf32> to vector<16x16x3xbf16>
    %29 = vector.shape_cast %28 : vector<16x16x3xbf16> to vector<256x3xbf16>
    %c3 = arith.constant 3 : index
    %c0_32 = arith.constant 0 : index
    %c0_33 = arith.constant 0 : index
    %30 = vector.load %arg2[%c3, %c0_32, %c0_33] : memref<9x3x128xbf16, #tpu.memory_space<vmem>>, vector<1x3x128xbf16>
    %31 = vector.shape_cast %30 : vector<1x3x128xbf16> to vector<3x128xbf16>
    %cst_34 = arith.constant dense<0.000000e+00> : vector<256x128xf32>
    %32 = tpu.matmul %29, %31, %cst_34 {dimension_numbers = #tpu.dot_dimension_numbers<[1], [0], [0], [1], [0, 0, 1, 1], [], []>} : vector<256x3xbf16>, vector<3x128xbf16>, vector<256x128xf32> -> vector<256x128xf32>
    %33 = arith.addf %26, %32 : vector<256x128xf32>
    %c1_35 = arith.constant 1 : index
    %c1_36 = arith.constant 1 : index
    %c0_37 = arith.constant 0 : index
    %34 = vector.load %arg5[%c1_35, %c1_36, %c0_37] : memref<18x18x3xf32, #tpu.memory_space<vmem>>, vector<16x16x3xf32>
    %35 = arith.truncf %34 : vector<16x16x3xf32> to vector<16x16x3xbf16>
    %36 = vector.shape_cast %35 : vector<16x16x3xbf16> to vector<256x3xbf16>
    %c4 = arith.constant 4 : index
    %c0_38 = arith.constant 0 : index
    %c0_39 = arith.constant 0 : index
    %37 = vector.load %arg2[%c4, %c0_38, %c0_39] : memref<9x3x128xbf16, #tpu.memory_space<vmem>>, vector<1x3x128xbf16>
    %38 = vector.shape_cast %37 : vector<1x3x128xbf16> to vector<3x128xbf16>
    %cst_40 = arith.constant dense<0.000000e+00> : vector<256x128xf32>
    %39 = tpu.matmul %36, %38, %cst_40 {dimension_numbers = #tpu.dot_dimension_numbers<[1], [0], [0], [1], [0, 0, 1, 1], [], []>} : vector<256x3xbf16>, vector<3x128xbf16>, vector<256x128xf32> -> vector<256x128xf32>
    %40 = arith.addf %33, %39 : vector<256x128xf32>
    %c1_41 = arith.constant 1 : index
    %c2_42 = arith.constant 2 : index
    %c0_43 = arith.constant 0 : index
    %41 = vector.load %arg5[%c1_41, %c2_42, %c0_43] : memref<18x18x3xf32, #tpu.memory_space<vmem>>, vector<16x16x3xf32>
    %42 = arith.truncf %41 : vector<16x16x3xf32> to vector<16x16x3xbf16>
    %43 = vector.shape_cast %42 : vector<16x16x3xbf16> to vector<256x3xbf16>
    %c5 = arith.constant 5 : index
    %c0_44 = arith.constant 0 : index
    %c0_45 = arith.constant 0 : index
    %44 = vector.load %arg2[%c5, %c0_44, %c0_45] : memref<9x3x128xbf16, #tpu.memory_space<vmem>>, vector<1x3x128xbf16>
    %45 = vector.shape_cast %44 : vector<1x3x128xbf16> to vector<3x128xbf16>
    %cst_46 = arith.constant dense<0.000000e+00> : vector<256x128xf32>
    %46 = tpu.matmul %43, %45, %cst_46 {dimension_numbers = #tpu.dot_dimension_numbers<[1], [0], [0], [1], [0, 0, 1, 1], [], []>} : vector<256x3xbf16>, vector<3x128xbf16>, vector<256x128xf32> -> vector<256x128xf32>
    %47 = arith.addf %40, %46 : vector<256x128xf32>
    %c2_47 = arith.constant 2 : index
    %c0_48 = arith.constant 0 : index
    %c0_49 = arith.constant 0 : index
    %48 = vector.load %arg5[%c2_47, %c0_48, %c0_49] : memref<18x18x3xf32, #tpu.memory_space<vmem>>, vector<16x16x3xf32>
    %49 = arith.truncf %48 : vector<16x16x3xf32> to vector<16x16x3xbf16>
    %50 = vector.shape_cast %49 : vector<16x16x3xbf16> to vector<256x3xbf16>
    %c6 = arith.constant 6 : index
    %c0_50 = arith.constant 0 : index
    %c0_51 = arith.constant 0 : index
    %51 = vector.load %arg2[%c6, %c0_50, %c0_51] : memref<9x3x128xbf16, #tpu.memory_space<vmem>>, vector<1x3x128xbf16>
    %52 = vector.shape_cast %51 : vector<1x3x128xbf16> to vector<3x128xbf16>
    %cst_52 = arith.constant dense<0.000000e+00> : vector<256x128xf32>
    %53 = tpu.matmul %50, %52, %cst_52 {dimension_numbers = #tpu.dot_dimension_numbers<[1], [0], [0], [1], [0, 0, 1, 1], [], []>} : vector<256x3xbf16>, vector<3x128xbf16>, vector<256x128xf32> -> vector<256x128xf32>
    %54 = arith.addf %47, %53 : vector<256x128xf32>
    %c2_53 = arith.constant 2 : index
    %c1_54 = arith.constant 1 : index
    %c0_55 = arith.constant 0 : index
    %55 = vector.load %arg5[%c2_53, %c1_54, %c0_55] : memref<18x18x3xf32, #tpu.memory_space<vmem>>, vector<16x16x3xf32>
    %56 = arith.truncf %55 : vector<16x16x3xf32> to vector<16x16x3xbf16>
    %57 = vector.shape_cast %56 : vector<16x16x3xbf16> to vector<256x3xbf16>
    %c7 = arith.constant 7 : index
    %c0_56 = arith.constant 0 : index
    %c0_57 = arith.constant 0 : index
    %58 = vector.load %arg2[%c7, %c0_56, %c0_57] : memref<9x3x128xbf16, #tpu.memory_space<vmem>>, vector<1x3x128xbf16>
    %59 = vector.shape_cast %58 : vector<1x3x128xbf16> to vector<3x128xbf16>
    %cst_58 = arith.constant dense<0.000000e+00> : vector<256x128xf32>
    %60 = tpu.matmul %57, %59, %cst_58 {dimension_numbers = #tpu.dot_dimension_numbers<[1], [0], [0], [1], [0, 0, 1, 1], [], []>} : vector<256x3xbf16>, vector<3x128xbf16>, vector<256x128xf32> -> vector<256x128xf32>
    %61 = arith.addf %54, %60 : vector<256x128xf32>
    %c2_59 = arith.constant 2 : index
    %c2_60 = arith.constant 2 : index
    %c0_61 = arith.constant 0 : index
    %62 = vector.load %arg5[%c2_59, %c2_60, %c0_61] : memref<18x18x3xf32, #tpu.memory_space<vmem>>, vector<16x16x3xf32>
    %63 = arith.truncf %62 : vector<16x16x3xf32> to vector<16x16x3xbf16>
    %64 = vector.shape_cast %63 : vector<16x16x3xbf16> to vector<256x3xbf16>
    %c8 = arith.constant 8 : index
    %c0_62 = arith.constant 0 : index
    %c0_63 = arith.constant 0 : index
    %65 = vector.load %arg2[%c8, %c0_62, %c0_63] : memref<9x3x128xbf16, #tpu.memory_space<vmem>>, vector<1x3x128xbf16>
    %66 = vector.shape_cast %65 : vector<1x3x128xbf16> to vector<3x128xbf16>
    %cst_64 = arith.constant dense<0.000000e+00> : vector<256x128xf32>
    %67 = tpu.matmul %64, %66, %cst_64 {dimension_numbers = #tpu.dot_dimension_numbers<[1], [0], [0], [1], [0, 0, 1, 1], [], []>} : vector<256x3xbf16>, vector<3x128xbf16>, vector<256x128xf32> -> vector<256x128xf32>
    %68 = arith.addf %61, %67 : vector<256x128xf32>
    %c0_65 = arith.constant 0 : index
    %c0_66 = arith.constant 0 : index
    %69 = vector.load %arg3[%c0_65, %c0_66] : memref<1x128xf32, #tpu.memory_space<vmem>>, vector<1x128xf32>
    %70 = vector.broadcast %69 : vector<1x128xf32> to vector<256x128xf32>
    %71 = arith.addf %68, %70 : vector<256x128xf32>
    %cst_67 = arith.constant 0.000000e+00 : f32
    %72 = vector.broadcast %cst_67 : f32 to vector<256x128xf32>
    %73 = arith.maximumf %71, %72 : vector<256x128xf32>
    %74 = vector.extract_strided_slice %73 {offsets = [0, 0], sizes = [16, 128], strides = [1, 1]} : vector<256x128xf32> to vector<16x128xf32>
    %75 = vector.extract_strided_slice %73 {offsets = [16, 0], sizes = [16, 128], strides = [1, 1]} : vector<256x128xf32> to vector<16x128xf32>
    %76 = arith.maximumf %74, %75 : vector<16x128xf32>
    %77 = vector.extract_strided_slice %76 {offsets = [0, 0], sizes = [1, 128], strides = [1, 1]} : vector<16x128xf32> to vector<1x128xf32>
    %78 = vector.extract_strided_slice %76 {offsets = [1, 0], sizes = [1, 128], strides = [1, 1]} : vector<16x128xf32> to vector<1x128xf32>
    %79 = arith.maximumf %77, %78 : vector<1x128xf32>
    %80 = arith.truncf %79 : vector<1x128xf32> to vector<1x128xbf16>
    %c0_68 = arith.constant 0 : index
    %c0_69 = arith.constant 0 : index
    %c0_70 = arith.constant 0 : index
    %c0_71 = arith.constant 0 : index
    %81 = vector.load %arg4[%c0_68, %c0_69, %c0_70, %c0_71] : memref<1x8x8x128xbf16, #tpu.memory_space<vmem>>, vector<1x1x1x128xbf16>
    %82 = vector.shape_cast %81 : vector<1x1x1x128xbf16> to vector<1x128xbf16>
    %83 = vector.shape_cast %80 : vector<1x128xbf16> to vector<1x1x1x128xbf16>
    tpu.vector_store %arg4[%c0_68, %c0_69, %c0_70, %c0_71], %83 {strides = array<i32>} : memref<1x8x8x128xbf16, #tpu.memory_space<vmem>>, vector<1x1x1x128xbf16>,
    %84 = vector.extract_strided_slice %76 {offsets = [2, 0], sizes = [1, 128], strides = [1, 1]} : vector<16x128xf32> to vector<1x128xf32>
    %85 = vector.extract_strided_slice %76 {offsets = [3, 0], sizes = [1, 128], strides = [1, 1]} : vector<16x128xf32> to vector<1x128xf32>
    %86 = arith.maximumf %84, %85 : vector<1x128xf32>
    %87 = arith.truncf %86 : vector<1x128xf32> to vector<1x128xbf16>
    %c0_72 = arith.constant 0 : index
    %c0_73 = arith.constant 0 : index
    %c1_74 = arith.constant 1 : index
    %c0_75 = arith.constant 0 : index
    %88 = vector.load %arg4[%c0_72, %c0_73, %c1_74, %c0_75] : memref<1x8x8x128xbf16, #tpu.memory_space<vmem>>, vector<1x1x1x128xbf16>
    %89 = vector.shape_cast %88 : vector<1x1x1x128xbf16> to vector<1x128xbf16>
    %90 = vector.shape_cast %87 : vector<1x128xbf16> to vector<1x1x1x128xbf16>
    tpu.vector_store %arg4[%c0_72, %c0_73, %c1_74, %c0_75], %90 {strides = array<i32>} : memref<1x8x8x128xbf16, #tpu.memory_space<vmem>>, vector<1x1x1x128xbf16>,
    %91 = vector.extract_strided_slice %76 {offsets = [4, 0], sizes = [1, 128], strides = [1, 1]} : vector<16x128xf32> to vector<1x128xf32>
    %92 = vector.extract_strided_slice %76 {offsets = [5, 0], sizes = [1, 128], strides = [1, 1]} : vector<16x128xf32> to vector<1x128xf32>
    %93 = arith.maximumf %91, %92 : vector<1x128xf32>
    %94 = arith.truncf %93 : vector<1x128xf32> to vector<1x128xbf16>
    %c0_76 = arith.constant 0 : index
    %c0_77 = arith.constant 0 : index
    %c2_78 = arith.constant 2 : index
    %c0_79 = arith.constant 0 : index
    %95 = vector.load %arg4[%c0_76, %c0_77, %c2_78, %c0_79] : memref<1x8x8x128xbf16, #tpu.memory_space<vmem>>, vector<1x1x1x128xbf16>
    %96 = vector.shape_cast %95 : vector<1x1x1x128xbf16> to vector<1x128xbf16>
    %97 = vector.shape_cast %94 : vector<1x128xbf16> to vector<1x1x1x128xbf16>
    tpu.vector_store %arg4[%c0_76, %c0_77, %c2_78, %c0_79], %97 {strides = array<i32>} : memref<1x8x8x128xbf16, #tpu.memory_space<vmem>>, vector<1x1x1x128xbf16>,
    %98 = vector.extract_strided_slice %76 {offsets = [6, 0], sizes = [1, 128], strides = [1, 1]} : vector<16x128xf32> to vector<1x128xf32>
    %99 = vector.extract_strided_slice %76 {offsets = [7, 0], sizes = [1, 128], strides = [1, 1]} : vector<16x128xf32> to vector<1x128xf32>
    %100 = arith.maximumf %98, %99 : vector<1x128xf32>
    %101 = arith.truncf %100 : vector<1x128xf32> to vector<1x128xbf16>
    %c0_80 = arith.constant 0 : index
    %c0_81 = arith.constant 0 : index
    %c3_82 = arith.constant 3 : index
    %c0_83 = arith.constant 0 : index
    %102 = vector.load %arg4[%c0_80, %c0_81, %c3_82, %c0_83] : memref<1x8x8x128xbf16, #tpu.memory_space<vmem>>, vector<1x1x1x128xbf16>
    %103 = vector.shape_cast %102 : vector<1x1x1x128xbf16> to vector<1x128xbf16>
    %104 = vector.shape_cast %101 : vector<1x128xbf16> to vector<1x1x1x128xbf16>
    tpu.vector_store %arg4[%c0_80, %c0_81, %c3_82, %c0_83], %104 {strides = array<i32>} : memref<1x8x8x128xbf16, #tpu.memory_space<vmem>>, vector<1x1x1x128xbf16>,
    %105 = vector.extract_strided_slice %76 {offsets = [8, 0], sizes = [1, 128], strides = [1, 1]} : vector<16x128xf32> to vector<1x128xf32>
    %106 = vector.extract_strided_slice %76 {offsets = [9, 0], sizes = [1, 128], strides = [1, 1]} : vector<16x128xf32> to vector<1x128xf32>
    %107 = arith.maximumf %105, %106 : vector<1x128xf32>
    %108 = arith.truncf %107 : vector<1x128xf32> to vector<1x128xbf16>
    %c0_84 = arith.constant 0 : index
    %c0_85 = arith.constant 0 : index
    %c4_86 = arith.constant 4 : index
    %c0_87 = arith.constant 0 : index
    %109 = vector.load %arg4[%c0_84, %c0_85, %c4_86, %c0_87] : memref<1x8x8x128xbf16, #tpu.memory_space<vmem>>, vector<1x1x1x128xbf16>
    %110 = vector.shape_cast %109 : vector<1x1x1x128xbf16> to vector<1x128xbf16>
    %111 = vector.shape_cast %108 : vector<1x128xbf16> to vector<1x1x1x128xbf16>
    tpu.vector_store %arg4[%c0_84, %c0_85, %c4_86, %c0_87], %111 {strides = array<i32>} : memref<1x8x8x128xbf16, #tpu.memory_space<vmem>>, vector<1x1x1x128xbf16>,
    %112 = vector.extract_strided_slice %76 {offsets = [10, 0], sizes = [1, 128], strides = [1, 1]} : vector<16x128xf32> to vector<1x128xf32>
    %113 = vector.extract_strided_slice %76 {offsets = [11, 0], sizes = [1, 128], strides = [1, 1]} : vector<16x128xf32> to vector<1x128xf32>
    %114 = arith.maximumf %112, %113 : vector<1x128xf32>
    %115 = arith.truncf %114 : vector<1x128xf32> to vector<1x128xbf16>
    %c0_88 = arith.constant 0 : index
    %c0_89 = arith.constant 0 : index
    %c5_90 = arith.constant 5 : index
    %c0_91 = arith.constant 0 : index
    %116 = vector.load %arg4[%c0_88, %c0_89, %c5_90, %c0_91] : memref<1x8x8x128xbf16, #tpu.memory_space<vmem>>, vector<1x1x1x128xbf16>
    %117 = vector.shape_cast %116 : vector<1x1x1x128xbf16> to vector<1x128xbf16>
    %118 = vector.shape_cast %115 : vector<1x128xbf16> to vector<1x1x1x128xbf16>
    tpu.vector_store %arg4[%c0_88, %c0_89, %c5_90, %c0_91], %118 {strides = array<i32>} : memref<1x8x8x128xbf16, #tpu.memory_space<vmem>>, vector<1x1x1x128xbf16>,
    %119 = vector.extract_strided_slice %76 {offsets = [12, 0], sizes = [1, 128], strides = [1, 1]} : vector<16x128xf32> to vector<1x128xf32>
    %120 = vector.extract_strided_slice %76 {offsets = [13, 0], sizes = [1, 128], strides = [1, 1]} : vector<16x128xf32> to vector<1x128xf32>
    %121 = arith.maximumf %119, %120 : vector<1x128xf32>
    %122 = arith.truncf %121 : vector<1x128xf32> to vector<1x128xbf16>
    %c0_92 = arith.constant 0 : index
    %c0_93 = arith.constant 0 : index
    %c6_94 = arith.constant 6 : index
    %c0_95 = arith.constant 0 : index
    %123 = vector.load %arg4[%c0_92, %c0_93, %c6_94, %c0_95] : memref<1x8x8x128xbf16, #tpu.memory_space<vmem>>, vector<1x1x1x128xbf16>
    %124 = vector.shape_cast %123 : vector<1x1x1x128xbf16> to vector<1x128xbf16>
    %125 = vector.shape_cast %122 : vector<1x128xbf16> to vector<1x1x1x128xbf16>
    tpu.vector_store %arg4[%c0_92, %c0_93, %c6_94, %c0_95], %125 {strides = array<i32>} : memref<1x8x8x128xbf16, #tpu.memory_space<vmem>>, vector<1x1x1x128xbf16>,
    %126 = vector.extract_strided_slice %76 {offsets = [14, 0], sizes = [1, 128], strides = [1, 1]} : vector<16x128xf32> to vector<1x128xf32>
    %127 = vector.extract_strided_slice %76 {offsets = [15, 0], sizes = [1, 128], strides = [1, 1]} : vector<16x128xf32> to vector<1x128xf32>
    %128 = arith.maximumf %126, %127 : vector<1x128xf32>
    %129 = arith.truncf %128 : vector<1x128xf32> to vector<1x128xbf16>
    %c0_96 = arith.constant 0 : index
    %c0_97 = arith.constant 0 : index
    %c7_98 = arith.constant 7 : index
    %c0_99 = arith.constant 0 : index
    %130 = vector.load %arg4[%c0_96, %c0_97, %c7_98, %c0_99] : memref<1x8x8x128xbf16, #tpu.memory_space<vmem>>, vector<1x1x1x128xbf16>
    %131 = vector.shape_cast %130 : vector<1x1x1x128xbf16> to vector<1x128xbf16>
    %132 = vector.shape_cast %129 : vector<1x128xbf16> to vector<1x1x1x128xbf16>
    tpu.vector_store %arg4[%c0_96, %c0_97, %c7_98, %c0_99], %132 {strides = array<i32>} : memref<1x8x8x128xbf16, #tpu.memory_space<vmem>>, vector<1x1x1x128xbf16>,
    %133 = vector.extract_strided_slice %73 {offsets = [32, 0], sizes = [16, 128], strides = [1, 1]} : vector<256x128xf32> to vector<16x128xf32>
    %134 = vector.extract_strided_slice %73 {offsets = [48, 0], sizes = [16, 128], strides = [1, 1]} : vector<256x128xf32> to vector<16x128xf32>
    %135 = arith.maximumf %133, %134 : vector<16x128xf32>
    %136 = vector.extract_strided_slice %135 {offsets = [0, 0], sizes = [1, 128], strides = [1, 1]} : vector<16x128xf32> to vector<1x128xf32>
    %137 = vector.extract_strided_slice %135 {offsets = [1, 0], sizes = [1, 128], strides = [1, 1]} : vector<16x128xf32> to vector<1x128xf32>
    %138 = arith.maximumf %136, %137 : vector<1x128xf32>
    %139 = arith.truncf %138 : vector<1x128xf32> to vector<1x128xbf16>
    %c0_100 = arith.constant 0 : index
    %c1_101 = arith.constant 1 : index
    %c0_102 = arith.constant 0 : index
    %c0_103 = arith.constant 0 : index
    %140 = vector.load %arg4[%c0_100, %c1_101, %c0_102, %c0_103] : memref<1x8x8x128xbf16, #tpu.memory_space<vmem>>, vector<1x1x1x128xbf16>
    %141 = vector.shape_cast %140 : vector<1x1x1x128xbf16> to vector<1x128xbf16>
    %142 = vector.shape_cast %139 : vector<1x128xbf16> to vector<1x1x1x128xbf16>
    tpu.vector_store %arg4[%c0_100, %c1_101, %c0_102, %c0_103], %142 {strides = array<i32>} : memref<1x8x8x128xbf16, #tpu.memory_space<vmem>>, vector<1x1x1x128xbf16>,
    %143 = vector.extract_strided_slice %135 {offsets = [2, 0], sizes = [1, 128], strides = [1, 1]} : vector<16x128xf32> to vector<1x128xf32>
    %144 = vector.extract_strided_slice %135 {offsets = [3, 0], sizes = [1, 128], strides = [1, 1]} : vector<16x128xf32> to vector<1x128xf32>
    %145 = arith.maximumf %143, %144 : vector<1x128xf32>
    %146 = arith.truncf %145 : vector<1x128xf32> to vector<1x128xbf16>
    %c0_104 = arith.constant 0 : index
    %c1_105 = arith.constant 1 : index
    %c1_106 = arith.constant 1 : index
    %c0_107 = arith.constant 0 : index
    %147 = vector.load %arg4[%c0_104, %c1_105, %c1_106, %c0_107] : memref<1x8x8x128xbf16, #tpu.memory_space<vmem>>, vector<1x1x1x128xbf16>
    %148 = vector.shape_cast %147 : vector<1x1x1x128xbf16> to vector<1x128xbf16>
    %149 = vector.shape_cast %146 : vector<1x128xbf16> to vector<1x1x1x128xbf16>
    tpu.vector_store %arg4[%c0_104, %c1_105, %c1_106, %c0_107], %149 {strides = array<i32>} : memref<1x8x8x128xbf16, #tpu.memory_space<vmem>>, vector<1x1x1x128xbf16>,
    %150 = vector.extract_strided_slice %135 {offsets = [4, 0], sizes = [1, 128], strides = [1, 1]} : vector<16x128xf32> to vector<1x128xf32>
    %151 = vector.extract_strided_slice %135 {offsets = [5, 0], sizes = [1, 128], strides = [1, 1]} : vector<16x128xf32> to vector<1x128xf32>
    %152 = arith.maximumf %150, %151 : vector<1x128xf32>
    %153 = arith.truncf %152 : vector<1x128xf32> to vector<1x128xbf16>
    %c0_108 = arith.constant 0 : index
    %c1_109 = arith.constant 1 : index
    %c2_110 = arith.constant 2 : index
    %c0_111 = arith.constant 0 : index
    %154 = vector.load %arg4[%c0_108, %c1_109, %c2_110, %c0_111] : memref<1x8x8x128xbf16, #tpu.memory_space<vmem>>, vector<1x1x1x128xbf16>
    %155 = vector.shape_cast %154 : vector<1x1x1x128xbf16> to vector<1x128xbf16>
    %156 = vector.shape_cast %153 : vector<1x128xbf16> to vector<1x1x1x128xbf16>
    tpu.vector_store %arg4[%c0_108, %c1_109, %c2_110, %c0_111], %156 {strides = array<i32>} : memref<1x8x8x128xbf16, #tpu.memory_space<vmem>>, vector<1x1x1x128xbf16>,
    %157 = vector.extract_strided_slice %135 {offsets = [6, 0], sizes = [1, 128], strides = [1, 1]} : vector<16x128xf32> to vector<1x128xf32>
    %158 = vector.extract_strided_slice %135 {offsets = [7, 0], sizes = [1, 128], strides = [1, 1]} : vector<16x128xf32> to vector<1x128xf32>
    %159 = arith.maximumf %157, %158 : vector<1x128xf32>
    %160 = arith.truncf %159 : vector<1x128xf32> to vector<1x128xbf16>
    %c0_112 = arith.constant 0 : index
    %c1_113 = arith.constant 1 : index
    %c3_114 = arith.constant 3 : index
    %c0_115 = arith.constant 0 : index
    %161 = vector.load %arg4[%c0_112, %c1_113, %c3_114, %c0_115] : memref<1x8x8x128xbf16, #tpu.memory_space<vmem>>, vector<1x1x1x128xbf16>
    %162 = vector.shape_cast %161 : vector<1x1x1x128xbf16> to vector<1x128xbf16>
    %163 = vector.shape_cast %160 : vector<1x128xbf16> to vector<1x1x1x128xbf16>
    tpu.vector_store %arg4[%c0_112, %c1_113, %c3_114, %c0_115], %163 {strides = array<i32>} : memref<1x8x8x128xbf16, #tpu.memory_space<vmem>>, vector<1x1x1x128xbf16>,
    %164 = vector.extract_strided_slice %135 {offsets = [8, 0], sizes = [1, 128], strides = [1, 1]} : vector<16x128xf32> to vector<1x128xf32>
    %165 = vector.extract_strided_slice %135 {offsets = [9, 0], sizes = [1, 128], strides = [1, 1]} : vector<16x128xf32> to vector<1x128xf32>
    %166 = arith.maximumf %164, %165 : vector<1x128xf32>
    %167 = arith.truncf %166 : vector<1x128xf32> to vector<1x128xbf16>
    %c0_116 = arith.constant 0 : index
    %c1_117 = arith.constant 1 : index
    %c4_118 = arith.constant 4 : index
    %c0_119 = arith.constant 0 : index
    %168 = vector.load %arg4[%c0_116, %c1_117, %c4_118, %c0_119] : memref<1x8x8x128xbf16, #tpu.memory_space<vmem>>, vector<1x1x1x128xbf16>
    %169 = vector.shape_cast %168 : vector<1x1x1x128xbf16> to vector<1x128xbf16>
    %170 = vector.shape_cast %167 : vector<1x128xbf16> to vector<1x1x1x128xbf16>
    tpu.vector_store %arg4[%c0_116, %c1_117, %c4_118, %c0_119], %170 {strides = array<i32>} : memref<1x8x8x128xbf16, #tpu.memory_space<vmem>>, vector<1x1x1x128xbf16>,
    %171 = vector.extract_strided_slice %135 {offsets = [10, 0], sizes = [1, 128], strides = [1, 1]} : vector<16x128xf32> to vector<1x128xf32>
    %172 = vector.extract_strided_slice %135 {offsets = [11, 0], sizes = [1, 128], strides = [1, 1]} : vector<16x128xf32> to vector<1x128xf32>
    %173 = arith.maximumf %171, %172 : vector<1x128xf32>
    %174 = arith.truncf %173 : vector<1x128xf32> to vector<1x128xbf16>
    %c0_120 = arith.constant 0 : index
    %c1_121 = arith.constant 1 : index
    %c5_122 = arith.constant 5 : index
    %c0_123 = arith.constant 0 : index
    %175 = vector.load %arg4[%c0_120, %c1_121, %c5_122, %c0_123] : memref<1x8x8x128xbf16, #tpu.memory_space<vmem>>, vector<1x1x1x128xbf16>
    %176 = vector.shape_cast %175 : vector<1x1x1x128xbf16> to vector<1x128xbf16>
    %177 = vector.shape_cast %174 : vector<1x128xbf16> to vector<1x1x1x128xbf16>
    tpu.vector_store %arg4[%c0_120, %c1_121, %c5_122, %c0_123], %177 {strides = array<i32>} : memref<1x8x8x128xbf16, #tpu.memory_space<vmem>>, vector<1x1x1x128xbf16>,
    %178 = vector.extract_strided_slice %135 {offsets = [12, 0], sizes = [1, 128], strides = [1, 1]} : vector<16x128xf32> to vector<1x128xf32>
    %179 = vector.extract_strided_slice %135 {offsets = [13, 0], sizes = [1, 128], strides = [1, 1]} : vector<16x128xf32> to vector<1x128xf32>
    %180 = arith.maximumf %178, %179 : vector<1x128xf32>
    %181 = arith.truncf %180 : vector<1x128xf32> to vector<1x128xbf16>
    %c0_124 = arith.constant 0 : index
    %c1_125 = arith.constant 1 : index
    %c6_126 = arith.constant 6 : index
    %c0_127 = arith.constant 0 : index
    %182 = vector.load %arg4[%c0_124, %c1_125, %c6_126, %c0_127] : memref<1x8x8x128xbf16, #tpu.memory_space<vmem>>, vector<1x1x1x128xbf16>
    %183 = vector.shape_cast %182 : vector<1x1x1x128xbf16> to vector<1x128xbf16>
    %184 = vector.shape_cast %181 : vector<1x128xbf16> to vector<1x1x1x128xbf16>
    tpu.vector_store %arg4[%c0_124, %c1_125, %c6_126, %c0_127], %184 {strides = array<i32>} : memref<1x8x8x128xbf16, #tpu.memory_space<vmem>>, vector<1x1x1x128xbf16>,
    %185 = vector.extract_strided_slice %135 {offsets = [14, 0], sizes = [1, 128], strides = [1, 1]} : vector<16x128xf32> to vector<1x128xf32>
    %186 = vector.extract_strided_slice %135 {offsets = [15, 0], sizes = [1, 128], strides = [1, 1]} : vector<16x128xf32> to vector<1x128xf32>
    %187 = arith.maximumf %185, %186 : vector<1x128xf32>
    %188 = arith.truncf %187 : vector<1x128xf32> to vector<1x128xbf16>
    %c0_128 = arith.constant 0 : index
    %c1_129 = arith.constant 1 : index
    %c7_130 = arith.constant 7 : index
    %c0_131 = arith.constant 0 : index
    %189 = vector.load %arg4[%c0_128, %c1_129, %c7_130, %c0_131] : memref<1x8x8x128xbf16, #tpu.memory_space<vmem>>, vector<1x1x1x128xbf16>
    %190 = vector.shape_cast %189 : vector<1x1x1x128xbf16> to vector<1x128xbf16>
    %191 = vector.shape_cast %188 : vector<1x128xbf16> to vector<1x1x1x128xbf16>
    tpu.vector_store %arg4[%c0_128, %c1_129, %c7_130, %c0_131], %191 {strides = array<i32>} : memref<1x8x8x128xbf16, #tpu.memory_space<vmem>>, vector<1x1x1x128xbf16>,
    %192 = vector.extract_strided_slice %73 {offsets = [64, 0], sizes = [16, 128], strides = [1, 1]} : vector<256x128xf32> to vector<16x128xf32>
    %193 = vector.extract_strided_slice %73 {offsets = [80, 0], sizes = [16, 128], strides = [1, 1]} : vector<256x128xf32> to vector<16x128xf32>
    %194 = arith.maximumf %192, %193 : vector<16x128xf32>
    %195 = vector.extract_strided_slice %194 {offsets = [0, 0], sizes = [1, 128], strides = [1, 1]} : vector<16x128xf32> to vector<1x128xf32>
    %196 = vector.extract_strided_slice %194 {offsets = [1, 0], sizes = [1, 128], strides = [1, 1]} : vector<16x128xf32> to vector<1x128xf32>
    %197 = arith.maximumf %195, %196 : vector<1x128xf32>
    %198 = arith.truncf %197 : vector<1x128xf32> to vector<1x128xbf16>
    %c0_132 = arith.constant 0 : index
    %c2_133 = arith.constant 2 : index
    %c0_134 = arith.constant 0 : index
    %c0_135 = arith.constant 0 : index
    %199 = vector.load %arg4[%c0_132, %c2_133, %c0_134, %c0_135] : memref<1x8x8x128xbf16, #tpu.memory_space<vmem>>, vector<1x1x1x128xbf16>
    %200 = vector.shape_cast %199 : vector<1x1x1x128xbf16> to vector<1x128xbf16>
    %201 = vector.shape_cast %198 : vector<1x128xbf16> to vector<1x1x1x128xbf16>
    tpu.vector_store %arg4[%c0_132, %c2_133, %c0_134, %c0_135], %201 {strides = array<i32>} : memref<1x8x8x128xbf16, #tpu.memory_space<vmem>>, vector<1x1x1x128xbf16>,
    %202 = vector.extract_strided_slice %194 {offsets = [2, 0], sizes = [1, 128], strides = [1, 1]} : vector<16x128xf32> to vector<1x128xf32>
    %203 = vector.extract_strided_slice %194 {offsets = [3, 0], sizes = [1, 128], strides = [1, 1]} : vector<16x128xf32> to vector<1x128xf32>
    %204 = arith.maximumf %202, %203 : vector<1x128xf32>
    %205 = arith.truncf %204 : vector<1x128xf32> to vector<1x128xbf16>
    %c0_136 = arith.constant 0 : index
    %c2_137 = arith.constant 2 : index
    %c1_138 = arith.constant 1 : index
    %c0_139 = arith.constant 0 : index
    %206 = vector.load %arg4[%c0_136, %c2_137, %c1_138, %c0_139] : memref<1x8x8x128xbf16, #tpu.memory_space<vmem>>, vector<1x1x1x128xbf16>
    %207 = vector.shape_cast %206 : vector<1x1x1x128xbf16> to vector<1x128xbf16>
    %208 = vector.shape_cast %205 : vector<1x128xbf16> to vector<1x1x1x128xbf16>
    tpu.vector_store %arg4[%c0_136, %c2_137, %c1_138, %c0_139], %208 {strides = array<i32>} : memref<1x8x8x128xbf16, #tpu.memory_space<vmem>>, vector<1x1x1x128xbf16>,
    %209 = vector.extract_strided_slice %194 {offsets = [4, 0], sizes = [1, 128], strides = [1, 1]} : vector<16x128xf32> to vector<1x128xf32>
    %210 = vector.extract_strided_slice %194 {offsets = [5, 0], sizes = [1, 128], strides = [1, 1]} : vector<16x128xf32> to vector<1x128xf32>
    %211 = arith.maximumf %209, %210 : vector<1x128xf32>
    %212 = arith.truncf %211 : vector<1x128xf32> to vector<1x128xbf16>
    %c0_140 = arith.constant 0 : index
    %c2_141 = arith.constant 2 : index
    %c2_142 = arith.constant 2 : index
    %c0_143 = arith.constant 0 : index
    %213 = vector.load %arg4[%c0_140, %c2_141, %c2_142, %c0_143] : memref<1x8x8x128xbf16, #tpu.memory_space<vmem>>, vector<1x1x1x128xbf16>
    %214 = vector.shape_cast %213 : vector<1x1x1x128xbf16> to vector<1x128xbf16>
    %215 = vector.shape_cast %212 : vector<1x128xbf16> to vector<1x1x1x128xbf16>
    tpu.vector_store %arg4[%c0_140, %c2_141, %c2_142, %c0_143], %215 {strides = array<i32>} : memref<1x8x8x128xbf16, #tpu.memory_space<vmem>>, vector<1x1x1x128xbf16>,
    %216 = vector.extract_strided_slice %194 {offsets = [6, 0], sizes = [1, 128], strides = [1, 1]} : vector<16x128xf32> to vector<1x128xf32>
    %217 = vector.extract_strided_slice %194 {offsets = [7, 0], sizes = [1, 128], strides = [1, 1]} : vector<16x128xf32> to vector<1x128xf32>
    %218 = arith.maximumf %216, %217 : vector<1x128xf32>
    %219 = arith.truncf %218 : vector<1x128xf32> to vector<1x128xbf16>
    %c0_144 = arith.constant 0 : index
    %c2_145 = arith.constant 2 : index
    %c3_146 = arith.constant 3 : index
    %c0_147 = arith.constant 0 : index
    %220 = vector.load %arg4[%c0_144, %c2_145, %c3_146, %c0_147] : memref<1x8x8x128xbf16, #tpu.memory_space<vmem>>, vector<1x1x1x128xbf16>
    %221 = vector.shape_cast %220 : vector<1x1x1x128xbf16> to vector<1x128xbf16>
    %222 = vector.shape_cast %219 : vector<1x128xbf16> to vector<1x1x1x128xbf16>
    tpu.vector_store %arg4[%c0_144, %c2_145, %c3_146, %c0_147], %222 {strides = array<i32>} : memref<1x8x8x128xbf16, #tpu.memory_space<vmem>>, vector<1x1x1x128xbf16>,
    %223 = vector.extract_strided_slice %194 {offsets = [8, 0], sizes = [1, 128], strides = [1, 1]} : vector<16x128xf32> to vector<1x128xf32>
    %224 = vector.extract_strided_slice %194 {offsets = [9, 0], sizes = [1, 128], strides = [1, 1]} : vector<16x128xf32> to vector<1x128xf32>
    %225 = arith.maximumf %223, %224 : vector<1x128xf32>
    %226 = arith.truncf %225 : vector<1x128xf32> to vector<1x128xbf16>
    %c0_148 = arith.constant 0 : index
    %c2_149 = arith.constant 2 : index
    %c4_150 = arith.constant 4 : index
    %c0_151 = arith.constant 0 : index
    %227 = vector.load %arg4[%c0_148, %c2_149, %c4_150, %c0_151] : memref<1x8x8x128xbf16, #tpu.memory_space<vmem>>, vector<1x1x1x128xbf16>
    %228 = vector.shape_cast %227 : vector<1x1x1x128xbf16> to vector<1x128xbf16>
    %229 = vector.shape_cast %226 : vector<1x128xbf16> to vector<1x1x1x128xbf16>
    tpu.vector_store %arg4[%c0_148, %c2_149, %c4_150, %c0_151], %229 {strides = array<i32>} : memref<1x8x8x128xbf16, #tpu.memory_space<vmem>>, vector<1x1x1x128xbf16>,
    %230 = vector.extract_strided_slice %194 {offsets = [10, 0], sizes = [1, 128], strides = [1, 1]} : vector<16x128xf32> to vector<1x128xf32>
    %231 = vector.extract_strided_slice %194 {offsets = [11, 0], sizes = [1, 128], strides = [1, 1]} : vector<16x128xf32> to vector<1x128xf32>
    %232 = arith.maximumf %230, %231 : vector<1x128xf32>
    %233 = arith.truncf %232 : vector<1x128xf32> to vector<1x128xbf16>
    %c0_152 = arith.constant 0 : index
    %c2_153 = arith.constant 2 : index
    %c5_154 = arith.constant 5 : index
    %c0_155 = arith.constant 0 : index
    %234 = vector.load %arg4[%c0_152, %c2_153, %c5_154, %c0_155] : memref<1x8x8x128xbf16, #tpu.memory_space<vmem>>, vector<1x1x1x128xbf16>
    %235 = vector.shape_cast %234 : vector<1x1x1x128xbf16> to vector<1x128xbf16>
    %236 = vector.shape_cast %233 : vector<1x128xbf16> to vector<1x1x1x128xbf16>
    tpu.vector_store %arg4[%c0_152, %c2_153, %c5_154, %c0_155], %236 {strides = array<i32>} : memref<1x8x8x128xbf16, #tpu.memory_space<vmem>>, vector<1x1x1x128xbf16>,
    %237 = vector.extract_strided_slice %194 {offsets = [12, 0], sizes = [1, 128], strides = [1, 1]} : vector<16x128xf32> to vector<1x128xf32>
    %238 = vector.extract_strided_slice %194 {offsets = [13, 0], sizes = [1, 128], strides = [1, 1]} : vector<16x128xf32> to vector<1x128xf32>
    %239 = arith.maximumf %237, %238 : vector<1x128xf32>
    %240 = arith.truncf %239 : vector<1x128xf32> to vector<1x128xbf16>
    %c0_156 = arith.constant 0 : index
    %c2_157 = arith.constant 2 : index
    %c6_158 = arith.constant 6 : index
    %c0_159 = arith.constant 0 : index
    %241 = vector.load %arg4[%c0_156, %c2_157, %c6_158, %c0_159] : memref<1x8x8x128xbf16, #tpu.memory_space<vmem>>, vector<1x1x1x128xbf16>
    %242 = vector.shape_cast %241 : vector<1x1x1x128xbf16> to vector<1x128xbf16>
    %243 = vector.shape_cast %240 : vector<1x128xbf16> to vector<1x1x1x128xbf16>
    tpu.vector_store %arg4[%c0_156, %c2_157, %c6_158, %c0_159], %243 {strides = array<i32>} : memref<1x8x8x128xbf16, #tpu.memory_space<vmem>>, vector<1x1x1x128xbf16>,
    %244 = vector.extract_strided_slice %194 {offsets = [14, 0], sizes = [1, 128], strides = [1, 1]} : vector<16x128xf32> to vector<1x128xf32>
    %245 = vector.extract_strided_slice %194 {offsets = [15, 0], sizes = [1, 128], strides = [1, 1]} : vector<16x128xf32> to vector<1x128xf32>
    %246 = arith.maximumf %244, %245 : vector<1x128xf32>
    %247 = arith.truncf %246 : vector<1x128xf32> to vector<1x128xbf16>
    %c0_160 = arith.constant 0 : index
    %c2_161 = arith.constant 2 : index
    %c7_162 = arith.constant 7 : index
    %c0_163 = arith.constant 0 : index
    %248 = vector.load %arg4[%c0_160, %c2_161, %c7_162, %c0_163] : memref<1x8x8x128xbf16, #tpu.memory_space<vmem>>, vector<1x1x1x128xbf16>
    %249 = vector.shape_cast %248 : vector<1x1x1x128xbf16> to vector<1x128xbf16>
    %250 = vector.shape_cast %247 : vector<1x128xbf16> to vector<1x1x1x128xbf16>
    tpu.vector_store %arg4[%c0_160, %c2_161, %c7_162, %c0_163], %250 {strides = array<i32>} : memref<1x8x8x128xbf16, #tpu.memory_space<vmem>>, vector<1x1x1x128xbf16>,
    %251 = vector.extract_strided_slice %73 {offsets = [96, 0], sizes = [16, 128], strides = [1, 1]} : vector<256x128xf32> to vector<16x128xf32>
    %252 = vector.extract_strided_slice %73 {offsets = [112, 0], sizes = [16, 128], strides = [1, 1]} : vector<256x128xf32> to vector<16x128xf32>
    %253 = arith.maximumf %251, %252 : vector<16x128xf32>
    %254 = vector.extract_strided_slice %253 {offsets = [0, 0], sizes = [1, 128], strides = [1, 1]} : vector<16x128xf32> to vector<1x128xf32>
    %255 = vector.extract_strided_slice %253 {offsets = [1, 0], sizes = [1, 128], strides = [1, 1]} : vector<16x128xf32> to vector<1x128xf32>
    %256 = arith.maximumf %254, %255 : vector<1x128xf32>
    %257 = arith.truncf %256 : vector<1x128xf32> to vector<1x128xbf16>
    %c0_164 = arith.constant 0 : index
    %c3_165 = arith.constant 3 : index
    %c0_166 = arith.constant 0 : index
    %c0_167 = arith.constant 0 : index
    %258 = vector.load %arg4[%c0_164, %c3_165, %c0_166, %c0_167] : memref<1x8x8x128xbf16, #tpu.memory_space<vmem>>, vector<1x1x1x128xbf16>
    %259 = vector.shape_cast %258 : vector<1x1x1x128xbf16> to vector<1x128xbf16>
    %260 = vector.shape_cast %257 : vector<1x128xbf16> to vector<1x1x1x128xbf16>
    tpu.vector_store %arg4[%c0_164, %c3_165, %c0_166, %c0_167], %260 {strides = array<i32>} : memref<1x8x8x128xbf16, #tpu.memory_space<vmem>>, vector<1x1x1x128xbf16>,
    %261 = vector.extract_strided_slice %253 {offsets = [2, 0], sizes = [1, 128], strides = [1, 1]} : vector<16x128xf32> to vector<1x128xf32>
    %262 = vector.extract_strided_slice %253 {offsets = [3, 0], sizes = [1, 128], strides = [1, 1]} : vector<16x128xf32> to vector<1x128xf32>
    %263 = arith.maximumf %261, %262 : vector<1x128xf32>
    %264 = arith.truncf %263 : vector<1x128xf32> to vector<1x128xbf16>
    %c0_168 = arith.constant 0 : index
    %c3_169 = arith.constant 3 : index
    %c1_170 = arith.constant 1 : index
    %c0_171 = arith.constant 0 : index
    %265 = vector.load %arg4[%c0_168, %c3_169, %c1_170, %c0_171] : memref<1x8x8x128xbf16, #tpu.memory_space<vmem>>, vector<1x1x1x128xbf16>
    %266 = vector.shape_cast %265 : vector<1x1x1x128xbf16> to vector<1x128xbf16>
    %267 = vector.shape_cast %264 : vector<1x128xbf16> to vector<1x1x1x128xbf16>
    tpu.vector_store %arg4[%c0_168, %c3_169, %c1_170, %c0_171], %267 {strides = array<i32>} : memref<1x8x8x128xbf16, #tpu.memory_space<vmem>>, vector<1x1x1x128xbf16>,
    %268 = vector.extract_strided_slice %253 {offsets = [4, 0], sizes = [1, 128], strides = [1, 1]} : vector<16x128xf32> to vector<1x128xf32>
    %269 = vector.extract_strided_slice %253 {offsets = [5, 0], sizes = [1, 128], strides = [1, 1]} : vector<16x128xf32> to vector<1x128xf32>
    %270 = arith.maximumf %268, %269 : vector<1x128xf32>
    %271 = arith.truncf %270 : vector<1x128xf32> to vector<1x128xbf16>
    %c0_172 = arith.constant 0 : index
    %c3_173 = arith.constant 3 : index
    %c2_174 = arith.constant 2 : index
    %c0_175 = arith.constant 0 : index
    %272 = vector.load %arg4[%c0_172, %c3_173, %c2_174, %c0_175] : memref<1x8x8x128xbf16, #tpu.memory_space<vmem>>, vector<1x1x1x128xbf16>
    %273 = vector.shape_cast %272 : vector<1x1x1x128xbf16> to vector<1x128xbf16>
    %274 = vector.shape_cast %271 : vector<1x128xbf16> to vector<1x1x1x128xbf16>
    tpu.vector_store %arg4[%c0_172, %c3_173, %c2_174, %c0_175], %274 {strides = array<i32>} : memref<1x8x8x128xbf16, #tpu.memory_space<vmem>>, vector<1x1x1x128xbf16>,
    %275 = vector.extract_strided_slice %253 {offsets = [6, 0], sizes = [1, 128], strides = [1, 1]} : vector<16x128xf32> to vector<1x128xf32>
    %276 = vector.extract_strided_slice %253 {offsets = [7, 0], sizes = [1, 128], strides = [1, 1]} : vector<16x128xf32> to vector<1x128xf32>
    %277 = arith.maximumf %275, %276 : vector<1x128xf32>
    %278 = arith.truncf %277 : vector<1x128xf32> to vector<1x128xbf16>
    %c0_176 = arith.constant 0 : index
    %c3_177 = arith.constant 3 : index
    %c3_178 = arith.constant 3 : index
    %c0_179 = arith.constant 0 : index
    %279 = vector.load %arg4[%c0_176, %c3_177, %c3_178, %c0_179] : memref<1x8x8x128xbf16, #tpu.memory_space<vmem>>, vector<1x1x1x128xbf16>
    %280 = vector.shape_cast %279 : vector<1x1x1x128xbf16> to vector<1x128xbf16>
    %281 = vector.shape_cast %278 : vector<1x128xbf16> to vector<1x1x1x128xbf16>
    tpu.vector_store %arg4[%c0_176, %c3_177, %c3_178, %c0_179], %281 {strides = array<i32>} : memref<1x8x8x128xbf16, #tpu.memory_space<vmem>>, vector<1x1x1x128xbf16>,
    %282 = vector.extract_strided_slice %253 {offsets = [8, 0], sizes = [1, 128], strides = [1, 1]} : vector<16x128xf32> to vector<1x128xf32>
    %283 = vector.extract_strided_slice %253 {offsets = [9, 0], sizes = [1, 128], strides = [1, 1]} : vector<16x128xf32> to vector<1x128xf32>
    %284 = arith.maximumf %282, %283 : vector<1x128xf32>
    %285 = arith.truncf %284 : vector<1x128xf32> to vector<1x128xbf16>
    %c0_180 = arith.constant 0 : index
    %c3_181 = arith.constant 3 : index
    %c4_182 = arith.constant 4 : index
    %c0_183 = arith.constant 0 : index
    %286 = vector.load %arg4[%c0_180, %c3_181, %c4_182, %c0_183] : memref<1x8x8x128xbf16, #tpu.memory_space<vmem>>, vector<1x1x1x128xbf16>
    %287 = vector.shape_cast %286 : vector<1x1x1x128xbf16> to vector<1x128xbf16>
    %288 = vector.shape_cast %285 : vector<1x128xbf16> to vector<1x1x1x128xbf16>
    tpu.vector_store %arg4[%c0_180, %c3_181, %c4_182, %c0_183], %288 {strides = array<i32>} : memref<1x8x8x128xbf16, #tpu.memory_space<vmem>>, vector<1x1x1x128xbf16>,
    %289 = vector.extract_strided_slice %253 {offsets = [10, 0], sizes = [1, 128], strides = [1, 1]} : vector<16x128xf32> to vector<1x128xf32>
    %290 = vector.extract_strided_slice %253 {offsets = [11, 0], sizes = [1, 128], strides = [1, 1]} : vector<16x128xf32> to vector<1x128xf32>
    %291 = arith.maximumf %289, %290 : vector<1x128xf32>
    %292 = arith.truncf %291 : vector<1x128xf32> to vector<1x128xbf16>
    %c0_184 = arith.constant 0 : index
    %c3_185 = arith.constant 3 : index
    %c5_186 = arith.constant 5 : index
    %c0_187 = arith.constant 0 : index
    %293 = vector.load %arg4[%c0_184, %c3_185, %c5_186, %c0_187] : memref<1x8x8x128xbf16, #tpu.memory_space<vmem>>, vector<1x1x1x128xbf16>
    %294 = vector.shape_cast %293 : vector<1x1x1x128xbf16> to vector<1x128xbf16>
    %295 = vector.shape_cast %292 : vector<1x128xbf16> to vector<1x1x1x128xbf16>
    tpu.vector_store %arg4[%c0_184, %c3_185, %c5_186, %c0_187], %295 {strides = array<i32>} : memref<1x8x8x128xbf16, #tpu.memory_space<vmem>>, vector<1x1x1x128xbf16>,
    %296 = vector.extract_strided_slice %253 {offsets = [12, 0], sizes = [1, 128], strides = [1, 1]} : vector<16x128xf32> to vector<1x128xf32>
    %297 = vector.extract_strided_slice %253 {offsets = [13, 0], sizes = [1, 128], strides = [1, 1]} : vector<16x128xf32> to vector<1x128xf32>
    %298 = arith.maximumf %296, %297 : vector<1x128xf32>
    %299 = arith.truncf %298 : vector<1x128xf32> to vector<1x128xbf16>
    %c0_188 = arith.constant 0 : index
    %c3_189 = arith.constant 3 : index
    %c6_190 = arith.constant 6 : index
    %c0_191 = arith.constant 0 : index
    %300 = vector.load %arg4[%c0_188, %c3_189, %c6_190, %c0_191] : memref<1x8x8x128xbf16, #tpu.memory_space<vmem>>, vector<1x1x1x128xbf16>
    %301 = vector.shape_cast %300 : vector<1x1x1x128xbf16> to vector<1x128xbf16>
    %302 = vector.shape_cast %299 : vector<1x128xbf16> to vector<1x1x1x128xbf16>
    tpu.vector_store %arg4[%c0_188, %c3_189, %c6_190, %c0_191], %302 {strides = array<i32>} : memref<1x8x8x128xbf16, #tpu.memory_space<vmem>>, vector<1x1x1x128xbf16>,
    %303 = vector.extract_strided_slice %253 {offsets = [14, 0], sizes = [1, 128], strides = [1, 1]} : vector<16x128xf32> to vector<1x128xf32>
    %304 = vector.extract_strided_slice %253 {offsets = [15, 0], sizes = [1, 128], strides = [1, 1]} : vector<16x128xf32> to vector<1x128xf32>
    %305 = arith.maximumf %303, %304 : vector<1x128xf32>
    %306 = arith.truncf %305 : vector<1x128xf32> to vector<1x128xbf16>
    %c0_192 = arith.constant 0 : index
    %c3_193 = arith.constant 3 : index
    %c7_194 = arith.constant 7 : index
    %c0_195 = arith.constant 0 : index
    %307 = vector.load %arg4[%c0_192, %c3_193, %c7_194, %c0_195] : memref<1x8x8x128xbf16, #tpu.memory_space<vmem>>, vector<1x1x1x128xbf16>
    %308 = vector.shape_cast %307 : vector<1x1x1x128xbf16> to vector<1x128xbf16>
    %309 = vector.shape_cast %306 : vector<1x128xbf16> to vector<1x1x1x128xbf16>
    tpu.vector_store %arg4[%c0_192, %c3_193, %c7_194, %c0_195], %309 {strides = array<i32>} : memref<1x8x8x128xbf16, #tpu.memory_space<vmem>>, vector<1x1x1x128xbf16>,
    %310 = vector.extract_strided_slice %73 {offsets = [128, 0], sizes = [16, 128], strides = [1, 1]} : vector<256x128xf32> to vector<16x128xf32>
    %311 = vector.extract_strided_slice %73 {offsets = [144, 0], sizes = [16, 128], strides = [1, 1]} : vector<256x128xf32> to vector<16x128xf32>
    %312 = arith.maximumf %310, %311 : vector<16x128xf32>
    %313 = vector.extract_strided_slice %312 {offsets = [0, 0], sizes = [1, 128], strides = [1, 1]} : vector<16x128xf32> to vector<1x128xf32>
    %314 = vector.extract_strided_slice %312 {offsets = [1, 0], sizes = [1, 128], strides = [1, 1]} : vector<16x128xf32> to vector<1x128xf32>
    %315 = arith.maximumf %313, %314 : vector<1x128xf32>
    %316 = arith.truncf %315 : vector<1x128xf32> to vector<1x128xbf16>
    %c0_196 = arith.constant 0 : index
    %c4_197 = arith.constant 4 : index
    %c0_198 = arith.constant 0 : index
    %c0_199 = arith.constant 0 : index
    %317 = vector.load %arg4[%c0_196, %c4_197, %c0_198, %c0_199] : memref<1x8x8x128xbf16, #tpu.memory_space<vmem>>, vector<1x1x1x128xbf16>
    %318 = vector.shape_cast %317 : vector<1x1x1x128xbf16> to vector<1x128xbf16>
    %319 = vector.shape_cast %316 : vector<1x128xbf16> to vector<1x1x1x128xbf16>
    tpu.vector_store %arg4[%c0_196, %c4_197, %c0_198, %c0_199], %319 {strides = array<i32>} : memref<1x8x8x128xbf16, #tpu.memory_space<vmem>>, vector<1x1x1x128xbf16>,
    %320 = vector.extract_strided_slice %312 {offsets = [2, 0], sizes = [1, 128], strides = [1, 1]} : vector<16x128xf32> to vector<1x128xf32>
    %321 = vector.extract_strided_slice %312 {offsets = [3, 0], sizes = [1, 128], strides = [1, 1]} : vector<16x128xf32> to vector<1x128xf32>
    %322 = arith.maximumf %320, %321 : vector<1x128xf32>
    %323 = arith.truncf %322 : vector<1x128xf32> to vector<1x128xbf16>
    %c0_200 = arith.constant 0 : index
    %c4_201 = arith.constant 4 : index
    %c1_202 = arith.constant 1 : index
    %c0_203 = arith.constant 0 : index
    %324 = vector.load %arg4[%c0_200, %c4_201, %c1_202, %c0_203] : memref<1x8x8x128xbf16, #tpu.memory_space<vmem>>, vector<1x1x1x128xbf16>
    %325 = vector.shape_cast %324 : vector<1x1x1x128xbf16> to vector<1x128xbf16>
    %326 = vector.shape_cast %323 : vector<1x128xbf16> to vector<1x1x1x128xbf16>
    tpu.vector_store %arg4[%c0_200, %c4_201, %c1_202, %c0_203], %326 {strides = array<i32>} : memref<1x8x8x128xbf16, #tpu.memory_space<vmem>>, vector<1x1x1x128xbf16>,
    %327 = vector.extract_strided_slice %312 {offsets = [4, 0], sizes = [1, 128], strides = [1, 1]} : vector<16x128xf32> to vector<1x128xf32>
    %328 = vector.extract_strided_slice %312 {offsets = [5, 0], sizes = [1, 128], strides = [1, 1]} : vector<16x128xf32> to vector<1x128xf32>
    %329 = arith.maximumf %327, %328 : vector<1x128xf32>
    %330 = arith.truncf %329 : vector<1x128xf32> to vector<1x128xbf16>
    %c0_204 = arith.constant 0 : index
    %c4_205 = arith.constant 4 : index
    %c2_206 = arith.constant 2 : index
    %c0_207 = arith.constant 0 : index
    %331 = vector.load %arg4[%c0_204, %c4_205, %c2_206, %c0_207] : memref<1x8x8x128xbf16, #tpu.memory_space<vmem>>, vector<1x1x1x128xbf16>
    %332 = vector.shape_cast %331 : vector<1x1x1x128xbf16> to vector<1x128xbf16>
    %333 = vector.shape_cast %330 : vector<1x128xbf16> to vector<1x1x1x128xbf16>
    tpu.vector_store %arg4[%c0_204, %c4_205, %c2_206, %c0_207], %333 {strides = array<i32>} : memref<1x8x8x128xbf16, #tpu.memory_space<vmem>>, vector<1x1x1x128xbf16>,
    %334 = vector.extract_strided_slice %312 {offsets = [6, 0], sizes = [1, 128], strides = [1, 1]} : vector<16x128xf32> to vector<1x128xf32>
    %335 = vector.extract_strided_slice %312 {offsets = [7, 0], sizes = [1, 128], strides = [1, 1]} : vector<16x128xf32> to vector<1x128xf32>
    %336 = arith.maximumf %334, %335 : vector<1x128xf32>
    %337 = arith.truncf %336 : vector<1x128xf32> to vector<1x128xbf16>
    %c0_208 = arith.constant 0 : index
    %c4_209 = arith.constant 4 : index
    %c3_210 = arith.constant 3 : index
    %c0_211 = arith.constant 0 : index
    %338 = vector.load %arg4[%c0_208, %c4_209, %c3_210, %c0_211] : memref<1x8x8x128xbf16, #tpu.memory_space<vmem>>, vector<1x1x1x128xbf16>
    %339 = vector.shape_cast %338 : vector<1x1x1x128xbf16> to vector<1x128xbf16>
    %340 = vector.shape_cast %337 : vector<1x128xbf16> to vector<1x1x1x128xbf16>
    tpu.vector_store %arg4[%c0_208, %c4_209, %c3_210, %c0_211], %340 {strides = array<i32>} : memref<1x8x8x128xbf16, #tpu.memory_space<vmem>>, vector<1x1x1x128xbf16>,
    %341 = vector.extract_strided_slice %312 {offsets = [8, 0], sizes = [1, 128], strides = [1, 1]} : vector<16x128xf32> to vector<1x128xf32>
    %342 = vector.extract_strided_slice %312 {offsets = [9, 0], sizes = [1, 128], strides = [1, 1]} : vector<16x128xf32> to vector<1x128xf32>
    %343 = arith.maximumf %341, %342 : vector<1x128xf32>
    %344 = arith.truncf %343 : vector<1x128xf32> to vector<1x128xbf16>
    %c0_212 = arith.constant 0 : index
    %c4_213 = arith.constant 4 : index
    %c4_214 = arith.constant 4 : index
    %c0_215 = arith.constant 0 : index
    %345 = vector.load %arg4[%c0_212, %c4_213, %c4_214, %c0_215] : memref<1x8x8x128xbf16, #tpu.memory_space<vmem>>, vector<1x1x1x128xbf16>
    %346 = vector.shape_cast %345 : vector<1x1x1x128xbf16> to vector<1x128xbf16>
    %347 = vector.shape_cast %344 : vector<1x128xbf16> to vector<1x1x1x128xbf16>
    tpu.vector_store %arg4[%c0_212, %c4_213, %c4_214, %c0_215], %347 {strides = array<i32>} : memref<1x8x8x128xbf16, #tpu.memory_space<vmem>>, vector<1x1x1x128xbf16>,
    %348 = vector.extract_strided_slice %312 {offsets = [10, 0], sizes = [1, 128], strides = [1, 1]} : vector<16x128xf32> to vector<1x128xf32>
    %349 = vector.extract_strided_slice %312 {offsets = [11, 0], sizes = [1, 128], strides = [1, 1]} : vector<16x128xf32> to vector<1x128xf32>
    %350 = arith.maximumf %348, %349 : vector<1x128xf32>
    %351 = arith.truncf %350 : vector<1x128xf32> to vector<1x128xbf16>
    %c0_216 = arith.constant 0 : index
    %c4_217 = arith.constant 4 : index
    %c5_218 = arith.constant 5 : index
    %c0_219 = arith.constant 0 : index
    %352 = vector.load %arg4[%c0_216, %c4_217, %c5_218, %c0_219] : memref<1x8x8x128xbf16, #tpu.memory_space<vmem>>, vector<1x1x1x128xbf16>
    %353 = vector.shape_cast %352 : vector<1x1x1x128xbf16> to vector<1x128xbf16>
    %354 = vector.shape_cast %351 : vector<1x128xbf16> to vector<1x1x1x128xbf16>
    tpu.vector_store %arg4[%c0_216, %c4_217, %c5_218, %c0_219], %354 {strides = array<i32>} : memref<1x8x8x128xbf16, #tpu.memory_space<vmem>>, vector<1x1x1x128xbf16>,
    %355 = vector.extract_strided_slice %312 {offsets = [12, 0], sizes = [1, 128], strides = [1, 1]} : vector<16x128xf32> to vector<1x128xf32>
    %356 = vector.extract_strided_slice %312 {offsets = [13, 0], sizes = [1, 128], strides = [1, 1]} : vector<16x128xf32> to vector<1x128xf32>
    %357 = arith.maximumf %355, %356 : vector<1x128xf32>
    %358 = arith.truncf %357 : vector<1x128xf32> to vector<1x128xbf16>
    %c0_220 = arith.constant 0 : index
    %c4_221 = arith.constant 4 : index
    %c6_222 = arith.constant 6 : index
    %c0_223 = arith.constant 0 : index
    %359 = vector.load %arg4[%c0_220, %c4_221, %c6_222, %c0_223] : memref<1x8x8x128xbf16, #tpu.memory_space<vmem>>, vector<1x1x1x128xbf16>
    %360 = vector.shape_cast %359 : vector<1x1x1x128xbf16> to vector<1x128xbf16>
    %361 = vector.shape_cast %358 : vector<1x128xbf16> to vector<1x1x1x128xbf16>
    tpu.vector_store %arg4[%c0_220, %c4_221, %c6_222, %c0_223], %361 {strides = array<i32>} : memref<1x8x8x128xbf16, #tpu.memory_space<vmem>>, vector<1x1x1x128xbf16>,
    %362 = vector.extract_strided_slice %312 {offsets = [14, 0], sizes = [1, 128], strides = [1, 1]} : vector<16x128xf32> to vector<1x128xf32>
    %363 = vector.extract_strided_slice %312 {offsets = [15, 0], sizes = [1, 128], strides = [1, 1]} : vector<16x128xf32> to vector<1x128xf32>
    %364 = arith.maximumf %362, %363 : vector<1x128xf32>
    %365 = arith.truncf %364 : vector<1x128xf32> to vector<1x128xbf16>
    %c0_224 = arith.constant 0 : index
    %c4_225 = arith.constant 4 : index
    %c7_226 = arith.constant 7 : index
    %c0_227 = arith.constant 0 : index
    %366 = vector.load %arg4[%c0_224, %c4_225, %c7_226, %c0_227] : memref<1x8x8x128xbf16, #tpu.memory_space<vmem>>, vector<1x1x1x128xbf16>
    %367 = vector.shape_cast %366 : vector<1x1x1x128xbf16> to vector<1x128xbf16>
    %368 = vector.shape_cast %365 : vector<1x128xbf16> to vector<1x1x1x128xbf16>
    tpu.vector_store %arg4[%c0_224, %c4_225, %c7_226, %c0_227], %368 {strides = array<i32>} : memref<1x8x8x128xbf16, #tpu.memory_space<vmem>>, vector<1x1x1x128xbf16>,
    %369 = vector.extract_strided_slice %73 {offsets = [160, 0], sizes = [16, 128], strides = [1, 1]} : vector<256x128xf32> to vector<16x128xf32>
    %370 = vector.extract_strided_slice %73 {offsets = [176, 0], sizes = [16, 128], strides = [1, 1]} : vector<256x128xf32> to vector<16x128xf32>
    %371 = arith.maximumf %369, %370 : vector<16x128xf32>
    %372 = vector.extract_strided_slice %371 {offsets = [0, 0], sizes = [1, 128], strides = [1, 1]} : vector<16x128xf32> to vector<1x128xf32>
    %373 = vector.extract_strided_slice %371 {offsets = [1, 0], sizes = [1, 128], strides = [1, 1]} : vector<16x128xf32> to vector<1x128xf32>
    %374 = arith.maximumf %372, %373 : vector<1x128xf32>
    %375 = arith.truncf %374 : vector<1x128xf32> to vector<1x128xbf16>
    %c0_228 = arith.constant 0 : index
    %c5_229 = arith.constant 5 : index
    %c0_230 = arith.constant 0 : index
    %c0_231 = arith.constant 0 : index
    %376 = vector.load %arg4[%c0_228, %c5_229, %c0_230, %c0_231] : memref<1x8x8x128xbf16, #tpu.memory_space<vmem>>, vector<1x1x1x128xbf16>
    %377 = vector.shape_cast %376 : vector<1x1x1x128xbf16> to vector<1x128xbf16>
    %378 = vector.shape_cast %375 : vector<1x128xbf16> to vector<1x1x1x128xbf16>
    tpu.vector_store %arg4[%c0_228, %c5_229, %c0_230, %c0_231], %378 {strides = array<i32>} : memref<1x8x8x128xbf16, #tpu.memory_space<vmem>>, vector<1x1x1x128xbf16>,
    %379 = vector.extract_strided_slice %371 {offsets = [2, 0], sizes = [1, 128], strides = [1, 1]} : vector<16x128xf32> to vector<1x128xf32>
    %380 = vector.extract_strided_slice %371 {offsets = [3, 0], sizes = [1, 128], strides = [1, 1]} : vector<16x128xf32> to vector<1x128xf32>
    %381 = arith.maximumf %379, %380 : vector<1x128xf32>
    %382 = arith.truncf %381 : vector<1x128xf32> to vector<1x128xbf16>
    %c0_232 = arith.constant 0 : index
    %c5_233 = arith.constant 5 : index
    %c1_234 = arith.constant 1 : index
    %c0_235 = arith.constant 0 : index
    %383 = vector.load %arg4[%c0_232, %c5_233, %c1_234, %c0_235] : memref<1x8x8x128xbf16, #tpu.memory_space<vmem>>, vector<1x1x1x128xbf16>
    %384 = vector.shape_cast %383 : vector<1x1x1x128xbf16> to vector<1x128xbf16>
    %385 = vector.shape_cast %382 : vector<1x128xbf16> to vector<1x1x1x128xbf16>
    tpu.vector_store %arg4[%c0_232, %c5_233, %c1_234, %c0_235], %385 {strides = array<i32>} : memref<1x8x8x128xbf16, #tpu.memory_space<vmem>>, vector<1x1x1x128xbf16>,
    %386 = vector.extract_strided_slice %371 {offsets = [4, 0], sizes = [1, 128], strides = [1, 1]} : vector<16x128xf32> to vector<1x128xf32>
    %387 = vector.extract_strided_slice %371 {offsets = [5, 0], sizes = [1, 128], strides = [1, 1]} : vector<16x128xf32> to vector<1x128xf32>
    %388 = arith.maximumf %386, %387 : vector<1x128xf32>
    %389 = arith.truncf %388 : vector<1x128xf32> to vector<1x128xbf16>
    %c0_236 = arith.constant 0 : index
    %c5_237 = arith.constant 5 : index
    %c2_238 = arith.constant 2 : index
    %c0_239 = arith.constant 0 : index
    %390 = vector.load %arg4[%c0_236, %c5_237, %c2_238, %c0_239] : memref<1x8x8x128xbf16, #tpu.memory_space<vmem>>, vector<1x1x1x128xbf16>
    %391 = vector.shape_cast %390 : vector<1x1x1x128xbf16> to vector<1x128xbf16>
    %392 = vector.shape_cast %389 : vector<1x128xbf16> to vector<1x1x1x128xbf16>
    tpu.vector_store %arg4[%c0_236, %c5_237, %c2_238, %c0_239], %392 {strides = array<i32>} : memref<1x8x8x128xbf16, #tpu.memory_space<vmem>>, vector<1x1x1x128xbf16>,
    %393 = vector.extract_strided_slice %371 {offsets = [6, 0], sizes = [1, 128], strides = [1, 1]} : vector<16x128xf32> to vector<1x128xf32>
    %394 = vector.extract_strided_slice %371 {offsets = [7, 0], sizes = [1, 128], strides = [1, 1]} : vector<16x128xf32> to vector<1x128xf32>
    %395 = arith.maximumf %393, %394 : vector<1x128xf32>
    %396 = arith.truncf %395 : vector<1x128xf32> to vector<1x128xbf16>
    %c0_240 = arith.constant 0 : index
    %c5_241 = arith.constant 5 : index
    %c3_242 = arith.constant 3 : index
    %c0_243 = arith.constant 0 : index
    %397 = vector.load %arg4[%c0_240, %c5_241, %c3_242, %c0_243] : memref<1x8x8x128xbf16, #tpu.memory_space<vmem>>, vector<1x1x1x128xbf16>
    %398 = vector.shape_cast %397 : vector<1x1x1x128xbf16> to vector<1x128xbf16>
    %399 = vector.shape_cast %396 : vector<1x128xbf16> to vector<1x1x1x128xbf16>
    tpu.vector_store %arg4[%c0_240, %c5_241, %c3_242, %c0_243], %399 {strides = array<i32>} : memref<1x8x8x128xbf16, #tpu.memory_space<vmem>>, vector<1x1x1x128xbf16>,
    %400 = vector.extract_strided_slice %371 {offsets = [8, 0], sizes = [1, 128], strides = [1, 1]} : vector<16x128xf32> to vector<1x128xf32>
    %401 = vector.extract_strided_slice %371 {offsets = [9, 0], sizes = [1, 128], strides = [1, 1]} : vector<16x128xf32> to vector<1x128xf32>
    %402 = arith.maximumf %400, %401 : vector<1x128xf32>
    %403 = arith.truncf %402 : vector<1x128xf32> to vector<1x128xbf16>
    %c0_244 = arith.constant 0 : index
    %c5_245 = arith.constant 5 : index
    %c4_246 = arith.constant 4 : index
    %c0_247 = arith.constant 0 : index
    %404 = vector.load %arg4[%c0_244, %c5_245, %c4_246, %c0_247] : memref<1x8x8x128xbf16, #tpu.memory_space<vmem>>, vector<1x1x1x128xbf16>
    %405 = vector.shape_cast %404 : vector<1x1x1x128xbf16> to vector<1x128xbf16>
    %406 = vector.shape_cast %403 : vector<1x128xbf16> to vector<1x1x1x128xbf16>
    tpu.vector_store %arg4[%c0_244, %c5_245, %c4_246, %c0_247], %406 {strides = array<i32>} : memref<1x8x8x128xbf16, #tpu.memory_space<vmem>>, vector<1x1x1x128xbf16>,
    %407 = vector.extract_strided_slice %371 {offsets = [10, 0], sizes = [1, 128], strides = [1, 1]} : vector<16x128xf32> to vector<1x128xf32>
    %408 = vector.extract_strided_slice %371 {offsets = [11, 0], sizes = [1, 128], strides = [1, 1]} : vector<16x128xf32> to vector<1x128xf32>
    %409 = arith.maximumf %407, %408 : vector<1x128xf32>
    %410 = arith.truncf %409 : vector<1x128xf32> to vector<1x128xbf16>
    %c0_248 = arith.constant 0 : index
    %c5_249 = arith.constant 5 : index
    %c5_250 = arith.constant 5 : index
    %c0_251 = arith.constant 0 : index
    %411 = vector.load %arg4[%c0_248, %c5_249, %c5_250, %c0_251] : memref<1x8x8x128xbf16, #tpu.memory_space<vmem>>, vector<1x1x1x128xbf16>
    %412 = vector.shape_cast %411 : vector<1x1x1x128xbf16> to vector<1x128xbf16>
    %413 = vector.shape_cast %410 : vector<1x128xbf16> to vector<1x1x1x128xbf16>
    tpu.vector_store %arg4[%c0_248, %c5_249, %c5_250, %c0_251], %413 {strides = array<i32>} : memref<1x8x8x128xbf16, #tpu.memory_space<vmem>>, vector<1x1x1x128xbf16>,
    %414 = vector.extract_strided_slice %371 {offsets = [12, 0], sizes = [1, 128], strides = [1, 1]} : vector<16x128xf32> to vector<1x128xf32>
    %415 = vector.extract_strided_slice %371 {offsets = [13, 0], sizes = [1, 128], strides = [1, 1]} : vector<16x128xf32> to vector<1x128xf32>
    %416 = arith.maximumf %414, %415 : vector<1x128xf32>
    %417 = arith.truncf %416 : vector<1x128xf32> to vector<1x128xbf16>
    %c0_252 = arith.constant 0 : index
    %c5_253 = arith.constant 5 : index
    %c6_254 = arith.constant 6 : index
    %c0_255 = arith.constant 0 : index
    %418 = vector.load %arg4[%c0_252, %c5_253, %c6_254, %c0_255] : memref<1x8x8x128xbf16, #tpu.memory_space<vmem>>, vector<1x1x1x128xbf16>
    %419 = vector.shape_cast %418 : vector<1x1x1x128xbf16> to vector<1x128xbf16>
    %420 = vector.shape_cast %417 : vector<1x128xbf16> to vector<1x1x1x128xbf16>
    tpu.vector_store %arg4[%c0_252, %c5_253, %c6_254, %c0_255], %420 {strides = array<i32>} : memref<1x8x8x128xbf16, #tpu.memory_space<vmem>>, vector<1x1x1x128xbf16>,
    %421 = vector.extract_strided_slice %371 {offsets = [14, 0], sizes = [1, 128], strides = [1, 1]} : vector<16x128xf32> to vector<1x128xf32>
    %422 = vector.extract_strided_slice %371 {offsets = [15, 0], sizes = [1, 128], strides = [1, 1]} : vector<16x128xf32> to vector<1x128xf32>
    %423 = arith.maximumf %421, %422 : vector<1x128xf32>
    %424 = arith.truncf %423 : vector<1x128xf32> to vector<1x128xbf16>
    %c0_256 = arith.constant 0 : index
    %c5_257 = arith.constant 5 : index
    %c7_258 = arith.constant 7 : index
    %c0_259 = arith.constant 0 : index
    %425 = vector.load %arg4[%c0_256, %c5_257, %c7_258, %c0_259] : memref<1x8x8x128xbf16, #tpu.memory_space<vmem>>, vector<1x1x1x128xbf16>
    %426 = vector.shape_cast %425 : vector<1x1x1x128xbf16> to vector<1x128xbf16>
    %427 = vector.shape_cast %424 : vector<1x128xbf16> to vector<1x1x1x128xbf16>
    tpu.vector_store %arg4[%c0_256, %c5_257, %c7_258, %c0_259], %427 {strides = array<i32>} : memref<1x8x8x128xbf16, #tpu.memory_space<vmem>>, vector<1x1x1x128xbf16>,
    %428 = vector.extract_strided_slice %73 {offsets = [192, 0], sizes = [16, 128], strides = [1, 1]} : vector<256x128xf32> to vector<16x128xf32>
    %429 = vector.extract_strided_slice %73 {offsets = [208, 0], sizes = [16, 128], strides = [1, 1]} : vector<256x128xf32> to vector<16x128xf32>
    %430 = arith.maximumf %428, %429 : vector<16x128xf32>
    %431 = vector.extract_strided_slice %430 {offsets = [0, 0], sizes = [1, 128], strides = [1, 1]} : vector<16x128xf32> to vector<1x128xf32>
    %432 = vector.extract_strided_slice %430 {offsets = [1, 0], sizes = [1, 128], strides = [1, 1]} : vector<16x128xf32> to vector<1x128xf32>
    %433 = arith.maximumf %431, %432 : vector<1x128xf32>
    %434 = arith.truncf %433 : vector<1x128xf32> to vector<1x128xbf16>
    %c0_260 = arith.constant 0 : index
    %c6_261 = arith.constant 6 : index
    %c0_262 = arith.constant 0 : index
    %c0_263 = arith.constant 0 : index
    %435 = vector.load %arg4[%c0_260, %c6_261, %c0_262, %c0_263] : memref<1x8x8x128xbf16, #tpu.memory_space<vmem>>, vector<1x1x1x128xbf16>
    %436 = vector.shape_cast %435 : vector<1x1x1x128xbf16> to vector<1x128xbf16>
    %437 = vector.shape_cast %434 : vector<1x128xbf16> to vector<1x1x1x128xbf16>
    tpu.vector_store %arg4[%c0_260, %c6_261, %c0_262, %c0_263], %437 {strides = array<i32>} : memref<1x8x8x128xbf16, #tpu.memory_space<vmem>>, vector<1x1x1x128xbf16>,
    %438 = vector.extract_strided_slice %430 {offsets = [2, 0], sizes = [1, 128], strides = [1, 1]} : vector<16x128xf32> to vector<1x128xf32>
    %439 = vector.extract_strided_slice %430 {offsets = [3, 0], sizes = [1, 128], strides = [1, 1]} : vector<16x128xf32> to vector<1x128xf32>
    %440 = arith.maximumf %438, %439 : vector<1x128xf32>
    %441 = arith.truncf %440 : vector<1x128xf32> to vector<1x128xbf16>
    %c0_264 = arith.constant 0 : index
    %c6_265 = arith.constant 6 : index
    %c1_266 = arith.constant 1 : index
    %c0_267 = arith.constant 0 : index
    %442 = vector.load %arg4[%c0_264, %c6_265, %c1_266, %c0_267] : memref<1x8x8x128xbf16, #tpu.memory_space<vmem>>, vector<1x1x1x128xbf16>
    %443 = vector.shape_cast %442 : vector<1x1x1x128xbf16> to vector<1x128xbf16>
    %444 = vector.shape_cast %441 : vector<1x128xbf16> to vector<1x1x1x128xbf16>
    tpu.vector_store %arg4[%c0_264, %c6_265, %c1_266, %c0_267], %444 {strides = array<i32>} : memref<1x8x8x128xbf16, #tpu.memory_space<vmem>>, vector<1x1x1x128xbf16>,
    %445 = vector.extract_strided_slice %430 {offsets = [4, 0], sizes = [1, 128], strides = [1, 1]} : vector<16x128xf32> to vector<1x128xf32>
    %446 = vector.extract_strided_slice %430 {offsets = [5, 0], sizes = [1, 128], strides = [1, 1]} : vector<16x128xf32> to vector<1x128xf32>
    %447 = arith.maximumf %445, %446 : vector<1x128xf32>
    %448 = arith.truncf %447 : vector<1x128xf32> to vector<1x128xbf16>
    %c0_268 = arith.constant 0 : index
    %c6_269 = arith.constant 6 : index
    %c2_270 = arith.constant 2 : index
    %c0_271 = arith.constant 0 : index
    %449 = vector.load %arg4[%c0_268, %c6_269, %c2_270, %c0_271] : memref<1x8x8x128xbf16, #tpu.memory_space<vmem>>, vector<1x1x1x128xbf16>
    %450 = vector.shape_cast %449 : vector<1x1x1x128xbf16> to vector<1x128xbf16>
    %451 = vector.shape_cast %448 : vector<1x128xbf16> to vector<1x1x1x128xbf16>
    tpu.vector_store %arg4[%c0_268, %c6_269, %c2_270, %c0_271], %451 {strides = array<i32>} : memref<1x8x8x128xbf16, #tpu.memory_space<vmem>>, vector<1x1x1x128xbf16>,
    %452 = vector.extract_strided_slice %430 {offsets = [6, 0], sizes = [1, 128], strides = [1, 1]} : vector<16x128xf32> to vector<1x128xf32>
    %453 = vector.extract_strided_slice %430 {offsets = [7, 0], sizes = [1, 128], strides = [1, 1]} : vector<16x128xf32> to vector<1x128xf32>
    %454 = arith.maximumf %452, %453 : vector<1x128xf32>
    %455 = arith.truncf %454 : vector<1x128xf32> to vector<1x128xbf16>
    %c0_272 = arith.constant 0 : index
    %c6_273 = arith.constant 6 : index
    %c3_274 = arith.constant 3 : index
    %c0_275 = arith.constant 0 : index
    %456 = vector.load %arg4[%c0_272, %c6_273, %c3_274, %c0_275] : memref<1x8x8x128xbf16, #tpu.memory_space<vmem>>, vector<1x1x1x128xbf16>
    %457 = vector.shape_cast %456 : vector<1x1x1x128xbf16> to vector<1x128xbf16>
    %458 = vector.shape_cast %455 : vector<1x128xbf16> to vector<1x1x1x128xbf16>
    tpu.vector_store %arg4[%c0_272, %c6_273, %c3_274, %c0_275], %458 {strides = array<i32>} : memref<1x8x8x128xbf16, #tpu.memory_space<vmem>>, vector<1x1x1x128xbf16>,
    %459 = vector.extract_strided_slice %430 {offsets = [8, 0], sizes = [1, 128], strides = [1, 1]} : vector<16x128xf32> to vector<1x128xf32>
    %460 = vector.extract_strided_slice %430 {offsets = [9, 0], sizes = [1, 128], strides = [1, 1]} : vector<16x128xf32> to vector<1x128xf32>
    %461 = arith.maximumf %459, %460 : vector<1x128xf32>
    %462 = arith.truncf %461 : vector<1x128xf32> to vector<1x128xbf16>
    %c0_276 = arith.constant 0 : index
    %c6_277 = arith.constant 6 : index
    %c4_278 = arith.constant 4 : index
    %c0_279 = arith.constant 0 : index
    %463 = vector.load %arg4[%c0_276, %c6_277, %c4_278, %c0_279] : memref<1x8x8x128xbf16, #tpu.memory_space<vmem>>, vector<1x1x1x128xbf16>
    %464 = vector.shape_cast %463 : vector<1x1x1x128xbf16> to vector<1x128xbf16>
    %465 = vector.shape_cast %462 : vector<1x128xbf16> to vector<1x1x1x128xbf16>
    tpu.vector_store %arg4[%c0_276, %c6_277, %c4_278, %c0_279], %465 {strides = array<i32>} : memref<1x8x8x128xbf16, #tpu.memory_space<vmem>>, vector<1x1x1x128xbf16>,
    %466 = vector.extract_strided_slice %430 {offsets = [10, 0], sizes = [1, 128], strides = [1, 1]} : vector<16x128xf32> to vector<1x128xf32>
    %467 = vector.extract_strided_slice %430 {offsets = [11, 0], sizes = [1, 128], strides = [1, 1]} : vector<16x128xf32> to vector<1x128xf32>
    %468 = arith.maximumf %466, %467 : vector<1x128xf32>
    %469 = arith.truncf %468 : vector<1x128xf32> to vector<1x128xbf16>
    %c0_280 = arith.constant 0 : index
    %c6_281 = arith.constant 6 : index
    %c5_282 = arith.constant 5 : index
    %c0_283 = arith.constant 0 : index
    %470 = vector.load %arg4[%c0_280, %c6_281, %c5_282, %c0_283] : memref<1x8x8x128xbf16, #tpu.memory_space<vmem>>, vector<1x1x1x128xbf16>
    %471 = vector.shape_cast %470 : vector<1x1x1x128xbf16> to vector<1x128xbf16>
    %472 = vector.shape_cast %469 : vector<1x128xbf16> to vector<1x1x1x128xbf16>
    tpu.vector_store %arg4[%c0_280, %c6_281, %c5_282, %c0_283], %472 {strides = array<i32>} : memref<1x8x8x128xbf16, #tpu.memory_space<vmem>>, vector<1x1x1x128xbf16>,
    %473 = vector.extract_strided_slice %430 {offsets = [12, 0], sizes = [1, 128], strides = [1, 1]} : vector<16x128xf32> to vector<1x128xf32>
    %474 = vector.extract_strided_slice %430 {offsets = [13, 0], sizes = [1, 128], strides = [1, 1]} : vector<16x128xf32> to vector<1x128xf32>
    %475 = arith.maximumf %473, %474 : vector<1x128xf32>
    %476 = arith.truncf %475 : vector<1x128xf32> to vector<1x128xbf16>
    %c0_284 = arith.constant 0 : index
    %c6_285 = arith.constant 6 : index
    %c6_286 = arith.constant 6 : index
    %c0_287 = arith.constant 0 : index
    %477 = vector.load %arg4[%c0_284, %c6_285, %c6_286, %c0_287] : memref<1x8x8x128xbf16, #tpu.memory_space<vmem>>, vector<1x1x1x128xbf16>
    %478 = vector.shape_cast %477 : vector<1x1x1x128xbf16> to vector<1x128xbf16>
    %479 = vector.shape_cast %476 : vector<1x128xbf16> to vector<1x1x1x128xbf16>
    tpu.vector_store %arg4[%c0_284, %c6_285, %c6_286, %c0_287], %479 {strides = array<i32>} : memref<1x8x8x128xbf16, #tpu.memory_space<vmem>>, vector<1x1x1x128xbf16>,
    %480 = vector.extract_strided_slice %430 {offsets = [14, 0], sizes = [1, 128], strides = [1, 1]} : vector<16x128xf32> to vector<1x128xf32>
    %481 = vector.extract_strided_slice %430 {offsets = [15, 0], sizes = [1, 128], strides = [1, 1]} : vector<16x128xf32> to vector<1x128xf32>
    %482 = arith.maximumf %480, %481 : vector<1x128xf32>
    %483 = arith.truncf %482 : vector<1x128xf32> to vector<1x128xbf16>
    %c0_288 = arith.constant 0 : index
    %c6_289 = arith.constant 6 : index
    %c7_290 = arith.constant 7 : index
    %c0_291 = arith.constant 0 : index
    %484 = vector.load %arg4[%c0_288, %c6_289, %c7_290, %c0_291] : memref<1x8x8x128xbf16, #tpu.memory_space<vmem>>, vector<1x1x1x128xbf16>
    %485 = vector.shape_cast %484 : vector<1x1x1x128xbf16> to vector<1x128xbf16>
    %486 = vector.shape_cast %483 : vector<1x128xbf16> to vector<1x1x1x128xbf16>
    tpu.vector_store %arg4[%c0_288, %c6_289, %c7_290, %c0_291], %486 {strides = array<i32>} : memref<1x8x8x128xbf16, #tpu.memory_space<vmem>>, vector<1x1x1x128xbf16>,
    %487 = vector.extract_strided_slice %73 {offsets = [224, 0], sizes = [16, 128], strides = [1, 1]} : vector<256x128xf32> to vector<16x128xf32>
    %488 = vector.extract_strided_slice %73 {offsets = [240, 0], sizes = [16, 128], strides = [1, 1]} : vector<256x128xf32> to vector<16x128xf32>
    %489 = arith.maximumf %487, %488 : vector<16x128xf32>
    %490 = vector.extract_strided_slice %489 {offsets = [0, 0], sizes = [1, 128], strides = [1, 1]} : vector<16x128xf32> to vector<1x128xf32>
    %491 = vector.extract_strided_slice %489 {offsets = [1, 0], sizes = [1, 128], strides = [1, 1]} : vector<16x128xf32> to vector<1x128xf32>
    %492 = arith.maximumf %490, %491 : vector<1x128xf32>
    %493 = arith.truncf %492 : vector<1x128xf32> to vector<1x128xbf16>
    %c0_292 = arith.constant 0 : index
    %c7_293 = arith.constant 7 : index
    %c0_294 = arith.constant 0 : index
    %c0_295 = arith.constant 0 : index
    %494 = vector.load %arg4[%c0_292, %c7_293, %c0_294, %c0_295] : memref<1x8x8x128xbf16, #tpu.memory_space<vmem>>, vector<1x1x1x128xbf16>
    %495 = vector.shape_cast %494 : vector<1x1x1x128xbf16> to vector<1x128xbf16>
    %496 = vector.shape_cast %493 : vector<1x128xbf16> to vector<1x1x1x128xbf16>
    tpu.vector_store %arg4[%c0_292, %c7_293, %c0_294, %c0_295], %496 {strides = array<i32>} : memref<1x8x8x128xbf16, #tpu.memory_space<vmem>>, vector<1x1x1x128xbf16>,
    %497 = vector.extract_strided_slice %489 {offsets = [2, 0], sizes = [1, 128], strides = [1, 1]} : vector<16x128xf32> to vector<1x128xf32>
    %498 = vector.extract_strided_slice %489 {offsets = [3, 0], sizes = [1, 128], strides = [1, 1]} : vector<16x128xf32> to vector<1x128xf32>
    %499 = arith.maximumf %497, %498 : vector<1x128xf32>
    %500 = arith.truncf %499 : vector<1x128xf32> to vector<1x128xbf16>
    %c0_296 = arith.constant 0 : index
    %c7_297 = arith.constant 7 : index
    %c1_298 = arith.constant 1 : index
    %c0_299 = arith.constant 0 : index
    %501 = vector.load %arg4[%c0_296, %c7_297, %c1_298, %c0_299] : memref<1x8x8x128xbf16, #tpu.memory_space<vmem>>, vector<1x1x1x128xbf16>
    %502 = vector.shape_cast %501 : vector<1x1x1x128xbf16> to vector<1x128xbf16>
    %503 = vector.shape_cast %500 : vector<1x128xbf16> to vector<1x1x1x128xbf16>
    tpu.vector_store %arg4[%c0_296, %c7_297, %c1_298, %c0_299], %503 {strides = array<i32>} : memref<1x8x8x128xbf16, #tpu.memory_space<vmem>>, vector<1x1x1x128xbf16>,
    %504 = vector.extract_strided_slice %489 {offsets = [4, 0], sizes = [1, 128], strides = [1, 1]} : vector<16x128xf32> to vector<1x128xf32>
    %505 = vector.extract_strided_slice %489 {offsets = [5, 0], sizes = [1, 128], strides = [1, 1]} : vector<16x128xf32> to vector<1x128xf32>
    %506 = arith.maximumf %504, %505 : vector<1x128xf32>
    %507 = arith.truncf %506 : vector<1x128xf32> to vector<1x128xbf16>
    %c0_300 = arith.constant 0 : index
    %c7_301 = arith.constant 7 : index
    %c2_302 = arith.constant 2 : index
    %c0_303 = arith.constant 0 : index
    %508 = vector.load %arg4[%c0_300, %c7_301, %c2_302, %c0_303] : memref<1x8x8x128xbf16, #tpu.memory_space<vmem>>, vector<1x1x1x128xbf16>
    %509 = vector.shape_cast %508 : vector<1x1x1x128xbf16> to vector<1x128xbf16>
    %510 = vector.shape_cast %507 : vector<1x128xbf16> to vector<1x1x1x128xbf16>
    tpu.vector_store %arg4[%c0_300, %c7_301, %c2_302, %c0_303], %510 {strides = array<i32>} : memref<1x8x8x128xbf16, #tpu.memory_space<vmem>>, vector<1x1x1x128xbf16>,
    %511 = vector.extract_strided_slice %489 {offsets = [6, 0], sizes = [1, 128], strides = [1, 1]} : vector<16x128xf32> to vector<1x128xf32>
    %512 = vector.extract_strided_slice %489 {offsets = [7, 0], sizes = [1, 128], strides = [1, 1]} : vector<16x128xf32> to vector<1x128xf32>
    %513 = arith.maximumf %511, %512 : vector<1x128xf32>
    %514 = arith.truncf %513 : vector<1x128xf32> to vector<1x128xbf16>
    %c0_304 = arith.constant 0 : index
    %c7_305 = arith.constant 7 : index
    %c3_306 = arith.constant 3 : index
    %c0_307 = arith.constant 0 : index
    %515 = vector.load %arg4[%c0_304, %c7_305, %c3_306, %c0_307] : memref<1x8x8x128xbf16, #tpu.memory_space<vmem>>, vector<1x1x1x128xbf16>
    %516 = vector.shape_cast %515 : vector<1x1x1x128xbf16> to vector<1x128xbf16>
    %517 = vector.shape_cast %514 : vector<1x128xbf16> to vector<1x1x1x128xbf16>
    tpu.vector_store %arg4[%c0_304, %c7_305, %c3_306, %c0_307], %517 {strides = array<i32>} : memref<1x8x8x128xbf16, #tpu.memory_space<vmem>>, vector<1x1x1x128xbf16>,
    %518 = vector.extract_strided_slice %489 {offsets = [8, 0], sizes = [1, 128], strides = [1, 1]} : vector<16x128xf32> to vector<1x128xf32>
    %519 = vector.extract_strided_slice %489 {offsets = [9, 0], sizes = [1, 128], strides = [1, 1]} : vector<16x128xf32> to vector<1x128xf32>
    %520 = arith.maximumf %518, %519 : vector<1x128xf32>
    %521 = arith.truncf %520 : vector<1x128xf32> to vector<1x128xbf16>
    %c0_308 = arith.constant 0 : index
    %c7_309 = arith.constant 7 : index
    %c4_310 = arith.constant 4 : index
    %c0_311 = arith.constant 0 : index
    %522 = vector.load %arg4[%c0_308, %c7_309, %c4_310, %c0_311] : memref<1x8x8x128xbf16, #tpu.memory_space<vmem>>, vector<1x1x1x128xbf16>
    %523 = vector.shape_cast %522 : vector<1x1x1x128xbf16> to vector<1x128xbf16>
    %524 = vector.shape_cast %521 : vector<1x128xbf16> to vector<1x1x1x128xbf16>
    tpu.vector_store %arg4[%c0_308, %c7_309, %c4_310, %c0_311], %524 {strides = array<i32>} : memref<1x8x8x128xbf16, #tpu.memory_space<vmem>>, vector<1x1x1x128xbf16>,
    %525 = vector.extract_strided_slice %489 {offsets = [10, 0], sizes = [1, 128], strides = [1, 1]} : vector<16x128xf32> to vector<1x128xf32>
    %526 = vector.extract_strided_slice %489 {offsets = [11, 0], sizes = [1, 128], strides = [1, 1]} : vector<16x128xf32> to vector<1x128xf32>
    %527 = arith.maximumf %525, %526 : vector<1x128xf32>
    %528 = arith.truncf %527 : vector<1x128xf32> to vector<1x128xbf16>
    %c0_312 = arith.constant 0 : index
    %c7_313 = arith.constant 7 : index
    %c5_314 = arith.constant 5 : index
    %c0_315 = arith.constant 0 : index
    %529 = vector.load %arg4[%c0_312, %c7_313, %c5_314, %c0_315] : memref<1x8x8x128xbf16, #tpu.memory_space<vmem>>, vector<1x1x1x128xbf16>
    %530 = vector.shape_cast %529 : vector<1x1x1x128xbf16> to vector<1x128xbf16>
    %531 = vector.shape_cast %528 : vector<1x128xbf16> to vector<1x1x1x128xbf16>
    tpu.vector_store %arg4[%c0_312, %c7_313, %c5_314, %c0_315], %531 {strides = array<i32>} : memref<1x8x8x128xbf16, #tpu.memory_space<vmem>>, vector<1x1x1x128xbf16>,
    %532 = vector.extract_strided_slice %489 {offsets = [12, 0], sizes = [1, 128], strides = [1, 1]} : vector<16x128xf32> to vector<1x128xf32>
    %533 = vector.extract_strided_slice %489 {offsets = [13, 0], sizes = [1, 128], strides = [1, 1]} : vector<16x128xf32> to vector<1x128xf32>
    %534 = arith.maximumf %532, %533 : vector<1x128xf32>
    %535 = arith.truncf %534 : vector<1x128xf32> to vector<1x128xbf16>
    %c0_316 = arith.constant 0 : index
    %c7_317 = arith.constant 7 : index
    %c6_318 = arith.constant 6 : index
    %c0_319 = arith.constant 0 : index
    %536 = vector.load %arg4[%c0_316, %c7_317, %c6_318, %c0_319] : memref<1x8x8x128xbf16, #tpu.memory_space<vmem>>, vector<1x1x1x128xbf16>
    %537 = vector.shape_cast %536 : vector<1x1x1x128xbf16> to vector<1x128xbf16>
    %538 = vector.shape_cast %535 : vector<1x128xbf16> to vector<1x1x1x128xbf16>
    tpu.vector_store %arg4[%c0_316, %c7_317, %c6_318, %c0_319], %538 {strides = array<i32>} : memref<1x8x8x128xbf16, #tpu.memory_space<vmem>>, vector<1x1x1x128xbf16>,
    %539 = vector.extract_strided_slice %489 {offsets = [14, 0], sizes = [1, 128], strides = [1, 1]} : vector<16x128xf32> to vector<1x128xf32>
    %540 = vector.extract_strided_slice %489 {offsets = [15, 0], sizes = [1, 128], strides = [1, 1]} : vector<16x128xf32> to vector<1x128xf32>
    %541 = arith.maximumf %539, %540 : vector<1x128xf32>
    %542 = arith.truncf %541 : vector<1x128xf32> to vector<1x128xbf16>
    %c0_320 = arith.constant 0 : index
    %c7_321 = arith.constant 7 : index
    %c7_322 = arith.constant 7 : index
    %c0_323 = arith.constant 0 : index
    %543 = vector.load %arg4[%c0_320, %c7_321, %c7_322, %c0_323] : memref<1x8x8x128xbf16, #tpu.memory_space<vmem>>, vector<1x1x1x128xbf16>
    %544 = vector.shape_cast %543 : vector<1x1x1x128xbf16> to vector<1x128xbf16>
    %545 = vector.shape_cast %542 : vector<1x128xbf16> to vector<1x1x1x128xbf16>
    tpu.vector_store %arg4[%c0_320, %c7_321, %c7_322, %c0_323], %545 {strides = array<i32>} : memref<1x8x8x128xbf16, #tpu.memory_space<vmem>>, vector<1x1x1x128xbf16>,
    return
  }
  func.func @transform_0(%arg0: i32) -> (i32, i32, i32, i32) {
    %c0_i32 = arith.constant 0 : i32
    %c0_i32_0 = arith.constant 0 : i32
    %c0_i32_1 = arith.constant 0 : i32
    %c0_i32_2 = arith.constant 0 : i32
    return %arg0, %c0_i32, %c0_i32_0, %c0_i32_1 : i32, i32, i32, i32
  }
  func.func @transform_1(%arg0: i32) -> (i32, i32, i32) {
    %c0_i32 = arith.constant 0 : i32
    %c0_i32_0 = arith.constant 0 : i32
    %c0_i32_1 = arith.constant 0 : i32
    %c0_i32_2 = arith.constant 0 : i32
    return %c0_i32, %c0_i32_0, %c0_i32_1 : i32, i32, i32
  }
  func.func @transform_2(%arg0: i32) -> (i32, i32) {
    %c0_i32 = arith.constant 0 : i32
    %c0_i32_0 = arith.constant 0 : i32
    %c0_i32_1 = arith.constant 0 : i32
    return %c0_i32, %c0_i32_0 : i32, i32
  }
  func.func @transform_3(%arg0: i32) -> (i32, i32, i32, i32) {
    %c0_i32 = arith.constant 0 : i32
    %c0_i32_0 = arith.constant 0 : i32
    %c0_i32_1 = arith.constant 0 : i32
    %c0_i32_2 = arith.constant 0 : i32
    return %arg0, %c0_i32, %c0_i32_0, %c0_i32_1 : i32, i32, i32, i32
  }
}

module attributes {stable_mosaic.version = 11 : i64} {
  func.func @_conv_relu_pool_kernel(%arg0: i32, %arg1: memref<1x8x8x128xbf16, #tpu.memory_space<vmem>>, %arg2: memref<9x128x64xbf16, #tpu.memory_space<vmem>>, %arg3: memref<1x64xf32, #tpu.memory_space<vmem>>, %arg4: memref<1x4x4x64xbf16, #tpu.memory_space<vmem>>, %arg5: memref<10x10x128xf32, #tpu.memory_space<vmem>>) attributes {dimension_semantics = [#tpu.dimension_semantics<parallel>], iteration_bounds = array<i64: 2>, scalar_prefetch = 0 : i64, scratch_operands = 1 : i64, tpu.core_type = #tpu.core_type<tc>, window_params = [{transform_indices = @transform_0, window_bounds = array<i64: 1, 8, 8, 128>}, {pipeline_mode = #tpu.pipeline_mode<synchronous>, transform_indices = @transform_1, window_bounds = array<i64: 9, 128, 64>}, {pipeline_mode = #tpu.pipeline_mode<synchronous>, transform_indices = @transform_2, window_bounds = array<i64: 1, 64>}, {transform_indices = @transform_3, window_bounds = array<i64: 1, 4, 4, 64>}]} {
    %cst = arith.constant 0.000000e+00 : f32
    %0 = vector.broadcast %cst : f32 to vector<10x10x128xf32>
    %c0 = arith.constant 0 : index
    %c0_0 = arith.constant 0 : index
    %c0_1 = arith.constant 0 : index
    %1 = vector.load %arg5[%c0, %c0_0, %c0_1] : memref<10x10x128xf32, #tpu.memory_space<vmem>>, vector<10x10x128xf32>
    tpu.vector_store %arg5[%c0, %c0_0, %c0_1], %0 {strides = array<i32>} : memref<10x10x128xf32, #tpu.memory_space<vmem>>, vector<10x10x128xf32>,
    %c0_2 = arith.constant 0 : index
    %c0_3 = arith.constant 0 : index
    %c0_4 = arith.constant 0 : index
    %c0_5 = arith.constant 0 : index
    %2 = vector.load %arg1[%c0_2, %c0_3, %c0_4, %c0_5] : memref<1x8x8x128xbf16, #tpu.memory_space<vmem>>, vector<1x8x8x128xbf16>
    %3 = vector.shape_cast %2 : vector<1x8x8x128xbf16> to vector<8x8x128xbf16>
    %4 = arith.extf %3 : vector<8x8x128xbf16> to vector<8x8x128xf32>
    %c1 = arith.constant 1 : index
    %c1_6 = arith.constant 1 : index
    %c0_7 = arith.constant 0 : index
    %5 = vector.load %arg5[%c1, %c1_6, %c0_7] : memref<10x10x128xf32, #tpu.memory_space<vmem>>, vector<8x8x128xf32>
    tpu.vector_store %arg5[%c1, %c1_6, %c0_7], %4 {strides = array<i32>} : memref<10x10x128xf32, #tpu.memory_space<vmem>>, vector<8x8x128xf32>,
    %cst_8 = arith.constant 0.000000e+00 : f32
    %6 = vector.broadcast %cst_8 : f32 to vector<64x64xf32>
    %c0_9 = arith.constant 0 : index
    %c0_10 = arith.constant 0 : index
    %c0_11 = arith.constant 0 : index
    %7 = vector.load %arg5[%c0_9, %c0_10, %c0_11] : memref<10x10x128xf32, #tpu.memory_space<vmem>>, vector<8x8x128xf32>
    %8 = arith.truncf %7 : vector<8x8x128xf32> to vector<8x8x128xbf16>
    %9 = vector.shape_cast %8 : vector<8x8x128xbf16> to vector<64x128xbf16>
    %c0_12 = arith.constant 0 : index
    %c0_13 = arith.constant 0 : index
    %c0_14 = arith.constant 0 : index
    %10 = vector.load %arg2[%c0_12, %c0_13, %c0_14] : memref<9x128x64xbf16, #tpu.memory_space<vmem>>, vector<1x128x64xbf16>
    %11 = vector.shape_cast %10 : vector<1x128x64xbf16> to vector<128x64xbf16>
    %cst_15 = arith.constant dense<0.000000e+00> : vector<64x64xf32>
    %12 = tpu.matmul %9, %11, %cst_15 {dimension_numbers = #tpu.dot_dimension_numbers<[1], [0], [0], [1], [0, 0, 1, 1], [], []>} : vector<64x128xbf16>, vector<128x64xbf16>, vector<64x64xf32> -> vector<64x64xf32>
    %13 = arith.addf %6, %12 : vector<64x64xf32>
    %c0_16 = arith.constant 0 : index
    %c1_17 = arith.constant 1 : index
    %c0_18 = arith.constant 0 : index
    %14 = vector.load %arg5[%c0_16, %c1_17, %c0_18] : memref<10x10x128xf32, #tpu.memory_space<vmem>>, vector<8x8x128xf32>
    %15 = arith.truncf %14 : vector<8x8x128xf32> to vector<8x8x128xbf16>
    %16 = vector.shape_cast %15 : vector<8x8x128xbf16> to vector<64x128xbf16>
    %c1_19 = arith.constant 1 : index
    %c0_20 = arith.constant 0 : index
    %c0_21 = arith.constant 0 : index
    %17 = vector.load %arg2[%c1_19, %c0_20, %c0_21] : memref<9x128x64xbf16, #tpu.memory_space<vmem>>, vector<1x128x64xbf16>
    %18 = vector.shape_cast %17 : vector<1x128x64xbf16> to vector<128x64xbf16>
    %cst_22 = arith.constant dense<0.000000e+00> : vector<64x64xf32>
    %19 = tpu.matmul %16, %18, %cst_22 {dimension_numbers = #tpu.dot_dimension_numbers<[1], [0], [0], [1], [0, 0, 1, 1], [], []>} : vector<64x128xbf16>, vector<128x64xbf16>, vector<64x64xf32> -> vector<64x64xf32>
    %20 = arith.addf %13, %19 : vector<64x64xf32>
    %c0_23 = arith.constant 0 : index
    %c2 = arith.constant 2 : index
    %c0_24 = arith.constant 0 : index
    %21 = vector.load %arg5[%c0_23, %c2, %c0_24] : memref<10x10x128xf32, #tpu.memory_space<vmem>>, vector<8x8x128xf32>
    %22 = arith.truncf %21 : vector<8x8x128xf32> to vector<8x8x128xbf16>
    %23 = vector.shape_cast %22 : vector<8x8x128xbf16> to vector<64x128xbf16>
    %c2_25 = arith.constant 2 : index
    %c0_26 = arith.constant 0 : index
    %c0_27 = arith.constant 0 : index
    %24 = vector.load %arg2[%c2_25, %c0_26, %c0_27] : memref<9x128x64xbf16, #tpu.memory_space<vmem>>, vector<1x128x64xbf16>
    %25 = vector.shape_cast %24 : vector<1x128x64xbf16> to vector<128x64xbf16>
    %cst_28 = arith.constant dense<0.000000e+00> : vector<64x64xf32>
    %26 = tpu.matmul %23, %25, %cst_28 {dimension_numbers = #tpu.dot_dimension_numbers<[1], [0], [0], [1], [0, 0, 1, 1], [], []>} : vector<64x128xbf16>, vector<128x64xbf16>, vector<64x64xf32> -> vector<64x64xf32>
    %27 = arith.addf %20, %26 : vector<64x64xf32>
    %c1_29 = arith.constant 1 : index
    %c0_30 = arith.constant 0 : index
    %c0_31 = arith.constant 0 : index
    %28 = vector.load %arg5[%c1_29, %c0_30, %c0_31] : memref<10x10x128xf32, #tpu.memory_space<vmem>>, vector<8x8x128xf32>
    %29 = arith.truncf %28 : vector<8x8x128xf32> to vector<8x8x128xbf16>
    %30 = vector.shape_cast %29 : vector<8x8x128xbf16> to vector<64x128xbf16>
    %c3 = arith.constant 3 : index
    %c0_32 = arith.constant 0 : index
    %c0_33 = arith.constant 0 : index
    %31 = vector.load %arg2[%c3, %c0_32, %c0_33] : memref<9x128x64xbf16, #tpu.memory_space<vmem>>, vector<1x128x64xbf16>
    %32 = vector.shape_cast %31 : vector<1x128x64xbf16> to vector<128x64xbf16>
    %cst_34 = arith.constant dense<0.000000e+00> : vector<64x64xf32>
    %33 = tpu.matmul %30, %32, %cst_34 {dimension_numbers = #tpu.dot_dimension_numbers<[1], [0], [0], [1], [0, 0, 1, 1], [], []>} : vector<64x128xbf16>, vector<128x64xbf16>, vector<64x64xf32> -> vector<64x64xf32>
    %34 = arith.addf %27, %33 : vector<64x64xf32>
    %c1_35 = arith.constant 1 : index
    %c1_36 = arith.constant 1 : index
    %c0_37 = arith.constant 0 : index
    %35 = vector.load %arg5[%c1_35, %c1_36, %c0_37] : memref<10x10x128xf32, #tpu.memory_space<vmem>>, vector<8x8x128xf32>
    %36 = arith.truncf %35 : vector<8x8x128xf32> to vector<8x8x128xbf16>
    %37 = vector.shape_cast %36 : vector<8x8x128xbf16> to vector<64x128xbf16>
    %c4 = arith.constant 4 : index
    %c0_38 = arith.constant 0 : index
    %c0_39 = arith.constant 0 : index
    %38 = vector.load %arg2[%c4, %c0_38, %c0_39] : memref<9x128x64xbf16, #tpu.memory_space<vmem>>, vector<1x128x64xbf16>
    %39 = vector.shape_cast %38 : vector<1x128x64xbf16> to vector<128x64xbf16>
    %cst_40 = arith.constant dense<0.000000e+00> : vector<64x64xf32>
    %40 = tpu.matmul %37, %39, %cst_40 {dimension_numbers = #tpu.dot_dimension_numbers<[1], [0], [0], [1], [0, 0, 1, 1], [], []>} : vector<64x128xbf16>, vector<128x64xbf16>, vector<64x64xf32> -> vector<64x64xf32>
    %41 = arith.addf %34, %40 : vector<64x64xf32>
    %c1_41 = arith.constant 1 : index
    %c2_42 = arith.constant 2 : index
    %c0_43 = arith.constant 0 : index
    %42 = vector.load %arg5[%c1_41, %c2_42, %c0_43] : memref<10x10x128xf32, #tpu.memory_space<vmem>>, vector<8x8x128xf32>
    %43 = arith.truncf %42 : vector<8x8x128xf32> to vector<8x8x128xbf16>
    %44 = vector.shape_cast %43 : vector<8x8x128xbf16> to vector<64x128xbf16>
    %c5 = arith.constant 5 : index
    %c0_44 = arith.constant 0 : index
    %c0_45 = arith.constant 0 : index
    %45 = vector.load %arg2[%c5, %c0_44, %c0_45] : memref<9x128x64xbf16, #tpu.memory_space<vmem>>, vector<1x128x64xbf16>
    %46 = vector.shape_cast %45 : vector<1x128x64xbf16> to vector<128x64xbf16>
    %cst_46 = arith.constant dense<0.000000e+00> : vector<64x64xf32>
    %47 = tpu.matmul %44, %46, %cst_46 {dimension_numbers = #tpu.dot_dimension_numbers<[1], [0], [0], [1], [0, 0, 1, 1], [], []>} : vector<64x128xbf16>, vector<128x64xbf16>, vector<64x64xf32> -> vector<64x64xf32>
    %48 = arith.addf %41, %47 : vector<64x64xf32>
    %c2_47 = arith.constant 2 : index
    %c0_48 = arith.constant 0 : index
    %c0_49 = arith.constant 0 : index
    %49 = vector.load %arg5[%c2_47, %c0_48, %c0_49] : memref<10x10x128xf32, #tpu.memory_space<vmem>>, vector<8x8x128xf32>
    %50 = arith.truncf %49 : vector<8x8x128xf32> to vector<8x8x128xbf16>
    %51 = vector.shape_cast %50 : vector<8x8x128xbf16> to vector<64x128xbf16>
    %c6 = arith.constant 6 : index
    %c0_50 = arith.constant 0 : index
    %c0_51 = arith.constant 0 : index
    %52 = vector.load %arg2[%c6, %c0_50, %c0_51] : memref<9x128x64xbf16, #tpu.memory_space<vmem>>, vector<1x128x64xbf16>
    %53 = vector.shape_cast %52 : vector<1x128x64xbf16> to vector<128x64xbf16>
    %cst_52 = arith.constant dense<0.000000e+00> : vector<64x64xf32>
    %54 = tpu.matmul %51, %53, %cst_52 {dimension_numbers = #tpu.dot_dimension_numbers<[1], [0], [0], [1], [0, 0, 1, 1], [], []>} : vector<64x128xbf16>, vector<128x64xbf16>, vector<64x64xf32> -> vector<64x64xf32>
    %55 = arith.addf %48, %54 : vector<64x64xf32>
    %c2_53 = arith.constant 2 : index
    %c1_54 = arith.constant 1 : index
    %c0_55 = arith.constant 0 : index
    %56 = vector.load %arg5[%c2_53, %c1_54, %c0_55] : memref<10x10x128xf32, #tpu.memory_space<vmem>>, vector<8x8x128xf32>
    %57 = arith.truncf %56 : vector<8x8x128xf32> to vector<8x8x128xbf16>
    %58 = vector.shape_cast %57 : vector<8x8x128xbf16> to vector<64x128xbf16>
    %c7 = arith.constant 7 : index
    %c0_56 = arith.constant 0 : index
    %c0_57 = arith.constant 0 : index
    %59 = vector.load %arg2[%c7, %c0_56, %c0_57] : memref<9x128x64xbf16, #tpu.memory_space<vmem>>, vector<1x128x64xbf16>
    %60 = vector.shape_cast %59 : vector<1x128x64xbf16> to vector<128x64xbf16>
    %cst_58 = arith.constant dense<0.000000e+00> : vector<64x64xf32>
    %61 = tpu.matmul %58, %60, %cst_58 {dimension_numbers = #tpu.dot_dimension_numbers<[1], [0], [0], [1], [0, 0, 1, 1], [], []>} : vector<64x128xbf16>, vector<128x64xbf16>, vector<64x64xf32> -> vector<64x64xf32>
    %62 = arith.addf %55, %61 : vector<64x64xf32>
    %c2_59 = arith.constant 2 : index
    %c2_60 = arith.constant 2 : index
    %c0_61 = arith.constant 0 : index
    %63 = vector.load %arg5[%c2_59, %c2_60, %c0_61] : memref<10x10x128xf32, #tpu.memory_space<vmem>>, vector<8x8x128xf32>
    %64 = arith.truncf %63 : vector<8x8x128xf32> to vector<8x8x128xbf16>
    %65 = vector.shape_cast %64 : vector<8x8x128xbf16> to vector<64x128xbf16>
    %c8 = arith.constant 8 : index
    %c0_62 = arith.constant 0 : index
    %c0_63 = arith.constant 0 : index
    %66 = vector.load %arg2[%c8, %c0_62, %c0_63] : memref<9x128x64xbf16, #tpu.memory_space<vmem>>, vector<1x128x64xbf16>
    %67 = vector.shape_cast %66 : vector<1x128x64xbf16> to vector<128x64xbf16>
    %cst_64 = arith.constant dense<0.000000e+00> : vector<64x64xf32>
    %68 = tpu.matmul %65, %67, %cst_64 {dimension_numbers = #tpu.dot_dimension_numbers<[1], [0], [0], [1], [0, 0, 1, 1], [], []>} : vector<64x128xbf16>, vector<128x64xbf16>, vector<64x64xf32> -> vector<64x64xf32>
    %69 = arith.addf %62, %68 : vector<64x64xf32>
    %c0_65 = arith.constant 0 : index
    %c0_66 = arith.constant 0 : index
    %70 = vector.load %arg3[%c0_65, %c0_66] : memref<1x64xf32, #tpu.memory_space<vmem>>, vector<1x64xf32>
    %71 = vector.broadcast %70 : vector<1x64xf32> to vector<64x64xf32>
    %72 = arith.addf %69, %71 : vector<64x64xf32>
    %cst_67 = arith.constant 0.000000e+00 : f32
    %73 = vector.broadcast %cst_67 : f32 to vector<64x64xf32>
    %74 = arith.maximumf %72, %73 : vector<64x64xf32>
    %75 = vector.extract_strided_slice %74 {offsets = [0, 0], sizes = [8, 64], strides = [1, 1]} : vector<64x64xf32> to vector<8x64xf32>
    %76 = vector.extract_strided_slice %74 {offsets = [8, 0], sizes = [8, 64], strides = [1, 1]} : vector<64x64xf32> to vector<8x64xf32>
    %77 = arith.maximumf %75, %76 : vector<8x64xf32>
    %78 = vector.extract_strided_slice %77 {offsets = [0, 0], sizes = [1, 64], strides = [1, 1]} : vector<8x64xf32> to vector<1x64xf32>
    %79 = vector.extract_strided_slice %77 {offsets = [1, 0], sizes = [1, 64], strides = [1, 1]} : vector<8x64xf32> to vector<1x64xf32>
    %80 = arith.maximumf %78, %79 : vector<1x64xf32>
    %81 = arith.truncf %80 : vector<1x64xf32> to vector<1x64xbf16>
    %c0_68 = arith.constant 0 : index
    %c0_69 = arith.constant 0 : index
    %c0_70 = arith.constant 0 : index
    %c0_71 = arith.constant 0 : index
    %82 = vector.load %arg4[%c0_68, %c0_69, %c0_70, %c0_71] : memref<1x4x4x64xbf16, #tpu.memory_space<vmem>>, vector<1x1x1x64xbf16>
    %83 = vector.shape_cast %82 : vector<1x1x1x64xbf16> to vector<1x64xbf16>
    %84 = vector.shape_cast %81 : vector<1x64xbf16> to vector<1x1x1x64xbf16>
    tpu.vector_store %arg4[%c0_68, %c0_69, %c0_70, %c0_71], %84 {strides = array<i32>} : memref<1x4x4x64xbf16, #tpu.memory_space<vmem>>, vector<1x1x1x64xbf16>,
    %85 = vector.extract_strided_slice %77 {offsets = [2, 0], sizes = [1, 64], strides = [1, 1]} : vector<8x64xf32> to vector<1x64xf32>
    %86 = vector.extract_strided_slice %77 {offsets = [3, 0], sizes = [1, 64], strides = [1, 1]} : vector<8x64xf32> to vector<1x64xf32>
    %87 = arith.maximumf %85, %86 : vector<1x64xf32>
    %88 = arith.truncf %87 : vector<1x64xf32> to vector<1x64xbf16>
    %c0_72 = arith.constant 0 : index
    %c0_73 = arith.constant 0 : index
    %c1_74 = arith.constant 1 : index
    %c0_75 = arith.constant 0 : index
    %89 = vector.load %arg4[%c0_72, %c0_73, %c1_74, %c0_75] : memref<1x4x4x64xbf16, #tpu.memory_space<vmem>>, vector<1x1x1x64xbf16>
    %90 = vector.shape_cast %89 : vector<1x1x1x64xbf16> to vector<1x64xbf16>
    %91 = vector.shape_cast %88 : vector<1x64xbf16> to vector<1x1x1x64xbf16>
    tpu.vector_store %arg4[%c0_72, %c0_73, %c1_74, %c0_75], %91 {strides = array<i32>} : memref<1x4x4x64xbf16, #tpu.memory_space<vmem>>, vector<1x1x1x64xbf16>,
    %92 = vector.extract_strided_slice %77 {offsets = [4, 0], sizes = [1, 64], strides = [1, 1]} : vector<8x64xf32> to vector<1x64xf32>
    %93 = vector.extract_strided_slice %77 {offsets = [5, 0], sizes = [1, 64], strides = [1, 1]} : vector<8x64xf32> to vector<1x64xf32>
    %94 = arith.maximumf %92, %93 : vector<1x64xf32>
    %95 = arith.truncf %94 : vector<1x64xf32> to vector<1x64xbf16>
    %c0_76 = arith.constant 0 : index
    %c0_77 = arith.constant 0 : index
    %c2_78 = arith.constant 2 : index
    %c0_79 = arith.constant 0 : index
    %96 = vector.load %arg4[%c0_76, %c0_77, %c2_78, %c0_79] : memref<1x4x4x64xbf16, #tpu.memory_space<vmem>>, vector<1x1x1x64xbf16>
    %97 = vector.shape_cast %96 : vector<1x1x1x64xbf16> to vector<1x64xbf16>
    %98 = vector.shape_cast %95 : vector<1x64xbf16> to vector<1x1x1x64xbf16>
    tpu.vector_store %arg4[%c0_76, %c0_77, %c2_78, %c0_79], %98 {strides = array<i32>} : memref<1x4x4x64xbf16, #tpu.memory_space<vmem>>, vector<1x1x1x64xbf16>,
    %99 = vector.extract_strided_slice %77 {offsets = [6, 0], sizes = [1, 64], strides = [1, 1]} : vector<8x64xf32> to vector<1x64xf32>
    %100 = vector.extract_strided_slice %77 {offsets = [7, 0], sizes = [1, 64], strides = [1, 1]} : vector<8x64xf32> to vector<1x64xf32>
    %101 = arith.maximumf %99, %100 : vector<1x64xf32>
    %102 = arith.truncf %101 : vector<1x64xf32> to vector<1x64xbf16>
    %c0_80 = arith.constant 0 : index
    %c0_81 = arith.constant 0 : index
    %c3_82 = arith.constant 3 : index
    %c0_83 = arith.constant 0 : index
    %103 = vector.load %arg4[%c0_80, %c0_81, %c3_82, %c0_83] : memref<1x4x4x64xbf16, #tpu.memory_space<vmem>>, vector<1x1x1x64xbf16>
    %104 = vector.shape_cast %103 : vector<1x1x1x64xbf16> to vector<1x64xbf16>
    %105 = vector.shape_cast %102 : vector<1x64xbf16> to vector<1x1x1x64xbf16>
    tpu.vector_store %arg4[%c0_80, %c0_81, %c3_82, %c0_83], %105 {strides = array<i32>} : memref<1x4x4x64xbf16, #tpu.memory_space<vmem>>, vector<1x1x1x64xbf16>,
    %106 = vector.extract_strided_slice %74 {offsets = [16, 0], sizes = [8, 64], strides = [1, 1]} : vector<64x64xf32> to vector<8x64xf32>
    %107 = vector.extract_strided_slice %74 {offsets = [24, 0], sizes = [8, 64], strides = [1, 1]} : vector<64x64xf32> to vector<8x64xf32>
    %108 = arith.maximumf %106, %107 : vector<8x64xf32>
    %109 = vector.extract_strided_slice %108 {offsets = [0, 0], sizes = [1, 64], strides = [1, 1]} : vector<8x64xf32> to vector<1x64xf32>
    %110 = vector.extract_strided_slice %108 {offsets = [1, 0], sizes = [1, 64], strides = [1, 1]} : vector<8x64xf32> to vector<1x64xf32>
    %111 = arith.maximumf %109, %110 : vector<1x64xf32>
    %112 = arith.truncf %111 : vector<1x64xf32> to vector<1x64xbf16>
    %c0_84 = arith.constant 0 : index
    %c1_85 = arith.constant 1 : index
    %c0_86 = arith.constant 0 : index
    %c0_87 = arith.constant 0 : index
    %113 = vector.load %arg4[%c0_84, %c1_85, %c0_86, %c0_87] : memref<1x4x4x64xbf16, #tpu.memory_space<vmem>>, vector<1x1x1x64xbf16>
    %114 = vector.shape_cast %113 : vector<1x1x1x64xbf16> to vector<1x64xbf16>
    %115 = vector.shape_cast %112 : vector<1x64xbf16> to vector<1x1x1x64xbf16>
    tpu.vector_store %arg4[%c0_84, %c1_85, %c0_86, %c0_87], %115 {strides = array<i32>} : memref<1x4x4x64xbf16, #tpu.memory_space<vmem>>, vector<1x1x1x64xbf16>,
    %116 = vector.extract_strided_slice %108 {offsets = [2, 0], sizes = [1, 64], strides = [1, 1]} : vector<8x64xf32> to vector<1x64xf32>
    %117 = vector.extract_strided_slice %108 {offsets = [3, 0], sizes = [1, 64], strides = [1, 1]} : vector<8x64xf32> to vector<1x64xf32>
    %118 = arith.maximumf %116, %117 : vector<1x64xf32>
    %119 = arith.truncf %118 : vector<1x64xf32> to vector<1x64xbf16>
    %c0_88 = arith.constant 0 : index
    %c1_89 = arith.constant 1 : index
    %c1_90 = arith.constant 1 : index
    %c0_91 = arith.constant 0 : index
    %120 = vector.load %arg4[%c0_88, %c1_89, %c1_90, %c0_91] : memref<1x4x4x64xbf16, #tpu.memory_space<vmem>>, vector<1x1x1x64xbf16>
    %121 = vector.shape_cast %120 : vector<1x1x1x64xbf16> to vector<1x64xbf16>
    %122 = vector.shape_cast %119 : vector<1x64xbf16> to vector<1x1x1x64xbf16>
    tpu.vector_store %arg4[%c0_88, %c1_89, %c1_90, %c0_91], %122 {strides = array<i32>} : memref<1x4x4x64xbf16, #tpu.memory_space<vmem>>, vector<1x1x1x64xbf16>,
    %123 = vector.extract_strided_slice %108 {offsets = [4, 0], sizes = [1, 64], strides = [1, 1]} : vector<8x64xf32> to vector<1x64xf32>
    %124 = vector.extract_strided_slice %108 {offsets = [5, 0], sizes = [1, 64], strides = [1, 1]} : vector<8x64xf32> to vector<1x64xf32>
    %125 = arith.maximumf %123, %124 : vector<1x64xf32>
    %126 = arith.truncf %125 : vector<1x64xf32> to vector<1x64xbf16>
    %c0_92 = arith.constant 0 : index
    %c1_93 = arith.constant 1 : index
    %c2_94 = arith.constant 2 : index
    %c0_95 = arith.constant 0 : index
    %127 = vector.load %arg4[%c0_92, %c1_93, %c2_94, %c0_95] : memref<1x4x4x64xbf16, #tpu.memory_space<vmem>>, vector<1x1x1x64xbf16>
    %128 = vector.shape_cast %127 : vector<1x1x1x64xbf16> to vector<1x64xbf16>
    %129 = vector.shape_cast %126 : vector<1x64xbf16> to vector<1x1x1x64xbf16>
    tpu.vector_store %arg4[%c0_92, %c1_93, %c2_94, %c0_95], %129 {strides = array<i32>} : memref<1x4x4x64xbf16, #tpu.memory_space<vmem>>, vector<1x1x1x64xbf16>,
    %130 = vector.extract_strided_slice %108 {offsets = [6, 0], sizes = [1, 64], strides = [1, 1]} : vector<8x64xf32> to vector<1x64xf32>
    %131 = vector.extract_strided_slice %108 {offsets = [7, 0], sizes = [1, 64], strides = [1, 1]} : vector<8x64xf32> to vector<1x64xf32>
    %132 = arith.maximumf %130, %131 : vector<1x64xf32>
    %133 = arith.truncf %132 : vector<1x64xf32> to vector<1x64xbf16>
    %c0_96 = arith.constant 0 : index
    %c1_97 = arith.constant 1 : index
    %c3_98 = arith.constant 3 : index
    %c0_99 = arith.constant 0 : index
    %134 = vector.load %arg4[%c0_96, %c1_97, %c3_98, %c0_99] : memref<1x4x4x64xbf16, #tpu.memory_space<vmem>>, vector<1x1x1x64xbf16>
    %135 = vector.shape_cast %134 : vector<1x1x1x64xbf16> to vector<1x64xbf16>
    %136 = vector.shape_cast %133 : vector<1x64xbf16> to vector<1x1x1x64xbf16>
    tpu.vector_store %arg4[%c0_96, %c1_97, %c3_98, %c0_99], %136 {strides = array<i32>} : memref<1x4x4x64xbf16, #tpu.memory_space<vmem>>, vector<1x1x1x64xbf16>,
    %137 = vector.extract_strided_slice %74 {offsets = [32, 0], sizes = [8, 64], strides = [1, 1]} : vector<64x64xf32> to vector<8x64xf32>
    %138 = vector.extract_strided_slice %74 {offsets = [40, 0], sizes = [8, 64], strides = [1, 1]} : vector<64x64xf32> to vector<8x64xf32>
    %139 = arith.maximumf %137, %138 : vector<8x64xf32>
    %140 = vector.extract_strided_slice %139 {offsets = [0, 0], sizes = [1, 64], strides = [1, 1]} : vector<8x64xf32> to vector<1x64xf32>
    %141 = vector.extract_strided_slice %139 {offsets = [1, 0], sizes = [1, 64], strides = [1, 1]} : vector<8x64xf32> to vector<1x64xf32>
    %142 = arith.maximumf %140, %141 : vector<1x64xf32>
    %143 = arith.truncf %142 : vector<1x64xf32> to vector<1x64xbf16>
    %c0_100 = arith.constant 0 : index
    %c2_101 = arith.constant 2 : index
    %c0_102 = arith.constant 0 : index
    %c0_103 = arith.constant 0 : index
    %144 = vector.load %arg4[%c0_100, %c2_101, %c0_102, %c0_103] : memref<1x4x4x64xbf16, #tpu.memory_space<vmem>>, vector<1x1x1x64xbf16>
    %145 = vector.shape_cast %144 : vector<1x1x1x64xbf16> to vector<1x64xbf16>
    %146 = vector.shape_cast %143 : vector<1x64xbf16> to vector<1x1x1x64xbf16>
    tpu.vector_store %arg4[%c0_100, %c2_101, %c0_102, %c0_103], %146 {strides = array<i32>} : memref<1x4x4x64xbf16, #tpu.memory_space<vmem>>, vector<1x1x1x64xbf16>,
    %147 = vector.extract_strided_slice %139 {offsets = [2, 0], sizes = [1, 64], strides = [1, 1]} : vector<8x64xf32> to vector<1x64xf32>
    %148 = vector.extract_strided_slice %139 {offsets = [3, 0], sizes = [1, 64], strides = [1, 1]} : vector<8x64xf32> to vector<1x64xf32>
    %149 = arith.maximumf %147, %148 : vector<1x64xf32>
    %150 = arith.truncf %149 : vector<1x64xf32> to vector<1x64xbf16>
    %c0_104 = arith.constant 0 : index
    %c2_105 = arith.constant 2 : index
    %c1_106 = arith.constant 1 : index
    %c0_107 = arith.constant 0 : index
    %151 = vector.load %arg4[%c0_104, %c2_105, %c1_106, %c0_107] : memref<1x4x4x64xbf16, #tpu.memory_space<vmem>>, vector<1x1x1x64xbf16>
    %152 = vector.shape_cast %151 : vector<1x1x1x64xbf16> to vector<1x64xbf16>
    %153 = vector.shape_cast %150 : vector<1x64xbf16> to vector<1x1x1x64xbf16>
    tpu.vector_store %arg4[%c0_104, %c2_105, %c1_106, %c0_107], %153 {strides = array<i32>} : memref<1x4x4x64xbf16, #tpu.memory_space<vmem>>, vector<1x1x1x64xbf16>,
    %154 = vector.extract_strided_slice %139 {offsets = [4, 0], sizes = [1, 64], strides = [1, 1]} : vector<8x64xf32> to vector<1x64xf32>
    %155 = vector.extract_strided_slice %139 {offsets = [5, 0], sizes = [1, 64], strides = [1, 1]} : vector<8x64xf32> to vector<1x64xf32>
    %156 = arith.maximumf %154, %155 : vector<1x64xf32>
    %157 = arith.truncf %156 : vector<1x64xf32> to vector<1x64xbf16>
    %c0_108 = arith.constant 0 : index
    %c2_109 = arith.constant 2 : index
    %c2_110 = arith.constant 2 : index
    %c0_111 = arith.constant 0 : index
    %158 = vector.load %arg4[%c0_108, %c2_109, %c2_110, %c0_111] : memref<1x4x4x64xbf16, #tpu.memory_space<vmem>>, vector<1x1x1x64xbf16>
    %159 = vector.shape_cast %158 : vector<1x1x1x64xbf16> to vector<1x64xbf16>
    %160 = vector.shape_cast %157 : vector<1x64xbf16> to vector<1x1x1x64xbf16>
    tpu.vector_store %arg4[%c0_108, %c2_109, %c2_110, %c0_111], %160 {strides = array<i32>} : memref<1x4x4x64xbf16, #tpu.memory_space<vmem>>, vector<1x1x1x64xbf16>,
    %161 = vector.extract_strided_slice %139 {offsets = [6, 0], sizes = [1, 64], strides = [1, 1]} : vector<8x64xf32> to vector<1x64xf32>
    %162 = vector.extract_strided_slice %139 {offsets = [7, 0], sizes = [1, 64], strides = [1, 1]} : vector<8x64xf32> to vector<1x64xf32>
    %163 = arith.maximumf %161, %162 : vector<1x64xf32>
    %164 = arith.truncf %163 : vector<1x64xf32> to vector<1x64xbf16>
    %c0_112 = arith.constant 0 : index
    %c2_113 = arith.constant 2 : index
    %c3_114 = arith.constant 3 : index
    %c0_115 = arith.constant 0 : index
    %165 = vector.load %arg4[%c0_112, %c2_113, %c3_114, %c0_115] : memref<1x4x4x64xbf16, #tpu.memory_space<vmem>>, vector<1x1x1x64xbf16>
    %166 = vector.shape_cast %165 : vector<1x1x1x64xbf16> to vector<1x64xbf16>
    %167 = vector.shape_cast %164 : vector<1x64xbf16> to vector<1x1x1x64xbf16>
    tpu.vector_store %arg4[%c0_112, %c2_113, %c3_114, %c0_115], %167 {strides = array<i32>} : memref<1x4x4x64xbf16, #tpu.memory_space<vmem>>, vector<1x1x1x64xbf16>,
    %168 = vector.extract_strided_slice %74 {offsets = [48, 0], sizes = [8, 64], strides = [1, 1]} : vector<64x64xf32> to vector<8x64xf32>
    %169 = vector.extract_strided_slice %74 {offsets = [56, 0], sizes = [8, 64], strides = [1, 1]} : vector<64x64xf32> to vector<8x64xf32>
    %170 = arith.maximumf %168, %169 : vector<8x64xf32>
    %171 = vector.extract_strided_slice %170 {offsets = [0, 0], sizes = [1, 64], strides = [1, 1]} : vector<8x64xf32> to vector<1x64xf32>
    %172 = vector.extract_strided_slice %170 {offsets = [1, 0], sizes = [1, 64], strides = [1, 1]} : vector<8x64xf32> to vector<1x64xf32>
    %173 = arith.maximumf %171, %172 : vector<1x64xf32>
    %174 = arith.truncf %173 : vector<1x64xf32> to vector<1x64xbf16>
    %c0_116 = arith.constant 0 : index
    %c3_117 = arith.constant 3 : index
    %c0_118 = arith.constant 0 : index
    %c0_119 = arith.constant 0 : index
    %175 = vector.load %arg4[%c0_116, %c3_117, %c0_118, %c0_119] : memref<1x4x4x64xbf16, #tpu.memory_space<vmem>>, vector<1x1x1x64xbf16>
    %176 = vector.shape_cast %175 : vector<1x1x1x64xbf16> to vector<1x64xbf16>
    %177 = vector.shape_cast %174 : vector<1x64xbf16> to vector<1x1x1x64xbf16>
    tpu.vector_store %arg4[%c0_116, %c3_117, %c0_118, %c0_119], %177 {strides = array<i32>} : memref<1x4x4x64xbf16, #tpu.memory_space<vmem>>, vector<1x1x1x64xbf16>,
    %178 = vector.extract_strided_slice %170 {offsets = [2, 0], sizes = [1, 64], strides = [1, 1]} : vector<8x64xf32> to vector<1x64xf32>
    %179 = vector.extract_strided_slice %170 {offsets = [3, 0], sizes = [1, 64], strides = [1, 1]} : vector<8x64xf32> to vector<1x64xf32>
    %180 = arith.maximumf %178, %179 : vector<1x64xf32>
    %181 = arith.truncf %180 : vector<1x64xf32> to vector<1x64xbf16>
    %c0_120 = arith.constant 0 : index
    %c3_121 = arith.constant 3 : index
    %c1_122 = arith.constant 1 : index
    %c0_123 = arith.constant 0 : index
    %182 = vector.load %arg4[%c0_120, %c3_121, %c1_122, %c0_123] : memref<1x4x4x64xbf16, #tpu.memory_space<vmem>>, vector<1x1x1x64xbf16>
    %183 = vector.shape_cast %182 : vector<1x1x1x64xbf16> to vector<1x64xbf16>
    %184 = vector.shape_cast %181 : vector<1x64xbf16> to vector<1x1x1x64xbf16>
    tpu.vector_store %arg4[%c0_120, %c3_121, %c1_122, %c0_123], %184 {strides = array<i32>} : memref<1x4x4x64xbf16, #tpu.memory_space<vmem>>, vector<1x1x1x64xbf16>,
    %185 = vector.extract_strided_slice %170 {offsets = [4, 0], sizes = [1, 64], strides = [1, 1]} : vector<8x64xf32> to vector<1x64xf32>
    %186 = vector.extract_strided_slice %170 {offsets = [5, 0], sizes = [1, 64], strides = [1, 1]} : vector<8x64xf32> to vector<1x64xf32>
    %187 = arith.maximumf %185, %186 : vector<1x64xf32>
    %188 = arith.truncf %187 : vector<1x64xf32> to vector<1x64xbf16>
    %c0_124 = arith.constant 0 : index
    %c3_125 = arith.constant 3 : index
    %c2_126 = arith.constant 2 : index
    %c0_127 = arith.constant 0 : index
    %189 = vector.load %arg4[%c0_124, %c3_125, %c2_126, %c0_127] : memref<1x4x4x64xbf16, #tpu.memory_space<vmem>>, vector<1x1x1x64xbf16>
    %190 = vector.shape_cast %189 : vector<1x1x1x64xbf16> to vector<1x64xbf16>
    %191 = vector.shape_cast %188 : vector<1x64xbf16> to vector<1x1x1x64xbf16>
    tpu.vector_store %arg4[%c0_124, %c3_125, %c2_126, %c0_127], %191 {strides = array<i32>} : memref<1x4x4x64xbf16, #tpu.memory_space<vmem>>, vector<1x1x1x64xbf16>,
    %192 = vector.extract_strided_slice %170 {offsets = [6, 0], sizes = [1, 64], strides = [1, 1]} : vector<8x64xf32> to vector<1x64xf32>
    %193 = vector.extract_strided_slice %170 {offsets = [7, 0], sizes = [1, 64], strides = [1, 1]} : vector<8x64xf32> to vector<1x64xf32>
    %194 = arith.maximumf %192, %193 : vector<1x64xf32>
    %195 = arith.truncf %194 : vector<1x64xf32> to vector<1x64xbf16>
    %c0_128 = arith.constant 0 : index
    %c3_129 = arith.constant 3 : index
    %c3_130 = arith.constant 3 : index
    %c0_131 = arith.constant 0 : index
    %196 = vector.load %arg4[%c0_128, %c3_129, %c3_130, %c0_131] : memref<1x4x4x64xbf16, #tpu.memory_space<vmem>>, vector<1x1x1x64xbf16>
    %197 = vector.shape_cast %196 : vector<1x1x1x64xbf16> to vector<1x64xbf16>
    %198 = vector.shape_cast %195 : vector<1x64xbf16> to vector<1x1x1x64xbf16>
    tpu.vector_store %arg4[%c0_128, %c3_129, %c3_130, %c0_131], %198 {strides = array<i32>} : memref<1x4x4x64xbf16, #tpu.memory_space<vmem>>, vector<1x1x1x64xbf16>,
    return
  }
  func.func @transform_0(%arg0: i32) -> (i32, i32, i32, i32) {
    %c0_i32 = arith.constant 0 : i32
    %c0_i32_0 = arith.constant 0 : i32
    %c0_i32_1 = arith.constant 0 : i32
    %c0_i32_2 = arith.constant 0 : i32
    return %arg0, %c0_i32, %c0_i32_0, %c0_i32_1 : i32, i32, i32, i32
  }
  func.func @transform_1(%arg0: i32) -> (i32, i32, i32) {
    %c0_i32 = arith.constant 0 : i32
    %c0_i32_0 = arith.constant 0 : i32
    %c0_i32_1 = arith.constant 0 : i32
    %c0_i32_2 = arith.constant 0 : i32
    return %c0_i32, %c0_i32_0, %c0_i32_1 : i32, i32, i32
  }
  func.func @transform_2(%arg0: i32) -> (i32, i32) {
    %c0_i32 = arith.constant 0 : i32
    %c0_i32_0 = arith.constant 0 : i32
    %c0_i32_1 = arith.constant 0 : i32
    return %c0_i32, %c0_i32_0 : i32, i32
  }
  func.func @transform_3(%arg0: i32) -> (i32, i32, i32, i32) {
    %c0_i32 = arith.constant 0 : i32
    %c0_i32_0 = arith.constant 0 : i32
    %c0_i32_1 = arith.constant 0 : i32
    %c0_i32_2 = arith.constant 0 : i32
    return %arg0, %c0_i32, %c0_i32_0, %c0_i32_1 : i32, i32, i32, i32
  }
}

module attributes {stable_mosaic.version = 11 : i64} {
  func.func @_matmul_bias_kernel(%arg0: i32, %arg1: memref<8x256xbf16, #tpu.memory_space<vmem>>, %arg2: memref<256x128xbf16, #tpu.memory_space<vmem>>, %arg3: memref<1x128xf32, #tpu.memory_space<vmem>>, %arg4: memref<8x128xbf16, #tpu.memory_space<vmem>>) attributes {dimension_semantics = [#tpu.dimension_semantics<parallel>], iteration_bounds = array<i64: 1>, scalar_prefetch = 0 : i64, scratch_operands = 0 : i64, tpu.core_type = #tpu.core_type<tc>, window_params = [{transform_indices = @transform_0, window_bounds = array<i64: 8, 256>}, {pipeline_mode = #tpu.pipeline_mode<synchronous>, transform_indices = @transform_1, window_bounds = array<i64: 256, 128>}, {pipeline_mode = #tpu.pipeline_mode<synchronous>, transform_indices = @transform_2, window_bounds = array<i64: 1, 128>}, {transform_indices = @transform_3, window_bounds = array<i64: 8, 128>}]} {
    %c0 = arith.constant 0 : index
    %c0_0 = arith.constant 0 : index
    %0 = vector.load %arg1[%c0, %c0_0] : memref<8x256xbf16, #tpu.memory_space<vmem>>, vector<8x256xbf16>
    %c0_1 = arith.constant 0 : index
    %c0_2 = arith.constant 0 : index
    %1 = vector.load %arg2[%c0_1, %c0_2] : memref<256x128xbf16, #tpu.memory_space<vmem>>, vector<256x128xbf16>
    %cst = arith.constant dense<0.000000e+00> : vector<8x128xf32>
    %2 = tpu.matmul %0, %1, %cst {dimension_numbers = #tpu.dot_dimension_numbers<[1], [0], [0], [1], [0, 0, 1, 1], [], []>} : vector<8x256xbf16>, vector<256x128xbf16>, vector<8x128xf32> -> vector<8x128xf32>
    %c0_3 = arith.constant 0 : index
    %c0_4 = arith.constant 0 : index
    %3 = vector.load %arg3[%c0_3, %c0_4] : memref<1x128xf32, #tpu.memory_space<vmem>>, vector<1x128xf32>
    %4 = vector.broadcast %3 : vector<1x128xf32> to vector<8x128xf32>
    %5 = arith.addf %2, %4 : vector<8x128xf32>
    %6 = arith.truncf %5 : vector<8x128xf32> to vector<8x128xbf16>
    %c0_5 = arith.constant 0 : index
    %c0_6 = arith.constant 0 : index
    %7 = vector.load %arg4[%c0_5, %c0_6] : memref<8x128xbf16, #tpu.memory_space<vmem>>, vector<8x128xbf16>
    tpu.vector_store %arg4[%c0_5, %c0_6], %6 {strides = array<i32>} : memref<8x128xbf16, #tpu.memory_space<vmem>>, vector<8x128xbf16>,
    return
  }
  func.func @transform_0(%arg0: i32) -> (i32, i32) {
    %c0_i32 = arith.constant 0 : i32
    %c0_i32_0 = arith.constant 0 : i32
    return %arg0, %c0_i32 : i32, i32
  }
  func.func @transform_1(%arg0: i32) -> (i32, i32) {
    %c0_i32 = arith.constant 0 : i32
    %c0_i32_0 = arith.constant 0 : i32
    %c0_i32_1 = arith.constant 0 : i32
    return %c0_i32, %c0_i32_0 : i32, i32
  }
  func.func @transform_2(%arg0: i32) -> (i32, i32) {
    %c0_i32 = arith.constant 0 : i32
    %c0_i32_0 = arith.constant 0 : i32
    %c0_i32_1 = arith.constant 0 : i32
    return %c0_i32, %c0_i32_0 : i32, i32
  }
  func.func @transform_3(%arg0: i32) -> (i32, i32) {
    %c0_i32 = arith.constant 0 : i32
    %c0_i32_0 = arith.constant 0 : i32
    return %arg0, %c0_i32 : i32, i32
  }
}

module attributes {stable_mosaic.version = 11 : i64} {
  func.func @_matmul_bias_kernel(%arg0: i32, %arg1: memref<8x64xbf16, #tpu.memory_space<vmem>>, %arg2: memref<64x256xbf16, #tpu.memory_space<vmem>>, %arg3: memref<1x256xf32, #tpu.memory_space<vmem>>, %arg4: memref<8x256xf32, #tpu.memory_space<vmem>>) attributes {dimension_semantics = [#tpu.dimension_semantics<parallel>], iteration_bounds = array<i64: 1>, scalar_prefetch = 0 : i64, scratch_operands = 0 : i64, tpu.core_type = #tpu.core_type<tc>, window_params = [{transform_indices = @transform_0, window_bounds = array<i64: 8, 64>}, {pipeline_mode = #tpu.pipeline_mode<synchronous>, transform_indices = @transform_1, window_bounds = array<i64: 64, 256>}, {pipeline_mode = #tpu.pipeline_mode<synchronous>, transform_indices = @transform_2, window_bounds = array<i64: 1, 256>}, {transform_indices = @transform_3, window_bounds = array<i64: 8, 256>}]} {
    %c0 = arith.constant 0 : index
    %c0_0 = arith.constant 0 : index
    %0 = vector.load %arg1[%c0, %c0_0] : memref<8x64xbf16, #tpu.memory_space<vmem>>, vector<8x64xbf16>
    %c0_1 = arith.constant 0 : index
    %c0_2 = arith.constant 0 : index
    %1 = vector.load %arg2[%c0_1, %c0_2] : memref<64x256xbf16, #tpu.memory_space<vmem>>, vector<64x256xbf16>
    %cst = arith.constant dense<0.000000e+00> : vector<8x256xf32>
    %2 = tpu.matmul %0, %1, %cst {dimension_numbers = #tpu.dot_dimension_numbers<[1], [0], [0], [1], [0, 0, 1, 1], [], []>} : vector<8x64xbf16>, vector<64x256xbf16>, vector<8x256xf32> -> vector<8x256xf32>
    %c0_3 = arith.constant 0 : index
    %c0_4 = arith.constant 0 : index
    %3 = vector.load %arg3[%c0_3, %c0_4] : memref<1x256xf32, #tpu.memory_space<vmem>>, vector<1x256xf32>
    %4 = vector.broadcast %3 : vector<1x256xf32> to vector<8x256xf32>
    %5 = arith.addf %2, %4 : vector<8x256xf32>
    %c0_5 = arith.constant 0 : index
    %c0_6 = arith.constant 0 : index
    %6 = vector.load %arg4[%c0_5, %c0_6] : memref<8x256xf32, #tpu.memory_space<vmem>>, vector<8x256xf32>
    tpu.vector_store %arg4[%c0_5, %c0_6], %5 {strides = array<i32>} : memref<8x256xf32, #tpu.memory_space<vmem>>, vector<8x256xf32>,
    return
  }
  func.func @transform_0(%arg0: i32) -> (i32, i32) {
    %c0_i32 = arith.constant 0 : i32
    %c0_i32_0 = arith.constant 0 : i32
    return %arg0, %c0_i32 : i32, i32
  }
  func.func @transform_1(%arg0: i32) -> (i32, i32) {
    %c0_i32 = arith.constant 0 : i32
    %c0_i32_0 = arith.constant 0 : i32
    %c0_i32_1 = arith.constant 0 : i32
    return %c0_i32, %c0_i32_0 : i32, i32
  }
  func.func @transform_2(%arg0: i32) -> (i32, i32) {
    %c0_i32 = arith.constant 0 : i32
    %c0_i32_0 = arith.constant 0 : i32
    %c0_i32_1 = arith.constant 0 : i32
    return %c0_i32, %c0_i32_0 : i32, i32
  }
  func.func @transform_3(%arg0: i32) -> (i32, i32) {
    %c0_i32 = arith.constant 0 : i32
    %c0_i32_0 = arith.constant 0 : i32
    return %arg0, %c0_i32 : i32, i32
  }
}

module attributes {stable_mosaic.version = 11 : i64} {
  func.func @_bigru_kernel(%arg0: memref<4x2x96xf32, #tpu.memory_space<vmem>>, %arg1: memref<4x2x96xf32, #tpu.memory_space<vmem>>, %arg2: memref<64x192xbf16, #tpu.memory_space<vmem>>, %arg3: memref<1x64xf32, #tpu.memory_space<vmem>>, %arg4: memref<4x2x32xbf16, #tpu.memory_space<vmem>>, %arg5: memref<4x2x32xbf16, #tpu.memory_space<vmem>>) attributes {dimension_semantics = [], scalar_prefetch = 0 : i64, scratch_operands = 0 : i64, tpu.core_type = #tpu.core_type<tc>} {
    %c0 = arith.constant 0 : index
    %c0_0 = arith.constant 0 : index
    %0 = vector.load %arg2[%c0, %c0_0] : memref<64x192xbf16, #tpu.memory_space<vmem>>, vector<64x192xbf16>
    %c0_1 = arith.constant 0 : index
    %c0_2 = arith.constant 0 : index
    %1 = vector.load %arg3[%c0_1, %c0_2] : memref<1x64xf32, #tpu.memory_space<vmem>>, vector<1x64xf32>
    %2 = vector.shape_cast %1 : vector<1x64xf32> to vector<1x64xf32>
    %3 = vector.broadcast %2 : vector<1x64xf32> to vector<2x64xf32>
    %cst = arith.constant 0.000000e+00 : f32
    %4 = vector.broadcast %cst : f32 to vector<2x64xf32>
    %c0_i32 = arith.constant 0 : i32
    %c3_i32 = arith.constant 3 : i32
    %5 = arith.subi %c3_i32, %c0_i32 : i32
    %6 = arith.truncf %4 : vector<2x64xf32> to vector<2x64xbf16>
    %cst_3 = arith.constant dense<0.000000e+00> : vector<2x192xf32>
    %7 = tpu.matmul %6, %0, %cst_3 {dimension_numbers = #tpu.dot_dimension_numbers<[1], [0], [0], [1], [0, 0, 1, 1], [], []>} : vector<2x64xbf16>, vector<64x192xbf16>, vector<2x192xf32> -> vector<2x192xf32>
    %8 = arith.index_cast %c0_i32 : i32 to index
    %c0_4 = arith.constant 0 : index
    %c0_5 = arith.constant 0 : index
    %9 = vector.load %arg0[%8, %c0_4, %c0_5] : memref<4x2x96xf32, #tpu.memory_space<vmem>>, vector<1x2x96xf32>
    %10 = vector.shape_cast %9 : vector<1x2x96xf32> to vector<2x96xf32>
    %11 = vector.extract_strided_slice %7 {offsets = [0, 0], sizes = [2, 96], strides = [1, 1]} : vector<2x192xf32> to vector<2x96xf32>
    %12 = vector.extract_strided_slice %3 {offsets = [0, 0], sizes = [2, 32], strides = [1, 1]} : vector<2x64xf32> to vector<2x32xf32>
    %13 = vector.extract_strided_slice %4 {offsets = [0, 0], sizes = [2, 32], strides = [1, 1]} : vector<2x64xf32> to vector<2x32xf32>
    %14 = vector.extract_strided_slice %10 {offsets = [0, 0], sizes = [2, 32], strides = [1, 1]} : vector<2x96xf32> to vector<2x32xf32>
    %15 = vector.extract_strided_slice %11 {offsets = [0, 0], sizes = [2, 32], strides = [1, 1]} : vector<2x96xf32> to vector<2x32xf32>
    %16 = arith.addf %14, %15 : vector<2x32xf32>
    %17 = arith.negf %16 : vector<2x32xf32>
    %18 = math.exp %17 : vector<2x32xf32>
    %cst_6 = arith.constant 1.000000e+00 : f32
    %19 = vector.broadcast %cst_6 : f32 to vector<2x32xf32>
    %20 = arith.addf %19, %18 : vector<2x32xf32>
    %21 = arith.divf %19, %20 : vector<2x32xf32>
    %22 = vector.extract_strided_slice %10 {offsets = [0, 32], sizes = [2, 32], strides = [1, 1]} : vector<2x96xf32> to vector<2x32xf32>
    %23 = vector.extract_strided_slice %11 {offsets = [0, 32], sizes = [2, 32], strides = [1, 1]} : vector<2x96xf32> to vector<2x32xf32>
    %24 = arith.addf %22, %23 : vector<2x32xf32>
    %25 = arith.negf %24 : vector<2x32xf32>
    %26 = math.exp %25 : vector<2x32xf32>
    %cst_7 = arith.constant 1.000000e+00 : f32
    %27 = vector.broadcast %cst_7 : f32 to vector<2x32xf32>
    %28 = arith.addf %27, %26 : vector<2x32xf32>
    %29 = arith.divf %27, %28 : vector<2x32xf32>
    %30 = vector.extract_strided_slice %10 {offsets = [0, 64], sizes = [2, 32], strides = [1, 1]} : vector<2x96xf32> to vector<2x32xf32>
    %31 = vector.extract_strided_slice %11 {offsets = [0, 64], sizes = [2, 32], strides = [1, 1]} : vector<2x96xf32> to vector<2x32xf32>
    %32 = arith.addf %31, %12 : vector<2x32xf32>
    %33 = arith.mulf %21, %32 : vector<2x32xf32>
    %34 = arith.addf %30, %33 : vector<2x32xf32>
    %35 = math.tanh %34 : vector<2x32xf32>
    %cst_8 = arith.constant 1.000000e+00 : f32
    %36 = vector.broadcast %cst_8 : f32 to vector<2x32xf32>
    %37 = arith.subf %36, %29 : vector<2x32xf32>
    %38 = arith.mulf %37, %35 : vector<2x32xf32>
    %39 = arith.mulf %29, %13 : vector<2x32xf32>
    %40 = arith.addf %38, %39 : vector<2x32xf32>
    %41 = arith.index_cast %5 : i32 to index
    %c0_9 = arith.constant 0 : index
    %c0_10 = arith.constant 0 : index
    %42 = vector.load %arg1[%41, %c0_9, %c0_10] : memref<4x2x96xf32, #tpu.memory_space<vmem>>, vector<1x2x96xf32>
    %43 = vector.shape_cast %42 : vector<1x2x96xf32> to vector<2x96xf32>
    %44 = vector.extract_strided_slice %7 {offsets = [0, 96], sizes = [2, 96], strides = [1, 1]} : vector<2x192xf32> to vector<2x96xf32>
    %45 = vector.extract_strided_slice %3 {offsets = [0, 32], sizes = [2, 32], strides = [1, 1]} : vector<2x64xf32> to vector<2x32xf32>
    %46 = vector.extract_strided_slice %4 {offsets = [0, 32], sizes = [2, 32], strides = [1, 1]} : vector<2x64xf32> to vector<2x32xf32>
    %47 = vector.extract_strided_slice %43 {offsets = [0, 0], sizes = [2, 32], strides = [1, 1]} : vector<2x96xf32> to vector<2x32xf32>
    %48 = vector.extract_strided_slice %44 {offsets = [0, 0], sizes = [2, 32], strides = [1, 1]} : vector<2x96xf32> to vector<2x32xf32>
    %49 = arith.addf %47, %48 : vector<2x32xf32>
    %50 = arith.negf %49 : vector<2x32xf32>
    %51 = math.exp %50 : vector<2x32xf32>
    %cst_11 = arith.constant 1.000000e+00 : f32
    %52 = vector.broadcast %cst_11 : f32 to vector<2x32xf32>
    %53 = arith.addf %52, %51 : vector<2x32xf32>
    %54 = arith.divf %52, %53 : vector<2x32xf32>
    %55 = vector.extract_strided_slice %43 {offsets = [0, 32], sizes = [2, 32], strides = [1, 1]} : vector<2x96xf32> to vector<2x32xf32>
    %56 = vector.extract_strided_slice %44 {offsets = [0, 32], sizes = [2, 32], strides = [1, 1]} : vector<2x96xf32> to vector<2x32xf32>
    %57 = arith.addf %55, %56 : vector<2x32xf32>
    %58 = arith.negf %57 : vector<2x32xf32>
    %59 = math.exp %58 : vector<2x32xf32>
    %cst_12 = arith.constant 1.000000e+00 : f32
    %60 = vector.broadcast %cst_12 : f32 to vector<2x32xf32>
    %61 = arith.addf %60, %59 : vector<2x32xf32>
    %62 = arith.divf %60, %61 : vector<2x32xf32>
    %63 = vector.extract_strided_slice %43 {offsets = [0, 64], sizes = [2, 32], strides = [1, 1]} : vector<2x96xf32> to vector<2x32xf32>
    %64 = vector.extract_strided_slice %44 {offsets = [0, 64], sizes = [2, 32], strides = [1, 1]} : vector<2x96xf32> to vector<2x32xf32>
    %65 = arith.addf %64, %45 : vector<2x32xf32>
    %66 = arith.mulf %54, %65 : vector<2x32xf32>
    %67 = arith.addf %63, %66 : vector<2x32xf32>
    %68 = math.tanh %67 : vector<2x32xf32>
    %cst_13 = arith.constant 1.000000e+00 : f32
    %69 = vector.broadcast %cst_13 : f32 to vector<2x32xf32>
    %70 = arith.subf %69, %62 : vector<2x32xf32>
    %71 = arith.mulf %70, %68 : vector<2x32xf32>
    %72 = arith.mulf %62, %46 : vector<2x32xf32>
    %73 = arith.addf %71, %72 : vector<2x32xf32>
    %74 = arith.truncf %40 : vector<2x32xf32> to vector<2x32xbf16>
    %75 = arith.index_cast %c0_i32 : i32 to index
    %c0_14 = arith.constant 0 : index
    %c0_15 = arith.constant 0 : index
    %76 = vector.load %arg4[%75, %c0_14, %c0_15] : memref<4x2x32xbf16, #tpu.memory_space<vmem>>, vector<1x2x32xbf16>
    %77 = vector.shape_cast %76 : vector<1x2x32xbf16> to vector<2x32xbf16>
    %78 = vector.shape_cast %74 : vector<2x32xbf16> to vector<1x2x32xbf16>
    tpu.vector_store %arg4[%75, %c0_14, %c0_15], %78 {strides = array<i32>} : memref<4x2x32xbf16, #tpu.memory_space<vmem>>, vector<1x2x32xbf16>,
    %79 = arith.truncf %73 : vector<2x32xf32> to vector<2x32xbf16>
    %80 = arith.index_cast %5 : i32 to index
    %c0_16 = arith.constant 0 : index
    %c0_17 = arith.constant 0 : index
    %81 = vector.load %arg5[%80, %c0_16, %c0_17] : memref<4x2x32xbf16, #tpu.memory_space<vmem>>, vector<1x2x32xbf16>
    %82 = vector.shape_cast %81 : vector<1x2x32xbf16> to vector<2x32xbf16>
    %83 = vector.shape_cast %79 : vector<2x32xbf16> to vector<1x2x32xbf16>
    tpu.vector_store %arg5[%80, %c0_16, %c0_17], %83 {strides = array<i32>} : memref<4x2x32xbf16, #tpu.memory_space<vmem>>, vector<1x2x32xbf16>,
    %84 = tpu.concatenate %40, %73 in 1 : vector<2x32xf32>, vector<2x32xf32> -> vector<2x64xf32>
    %c1_i32 = arith.constant 1 : i32
    %c3_i32_18 = arith.constant 3 : i32
    %85 = arith.subi %c3_i32_18, %c1_i32 : i32
    %86 = arith.truncf %84 : vector<2x64xf32> to vector<2x64xbf16>
    %cst_19 = arith.constant dense<0.000000e+00> : vector<2x192xf32>
    %87 = tpu.matmul %86, %0, %cst_19 {dimension_numbers = #tpu.dot_dimension_numbers<[1], [0], [0], [1], [0, 0, 1, 1], [], []>} : vector<2x64xbf16>, vector<64x192xbf16>, vector<2x192xf32> -> vector<2x192xf32>
    %88 = arith.index_cast %c1_i32 : i32 to index
    %c0_20 = arith.constant 0 : index
    %c0_21 = arith.constant 0 : index
    %89 = vector.load %arg0[%88, %c0_20, %c0_21] : memref<4x2x96xf32, #tpu.memory_space<vmem>>, vector<1x2x96xf32>
    %90 = vector.shape_cast %89 : vector<1x2x96xf32> to vector<2x96xf32>
    %91 = vector.extract_strided_slice %87 {offsets = [0, 0], sizes = [2, 96], strides = [1, 1]} : vector<2x192xf32> to vector<2x96xf32>
    %92 = vector.extract_strided_slice %3 {offsets = [0, 0], sizes = [2, 32], strides = [1, 1]} : vector<2x64xf32> to vector<2x32xf32>
    %93 = vector.extract_strided_slice %84 {offsets = [0, 0], sizes = [2, 32], strides = [1, 1]} : vector<2x64xf32> to vector<2x32xf32>
    %94 = vector.extract_strided_slice %90 {offsets = [0, 0], sizes = [2, 32], strides = [1, 1]} : vector<2x96xf32> to vector<2x32xf32>
    %95 = vector.extract_strided_slice %91 {offsets = [0, 0], sizes = [2, 32], strides = [1, 1]} : vector<2x96xf32> to vector<2x32xf32>
    %96 = arith.addf %94, %95 : vector<2x32xf32>
    %97 = arith.negf %96 : vector<2x32xf32>
    %98 = math.exp %97 : vector<2x32xf32>
    %cst_22 = arith.constant 1.000000e+00 : f32
    %99 = vector.broadcast %cst_22 : f32 to vector<2x32xf32>
    %100 = arith.addf %99, %98 : vector<2x32xf32>
    %101 = arith.divf %99, %100 : vector<2x32xf32>
    %102 = vector.extract_strided_slice %90 {offsets = [0, 32], sizes = [2, 32], strides = [1, 1]} : vector<2x96xf32> to vector<2x32xf32>
    %103 = vector.extract_strided_slice %91 {offsets = [0, 32], sizes = [2, 32], strides = [1, 1]} : vector<2x96xf32> to vector<2x32xf32>
    %104 = arith.addf %102, %103 : vector<2x32xf32>
    %105 = arith.negf %104 : vector<2x32xf32>
    %106 = math.exp %105 : vector<2x32xf32>
    %cst_23 = arith.constant 1.000000e+00 : f32
    %107 = vector.broadcast %cst_23 : f32 to vector<2x32xf32>
    %108 = arith.addf %107, %106 : vector<2x32xf32>
    %109 = arith.divf %107, %108 : vector<2x32xf32>
    %110 = vector.extract_strided_slice %90 {offsets = [0, 64], sizes = [2, 32], strides = [1, 1]} : vector<2x96xf32> to vector<2x32xf32>
    %111 = vector.extract_strided_slice %91 {offsets = [0, 64], sizes = [2, 32], strides = [1, 1]} : vector<2x96xf32> to vector<2x32xf32>
    %112 = arith.addf %111, %92 : vector<2x32xf32>
    %113 = arith.mulf %101, %112 : vector<2x32xf32>
    %114 = arith.addf %110, %113 : vector<2x32xf32>
    %115 = math.tanh %114 : vector<2x32xf32>
    %cst_24 = arith.constant 1.000000e+00 : f32
    %116 = vector.broadcast %cst_24 : f32 to vector<2x32xf32>
    %117 = arith.subf %116, %109 : vector<2x32xf32>
    %118 = arith.mulf %117, %115 : vector<2x32xf32>
    %119 = arith.mulf %109, %93 : vector<2x32xf32>
    %120 = arith.addf %118, %119 : vector<2x32xf32>
    %121 = arith.index_cast %85 : i32 to index
    %c0_25 = arith.constant 0 : index
    %c0_26 = arith.constant 0 : index
    %122 = vector.load %arg1[%121, %c0_25, %c0_26] : memref<4x2x96xf32, #tpu.memory_space<vmem>>, vector<1x2x96xf32>
    %123 = vector.shape_cast %122 : vector<1x2x96xf32> to vector<2x96xf32>
    %124 = vector.extract_strided_slice %87 {offsets = [0, 96], sizes = [2, 96], strides = [1, 1]} : vector<2x192xf32> to vector<2x96xf32>
    %125 = vector.extract_strided_slice %3 {offsets = [0, 32], sizes = [2, 32], strides = [1, 1]} : vector<2x64xf32> to vector<2x32xf32>
    %126 = vector.extract_strided_slice %84 {offsets = [0, 32], sizes = [2, 32], strides = [1, 1]} : vector<2x64xf32> to vector<2x32xf32>
    %127 = vector.extract_strided_slice %123 {offsets = [0, 0], sizes = [2, 32], strides = [1, 1]} : vector<2x96xf32> to vector<2x32xf32>
    %128 = vector.extract_strided_slice %124 {offsets = [0, 0], sizes = [2, 32], strides = [1, 1]} : vector<2x96xf32> to vector<2x32xf32>
    %129 = arith.addf %127, %128 : vector<2x32xf32>
    %130 = arith.negf %129 : vector<2x32xf32>
    %131 = math.exp %130 : vector<2x32xf32>
    %cst_27 = arith.constant 1.000000e+00 : f32
    %132 = vector.broadcast %cst_27 : f32 to vector<2x32xf32>
    %133 = arith.addf %132, %131 : vector<2x32xf32>
    %134 = arith.divf %132, %133 : vector<2x32xf32>
    %135 = vector.extract_strided_slice %123 {offsets = [0, 32], sizes = [2, 32], strides = [1, 1]} : vector<2x96xf32> to vector<2x32xf32>
    %136 = vector.extract_strided_slice %124 {offsets = [0, 32], sizes = [2, 32], strides = [1, 1]} : vector<2x96xf32> to vector<2x32xf32>
    %137 = arith.addf %135, %136 : vector<2x32xf32>
    %138 = arith.negf %137 : vector<2x32xf32>
    %139 = math.exp %138 : vector<2x32xf32>
    %cst_28 = arith.constant 1.000000e+00 : f32
    %140 = vector.broadcast %cst_28 : f32 to vector<2x32xf32>
    %141 = arith.addf %140, %139 : vector<2x32xf32>
    %142 = arith.divf %140, %141 : vector<2x32xf32>
    %143 = vector.extract_strided_slice %123 {offsets = [0, 64], sizes = [2, 32], strides = [1, 1]} : vector<2x96xf32> to vector<2x32xf32>
    %144 = vector.extract_strided_slice %124 {offsets = [0, 64], sizes = [2, 32], strides = [1, 1]} : vector<2x96xf32> to vector<2x32xf32>
    %145 = arith.addf %144, %125 : vector<2x32xf32>
    %146 = arith.mulf %134, %145 : vector<2x32xf32>
    %147 = arith.addf %143, %146 : vector<2x32xf32>
    %148 = math.tanh %147 : vector<2x32xf32>
    %cst_29 = arith.constant 1.000000e+00 : f32
    %149 = vector.broadcast %cst_29 : f32 to vector<2x32xf32>
    %150 = arith.subf %149, %142 : vector<2x32xf32>
    %151 = arith.mulf %150, %148 : vector<2x32xf32>
    %152 = arith.mulf %142, %126 : vector<2x32xf32>
    %153 = arith.addf %151, %152 : vector<2x32xf32>
    %154 = arith.truncf %120 : vector<2x32xf32> to vector<2x32xbf16>
    %155 = arith.index_cast %c1_i32 : i32 to index
    %c0_30 = arith.constant 0 : index
    %c0_31 = arith.constant 0 : index
    %156 = vector.load %arg4[%155, %c0_30, %c0_31] : memref<4x2x32xbf16, #tpu.memory_space<vmem>>, vector<1x2x32xbf16>
    %157 = vector.shape_cast %156 : vector<1x2x32xbf16> to vector<2x32xbf16>
    %158 = vector.shape_cast %154 : vector<2x32xbf16> to vector<1x2x32xbf16>
    tpu.vector_store %arg4[%155, %c0_30, %c0_31], %158 {strides = array<i32>} : memref<4x2x32xbf16, #tpu.memory_space<vmem>>, vector<1x2x32xbf16>,
    %159 = arith.truncf %153 : vector<2x32xf32> to vector<2x32xbf16>
    %160 = arith.index_cast %85 : i32 to index
    %c0_32 = arith.constant 0 : index
    %c0_33 = arith.constant 0 : index
    %161 = vector.load %arg5[%160, %c0_32, %c0_33] : memref<4x2x32xbf16, #tpu.memory_space<vmem>>, vector<1x2x32xbf16>
    %162 = vector.shape_cast %161 : vector<1x2x32xbf16> to vector<2x32xbf16>
    %163 = vector.shape_cast %159 : vector<2x32xbf16> to vector<1x2x32xbf16>
    tpu.vector_store %arg5[%160, %c0_32, %c0_33], %163 {strides = array<i32>} : memref<4x2x32xbf16, #tpu.memory_space<vmem>>, vector<1x2x32xbf16>,
    %164 = tpu.concatenate %120, %153 in 1 : vector<2x32xf32>, vector<2x32xf32> -> vector<2x64xf32>
    %c2_i32 = arith.constant 2 : i32
    %c3_i32_34 = arith.constant 3 : i32
    %165 = arith.subi %c3_i32_34, %c2_i32 : i32
    %166 = arith.truncf %164 : vector<2x64xf32> to vector<2x64xbf16>
    %cst_35 = arith.constant dense<0.000000e+00> : vector<2x192xf32>
    %167 = tpu.matmul %166, %0, %cst_35 {dimension_numbers = #tpu.dot_dimension_numbers<[1], [0], [0], [1], [0, 0, 1, 1], [], []>} : vector<2x64xbf16>, vector<64x192xbf16>, vector<2x192xf32> -> vector<2x192xf32>
    %168 = arith.index_cast %c2_i32 : i32 to index
    %c0_36 = arith.constant 0 : index
    %c0_37 = arith.constant 0 : index
    %169 = vector.load %arg0[%168, %c0_36, %c0_37] : memref<4x2x96xf32, #tpu.memory_space<vmem>>, vector<1x2x96xf32>
    %170 = vector.shape_cast %169 : vector<1x2x96xf32> to vector<2x96xf32>
    %171 = vector.extract_strided_slice %167 {offsets = [0, 0], sizes = [2, 96], strides = [1, 1]} : vector<2x192xf32> to vector<2x96xf32>
    %172 = vector.extract_strided_slice %3 {offsets = [0, 0], sizes = [2, 32], strides = [1, 1]} : vector<2x64xf32> to vector<2x32xf32>
    %173 = vector.extract_strided_slice %164 {offsets = [0, 0], sizes = [2, 32], strides = [1, 1]} : vector<2x64xf32> to vector<2x32xf32>
    %174 = vector.extract_strided_slice %170 {offsets = [0, 0], sizes = [2, 32], strides = [1, 1]} : vector<2x96xf32> to vector<2x32xf32>
    %175 = vector.extract_strided_slice %171 {offsets = [0, 0], sizes = [2, 32], strides = [1, 1]} : vector<2x96xf32> to vector<2x32xf32>
    %176 = arith.addf %174, %175 : vector<2x32xf32>
    %177 = arith.negf %176 : vector<2x32xf32>
    %178 = math.exp %177 : vector<2x32xf32>
    %cst_38 = arith.constant 1.000000e+00 : f32
    %179 = vector.broadcast %cst_38 : f32 to vector<2x32xf32>
    %180 = arith.addf %179, %178 : vector<2x32xf32>
    %181 = arith.divf %179, %180 : vector<2x32xf32>
    %182 = vector.extract_strided_slice %170 {offsets = [0, 32], sizes = [2, 32], strides = [1, 1]} : vector<2x96xf32> to vector<2x32xf32>
    %183 = vector.extract_strided_slice %171 {offsets = [0, 32], sizes = [2, 32], strides = [1, 1]} : vector<2x96xf32> to vector<2x32xf32>
    %184 = arith.addf %182, %183 : vector<2x32xf32>
    %185 = arith.negf %184 : vector<2x32xf32>
    %186 = math.exp %185 : vector<2x32xf32>
    %cst_39 = arith.constant 1.000000e+00 : f32
    %187 = vector.broadcast %cst_39 : f32 to vector<2x32xf32>
    %188 = arith.addf %187, %186 : vector<2x32xf32>
    %189 = arith.divf %187, %188 : vector<2x32xf32>
    %190 = vector.extract_strided_slice %170 {offsets = [0, 64], sizes = [2, 32], strides = [1, 1]} : vector<2x96xf32> to vector<2x32xf32>
    %191 = vector.extract_strided_slice %171 {offsets = [0, 64], sizes = [2, 32], strides = [1, 1]} : vector<2x96xf32> to vector<2x32xf32>
    %192 = arith.addf %191, %172 : vector<2x32xf32>
    %193 = arith.mulf %181, %192 : vector<2x32xf32>
    %194 = arith.addf %190, %193 : vector<2x32xf32>
    %195 = math.tanh %194 : vector<2x32xf32>
    %cst_40 = arith.constant 1.000000e+00 : f32
    %196 = vector.broadcast %cst_40 : f32 to vector<2x32xf32>
    %197 = arith.subf %196, %189 : vector<2x32xf32>
    %198 = arith.mulf %197, %195 : vector<2x32xf32>
    %199 = arith.mulf %189, %173 : vector<2x32xf32>
    %200 = arith.addf %198, %199 : vector<2x32xf32>
    %201 = arith.index_cast %165 : i32 to index
    %c0_41 = arith.constant 0 : index
    %c0_42 = arith.constant 0 : index
    %202 = vector.load %arg1[%201, %c0_41, %c0_42] : memref<4x2x96xf32, #tpu.memory_space<vmem>>, vector<1x2x96xf32>
    %203 = vector.shape_cast %202 : vector<1x2x96xf32> to vector<2x96xf32>
    %204 = vector.extract_strided_slice %167 {offsets = [0, 96], sizes = [2, 96], strides = [1, 1]} : vector<2x192xf32> to vector<2x96xf32>
    %205 = vector.extract_strided_slice %3 {offsets = [0, 32], sizes = [2, 32], strides = [1, 1]} : vector<2x64xf32> to vector<2x32xf32>
    %206 = vector.extract_strided_slice %164 {offsets = [0, 32], sizes = [2, 32], strides = [1, 1]} : vector<2x64xf32> to vector<2x32xf32>
    %207 = vector.extract_strided_slice %203 {offsets = [0, 0], sizes = [2, 32], strides = [1, 1]} : vector<2x96xf32> to vector<2x32xf32>
    %208 = vector.extract_strided_slice %204 {offsets = [0, 0], sizes = [2, 32], strides = [1, 1]} : vector<2x96xf32> to vector<2x32xf32>
    %209 = arith.addf %207, %208 : vector<2x32xf32>
    %210 = arith.negf %209 : vector<2x32xf32>
    %211 = math.exp %210 : vector<2x32xf32>
    %cst_43 = arith.constant 1.000000e+00 : f32
    %212 = vector.broadcast %cst_43 : f32 to vector<2x32xf32>
    %213 = arith.addf %212, %211 : vector<2x32xf32>
    %214 = arith.divf %212, %213 : vector<2x32xf32>
    %215 = vector.extract_strided_slice %203 {offsets = [0, 32], sizes = [2, 32], strides = [1, 1]} : vector<2x96xf32> to vector<2x32xf32>
    %216 = vector.extract_strided_slice %204 {offsets = [0, 32], sizes = [2, 32], strides = [1, 1]} : vector<2x96xf32> to vector<2x32xf32>
    %217 = arith.addf %215, %216 : vector<2x32xf32>
    %218 = arith.negf %217 : vector<2x32xf32>
    %219 = math.exp %218 : vector<2x32xf32>
    %cst_44 = arith.constant 1.000000e+00 : f32
    %220 = vector.broadcast %cst_44 : f32 to vector<2x32xf32>
    %221 = arith.addf %220, %219 : vector<2x32xf32>
    %222 = arith.divf %220, %221 : vector<2x32xf32>
    %223 = vector.extract_strided_slice %203 {offsets = [0, 64], sizes = [2, 32], strides = [1, 1]} : vector<2x96xf32> to vector<2x32xf32>
    %224 = vector.extract_strided_slice %204 {offsets = [0, 64], sizes = [2, 32], strides = [1, 1]} : vector<2x96xf32> to vector<2x32xf32>
    %225 = arith.addf %224, %205 : vector<2x32xf32>
    %226 = arith.mulf %214, %225 : vector<2x32xf32>
    %227 = arith.addf %223, %226 : vector<2x32xf32>
    %228 = math.tanh %227 : vector<2x32xf32>
    %cst_45 = arith.constant 1.000000e+00 : f32
    %229 = vector.broadcast %cst_45 : f32 to vector<2x32xf32>
    %230 = arith.subf %229, %222 : vector<2x32xf32>
    %231 = arith.mulf %230, %228 : vector<2x32xf32>
    %232 = arith.mulf %222, %206 : vector<2x32xf32>
    %233 = arith.addf %231, %232 : vector<2x32xf32>
    %234 = arith.truncf %200 : vector<2x32xf32> to vector<2x32xbf16>
    %235 = arith.index_cast %c2_i32 : i32 to index
    %c0_46 = arith.constant 0 : index
    %c0_47 = arith.constant 0 : index
    %236 = vector.load %arg4[%235, %c0_46, %c0_47] : memref<4x2x32xbf16, #tpu.memory_space<vmem>>, vector<1x2x32xbf16>
    %237 = vector.shape_cast %236 : vector<1x2x32xbf16> to vector<2x32xbf16>
    %238 = vector.shape_cast %234 : vector<2x32xbf16> to vector<1x2x32xbf16>
    tpu.vector_store %arg4[%235, %c0_46, %c0_47], %238 {strides = array<i32>} : memref<4x2x32xbf16, #tpu.memory_space<vmem>>, vector<1x2x32xbf16>,
    %239 = arith.truncf %233 : vector<2x32xf32> to vector<2x32xbf16>
    %240 = arith.index_cast %165 : i32 to index
    %c0_48 = arith.constant 0 : index
    %c0_49 = arith.constant 0 : index
    %241 = vector.load %arg5[%240, %c0_48, %c0_49] : memref<4x2x32xbf16, #tpu.memory_space<vmem>>, vector<1x2x32xbf16>
    %242 = vector.shape_cast %241 : vector<1x2x32xbf16> to vector<2x32xbf16>
    %243 = vector.shape_cast %239 : vector<2x32xbf16> to vector<1x2x32xbf16>
    tpu.vector_store %arg5[%240, %c0_48, %c0_49], %243 {strides = array<i32>} : memref<4x2x32xbf16, #tpu.memory_space<vmem>>, vector<1x2x32xbf16>,
    %244 = tpu.concatenate %200, %233 in 1 : vector<2x32xf32>, vector<2x32xf32> -> vector<2x64xf32>
    %c3_i32_50 = arith.constant 3 : i32
    %c3_i32_51 = arith.constant 3 : i32
    %245 = arith.subi %c3_i32_51, %c3_i32_50 : i32
    %246 = arith.truncf %244 : vector<2x64xf32> to vector<2x64xbf16>
    %cst_52 = arith.constant dense<0.000000e+00> : vector<2x192xf32>
    %247 = tpu.matmul %246, %0, %cst_52 {dimension_numbers = #tpu.dot_dimension_numbers<[1], [0], [0], [1], [0, 0, 1, 1], [], []>} : vector<2x64xbf16>, vector<64x192xbf16>, vector<2x192xf32> -> vector<2x192xf32>
    %248 = arith.index_cast %c3_i32_50 : i32 to index
    %c0_53 = arith.constant 0 : index
    %c0_54 = arith.constant 0 : index
    %249 = vector.load %arg0[%248, %c0_53, %c0_54] : memref<4x2x96xf32, #tpu.memory_space<vmem>>, vector<1x2x96xf32>
    %250 = vector.shape_cast %249 : vector<1x2x96xf32> to vector<2x96xf32>
    %251 = vector.extract_strided_slice %247 {offsets = [0, 0], sizes = [2, 96], strides = [1, 1]} : vector<2x192xf32> to vector<2x96xf32>
    %252 = vector.extract_strided_slice %3 {offsets = [0, 0], sizes = [2, 32], strides = [1, 1]} : vector<2x64xf32> to vector<2x32xf32>
    %253 = vector.extract_strided_slice %244 {offsets = [0, 0], sizes = [2, 32], strides = [1, 1]} : vector<2x64xf32> to vector<2x32xf32>
    %254 = vector.extract_strided_slice %250 {offsets = [0, 0], sizes = [2, 32], strides = [1, 1]} : vector<2x96xf32> to vector<2x32xf32>
    %255 = vector.extract_strided_slice %251 {offsets = [0, 0], sizes = [2, 32], strides = [1, 1]} : vector<2x96xf32> to vector<2x32xf32>
    %256 = arith.addf %254, %255 : vector<2x32xf32>
    %257 = arith.negf %256 : vector<2x32xf32>
    %258 = math.exp %257 : vector<2x32xf32>
    %cst_55 = arith.constant 1.000000e+00 : f32
    %259 = vector.broadcast %cst_55 : f32 to vector<2x32xf32>
    %260 = arith.addf %259, %258 : vector<2x32xf32>
    %261 = arith.divf %259, %260 : vector<2x32xf32>
    %262 = vector.extract_strided_slice %250 {offsets = [0, 32], sizes = [2, 32], strides = [1, 1]} : vector<2x96xf32> to vector<2x32xf32>
    %263 = vector.extract_strided_slice %251 {offsets = [0, 32], sizes = [2, 32], strides = [1, 1]} : vector<2x96xf32> to vector<2x32xf32>
    %264 = arith.addf %262, %263 : vector<2x32xf32>
    %265 = arith.negf %264 : vector<2x32xf32>
    %266 = math.exp %265 : vector<2x32xf32>
    %cst_56 = arith.constant 1.000000e+00 : f32
    %267 = vector.broadcast %cst_56 : f32 to vector<2x32xf32>
    %268 = arith.addf %267, %266 : vector<2x32xf32>
    %269 = arith.divf %267, %268 : vector<2x32xf32>
    %270 = vector.extract_strided_slice %250 {offsets = [0, 64], sizes = [2, 32], strides = [1, 1]} : vector<2x96xf32> to vector<2x32xf32>
    %271 = vector.extract_strided_slice %251 {offsets = [0, 64], sizes = [2, 32], strides = [1, 1]} : vector<2x96xf32> to vector<2x32xf32>
    %272 = arith.addf %271, %252 : vector<2x32xf32>
    %273 = arith.mulf %261, %272 : vector<2x32xf32>
    %274 = arith.addf %270, %273 : vector<2x32xf32>
    %275 = math.tanh %274 : vector<2x32xf32>
    %cst_57 = arith.constant 1.000000e+00 : f32
    %276 = vector.broadcast %cst_57 : f32 to vector<2x32xf32>
    %277 = arith.subf %276, %269 : vector<2x32xf32>
    %278 = arith.mulf %277, %275 : vector<2x32xf32>
    %279 = arith.mulf %269, %253 : vector<2x32xf32>
    %280 = arith.addf %278, %279 : vector<2x32xf32>
    %281 = arith.index_cast %245 : i32 to index
    %c0_58 = arith.constant 0 : index
    %c0_59 = arith.constant 0 : index
    %282 = vector.load %arg1[%281, %c0_58, %c0_59] : memref<4x2x96xf32, #tpu.memory_space<vmem>>, vector<1x2x96xf32>
    %283 = vector.shape_cast %282 : vector<1x2x96xf32> to vector<2x96xf32>
    %284 = vector.extract_strided_slice %247 {offsets = [0, 96], sizes = [2, 96], strides = [1, 1]} : vector<2x192xf32> to vector<2x96xf32>
    %285 = vector.extract_strided_slice %3 {offsets = [0, 32], sizes = [2, 32], strides = [1, 1]} : vector<2x64xf32> to vector<2x32xf32>
    %286 = vector.extract_strided_slice %244 {offsets = [0, 32], sizes = [2, 32], strides = [1, 1]} : vector<2x64xf32> to vector<2x32xf32>
    %287 = vector.extract_strided_slice %283 {offsets = [0, 0], sizes = [2, 32], strides = [1, 1]} : vector<2x96xf32> to vector<2x32xf32>
    %288 = vector.extract_strided_slice %284 {offsets = [0, 0], sizes = [2, 32], strides = [1, 1]} : vector<2x96xf32> to vector<2x32xf32>
    %289 = arith.addf %287, %288 : vector<2x32xf32>
    %290 = arith.negf %289 : vector<2x32xf32>
    %291 = math.exp %290 : vector<2x32xf32>
    %cst_60 = arith.constant 1.000000e+00 : f32
    %292 = vector.broadcast %cst_60 : f32 to vector<2x32xf32>
    %293 = arith.addf %292, %291 : vector<2x32xf32>
    %294 = arith.divf %292, %293 : vector<2x32xf32>
    %295 = vector.extract_strided_slice %283 {offsets = [0, 32], sizes = [2, 32], strides = [1, 1]} : vector<2x96xf32> to vector<2x32xf32>
    %296 = vector.extract_strided_slice %284 {offsets = [0, 32], sizes = [2, 32], strides = [1, 1]} : vector<2x96xf32> to vector<2x32xf32>
    %297 = arith.addf %295, %296 : vector<2x32xf32>
    %298 = arith.negf %297 : vector<2x32xf32>
    %299 = math.exp %298 : vector<2x32xf32>
    %cst_61 = arith.constant 1.000000e+00 : f32
    %300 = vector.broadcast %cst_61 : f32 to vector<2x32xf32>
    %301 = arith.addf %300, %299 : vector<2x32xf32>
    %302 = arith.divf %300, %301 : vector<2x32xf32>
    %303 = vector.extract_strided_slice %283 {offsets = [0, 64], sizes = [2, 32], strides = [1, 1]} : vector<2x96xf32> to vector<2x32xf32>
    %304 = vector.extract_strided_slice %284 {offsets = [0, 64], sizes = [2, 32], strides = [1, 1]} : vector<2x96xf32> to vector<2x32xf32>
    %305 = arith.addf %304, %285 : vector<2x32xf32>
    %306 = arith.mulf %294, %305 : vector<2x32xf32>
    %307 = arith.addf %303, %306 : vector<2x32xf32>
    %308 = math.tanh %307 : vector<2x32xf32>
    %cst_62 = arith.constant 1.000000e+00 : f32
    %309 = vector.broadcast %cst_62 : f32 to vector<2x32xf32>
    %310 = arith.subf %309, %302 : vector<2x32xf32>
    %311 = arith.mulf %310, %308 : vector<2x32xf32>
    %312 = arith.mulf %302, %286 : vector<2x32xf32>
    %313 = arith.addf %311, %312 : vector<2x32xf32>
    %314 = arith.truncf %280 : vector<2x32xf32> to vector<2x32xbf16>
    %315 = arith.index_cast %c3_i32_50 : i32 to index
    %c0_63 = arith.constant 0 : index
    %c0_64 = arith.constant 0 : index
    %316 = vector.load %arg4[%315, %c0_63, %c0_64] : memref<4x2x32xbf16, #tpu.memory_space<vmem>>, vector<1x2x32xbf16>
    %317 = vector.shape_cast %316 : vector<1x2x32xbf16> to vector<2x32xbf16>
    %318 = vector.shape_cast %314 : vector<2x32xbf16> to vector<1x2x32xbf16>
    tpu.vector_store %arg4[%315, %c0_63, %c0_64], %318 {strides = array<i32>} : memref<4x2x32xbf16, #tpu.memory_space<vmem>>, vector<1x2x32xbf16>,
    %319 = arith.truncf %313 : vector<2x32xf32> to vector<2x32xbf16>
    %320 = arith.index_cast %245 : i32 to index
    %c0_65 = arith.constant 0 : index
    %c0_66 = arith.constant 0 : index
    %321 = vector.load %arg5[%320, %c0_65, %c0_66] : memref<4x2x32xbf16, #tpu.memory_space<vmem>>, vector<1x2x32xbf16>
    %322 = vector.shape_cast %321 : vector<1x2x32xbf16> to vector<2x32xbf16>
    %323 = vector.shape_cast %319 : vector<2x32xbf16> to vector<1x2x32xbf16>
    tpu.vector_store %arg5[%320, %c0_65, %c0_66], %323 {strides = array<i32>} : memref<4x2x32xbf16, #tpu.memory_space<vmem>>, vector<1x2x32xbf16>,
    %324 = tpu.concatenate %280, %313 in 1 : vector<2x32xf32>, vector<2x32xf32> -> vector<2x64xf32>
    %c4_i32 = arith.constant 4 : i32
    return
  }
}

module attributes {stable_mosaic.version = 11 : i64} {
  func.func @_matmul_bias_kernel(%arg0: i32, %arg1: memref<8x64xbf16, #tpu.memory_space<vmem>>, %arg2: memref<64x128xbf16, #tpu.memory_space<vmem>>, %arg3: memref<1x128xf32, #tpu.memory_space<vmem>>, %arg4: memref<8x128xf32, #tpu.memory_space<vmem>>) attributes {dimension_semantics = [#tpu.dimension_semantics<parallel>], iteration_bounds = array<i64: 1>, scalar_prefetch = 0 : i64, scratch_operands = 0 : i64, tpu.core_type = #tpu.core_type<tc>, window_params = [{transform_indices = @transform_0, window_bounds = array<i64: 8, 64>}, {pipeline_mode = #tpu.pipeline_mode<synchronous>, transform_indices = @transform_1, window_bounds = array<i64: 64, 128>}, {pipeline_mode = #tpu.pipeline_mode<synchronous>, transform_indices = @transform_2, window_bounds = array<i64: 1, 128>}, {transform_indices = @transform_3, window_bounds = array<i64: 8, 128>}]} {
    %c0 = arith.constant 0 : index
    %c0_0 = arith.constant 0 : index
    %0 = vector.load %arg1[%c0, %c0_0] : memref<8x64xbf16, #tpu.memory_space<vmem>>, vector<8x64xbf16>
    %c0_1 = arith.constant 0 : index
    %c0_2 = arith.constant 0 : index
    %1 = vector.load %arg2[%c0_1, %c0_2] : memref<64x128xbf16, #tpu.memory_space<vmem>>, vector<64x128xbf16>
    %cst = arith.constant dense<0.000000e+00> : vector<8x128xf32>
    %2 = tpu.matmul %0, %1, %cst {dimension_numbers = #tpu.dot_dimension_numbers<[1], [0], [0], [1], [0, 0, 1, 1], [], []>} : vector<8x64xbf16>, vector<64x128xbf16>, vector<8x128xf32> -> vector<8x128xf32>
    %c0_3 = arith.constant 0 : index
    %c0_4 = arith.constant 0 : index
    %3 = vector.load %arg3[%c0_3, %c0_4] : memref<1x128xf32, #tpu.memory_space<vmem>>, vector<1x128xf32>
    %4 = vector.broadcast %3 : vector<1x128xf32> to vector<8x128xf32>
    %5 = arith.addf %2, %4 : vector<8x128xf32>
    %c0_5 = arith.constant 0 : index
    %c0_6 = arith.constant 0 : index
    %6 = vector.load %arg4[%c0_5, %c0_6] : memref<8x128xf32, #tpu.memory_space<vmem>>, vector<8x128xf32>
    tpu.vector_store %arg4[%c0_5, %c0_6], %5 {strides = array<i32>} : memref<8x128xf32, #tpu.memory_space<vmem>>, vector<8x128xf32>,
    return
  }
  func.func @transform_0(%arg0: i32) -> (i32, i32) {
    %c0_i32 = arith.constant 0 : i32
    %c0_i32_0 = arith.constant 0 : i32
    return %arg0, %c0_i32 : i32, i32
  }
  func.func @transform_1(%arg0: i32) -> (i32, i32) {
    %c0_i32 = arith.constant 0 : i32
    %c0_i32_0 = arith.constant 0 : i32
    %c0_i32_1 = arith.constant 0 : i32
    return %c0_i32, %c0_i32_0 : i32, i32
  }
  func.func @transform_2(%arg0: i32) -> (i32, i32) {
    %c0_i32 = arith.constant 0 : i32
    %c0_i32_0 = arith.constant 0 : i32
    %c0_i32_1 = arith.constant 0 : i32
    return %c0_i32, %c0_i32_0 : i32, i32
  }
  func.func @transform_3(%arg0: i32) -> (i32, i32) {
    %c0_i32 = arith.constant 0 : i32
    %c0_i32_0 = arith.constant 0 : i32
    return %arg0, %c0_i32 : i32, i32
  }
}

</mosaic_0001>

<llo_original>
// kernel: captcha_forward.9
$region0: #{captcha_forward.9}
  #allocation0 [shape = 'u32[]', space=smem, size = 0x4, offset = 0x4, fixed_abs, tag = 'smem constant byte address 0x4 - core index']
  #allocation1 [shape = 'u32[144,128]{1,0:T(1,128)}', space=vmem, size = 0x12000, scoped, tag = 'internal scratch']
  #allocation2 [shape = 'f32[10,10,128]{2,1,0:T(8,128)}', space=vmem, size = 0x14000, scoped, tag = 'scratch operand']
  %s0 = inlined_call_operand.vmem [shape: bf16[2,8,8,128], index: 0, kind: input, shape index: {}]
  %s1 = inlined_call_operand.vmem [shape: bf16[9,128,64], index: 1, kind: input, shape index: {}]
  %s2 = inlined_call_operand.vmem [shape: f32[1,64], index: 2, kind: input, shape index: {}]
  %s3 = inlined_call_operand.vmem [shape: bf16[2,4,4,64], index: 3, kind: output, shape index: {}]
  %s4 = sld [smem:[#allocation0]]
  $region45: #{captcha_forward.9} parent=0
    _
  %s6 = ssub.s32 1, %s4
  %s7 = scalar_select 0, %s6, %s4
  loop: start=0, step=1, limit=4
  $region2: #{captcha_forward.9} parent=0 // loop_pre_header
    _
  $region3: #{captcha_forward.9} parent=0 // loop_header
    %s9 = sphi 0, %s13
    %p10 = scmp.ge.s32.totalorder %s9, 4
    %s19 = sphi 0, %s21
    %s22 = sphi 0, %s19
    %s23 = sphi 0, %s22
    %s39 = sphi 0, %s23
    %s43 = sphi 0, %s43
    %s45 = sphi 0, %s43
    %s46 = sphi 0, %s45
    %s60 = sphi 0, %s46
    %s64 = sphi 0, %s64
    %s66 = sphi 0, %s64
    %s67 = sphi 0, %s66
    %s81 = sphi 0, %s67
    %s87 = sphi 0, %s89
    %s90 = sphi 0, %s87
    %s91 = sphi 0, %s90
    %s107 = sphi 0, %s91
  $region4: #{captcha_forward.9} parent=0 // loop_header_branch
    %12 = sbr.rel (%p10) target = $region8
  $region5: #{captcha_forward.9} parent=0 // loop_body
    %s14 = ssub.s32 %s9, 1
    %s15 = ssub.s32 %s9, 2
    %s16 = sadd.s32 %s9, 1
    %s17 = ssub.s32 %s9, %s16
    %p18 = scmp.eq.s32.totalorder %s17, 0
    %s20 = sadd.s32 %s19, 1
    %s21 = scalar_select %p18, %s19, %s20
    %p24 = pneg %p18
    %p25 = scmp.eq.s32.totalorder %s9, 1
    %p26 = por %p24, %p25
    %p27 = scmp.ne.s32.totalorder %s19, %s22
    %p28 = scmp.eq.s32.totalorder %s9, 0
    %p29 = por %p27, %p28
    %p30 = scmp.ne.s32.totalorder %s19, %s22
    %p31 = scmp.eq.s32.totalorder %s14, 1
    %p32 = por %p30, %p31
    %p33 = scmp.ne.s32.totalorder %s22, %s23
    %p34 = scmp.eq.s32.totalorder %s14, 0
    %p35 = por %p33, %p34
    %p36 = scmp.ne.s32.totalorder %s22, %s23
    %p37 = scmp.eq.s32.totalorder %s15, 1
    %p38 = por %p36, %p37
    %p40 = scmp.ne.s32.totalorder %s23, %s39
    %p41 = scmp.eq.s32.totalorder %s15, 0
    %p42 = por %p40, %p41
    %s44 = sadd.s32 %s43, 1
    %p47 = scmp.eq.s32.totalorder %s9, 1
    %p48 = scmp.ne.s32.totalorder %s43, %s45
    %p49 = scmp.eq.s32.totalorder %s9, 0
    %p50 = por %p48, %p49
    %p51 = scmp.ne.s32.totalorder %s43, %s45
    %p52 = scmp.eq.s32.totalorder %s14, 1
    %p53 = por %p51, %p52
    %p54 = scmp.ne.s32.totalorder %s45, %s46
    %p55 = scmp.eq.s32.totalorder %s14, 0
    %p56 = por %p54, %p55
    %p57 = scmp.ne.s32.totalorder %s45, %s46
    %p58 = scmp.eq.s32.totalorder %s15, 1
    %p59 = por %p57, %p58
    %p61 = scmp.ne.s32.totalorder %s46, %s60
    %p62 = scmp.eq.s32.totalorder %s15, 0
    %p63 = por %p61, %p62
    %s65 = sadd.s32 %s64, 1
    %p68 = scmp.eq.s32.totalorder %s9, 1
    %p69 = scmp.ne.s32.totalorder %s64, %s66
    %p70 = scmp.eq.s32.totalorder %s9, 0
    %p71 = por %p69, %p70
    %p72 = scmp.ne.s32.totalorder %s64, %s66
    %p73 = scmp.eq.s32.totalorder %s14, 1
    %p74 = por %p72, %p73
    %p75 = scmp.ne.s32.totalorder %s66, %s67
    %p76 = scmp.eq.s32.totalorder %s14, 0
    %p77 = por %p75, %p76
    %p78 = scmp.ne.s32.totalorder %s66, %s67
    %p79 = scmp.eq.s32.totalorder %s15, 1
    %p80 = por %p78, %p79
    %p82 = scmp.ne.s32.totalorder %s67, %s81
    %p83 = scmp.eq.s32.totalorder %s15, 0
    %p84 = por %p82, %p83
    %s85 = ssub.s32 %s9, %s16
    %p86 = scmp.eq.s32.totalorder %s85, 0
    %s88 = sadd.s32 %s87, 1
    %s89 = scalar_select %p86, %s87, %s88
    %p92 = pneg %p86
    %p93 = scmp.eq.s32.totalorder %s9, 1
    %p94 = por %p92, %p93
    %p95 = scmp.ne.s32.totalorder %s87, %s90
    %p96 = scmp.eq.s32.totalorder %s9, 0
    %p97 = por %p95, %p96
    %p98 = scmp.ne.s32.totalorder %s87, %s90
    %p99 = scmp.eq.s32.totalorder %s14, 1
    %p100 = por %p98, %p99
    %p101 = scmp.ne.s32.totalorder %s90, %s91
    %p102 = scmp.eq.s32.totalorder %s14, 0
    %p103 = por %p101, %p102
    %p104 = scmp.ne.s32.totalorder %s90, %s91
    %p105 = scmp.eq.s32.totalorder %s15, 1
    %p106 = por %p104, %p105
    %p108 = scmp.ne.s32.totalorder %s91, %s107
    %p109 = scmp.eq.s32.totalorder %s15, 0
    %p110 = por %p108, %p109
    %p111 = scmp.le.s32.totalorder 1, %s9
    %p112 = scmp.lt.s32.totalorder %s9, 3
    %p113 = pnand %p111, %p112
    %p114 = pneg %p113
    // Predicated region
    $region9: #{captcha_forward.9} parent=5 // pred_check
      _
    $region10: #{captcha_forward.9} parent=5 // pred_check_branch
      %116 = sbr.rel (%p113) target = $region12
    $region11: #{captcha_forward.9} parent=5 // pred_region
      %s117 = ssub.s32 %s9, 1
      // Predicated region
      $region13: #{captcha_forward.9} parent=11 // pred_check
        %p118 = pneg %p56
      $region14: #{captcha_forward.9} parent=11 // pred_check_branch
        %120 = sbr.rel (%p118) target = $region16
      $region15: #{captcha_forward.9} parent=11 // pred_region
        _
      $region16: #{captcha_forward.9} parent=11 // pred_fallthru
        _
      // Predicated region
      $region17: #{captcha_forward.9} parent=11 // pred_check
        %p121 = pneg %p77
      $region18: #{captcha_forward.9} parent=11 // pred_check_branch
        %123 = sbr.rel (%p121) target = $region20
      $region19: #{captcha_forward.9} parent=11 // pred_region
        _
      $region20: #{captcha_forward.9} parent=11 // pred_fallthru
        _
    $region12: #{captcha_forward.9} parent=5 // pred_fallthru
      _
    %p124 = scmp.lt.s32.totalorder %s9, 2
    // Predicated region
    $region21: #{captcha_forward.9} parent=5 // pred_check
      %p125 = pneg %p124
    $region22: #{captcha_forward.9} parent=5 // pred_check_branch
      %127 = sbr.rel (%p125) target = $region24
    $region23: #{captcha_forward.9} parent=5 // pred_region
      // Predicated region
      $region25: #{captcha_forward.9} parent=23 // pred_check
        %p128 = pneg %p29
      $region26: #{captcha_forward.9} parent=23 // pred_check_branch
        %130 = sbr.rel (%p128) target = $region28
      $region27: #{captcha_forward.9} parent=23 // pred_region
        %p131 = scmp.lt.s32.totalorder %s9, 1
        %s132 = scalar_select %p131, %s9, 1
        %s133 = smul.addr %s132, 8
        %s134 = smul.addr %s133, 4
        %s135 = scalar_lea.vmem %s0, %s134
      $region28: #{captcha_forward.9} parent=23 // pred_fallthru
        _
    $region24: #{captcha_forward.9} parent=5 // pred_fallthru
      _
    %p136 = scmp.le.s32.totalorder 1, %s9
    %p137 = scmp.lt.s32.totalorder %s9, 3
    %p138 = pnand %p136, %p137
    %p139 = pneg %p138
    // Predicated region
    $region29: #{captcha_forward.9} parent=5 // pred_check
      _
    $region30: #{captcha_forward.9} parent=5 // pred_check_branch
      %141 = sbr.rel (%p138) target = $region32
    $region31: #{captcha_forward.9} parent=5 // pred_region
      %s142 = ssub.s32 %s9, 1
      %p143 = scmp.lt.s32.totalorder %s14, 1
      %s144 = scalar_select %p143, %s14, 1
      %s145 = smul.addr %s144, 8
      %s146 = smul.addr %s145, 4
      %s147 = scalar_lea.vmem %s0, %s146
      %p148 = pneg %p35
      %p149 = pneg %p32
      %p150 = pneg %p56
      %p151 = pneg %p53
      %p152 = pneg %p77
      %p153 = pneg %p74
      %p154 = pneg %p103
      %p155 = pneg %p100
      %p156 = scmp.lt.s32.totalorder %s14, 1
      %s157 = scalar_select %p156, %s14, 1
      %s158 = smul.addr %s157, 4
      %s159 = smul.addr %s158, 2
      %s160 = scalar_lea.vmem %s3, %s159
      %p161 = scmp.lt.s32.totalorder %s14, 1
      %s162 = scalar_select %p161, %s14, 1
      %s163 = smul.addr %s162, 8
      %s164 = smul.addr %s163, 4
      %s165 = scalar_lea.vmem %s0, %s164
      %p166 = scmp.lt.s32.totalorder %s14, 1
      %s167 = scalar_select %p166, %s14, 1
      %s168 = smul.addr %s167, 4
      %s169 = smul.addr %s168, 2
      %s170 = scalar_lea.vmem %s3, %s169
      %172 = vst [vmem:[#allocation2] sm:$0xff] 0.0
      %173 = vst [vmem:[#allocation2 + $0x8] sm:$0x3] 0.0
      %174 = vst [vmem:[#allocation2 + $0x10] sm:$0xff] 0.0
      %175 = vst [vmem:[#allocation2 + $0x18] sm:$0x3] 0.0
      %176 = vst [vmem:[#allocation2 + $0x20] sm:$0xff] 0.0
      %177 = vst [vmem:[#allocation2 + $0x28] sm:$0x3] 0.0
      %178 = vst [vmem:[#allocation2 + $0x30] sm:$0xff] 0.0
      %179 = vst [vmem:[#allocation2 + $0x38] sm:$0x3] 0.0
      %180 = vst [vmem:[#allocation2 + $0x40] sm:$0xff] 0.0
      %181 = vst [vmem:[#allocation2 + $0x48] sm:$0x3] 0.0
      %182 = vst [vmem:[#allocation2 + $0x50] sm:$0xff] 0.0
      %183 = vst [vmem:[#allocation2 + $0x58] sm:$0x3] 0.0
      %184 = vst [vmem:[#allocation2 + $0x60] sm:$0xff] 0.0
      %185 = vst [vmem:[#allocation2 + $0x68] sm:$0x3] 0.0
      %186 = vst [vmem:[#allocation2 + $0x70] sm:$0xff] 0.0
      %187 = vst [vmem:[#allocation2 + $0x78] sm:$0x3] 0.0
      %188 = vst [vmem:[#allocation2 + $0x80] sm:$0xff] 0.0
      %189 = vst [vmem:[#allocation2 + $0x88] sm:$0x3] 0.0
      %190 = vst [vmem:[#allocation2 + $0x90] sm:$0xff] 0.0
      %191 = vst [vmem:[#allocation2 + $0x98] sm:$0x3] 0.0
      %v192 = vld [vmem:[%s165] sm:$0xf]
      %v193 = vld [vmem:[%s165 + $0x4] sm:$0xf]
      %v194 = vld [vmem:[%s165 + $0x8] sm:$0xf]
      %v195 = vld [vmem:[%s165 + $0xc] sm:$0xf]
      %v196 = vld [vmem:[%s165 + $0x10] sm:$0xf]
      %v197 = vld [vmem:[%s165 + $0x14] sm:$0xf]
      %v198 = vld [vmem:[%s165 + $0x18] sm:$0xf]
      %v199 = vld [vmem:[%s165 + $0x1c] sm:$0xf]
      %v200 = vunpack.c.l.bf16 %v192
      %v201 = vunpack.c.l.bf16 %v193
      %v202 = vunpack.c.l.bf16 %v194
      %v203 = vunpack.c.l.bf16 %v195
      %v204 = vunpack.c.l.bf16 %v196
      %v205 = vunpack.c.l.bf16 %v197
      %v206 = vunpack.c.l.bf16 %v198
      %v207 = vunpack.c.l.bf16 %v199
      %s208 = scalar_lea.vmem [#allocation2], 16
      %209 = vst [vmem:[%s208 + $0x1] sm:$0xff] %v200
      %210 = vst [vmem:[%s208 + $0x11] sm:$0xff] %v201
      %211 = vst [vmem:[%s208 + $0x21] sm:$0xff] %v202
      %212 = vst [vmem:[%s208 + $0x31] sm:$0xff] %v203
      %213 = vst [vmem:[%s208 + $0x41] sm:$0xff] %v204
      %214 = vst [vmem:[%s208 + $0x51] sm:$0xff] %v205
      %215 = vst [vmem:[%s208 + $0x61] sm:$0xff] %v206
      %216 = vst [vmem:[%s208 + $0x71] sm:$0xff] %v207
      %v217 = vld [vmem:[#allocation2] sm:$0xff]
      %v218 = vld [vmem:[#allocation2 + $0x10] sm:$0xff]
      %v219 = vld [vmem:[#allocation2 + $0x20] sm:$0xff]
      %v220 = vld [vmem:[#allocation2 + $0x30] sm:$0xff]
      %v221 = vld [vmem:[#allocation2 + $0x40] sm:$0xff]
      %v222 = vld [vmem:[#allocation2 + $0x50] sm:$0xff]
      %v223 = vld [vmem:[#allocation2 + $0x60] sm:$0xff]
      %v224 = vld [vmem:[#allocation2 + $0x70] sm:$0xff]
      %v225 = vpack.c.bf16 %v217, %v217
      %v226 = vpack.c.bf16 %v218, %v218
      %v227 = vpack.c.bf16 %v219, %v219
      %v228 = vpack.c.bf16 %v220, %v220
      %v229 = vpack.c.bf16 %v221, %v221
      %v230 = vpack.c.bf16 %v222, %v222
      %v231 = vpack.c.bf16 %v223, %v223
      %v232 = vpack.c.bf16 %v224, %v224
      %v233 = vld [vmem:[%s1] sm:$0xf]
      %v234 = vld [vmem:[%s1 + $0x4] sm:$0xf]
      %v235 = vld [vmem:[%s1 + $0x8] sm:$0xf]
      %v236 = vld [vmem:[%s1 + $0xc] sm:$0xf]
      %v237 = vld [vmem:[%s1 + $0x10] sm:$0xf]
      %v238 = vld [vmem:[%s1 + $0x14] sm:$0xf]
      %v239 = vld [vmem:[%s1 + $0x18] sm:$0xf]
      %v240 = vld [vmem:[%s1 + $0x1c] sm:$0xf]
      %v241 = vld [vmem:[%s1 + $0x20] sm:$0xf]
      %v242 = vld [vmem:[%s1 + $0x24] sm:$0xf]
      %v243 = vld [vmem:[%s1 + $0x28] sm:$0xf]
      %v244 = vld [vmem:[%s1 + $0x2c] sm:$0xf]
      %v245 = vld [vmem:[%s1 + $0x30] sm:$0xf]
      %v246 = vld [vmem:[%s1 + $0x34] sm:$0xf]
      %v247 = vld [vmem:[%s1 + $0x38] sm:$0xf]
      %v248 = vld [vmem:[%s1 + $0x3c] sm:$0xf]
      %v249 = vld [vmem:[#allocation2 + $0x1] sm:$0xff]
      %v250 = vld [vmem:[#allocation2 + $0x11] sm:$0xff]
      %v251 = vld [vmem:[#allocation2 + $0x21] sm:$0xff]
      %v252 = vld [vmem:[#allocation2 + $0x31] sm:$0xff]
      %v253 = vld [vmem:[#allocation2 + $0x41] sm:$0xff]
      %v254 = vld [vmem:[#allocation2 + $0x51] sm:$0xff]
      %v255 = vld [vmem:[#allocation2 + $0x61] sm:$0xff]
      %v256 = vld [vmem:[#allocation2 + $0x71] sm:$0xff]
      %v257 = vpack.c.bf16 %v249, %v249
      %v258 = vpack.c.bf16 %v250, %v250
      %v259 = vpack.c.bf16 %v251, %v251
      %v260 = vpack.c.bf16 %v252, %v252
      %v261 = vpack.c.bf16 %v253, %v253
      %v262 = vpack.c.bf16 %v254, %v254
      %v263 = vpack.c.bf16 %v255, %v255
      %v264 = vpack.c.bf16 %v256, %v256
      %s265 = scalar_lea.vmem %s1, 64
      %v266 = vld [vmem:[%s265] sm:$0xf]
      %v267 = vld [vmem:[%s265 + $0x4] sm:$0xf]
      %v268 = vld [vmem:[%s265 + $0x8] sm:$0xf]
      %v269 = vld [vmem:[%s265 + $0xc] sm:$0xf]
      %v270 = vld [vmem:[%s265 + $0x10] sm:$0xf]
      %v271 = vld [vmem:[%s265 + $0x14] sm:$0xf]
      %v272 = vld [vmem:[%s265 + $0x18] sm:$0xf]
      %v273 = vld [vmem:[%s265 + $0x1c] sm:$0xf]
      %v274 = vld [vmem:[%s265 + $0x20] sm:$0xf]
      %v275 = vld [vmem:[%s265 + $0x24] sm:$0xf]
      %v276 = vld [vmem:[%s265 + $0x28] sm:$0xf]
      %v277 = vld [vmem:[%s265 + $0x2c] sm:$0xf]
      %v278 = vld [vmem:[%s265 + $0x30] sm:$0xf]
      %v279 = vld [vmem:[%s265 + $0x34] sm:$0xf]
      %v280 = vld [vmem:[%s265 + $0x38] sm:$0xf]
      %v281 = vld [vmem:[%s265 + $0x3c] sm:$0xf]
      %v290 = vunpack.c.l.b16 %v257
      %v291 = vunpack.c.l.b16 %v258
      %v292 = vunpack.c.l.b16 %v259
      %v293 = vunpack.c.l.b16 %v260
      %v294 = vunpack.c.l.b16 %v261
      %v295 = vunpack.c.l.b16 %v262
      %v296 = vunpack.c.l.b16 %v263
      %v297 = vunpack.c.l.b16 %v264
      %v298 = vpack.c.b16 %v291, %v290
      %v299 = vpack.c.b16 %v293, %v292
      %v300 = vpack.c.b16 %v295, %v294
      %v301 = vpack.c.b16 %v297, %v296
      %v322 = vunpack.c.l.b16 %v266
      %v323 = vunpack.c.l.b16 %v267
      %v324 = vunpack.c.l.b16 %v268
      %v325 = vunpack.c.l.b16 %v269
      %v326 = vunpack.c.l.b16 %v270
      %v327 = vunpack.c.l.b16 %v271
      %v328 = vunpack.c.l.b16 %v272
      %v329 = vunpack.c.l.b16 %v273
      %v330 = vunpack.c.l.b16 %v274
      %v331 = vunpack.c.l.b16 %v275
      %v332 = vunpack.c.l.b16 %v276
      %v333 = vunpack.c.l.b16 %v277
      %v334 = vunpack.c.l.b16 %v278
      %v335 = vunpack.c.l.b16 %v279
      %v336 = vunpack.c.l.b16 %v280
      %v337 = vunpack.c.l.b16 %v281
      %v338 = vpack.c.b16 %v323, %v322
      %v339 = vpack.c.b16 %v325, %v324
      %v340 = vpack.c.b16 %v327, %v326
      %v341 = vpack.c.b16 %v329, %v328
      %v342 = vpack.c.b16 %v331, %v330
      %v343 = vpack.c.b16 %v333, %v332
      %v344 = vpack.c.b16 %v335, %v334
      %v345 = vpack.c.b16 %v337, %v336
      %354 = vmatprep.subr.bf16.mxu0 0
      %355 = vmatpush1.bf16.msra.mxu0 %v345
      %356 = vmatprep.subr.bf16.mxu0 0
      %357 = vmatpush1.bf16.msra.mxu0 %v344
      %358 = vmatprep.subr.bf16.mxu0 0
      %359 = vmatpush1.bf16.msra.mxu0 %v343
      %360 = vmatprep.subr.bf16.mxu0 0
      %361 = vmatpush1.bf16.msra.mxu0 %v342
      %362 = vmatprep.subr.bf16.mxu0 0
      %363 = vmatpush1.bf16.msra.mxu0 %v341
      %364 = vmatprep.subr.bf16.mxu0 0
      %365 = vmatpush1.bf16.msra.mxu0 %v340
      %366 = vmatprep.subr.bf16.mxu0 0
      %367 = vmatpush1.bf16.msra.mxu0 %v339
      %368 = vmatprep.subr.bf16.mxu0 0
      %369 = vmatpush1.bf16.msra.mxu0 %v338
      %370 = vmatprep.subr.bf16.mxu0 0
      %371 = vmatpush2.bf16.msra.mxu0 0
      %372 = vmatprep.subr.bf16.mxu0 0
      %373 = vmatpush2.bf16.msra.mxu0 0
      %374 = vmatprep.subr.bf16.mxu0 0
      %375 = vmatpush2.bf16.msra.mxu0 0
      %376 = vmatprep.subr.bf16.mxu0 0
      %377 = vmatpush2.bf16.msra.mxu0 0
      %378 = vmatprep.subr.bf16.mxu0 0
      %379 = vmatpush2.bf16.msra.mxu0 0
      %380 = vmatprep.subr.bf16.mxu0 0
      %381 = vmatpush2.bf16.msra.mxu0 0
      %382 = vmatprep.subr.bf16.mxu0 0
      %383 = vmatpush2.bf16.msra.mxu0 0
      %384 = vmatprep.subr.bf16.mxu0 0
      %385 = vmatpush2.bf16.msra.mxu0 0
      %386 = vmatprep.mubr.bf16.mxu0 0
      %387 = vmatmul.mubr.bf16.gmra.mxu0 %v298
      %v388 = vpop.f32.mrf.mxu0
      %v389 = vadd.f32 0.0, %v388
      %v390 = vpop.f32.mrf.mxu0
      %v391 = vpop.f32.mrf.mxu0
      %v392 = vadd.f32 0.0, %v391
      %v393 = vpop.f32.mrf.mxu0
      %394 = vmatprep.mubr.bf16.mxu0 0
      %395 = vmatmul.mubr.bf16.gmra.mxu0 %v299
      %v396 = vpop.f32.mrf.mxu0
      %v397 = vadd.f32 0.0, %v396
      %v398 = vpop.f32.mrf.mxu0
      %v399 = vpop.f32.mrf.mxu0
      %v400 = vadd.f32 0.0, %v399
      %v401 = vpop.f32.mrf.mxu0
      %402 = vmatprep.mubr.bf16.mxu0 0
      %403 = vmatmul.mubr.bf16.gmra.mxu0 %v300
      %v404 = vpop.f32.mrf.mxu0
      %v405 = vadd.f32 0.0, %v404
      %v406 = vpop.f32.mrf.mxu0
      %v407 = vpop.f32.mrf.mxu0
      %v408 = vadd.f32 0.0, %v407
      %v409 = vpop.f32.mrf.mxu0
      %410 = vmatprep.mubr.bf16.mxu0 0
      %411 = vmatmul.mubr.bf16.gmra.mxu0 %v301
      %v412 = vpop.f32.mrf.mxu0
      %v413 = vadd.f32 0.0, %v412
      %v414 = vpop.f32.mrf.mxu0
      %v415 = vpop.f32.mrf.mxu0
      %v416 = vadd.f32 0.0, %v415
      %v417 = vpop.f32.mrf.mxu0
      %418 = vdwg.mxu0
      %v427 = vunpack.c.l.b16 %v225
      %v428 = vunpack.c.l.b16 %v226
      %v429 = vunpack.c.l.b16 %v227
      %v430 = vunpack.c.l.b16 %v228
      %v431 = vunpack.c.l.b16 %v229
      %v432 = vunpack.c.l.b16 %v230
      %v433 = vunpack.c.l.b16 %v231
      %v434 = vunpack.c.l.b16 %v232
      %v435 = vpack.c.b16 %v428, %v427
      %v436 = vpack.c.b16 %v430, %v429
      %v437 = vpack.c.b16 %v432, %v431
      %v438 = vpack.c.b16 %v434, %v433
      %v459 = vunpack.c.l.b16 %v233
      %v460 = vunpack.c.l.b16 %v234
      %v461 = vunpack.c.l.b16 %v235
      %v462 = vunpack.c.l.b16 %v236
      %v463 = vunpack.c.l.b16 %v237
      %v464 = vunpack.c.l.b16 %v238
      %v465 = vunpack.c.l.b16 %v239
      %v466 = vunpack.c.l.b16 %v240
      %v467 = vunpack.c.l.b16 %v241
      %v468 = vunpack.c.l.b16 %v242
      %v469 = vunpack.c.l.b16 %v243
      %v470 = vunpack.c.l.b16 %v244
      %v471 = vunpack.c.l.b16 %v245
      %v472 = vunpack.c.l.b16 %v246
      %v473 = vunpack.c.l.b16 %v247
      %v474 = vunpack.c.l.b16 %v248
      %v475 = vpack.c.b16 %v460, %v459
      %v476 = vpack.c.b16 %v462, %v461
      %v477 = vpack.c.b16 %v464, %v463
      %v478 = vpack.c.b16 %v466, %v465
      %v479 = vpack.c.b16 %v468, %v467
      %v480 = vpack.c.b16 %v470, %v469
      %v481 = vpack.c.b16 %v472, %v471
      %v482 = vpack.c.b16 %v474, %v473
      %491 = vmatprep.subr.bf16.mxu0 0
      %492 = vmatpush1.bf16.msra.mxu0 %v482
      %493 = vmatprep.subr.bf16.mxu0 0
      %494 = vmatpush1.bf16.msra.mxu0 %v481
      %495 = vmatprep.subr.bf16.mxu0 0
      %496 = vmatpush1.bf16.msra.mxu0 %v480
      %497 = vmatprep.subr.bf16.mxu0 0
      %498 = vmatpush1.bf16.msra.mxu0 %v479
      %499 = vmatprep.subr.bf16.mxu0 0
      %500 = vmatpush1.bf16.msra.mxu0 %v478
      %501 = vmatprep.subr.bf16.mxu0 0
      %502 = vmatpush1.bf16.msra.mxu0 %v477
      %503 = vmatprep.subr.bf16.mxu0 0
      %504 = vmatpush1.bf16.msra.mxu0 %v476
      %505 = vmatprep.subr.bf16.mxu0 0
      %506 = vmatpush1.bf16.msra.mxu0 %v475
      %507 = vmatprep.subr.bf16.mxu0 0
      %508 = vmatpush2.bf16.msra.mxu0 0
      %509 = vmatprep.subr.bf16.mxu0 0
      %510 = vmatpush2.bf16.msra.mxu0 0
      %511 = vmatprep.subr.bf16.mxu0 0
      %512 = vmatpush2.bf16.msra.mxu0 0
      %513 = vmatprep.subr.bf16.mxu0 0
      %514 = vmatpush2.bf16.msra.mxu0 0
      %515 = vmatprep.subr.bf16.mxu0 0
      %516 = vmatpush2.bf16.msra.mxu0 0
      %517 = vmatprep.subr.bf16.mxu0 0
      %518 = vmatpush2.bf16.msra.mxu0 0
      %519 = vmatprep.subr.bf16.mxu0 0
      %520 = vmatpush2.bf16.msra.mxu0 0
      %521 = vmatprep.subr.bf16.mxu0 0
      %522 = vmatpush2.bf16.msra.mxu0 0
      %523 = vmatprep.mubr.bf16.mxu0 0
      %524 = vmatmul.mubr.bf16.gmra.mxu0 %v435
      %v525 = vpop.f32.mrf.mxu0
      %v526 = vadd.f32 %v389, %v525
      %v527 = vpop.f32.mrf.mxu0
      %v528 = vpop.f32.mrf.mxu0
      %v529 = vadd.f32 %v392, %v528
      %v530 = vpop.f32.mrf.mxu0
      %531 = vmatprep.mubr.bf16.mxu0 0
      %532 = vmatmul.mubr.bf16.gmra.mxu0 %v436
      %v533 = vpop.f32.mrf.mxu0
      %v534 = vadd.f32 %v397, %v533
      %v535 = vpop.f32.mrf.mxu0
      %v536 = vpop.f32.mrf.mxu0
      %v537 = vadd.f32 %v400, %v536
      %v538 = vpop.f32.mrf.mxu0
      %539 = vmatprep.mubr.bf16.mxu0 0
      %540 = vmatmul.mubr.bf16.gmra.mxu0 %v437
      %v541 = vpop.f32.mrf.mxu0
      %v542 = vadd.f32 %v405, %v541
      %v543 = vpop.f32.mrf.mxu0
      %v544 = vpop.f32.mrf.mxu0
      %v545 = vadd.f32 %v408, %v544
      %v546 = vpop.f32.mrf.mxu0
      %547 = vmatprep.mubr.bf16.mxu0 0
      %548 = vmatmul.mubr.bf16.gmra.mxu0 %v438
      %v549 = vpop.f32.mrf.mxu0
      %v550 = vadd.f32 %v413, %v549
      %v551 = vpop.f32.mrf.mxu0
      %v552 = vpop.f32.mrf.mxu0
      %v553 = vadd.f32 %v416, %v552
      %v554 = vpop.f32.mrf.mxu0
      %555 = vdwg.mxu0
      %v556 = vld [vmem:[#allocation2 + $0x2] sm:$0xff]
      %v557 = vld [vmem:[#allocation2 + $0x12] sm:$0xff]
      %v558 = vld [vmem:[#allocation2 + $0x22] sm:$0xff]
      %v559 = vld [vmem:[#allocation2 + $0x32] sm:$0xff]
      %v560 = vld [vmem:[#allocation2 + $0x42] sm:$0xff]
      %v561 = vld [vmem:[#allocation2 + $0x52] sm:$0xff]
      %v562 = vld [vmem:[#allocation2 + $0x62] sm:$0xff]
      %v563 = vld [vmem:[#allocation2 + $0x72] sm:$0xff]
      %v564 = vpack.c.bf16 %v556, %v556
      %v565 = vpack.c.bf16 %v557, %v557
      %v566 = vpack.c.bf16 %v558, %v558
      %v567 = vpack.c.bf16 %v559, %v559
      %v568 = vpack.c.bf16 %v560, %v560
      %v569 = vpack.c.bf16 %v561, %v561
      %v570 = vpack.c.bf16 %v562, %v562
      %v571 = vpack.c.bf16 %v563, %v563
      %s572 = scalar_lea.vmem %s1, 128
      %v573 = vld [vmem:[%s572] sm:$0xf]
      %v574 = vld [vmem:[%s572 + $0x4] sm:$0xf]
      %v575 = vld [vmem:[%s572 + $0x8] sm:$0xf]
      %v576 = vld [vmem:[%s572 + $0xc] sm:$0xf]
      %v577 = vld [vmem:[%s572 + $0x10] sm:$0xf]
      %v578 = vld [vmem:[%s572 + $0x14] sm:$0xf]
      %v579 = vld [vmem:[%s572 + $0x18] sm:$0xf]
      %v580 = vld [vmem:[%s572 + $0x1c] sm:$0xf]
      %v581 = vld [vmem:[%s572 + $0x20] sm:$0xf]
      %v582 = vld [vmem:[%s572 + $0x24] sm:$0xf]
      %v583 = vld [vmem:[%s572 + $0x28] sm:$0xf]
      %v584 = vld [vmem:[%s572 + $0x2c] sm:$0xf]
      %v585 = vld [vmem:[%s572 + $0x30] sm:$0xf]
      %v586 = vld [vmem:[%s572 + $0x34] sm:$0xf]
      %v587 = vld [vmem:[%s572 + $0x38] sm:$0xf]
      %v588 = vld [vmem:[%s572 + $0x3c] sm:$0xf]
      %v597 = vunpack.c.l.b16 %v564
      %v598 = vunpack.c.l.b16 %v565
      %v599 = vunpack.c.l.b16 %v566
      %v600 = vunpack.c.l.b16 %v567
      %v601 = vunpack.c.l.b16 %v568
      %v602 = vunpack.c.l.b16 %v569
      %v603 = vunpack.c.l.b16 %v570
      %v604 = vunpack.c.l.b16 %v571
      %v605 = vpack.c.b16 %v598, %v597
      %v606 = vpack.c.b16 %v600, %v599
      %v607 = vpack.c.b16 %v602, %v601
      %v608 = vpack.c.b16 %v604, %v603
      %v629 = vunpack.c.l.b16 %v573
      %v630 = vunpack.c.l.b16 %v574
      %v631 = vunpack.c.l.b16 %v575
      %v632 = vunpack.c.l.b16 %v576
      %v633 = vunpack.c.l.b16 %v577
      %v634 = vunpack.c.l.b16 %v578
      %v635 = vunpack.c.l.b16 %v579
      %v636 = vunpack.c.l.b16 %v580
      %v637 = vunpack.c.l.b16 %v581
      %v638 = vunpack.c.l.b16 %v582
      %v639 = vunpack.c.l.b16 %v583
      %v640 = vunpack.c.l.b16 %v584
      %v641 = vunpack.c.l.b16 %v585
      %v642 = vunpack.c.l.b16 %v586
      %v643 = vunpack.c.l.b16 %v587
      %v644 = vunpack.c.l.b16 %v588
      %v645 = vpack.c.b16 %v630, %v629
      %v646 = vpack.c.b16 %v632, %v631
      %v647 = vpack.c.b16 %v634, %v633
      %v648 = vpack.c.b16 %v636, %v635
      %v649 = vpack.c.b16 %v638, %v637
      %v650 = vpack.c.b16 %v640, %v639
      %v651 = vpack.c.b16 %v642, %v641
      %v652 = vpack.c.b16 %v644, %v643
      %661 = vmatprep.subr.bf16.mxu0 0
      %662 = vmatpush1.bf16.msra.mxu0 %v652
      %663 = vmatprep.subr.bf16.mxu0 0
      %664 = vmatpush1.bf16.msra.mxu0 %v651
      %665 = vmatprep.subr.bf16.mxu0 0
      %666 = vmatpush1.bf16.msra.mxu0 %v650
      %667 = vmatprep.subr.bf16.mxu0 0
      %668 = vmatpush1.bf16.msra.mxu0 %v649
      %669 = vmatprep.subr.bf16.mxu0 0
      %670 = vmatpush1.bf16.msra.mxu0 %v648
      %671 = vmatprep.subr.bf16.mxu0 0
      %672 = vmatpush1.bf16.msra.mxu0 %v647
      %673 = vmatprep.subr.bf16.mxu0 0
      %674 = vmatpush1.bf16.msra.mxu0 %v646
      %675 = vmatprep.subr.bf16.mxu0 0
      %676 = vmatpush1.bf16.msra.mxu0 %v645
      %677 = vmatprep.subr.bf16.mxu0 0
      %678 = vmatpush2.bf16.msra.mxu0 0
      %679 = vmatprep.subr.bf16.mxu0 0
      %680 = vmatpush2.bf16.msra.mxu0 0
      %681 = vmatprep.subr.bf16.mxu0 0
      %682 = vmatpush2.bf16.msra.mxu0 0
      %683 = vmatprep.subr.bf16.mxu0 0
      %684 = vmatpush2.bf16.msra.mxu0 0
      %685 = vmatprep.subr.bf16.mxu0 0
      %686 = vmatpush2.bf16.msra.mxu0 0
      %687 = vmatprep.subr.bf16.mxu0 0
      %688 = vmatpush2.bf16.msra.mxu0 0
      %689 = vmatprep.subr.bf16.mxu0 0
      %690 = vmatpush2.bf16.msra.mxu0 0
      %691 = vmatprep.subr.bf16.mxu0 0
      %692 = vmatpush2.bf16.msra.mxu0 0
      %693 = vmatprep.mubr.bf16.mxu0 0
      %694 = vmatmul.mubr.bf16.gmra.mxu0 %v605
      %v695 = vpop.f32.mrf.mxu0
      %v696 = vadd.f32 0.0, %v695
      %v697 = vpop.f32.mrf.mxu0
      %v698 = vpop.f32.mrf.mxu0
      %v699 = vadd.f32 0.0, %v698
      %v700 = vpop.f32.mrf.mxu0
      %701 = vmatprep.mubr.bf16.mxu0 0
      %702 = vmatmul.mubr.bf16.gmra.mxu0 %v606
      %v703 = vpop.f32.mrf.mxu0
      %v704 = vadd.f32 0.0, %v703
      %v705 = vpop.f32.mrf.mxu0
      %v706 = vpop.f32.mrf.mxu0
      %v707 = vadd.f32 0.0, %v706
      %v708 = vpop.f32.mrf.mxu0
      %709 = vmatprep.mubr.bf16.mxu0 0
      %710 = vmatmul.mubr.bf16.gmra.mxu0 %v607
      %v711 = vpop.f32.mrf.mxu0
      %v712 = vadd.f32 0.0, %v711
      %v713 = vpop.f32.mrf.mxu0
      %v714 = vpop.f32.mrf.mxu0
      %v715 = vadd.f32 0.0, %v714
      %v716 = vpop.f32.mrf.mxu0
      %717 = vmatprep.mubr.bf16.mxu0 0
      %718 = vmatmul.mubr.bf16.gmra.mxu0 %v608
      %v719 = vpop.f32.mrf.mxu0
      %v720 = vadd.f32 0.0, %v719
      %v721 = vpop.f32.mrf.mxu0
      %v722 = vpop.f32.mrf.mxu0
      %v723 = vadd.f32 0.0, %v722
      %v724 = vpop.f32.mrf.mxu0
      %725 = vdwg.mxu0
      %v726 = vadd.f32 %v526, %v696
      %v727 = vadd.f32 %v529, %v699
      %v728 = vadd.f32 %v534, %v704
      %v729 = vadd.f32 %v537, %v707
      %v730 = vadd.f32 %v542, %v712
      %v731 = vadd.f32 %v545, %v715
      %v732 = vadd.f32 %v550, %v720
      %v733 = vadd.f32 %v553, %v723
      %v734 = vld [vmem:[%s208] sm:$0xff]
      %v735 = vld [vmem:[%s208 + $0x10] sm:$0xff]
      %v736 = vld [vmem:[%s208 + $0x20] sm:$0xff]
      %v737 = vld [vmem:[%s208 + $0x30] sm:$0xff]
      %v738 = vld [vmem:[%s208 + $0x40] sm:$0xff]
      %v739 = vld [vmem:[%s208 + $0x50] sm:$0xff]
      %v740 = vld [vmem:[%s208 + $0x60] sm:$0xff]
      %v741 = vld [vmem:[%s208 + $0x70] sm:$0xff]
      %v742 = vpack.c.bf16 %v734, %v734
      %v743 = vpack.c.bf16 %v735, %v735
      %v744 = vpack.c.bf16 %v736, %v736
      %v745 = vpack.c.bf16 %v737, %v737
      %v746 = vpack.c.bf16 %v738, %v738
      %v747 = vpack.c.bf16 %v739, %v739
      %v748 = vpack.c.bf16 %v740, %v740
      %v749 = vpack.c.bf16 %v741, %v741
      %s750 = scalar_lea.vmem %s1, 192
      %v751 = vld [vmem:[%s750] sm:$0xf]
      %v752 = vld [vmem:[%s750 + $0x4] sm:$0xf]
      %v753 = vld [vmem:[%s750 + $0x8] sm:$0xf]
      %v754 = vld [vmem:[%s750 + $0xc] sm:$0xf]
      %v755 = vld [vmem:[%s750 + $0x10] sm:$0xf]
      %v756 = vld [vmem:[%s750 + $0x14] sm:$0xf]
      %v757 = vld [vmem:[%s750 + $0x18] sm:$0xf]
      %v758 = vld [vmem:[%s750 + $0x1c] sm:$0xf]
      %v759 = vld [vmem:[%s750 + $0x20] sm:$0xf]
      %v760 = vld [vmem:[%s750 + $0x24] sm:$0xf]
      %v761 = vld [vmem:[%s750 + $0x28] sm:$0xf]
      %v762 = vld [vmem:[%s750 + $0x2c] sm:$0xf]
      %v763 = vld [vmem:[%s750 + $0x30] sm:$0xf]
      %v764 = vld [vmem:[%s750 + $0x34] sm:$0xf]
      %v765 = vld [vmem:[%s750 + $0x38] sm:$0xf]
      %v766 = vld [vmem:[%s750 + $0x3c] sm:$0xf]
      %v775 = vunpack.c.l.b16 %v742
      %v776 = vunpack.c.l.b16 %v743
      %v777 = vunpack.c.l.b16 %v744
      %v778 = vunpack.c.l.b16 %v745
      %v779 = vunpack.c.l.b16 %v746
      %v780 = vunpack.c.l.b16 %v747
      %v781 = vunpack.c.l.b16 %v748
      %v782 = vunpack.c.l.b16 %v749
      %v783 = vpack.c.b16 %v776, %v775
      %v784 = vpack.c.b16 %v778, %v777
      %v785 = vpack.c.b16 %v780, %v779
      %v786 = vpack.c.b16 %v782, %v781
      %v807 = vunpack.c.l.b16 %v751
      %v808 = vunpack.c.l.b16 %v752
      %v809 = vunpack.c.l.b16 %v753
      %v810 = vunpack.c.l.b16 %v754
      %v811 = vunpack.c.l.b16 %v755
      %v812 = vunpack.c.l.b16 %v756
      %v813 = vunpack.c.l.b16 %v757
      %v814 = vunpack.c.l.b16 %v758
      %v815 = vunpack.c.l.b16 %v759
      %v816 = vunpack.c.l.b16 %v760
      %v817 = vunpack.c.l.b16 %v761
      %v818 = vunpack.c.l.b16 %v762
      %v819 = vunpack.c.l.b16 %v763
      %v820 = vunpack.c.l.b16 %v764
      %v821 = vunpack.c.l.b16 %v765
      %v822 = vunpack.c.l.b16 %v766
      %v823 = vpack.c.b16 %v808, %v807
      %v824 = vpack.c.b16 %v810, %v809
      %v825 = vpack.c.b16 %v812, %v811
      %v826 = vpack.c.b16 %v814, %v813
      %v827 = vpack.c.b16 %v816, %v815
      %v828 = vpack.c.b16 %v818, %v817
      %v829 = vpack.c.b16 %v820, %v819
      %v830 = vpack.c.b16 %v822, %v821
      %839 = vmatprep.subr.bf16.mxu0 0
      %840 = vmatpush1.bf16.msra.mxu0 %v830
      %841 = vmatprep.subr.bf16.mxu0 0
      %842 = vmatpush1.bf16.msra.mxu0 %v829
      %843 = vmatprep.subr.bf16.mxu0 0
      %844 = vmatpush1.bf16.msra.mxu0 %v828
      %845 = vmatprep.subr.bf16.mxu0 0
      %846 = vmatpush1.bf16.msra.mxu0 %v827
      %847 = vmatprep.subr.bf16.mxu0 0
      %848 = vmatpush1.bf16.msra.mxu0 %v826
      %849 = vmatprep.subr.bf16.mxu0 0
      %850 = vmatpush1.bf16.msra.mxu0 %v825
      %851 = vmatprep.subr.bf16.mxu0 0
      %852 = vmatpush1.bf16.msra.mxu0 %v824
      %853 = vmatprep.subr.bf16.mxu0 0
      %854 = vmatpush1.bf16.msra.mxu0 %v823
      %855 = vmatprep.subr.bf16.mxu0 0
      %856 = vmatpush2.bf16.msra.mxu0 0
      %857 = vmatprep.subr.bf16.mxu0 0
      %858 = vmatpush2.bf16.msra.mxu0 0
      %859 = vmatprep.subr.bf16.mxu0 0
      %860 = vmatpush2.bf16.msra.mxu0 0
      %861 = vmatprep.subr.bf16.mxu0 0
      %862 = vmatpush2.bf16.msra.mxu0 0
      %863 = vmatprep.subr.bf16.mxu0 0
      %864 = vmatpush2.bf16.msra.mxu0 0
      %865 = vmatprep.subr.bf16.mxu0 0
      %866 = vmatpush2.bf16.msra.mxu0 0
      %867 = vmatprep.subr.bf16.mxu0 0
      %868 = vmatpush2.bf16.msra.mxu0 0
      %869 = vmatprep.subr.bf16.mxu0 0
      %870 = vmatpush2.bf16.msra.mxu0 0
      %871 = vmatprep.mubr.bf16.mxu0 0
      %872 = vmatmul.mubr.bf16.gmra.mxu0 %v783
      %v873 = vpop.f32.mrf.mxu0
      %v874 = vadd.f32 0.0, %v873
      %v875 = vpop.f32.mrf.mxu0
      %v876 = vpop.f32.mrf.mxu0
      %v877 = vadd.f32 0.0, %v876
      %v878 = vpop.f32.mrf.mxu0
      %879 = vmatprep.mubr.bf16.mxu0 0
      %880 = vmatmul.mubr.bf16.gmra.mxu0 %v784
      %v881 = vpop.f32.mrf.mxu0
      %v882 = vadd.f32 0.0, %v881
      %v883 = vpop.f32.mrf.mxu0
      %v884 = vpop.f32.mrf.mxu0
      %v885 = vadd.f32 0.0, %v884
      %v886 = vpop.f32.mrf.mxu0
      %887 = vmatprep.mubr.bf16.mxu0 0
      %888 = vmatmul.mubr.bf16.gmra.mxu0 %v785
      %v889 = vpop.f32.mrf.mxu0
      %v890 = vadd.f32 0.0, %v889
      %v891 = vpop.f32.mrf.mxu0
      %v892 = vpop.f32.mrf.mxu0
      %v893 = vadd.f32 0.0, %v892
      %v894 = vpop.f32.mrf.mxu0
      %895 = vmatprep.mubr.bf16.mxu0 0
      %896 = vmatmul.mubr.bf16.gmra.mxu0 %v786
      %v897 = vpop.f32.mrf.mxu0
      %v898 = vadd.f32 0.0, %v897
      %v899 = vpop.f32.mrf.mxu0
      %v900 = vpop.f32.mrf.mxu0
      %v901 = vadd.f32 0.0, %v900
      %v902 = vpop.f32.mrf.mxu0
      %903 = vdwg.mxu0
      %v904 = vadd.f32 %v726, %v874
      %v905 = vadd.f32 %v727, %v877
      %v906 = vadd.f32 %v728, %v882
      %v907 = vadd.f32 %v729, %v885
      %v908 = vadd.f32 %v730, %v890
      %v909 = vadd.f32 %v731, %v893
      %v910 = vadd.f32 %v732, %v898
      %v911 = vadd.f32 %v733, %v901
      %v912 = vld [vmem:[%s208 + $0x1] sm:$0xff]
      %v913 = vld [vmem:[%s208 + $0x11] sm:$0xff]
      %v914 = vld [vmem:[%s208 + $0x21] sm:$0xff]
      %v915 = vld [vmem:[%s208 + $0x31] sm:$0xff]
      %v916 = vld [vmem:[%s208 + $0x41] sm:$0xff]
      %v917 = vld [vmem:[%s208 + $0x51] sm:$0xff]
      %v918 = vld [vmem:[%s208 + $0x61] sm:$0xff]
      %v919 = vld [vmem:[%s208 + $0x71] sm:$0xff]
      %v920 = vpack.c.bf16 %v912, %v912
      %v921 = vpack.c.bf16 %v913, %v913
      %v922 = vpack.c.bf16 %v914, %v914
      %v923 = vpack.c.bf16 %v915, %v915
      %v924 = vpack.c.bf16 %v916, %v916
      %v925 = vpack.c.bf16 %v917, %v917
      %v926 = vpack.c.bf16 %v918, %v918
      %v927 = vpack.c.bf16 %v919, %v919
      %s928 = scalar_lea.vmem %s1, 256
      %v929 = vld [vmem:[%s928] sm:$0xf]
      %v930 = vld [vmem:[%s928 + $0x4] sm:$0xf]
      %v931 = vld [vmem:[%s928 + $0x8] sm:$0xf]
      %v932 = vld [vmem:[%s928 + $0xc] sm:$0xf]
      %v933 = vld [vmem:[%s928 + $0x10] sm:$0xf]
      %v934 = vld [vmem:[%s928 + $0x14] sm:$0xf]
      %v935 = vld [vmem:[%s928 + $0x18] sm:$0xf]
      %v936 = vld [vmem:[%s928 + $0x1c] sm:$0xf]
      %v937 = vld [vmem:[%s928 + $0x20] sm:$0xf]
      %v938 = vld [vmem:[%s928 + $0x24] sm:$0xf]
      %v939 = vld [vmem:[%s928 + $0x28] sm:$0xf]
      %v940 = vld [vmem:[%s928 + $0x2c] sm:$0xf]
      %v941 = vld [vmem:[%s928 + $0x30] sm:$0xf]
      %v942 = vld [vmem:[%s928 + $0x34] sm:$0xf]
      %v943 = vld [vmem:[%s928 + $0x38] sm:$0xf]
      %v944 = vld [vmem:[%s928 + $0x3c] sm:$0xf]
      %v953 = vunpack.c.l.b16 %v920
      %v954 = vunpack.c.l.b16 %v921
      %v955 = vunpack.c.l.b16 %v922
      %v956 = vunpack.c.l.b16 %v923
      %v957 = vunpack.c.l.b16 %v924
      %v958 = vunpack.c.l.b16 %v925
      %v959 = vunpack.c.l.b16 %v926
      %v960 = vunpack.c.l.b16 %v927
      %v961 = vpack.c.b16 %v954, %v953
      %v962 = vpack.c.b16 %v956, %v955
      %v963 = vpack.c.b16 %v958, %v957
      %v964 = vpack.c.b16 %v960, %v959
      %v985 = vunpack.c.l.b16 %v929
      %v986 = vunpack.c.l.b16 %v930
      %v987 = vunpack.c.l.b16 %v931
      %v988 = vunpack.c.l.b16 %v932
      %v989 = vunpack.c.l.b16 %v933
      %v990 = vunpack.c.l.b16 %v934
      %v991 = vunpack.c.l.b16 %v935
      %v992 = vunpack.c.l.b16 %v936
      %v993 = vunpack.c.l.b16 %v937
      %v994 = vunpack.c.l.b16 %v938
      %v995 = vunpack.c.l.b16 %v939
      %v996 = vunpack.c.l.b16 %v940
      %v997 = vunpack.c.l.b16 %v941
      %v998 = vunpack.c.l.b16 %v942
      %v999 = vunpack.c.l.b16 %v943
      %v1000 = vunpack.c.l.b16 %v944
      %v1001 = vpack.c.b16 %v986, %v985
      %v1002 = vpack.c.b16 %v988, %v987
      %v1003 = vpack.c.b16 %v990, %v989
      %v1004 = vpack.c.b16 %v992, %v991
      %v1005 = vpack.c.b16 %v994, %v993
      %v1006 = vpack.c.b16 %v996, %v995
      %v1007 = vpack.c.b16 %v998, %v997
      %v1008 = vpack.c.b16 %v1000, %v999
      %1017 = vmatprep.subr.bf16.mxu0 0
      %1018 = vmatpush1.bf16.msra.mxu0 %v1008
      %1019 = vmatprep.subr.bf16.mxu0 0
      %1020 = vmatpush1.bf16.msra.mxu0 %v1007
      %1021 = vmatprep.subr.bf16.mxu0 0
      %1022 = vmatpush1.bf16.msra.mxu0 %v1006
      %1023 = vmatprep.subr.bf16.mxu0 0
      %1024 = vmatpush1.bf16.msra.mxu0 %v1005
      %1025 = vmatprep.subr.bf16.mxu0 0
      %1026 = vmatpush1.bf16.msra.mxu0 %v1004
      %1027 = vmatprep.subr.bf16.mxu0 0
      %1028 = vmatpush1.bf16.msra.mxu0 %v1003
      %1029 = vmatprep.subr.bf16.mxu0 0
      %1030 = vmatpush1.bf16.msra.mxu0 %v1002
      %1031 = vmatprep.subr.bf16.mxu0 0
      %1032 = vmatpush1.bf16.msra.mxu0 %v1001
      %1033 = vmatprep.subr.bf16.mxu0 0
      %1034 = vmatpush2.bf16.msra.mxu0 0
      %1035 = vmatprep.subr.bf16.mxu0 0
      %1036 = vmatpush2.bf16.msra.mxu0 0
      %1037 = vmatprep.subr.bf16.mxu0 0
      %1038 = vmatpush2.bf16.msra.mxu0 0
      %1039 = vmatprep.subr.bf16.mxu0 0
      %1040 = vmatpush2.bf16.msra.mxu0 0
      %1041 = vmatprep.subr.bf16.mxu0 0
      %1042 = vmatpush2.bf16.msra.mxu0 0
      %1043 = vmatprep.subr.bf16.mxu0 0
      %1044 = vmatpush2.bf16.msra.mxu0 0
      %1045 = vmatprep.subr.bf16.mxu0 0
      %1046 = vmatpush2.bf16.msra.mxu0 0
      %1047 = vmatprep.subr.bf16.mxu0 0
      %1048 = vmatpush2.bf16.msra.mxu0 0
      %1049 = vmatprep.mubr.bf16.mxu0 0
      %1050 = vmatmul.mubr.bf16.gmra.mxu0 %v961
      %v1051 = vpop.f32.mrf.mxu0
      %v1052 = vadd.f32 0.0, %v1051
      %v1053 = vpop.f32.mrf.mxu0
      %v1054 = vpop.f32.mrf.mxu0
      %v1055 = vadd.f32 0.0, %v1054
      %v1056 = vpop.f32.mrf.mxu0
      %1057 = vmatprep.mubr.bf16.mxu0 0
      %1058 = vmatmul.mubr.bf16.gmra.mxu0 %v962
      %v1059 = vpop.f32.mrf.mxu0
      %v1060 = vadd.f32 0.0, %v1059
      %v1061 = vpop.f32.mrf.mxu0
      %v1062 = vpop.f32.mrf.mxu0
      %v1063 = vadd.f32 0.0, %v1062
      %v1064 = vpop.f32.mrf.mxu0
      %1065 = vmatprep.mubr.bf16.mxu0 0
      %1066 = vmatmul.mubr.bf16.gmra.mxu0 %v963
      %v1067 = vpop.f32.mrf.mxu0
      %v1068 = vadd.f32 0.0, %v1067
      %v1069 = vpop.f32.mrf.mxu0
      %v1070 = vpop.f32.mrf.mxu0
      %v1071 = vadd.f32 0.0, %v1070
      %v1072 = vpop.f32.mrf.mxu0
      %1073 = vmatprep.mubr.bf16.mxu0 0
      %1074 = vmatmul.mubr.bf16.gmra.mxu0 %v964
      %v1075 = vpop.f32.mrf.mxu0
      %v1076 = vadd.f32 0.0, %v1075
      %v1077 = vpop.f32.mrf.mxu0
      %v1078 = vpop.f32.mrf.mxu0
      %v1079 = vadd.f32 0.0, %v1078
      %v1080 = vpop.f32.mrf.mxu0
      %1081 = vdwg.mxu0
      %v1082 = vadd.f32 %v904, %v1052
      %v1083 = vadd.f32 %v905, %v1055
      %v1084 = vadd.f32 %v906, %v1060
      %v1085 = vadd.f32 %v907, %v1063
      %v1086 = vadd.f32 %v908, %v1068
      %v1087 = vadd.f32 %v909, %v1071
      %v1088 = vadd.f32 %v910, %v1076
      %v1089 = vadd.f32 %v911, %v1079
      %v1090 = vld [vmem:[%s208 + $0x2] sm:$0xff]
      %v1091 = vld [vmem:[%s208 + $0x12] sm:$0xff]
      %v1092 = vld [vmem:[%s208 + $0x22] sm:$0xff]
      %v1093 = vld [vmem:[%s208 + $0x32] sm:$0xff]
      %v1094 = vld [vmem:[%s208 + $0x42] sm:$0xff]
      %v1095 = vld [vmem:[%s208 + $0x52] sm:$0xff]
      %v1096 = vld [vmem:[%s208 + $0x62] sm:$0xff]
      %v1097 = vld [vmem:[%s208 + $0x72] sm:$0xff]
      %v1098 = vpack.c.bf16 %v1090, %v1090
      %v1099 = vpack.c.bf16 %v1091, %v1091
      %v1100 = vpack.c.bf16 %v1092, %v1092
      %v1101 = vpack.c.bf16 %v1093, %v1093
      %v1102 = vpack.c.bf16 %v1094, %v1094
      %v1103 = vpack.c.bf16 %v1095, %v1095
      %v1104 = vpack.c.bf16 %v1096, %v1096
      %v1105 = vpack.c.bf16 %v1097, %v1097
      %s1106 = scalar_lea.vmem %s1, 320
      %v1107 = vld [vmem:[%s1106] sm:$0xf]
      %v1108 = vld [vmem:[%s1106 + $0x4] sm:$0xf]
      %v1109 = vld [vmem:[%s1106 + $0x8] sm:$0xf]
      %v1110 = vld [vmem:[%s1106 + $0xc] sm:$0xf]
      %v1111 = vld [vmem:[%s1106 + $0x10] sm:$0xf]
      %v1112 = vld [vmem:[%s1106 + $0x14] sm:$0xf]
      %v1113 = vld [vmem:[%s1106 + $0x18] sm:$0xf]
      %v1114 = vld [vmem:[%s1106 + $0x1c] sm:$0xf]
      %v1115 = vld [vmem:[%s1106 + $0x20] sm:$0xf]
      %v1116 = vld [vmem:[%s1106 + $0x24] sm:$0xf]
      %v1117 = vld [vmem:[%s1106 + $0x28] sm:$0xf]
      %v1118 = vld [vmem:[%s1106 + $0x2c] sm:$0xf]
      %v1119 = vld [vmem:[%s1106 + $0x30] sm:$0xf]
      %v1120 = vld [vmem:[%s1106 + $0x34] sm:$0xf]
      %v1121 = vld [vmem:[%s1106 + $0x38] sm:$0xf]
      %v1122 = vld [vmem:[%s1106 + $0x3c] sm:$0xf]
      %v1131 = vunpack.c.l.b16 %v1098
      %v1132 = vunpack.c.l.b16 %v1099
      %v1133 = vunpack.c.l.b16 %v1100
      %v1134 = vunpack.c.l.b16 %v1101
      %v1135 = vunpack.c.l.b16 %v1102
      %v1136 = vunpack.c.l.b16 %v1103
      %v1137 = vunpack.c.l.b16 %v1104
      %v1138 = vunpack.c.l.b16 %v1105
      %v1139 = vpack.c.b16 %v1132, %v1131
      %v1140 = vpack.c.b16 %v1134, %v1133
      %v1141 = vpack.c.b16 %v1136, %v1135
      %v1142 = vpack.c.b16 %v1138, %v1137
      %v1163 = vunpack.c.l.b16 %v1107
      %v1164 = vunpack.c.l.b16 %v1108
      %v1165 = vunpack.c.l.b16 %v1109
      %v1166 = vunpack.c.l.b16 %v1110
      %v1167 = vunpack.c.l.b16 %v1111
      %v1168 = vunpack.c.l.b16 %v1112
      %v1169 = vunpack.c.l.b16 %v1113
      %v1170 = vunpack.c.l.b16 %v1114
      %v1171 = vunpack.c.l.b16 %v1115
      %v1172 = vunpack.c.l.b16 %v1116
      %v1173 = vunpack.c.l.b16 %v1117
      %v1174 = vunpack.c.l.b16 %v1118
      %v1175 = vunpack.c.l.b16 %v1119
      %v1176 = vunpack.c.l.b16 %v1120
      %v1177 = vunpack.c.l.b16 %v1121
      %v1178 = vunpack.c.l.b16 %v1122
      %v1179 = vpack.c.b16 %v1164, %v1163
      %v1180 = vpack.c.b16 %v1166, %v1165
      %v1181 = vpack.c.b16 %v1168, %v1167
      %v1182 = vpack.c.b16 %v1170, %v1169
      %v1183 = vpack.c.b16 %v1172, %v1171
      %v1184 = vpack.c.b16 %v1174, %v1173
      %v1185 = vpack.c.b16 %v1176, %v1175
      %v1186 = vpack.c.b16 %v1178, %v1177
      %1195 = vmatprep.subr.bf16.mxu0 0
      %1196 = vmatpush1.bf16.msra.mxu0 %v1186
      %1197 = vmatprep.subr.bf16.mxu0 0
      %1198 = vmatpush1.bf16.msra.mxu0 %v1185
      %1199 = vmatprep.subr.bf16.mxu0 0
      %1200 = vmatpush1.bf16.msra.mxu0 %v1184
      %1201 = vmatprep.subr.bf16.mxu0 0
      %1202 = vmatpush1.bf16.msra.mxu0 %v1183
      %1203 = vmatprep.subr.bf16.mxu0 0
      %1204 = vmatpush1.bf16.msra.mxu0 %v1182
      %1205 = vmatprep.subr.bf16.mxu0 0
      %1206 = vmatpush1.bf16.msra.mxu0 %v1181
      %1207 = vmatprep.subr.bf16.mxu0 0
      %1208 = vmatpush1.bf16.msra.mxu0 %v1180
      %1209 = vmatprep.subr.bf16.mxu0 0
      %1210 = vmatpush1.bf16.msra.mxu0 %v1179
      %1211 = vmatprep.subr.bf16.mxu0 0
      %1212 = vmatpush2.bf16.msra.mxu0 0
      %1213 = vmatprep.subr.bf16.mxu0 0
      %1214 = vmatpush2.bf16.msra.mxu0 0
      %1215 = vmatprep.subr.bf16.mxu0 0
      %1216 = vmatpush2.bf16.msra.mxu0 0
      %1217 = vmatprep.subr.bf16.mxu0 0
      %1218 = vmatpush2.bf16.msra.mxu0 0
      %1219 = vmatprep.subr.bf16.mxu0 0
      %1220 = vmatpush2.bf16.msra.mxu0 0
      %1221 = vmatprep.subr.bf16.mxu0 0
      %1222 = vmatpush2.bf16.msra.mxu0 0
      %1223 = vmatprep.subr.bf16.mxu0 0
      %1224 = vmatpush2.bf16.msra.mxu0 0
      %1225 = vmatprep.subr.bf16.mxu0 0
      %1226 = vmatpush2.bf16.msra.mxu0 0
      %1227 = vmatprep.mubr.bf16.mxu0 0
      %1228 = vmatmul.mubr.bf16.gmra.mxu0 %v1139
      %v1229 = vpop.f32.mrf.mxu0
      %v1230 = vadd.f32 0.0, %v1229
      %v1231 = vpop.f32.mrf.mxu0
      %v1232 = vpop.f32.mrf.mxu0
      %v1233 = vadd.f32 0.0, %v1232
      %v1234 = vpop.f32.mrf.mxu0
      %1235 = vmatprep.mubr.bf16.mxu0 0
      %1236 = vmatmul.mubr.bf16.gmra.mxu0 %v1140
      %v1237 = vpop.f32.mrf.mxu0
      %v1238 = vadd.f32 0.0, %v1237
      %v1239 = vpop.f32.mrf.mxu0
      %v1240 = vpop.f32.mrf.mxu0
      %v1241 = vadd.f32 0.0, %v1240
      %v1242 = vpop.f32.mrf.mxu0
      %1243 = vmatprep.mubr.bf16.mxu0 0
      %1244 = vmatmul.mubr.bf16.gmra.mxu0 %v1141
      %v1245 = vpop.f32.mrf.mxu0
      %v1246 = vadd.f32 0.0, %v1245
      %v1247 = vpop.f32.mrf.mxu0
      %v1248 = vpop.f32.mrf.mxu0
      %v1249 = vadd.f32 0.0, %v1248
      %v1250 = vpop.f32.mrf.mxu0
      %1251 = vmatprep.mubr.bf16.mxu0 0
      %1252 = vmatmul.mubr.bf16.gmra.mxu0 %v1142
      %v1253 = vpop.f32.mrf.mxu0
      %v1254 = vadd.f32 0.0, %v1253
      %v1255 = vpop.f32.mrf.mxu0
      %v1256 = vpop.f32.mrf.mxu0
      %v1257 = vadd.f32 0.0, %v1256
      %v1258 = vpop.f32.mrf.mxu0
      %1259 = vdwg.mxu0
      %v1260 = vadd.f32 %v1082, %v1230
      %v1261 = vadd.f32 %v1083, %v1233
      %v1262 = vadd.f32 %v1084, %v1238
      %v1263 = vadd.f32 %v1085, %v1241
      %v1264 = vadd.f32 %v1086, %v1246
      %v1265 = vadd.f32 %v1087, %v1249
      %v1266 = vadd.f32 %v1088, %v1254
      %v1267 = vadd.f32 %v1089, %v1257
      %s1268 = scalar_lea.vmem [#allocation2], 32
      %v1269 = vld [vmem:[%s1268] sm:$0xff]
      %v1270 = vld [vmem:[%s1268 + $0x10] sm:$0xff]
      %v1271 = vld [vmem:[%s1268 + $0x20] sm:$0xff]
      %v1272 = vld [vmem:[%s1268 + $0x30] sm:$0xff]
      %v1273 = vld [vmem:[%s1268 + $0x40] sm:$0xff]
      %v1274 = vld [vmem:[%s1268 + $0x50] sm:$0xff]
      %v1275 = vld [vmem:[%s1268 + $0x60] sm:$0xff]
      %v1276 = vld [vmem:[%s1268 + $0x70] sm:$0xff]
      %v1277 = vpack.c.bf16 %v1269, %v1269
      %v1278 = vpack.c.bf16 %v1270, %v1270
      %v1279 = vpack.c.bf16 %v1271, %v1271
      %v1280 = vpack.c.bf16 %v1272, %v1272
      %v1281 = vpack.c.bf16 %v1273, %v1273
      %v1282 = vpack.c.bf16 %v1274, %v1274
      %v1283 = vpack.c.bf16 %v1275, %v1275
      %v1284 = vpack.c.bf16 %v1276, %v1276
      %s1285 = scalar_lea.vmem %s1, 384
      %v1286 = vld [vmem:[%s1285] sm:$0xf]
      %v1287 = vld [vmem:[%s1285 + $0x4] sm:$0xf]
      %v1288 = vld [vmem:[%s1285 + $0x8] sm:$0xf]
      %v1289 = vld [vmem:[%s1285 + $0xc] sm:$0xf]
      %v1290 = vld [vmem:[%s1285 + $0x10] sm:$0xf]
      %v1291 = vld [vmem:[%s1285 + $0x14] sm:$0xf]
      %v1292 = vld [vmem:[%s1285 + $0x18] sm:$0xf]
      %v1293 = vld [vmem:[%s1285 + $0x1c] sm:$0xf]
      %v1294 = vld [vmem:[%s1285 + $0x20] sm:$0xf]
      %v1295 = vld [vmem:[%s1285 + $0x24] sm:$0xf]
      %v1296 = vld [vmem:[%s1285 + $0x28] sm:$0xf]
      %v1297 = vld [vmem:[%s1285 + $0x2c] sm:$0xf]
      %v1298 = vld [vmem:[%s1285 + $0x30] sm:$0xf]
      %v1299 = vld [vmem:[%s1285 + $0x34] sm:$0xf]
      %v1300 = vld [vmem:[%s1285 + $0x38] sm:$0xf]
      %v1301 = vld [vmem:[%s1285 + $0x3c] sm:$0xf]
      %v1310 = vunpack.c.l.b16 %v1277
      %v1311 = vunpack.c.l.b16 %v1278
      %v1312 = vunpack.c.l.b16 %v1279
      %v1313 = vunpack.c.l.b16 %v1280
      %v1314 = vunpack.c.l.b16 %v1281
      %v1315 = vunpack.c.l.b16 %v1282
      %v1316 = vunpack.c.l.b16 %v1283
      %v1317 = vunpack.c.l.b16 %v1284
      %v1318 = vpack.c.b16 %v1311, %v1310
      %v1319 = vpack.c.b16 %v1313, %v1312
      %v1320 = vpack.c.b16 %v1315, %v1314
      %v1321 = vpack.c.b16 %v1317, %v1316
      %v1342 = vunpack.c.l.b16 %v1286
      %v1343 = vunpack.c.l.b16 %v1287
      %v1344 = vunpack.c.l.b16 %v1288
      %v1345 = vunpack.c.l.b16 %v1289
      %v1346 = vunpack.c.l.b16 %v1290
      %v1347 = vunpack.c.l.b16 %v1291
      %v1348 = vunpack.c.l.b16 %v1292
      %v1349 = vunpack.c.l.b16 %v1293
      %v1350 = vunpack.c.l.b16 %v1294
      %v1351 = vunpack.c.l.b16 %v1295
      %v1352 = vunpack.c.l.b16 %v1296
      %v1353 = vunpack.c.l.b16 %v1297
      %v1354 = vunpack.c.l.b16 %v1298
      %v1355 = vunpack.c.l.b16 %v1299
      %v1356 = vunpack.c.l.b16 %v1300
      %v1357 = vunpack.c.l.b16 %v1301
      %v1358 = vpack.c.b16 %v1343, %v1342
      %v1359 = vpack.c.b16 %v1345, %v1344
      %v1360 = vpack.c.b16 %v1347, %v1346
      %v1361 = vpack.c.b16 %v1349, %v1348
      %v1362 = vpack.c.b16 %v1351, %v1350
      %v1363 = vpack.c.b16 %v1353, %v1352
      %v1364 = vpack.c.b16 %v1355, %v1354
      %v1365 = vpack.c.b16 %v1357, %v1356
      %1374 = vmatprep.subr.bf16.mxu0 0
      %1375 = vmatpush1.bf16.msra.mxu0 %v1365
      %1376 = vmatprep.subr.bf16.mxu0 0
      %1377 = vmatpush1.bf16.msra.mxu0 %v1364
      %1378 = vmatprep.subr.bf16.mxu0 0
      %1379 = vmatpush1.bf16.msra.mxu0 %v1363
      %1380 = vmatprep.subr.bf16.mxu0 0
      %1381 = vmatpush1.bf16.msra.mxu0 %v1362
      %1382 = vmatprep.subr.bf16.mxu0 0
      %1383 = vmatpush1.bf16.msra.mxu0 %v1361
      %1384 = vmatprep.subr.bf16.mxu0 0
      %1385 = vmatpush1.bf16.msra.mxu0 %v1360
      %1386 = vmatprep.subr.bf16.mxu0 0
      %1387 = vmatpush1.bf16.msra.mxu0 %v1359
      %1388 = vmatprep.subr.bf16.mxu0 0
      %1389 = vmatpush1.bf16.msra.mxu0 %v1358
      %1390 = vmatprep.subr.bf16.mxu0 0
      %1391 = vmatpush2.bf16.msra.mxu0 0
      %1392 = vmatprep.subr.bf16.mxu0 0
      %1393 = vmatpush2.bf16.msra.mxu0 0
      %1394 = vmatprep.subr.bf16.mxu0 0
      %1395 = vmatpush2.bf16.msra.mxu0 0
      %1396 = vmatprep.subr.bf16.mxu0 0
      %1397 = vmatpush2.bf16.msra.mxu0 0
      %1398 = vmatprep.subr.bf16.mxu0 0
      %1399 = vmatpush2.bf16.msra.mxu0 0
      %1400 = vmatprep.subr.bf16.mxu0 0
      %1401 = vmatpush2.bf16.msra.mxu0 0
      %1402 = vmatprep.subr.bf16.mxu0 0
      %1403 = vmatpush2.bf16.msra.mxu0 0
      %1404 = vmatprep.subr.bf16.mxu0 0
      %1405 = vmatpush2.bf16.msra.mxu0 0
      %1406 = vmatprep.mubr.bf16.mxu0 0
      %1407 = vmatmul.mubr.bf16.gmra.mxu0 %v1318
      %v1408 = vpop.f32.mrf.mxu0
      %v1409 = vadd.f32 0.0, %v1408
      %v1410 = vpop.f32.mrf.mxu0
      %v1411 = vpop.f32.mrf.mxu0
      %v1412 = vadd.f32 0.0, %v1411
      %v1413 = vpop.f32.mrf.mxu0
      %1414 = vmatprep.mubr.bf16.mxu0 0
      %1415 = vmatmul.mubr.bf16.gmra.mxu0 %v1319
      %v1416 = vpop.f32.mrf.mxu0
      %v1417 = vadd.f32 0.0, %v1416
      %v1418 = vpop.f32.mrf.mxu0
      %v1419 = vpop.f32.mrf.mxu0
      %v1420 = vadd.f32 0.0, %v1419
      %v1421 = vpop.f32.mrf.mxu0
      %1422 = vmatprep.mubr.bf16.mxu0 0
      %1423 = vmatmul.mubr.bf16.gmra.mxu0 %v1320
      %v1424 = vpop.f32.mrf.mxu0
      %v1425 = vadd.f32 0.0, %v1424
      %v1426 = vpop.f32.mrf.mxu0
      %v1427 = vpop.f32.mrf.mxu0
      %v1428 = vadd.f32 0.0, %v1427
      %v1429 = vpop.f32.mrf.mxu0
      %1430 = vmatprep.mubr.bf16.mxu0 0
      %1431 = vmatmul.mubr.bf16.gmra.mxu0 %v1321
      %v1432 = vpop.f32.mrf.mxu0
      %v1433 = vadd.f32 0.0, %v1432
      %v1434 = vpop.f32.mrf.mxu0
      %v1435 = vpop.f32.mrf.mxu0
      %v1436 = vadd.f32 0.0, %v1435
      %v1437 = vpop.f32.mrf.mxu0
      %1438 = vdwg.mxu0
      %v1439 = vadd.f32 %v1260, %v1409
      %v1440 = vadd.f32 %v1261, %v1412
      %v1441 = vadd.f32 %v1262, %v1417
      %v1442 = vadd.f32 %v1263, %v1420
      %v1443 = vadd.f32 %v1264, %v1425
      %v1444 = vadd.f32 %v1265, %v1428
      %v1445 = vadd.f32 %v1266, %v1433
      %v1446 = vadd.f32 %v1267, %v1436
      %v1447 = vld [vmem:[%s1268 + $0x1] sm:$0xff]
      %v1448 = vld [vmem:[%s1268 + $0x11] sm:$0xff]
      %v1449 = vld [vmem:[%s1268 + $0x21] sm:$0xff]
      %v1450 = vld [vmem:[%s1268 + $0x31] sm:$0xff]
      %v1451 = vld [vmem:[%s1268 + $0x41] sm:$0xff]
      %v1452 = vld [vmem:[%s1268 + $0x51] sm:$0xff]
      %v1453 = vld [vmem:[%s1268 + $0x61] sm:$0xff]
      %v1454 = vld [vmem:[%s1268 + $0x71] sm:$0xff]
      %v1455 = vpack.c.bf16 %v1447, %v1447
      %v1456 = vpack.c.bf16 %v1448, %v1448
      %v1457 = vpack.c.bf16 %v1449, %v1449
      %v1458 = vpack.c.bf16 %v1450, %v1450
      %v1459 = vpack.c.bf16 %v1451, %v1451
      %v1460 = vpack.c.bf16 %v1452, %v1452
      %v1461 = vpack.c.bf16 %v1453, %v1453
      %v1462 = vpack.c.bf16 %v1454, %v1454
      %s1463 = scalar_lea.vmem %s1, 448
      %v1464 = vld [vmem:[%s1463] sm:$0xf]
      %v1465 = vld [vmem:[%s1463 + $0x4] sm:$0xf]
      %v1466 = vld [vmem:[%s1463 + $0x8] sm:$0xf]
      %v1467 = vld [vmem:[%s1463 + $0xc] sm:$0xf]
      %v1468 = vld [vmem:[%s1463 + $0x10] sm:$0xf]
      %v1469 = vld [vmem:[%s1463 + $0x14] sm:$0xf]
      %v1470 = vld [vmem:[%s1463 + $0x18] sm:$0xf]
      %v1471 = vld [vmem:[%s1463 + $0x1c] sm:$0xf]
      %v1472 = vld [vmem:[%s1463 + $0x20] sm:$0xf]
      %v1473 = vld [vmem:[%s1463 + $0x24] sm:$0xf]
      %v1474 = vld [vmem:[%s1463 + $0x28] sm:$0xf]
      %v1475 = vld [vmem:[%s1463 + $0x2c] sm:$0xf]
      %v1476 = vld [vmem:[%s1463 + $0x30] sm:$0xf]
      %v1477 = vld [vmem:[%s1463 + $0x34] sm:$0xf]
      %v1478 = vld [vmem:[%s1463 + $0x38] sm:$0xf]
      %v1479 = vld [vmem:[%s1463 + $0x3c] sm:$0xf]
      %v1488 = vunpack.c.l.b16 %v1455
      %v1489 = vunpack.c.l.b16 %v1456
      %v1490 = vunpack.c.l.b16 %v1457
      %v1491 = vunpack.c.l.b16 %v1458
      %v1492 = vunpack.c.l.b16 %v1459
      %v1493 = vunpack.c.l.b16 %v1460
      %v1494 = vunpack.c.l.b16 %v1461
      %v1495 = vunpack.c.l.b16 %v1462
      %v1496 = vpack.c.b16 %v1489, %v1488
      %v1497 = vpack.c.b16 %v1491, %v1490
      %v1498 = vpack.c.b16 %v1493, %v1492
      %v1499 = vpack.c.b16 %v1495, %v1494
      %v1520 = vunpack.c.l.b16 %v1464
      %v1521 = vunpack.c.l.b16 %v1465
      %v1522 = vunpack.c.l.b16 %v1466
      %v1523 = vunpack.c.l.b16 %v1467
      %v1524 = vunpack.c.l.b16 %v1468
      %v1525 = vunpack.c.l.b16 %v1469
      %v1526 = vunpack.c.l.b16 %v1470
      %v1527 = vunpack.c.l.b16 %v1471
      %v1528 = vunpack.c.l.b16 %v1472
      %v1529 = vunpack.c.l.b16 %v1473
      %v1530 = vunpack.c.l.b16 %v1474
      %v1531 = vunpack.c.l.b16 %v1475
      %v1532 = vunpack.c.l.b16 %v1476
      %v1533 = vunpack.c.l.b16 %v1477
      %v1534 = vunpack.c.l.b16 %v1478
      %v1535 = vunpack.c.l.b16 %v1479
      %v1536 = vpack.c.b16 %v1521, %v1520
      %v1537 = vpack.c.b16 %v1523, %v1522
      %v1538 = vpack.c.b16 %v1525, %v1524
      %v1539 = vpack.c.b16 %v1527, %v1526
      %v1540 = vpack.c.b16 %v1529, %v1528
      %v1541 = vpack.c.b16 %v1531, %v1530
      %v1542 = vpack.c.b16 %v1533, %v1532
      %v1543 = vpack.c.b16 %v1535, %v1534
      %1552 = vmatprep.subr.bf16.mxu0 0
      %1553 = vmatpush1.bf16.msra.mxu0 %v1543
      %1554 = vmatprep.subr.bf16.mxu0 0
      %1555 = vmatpush1.bf16.msra.mxu0 %v1542
      %1556 = vmatprep.subr.bf16.mxu0 0
      %1557 = vmatpush1.bf16.msra.mxu0 %v1541
      %1558 = vmatprep.subr.bf16.mxu0 0
      %1559 = vmatpush1.bf16.msra.mxu0 %v1540
      %1560 = vmatprep.subr.bf16.mxu0 0
      %1561 = vmatpush1.bf16.msra.mxu0 %v1539
      %1562 = vmatprep.subr.bf16.mxu0 0
      %1563 = vmatpush1.bf16.msra.mxu0 %v1538
      %1564 = vmatprep.subr.bf16.mxu0 0
      %1565 = vmatpush1.bf16.msra.mxu0 %v1537
      %1566 = vmatprep.subr.bf16.mxu0 0
      %1567 = vmatpush1.bf16.msra.mxu0 %v1536
      %1568 = vmatprep.subr.bf16.mxu0 0
      %1569 = vmatpush2.bf16.msra.mxu0 0
      %1570 = vmatprep.subr.bf16.mxu0 0
      %1571 = vmatpush2.bf16.msra.mxu0 0
      %1572 = vmatprep.subr.bf16.mxu0 0
      %1573 = vmatpush2.bf16.msra.mxu0 0
      %1574 = vmatprep.subr.bf16.mxu0 0
      %1575 = vmatpush2.bf16.msra.mxu0 0
      %1576 = vmatprep.subr.bf16.mxu0 0
      %1577 = vmatpush2.bf16.msra.mxu0 0
      %1578 = vmatprep.subr.bf16.mxu0 0
      %1579 = vmatpush2.bf16.msra.mxu0 0
      %1580 = vmatprep.subr.bf16.mxu0 0
      %1581 = vmatpush2.bf16.msra.mxu0 0
      %1582 = vmatprep.subr.bf16.mxu0 0
      %1583 = vmatpush2.bf16.msra.mxu0 0
      %1584 = vmatprep.mubr.bf16.mxu0 0
      %1585 = vmatmul.mubr.bf16.gmra.mxu0 %v1496
      %v1586 = vpop.f32.mrf.mxu0
      %v1587 = vadd.f32 0.0, %v1586
      %v1588 = vpop.f32.mrf.mxu0
      %v1589 = vpop.f32.mrf.mxu0
      %v1590 = vadd.f32 0.0, %v1589
      %v1591 = vpop.f32.mrf.mxu0
      %1592 = vmatprep.mubr.bf16.mxu0 0
      %1593 = vmatmul.mubr.bf16.gmra.mxu0 %v1497
      %v1594 = vpop.f32.mrf.mxu0
      %v1595 = vadd.f32 0.0, %v1594
      %v1596 = vpop.f32.mrf.mxu0
      %v1597 = vpop.f32.mrf.mxu0
      %v1598 = vadd.f32 0.0, %v1597
      %v1599 = vpop.f32.mrf.mxu0
      %1600 = vmatprep.mubr.bf16.mxu0 0
      %1601 = vmatmul.mubr.bf16.gmra.mxu0 %v1498
      %v1602 = vpop.f32.mrf.mxu0
      %v1603 = vadd.f32 0.0, %v1602
      %v1604 = vpop.f32.mrf.mxu0
      %v1605 = vpop.f32.mrf.mxu0
      %v1606 = vadd.f32 0.0, %v1605
      %v1607 = vpop.f32.mrf.mxu0
      %1608 = vmatprep.mubr.bf16.mxu0 0
      %1609 = vmatmul.mubr.bf16.gmra.mxu0 %v1499
      %v1610 = vpop.f32.mrf.mxu0
      %v1611 = vadd.f32 0.0, %v1610
      %v1612 = vpop.f32.mrf.mxu0
      %v1613 = vpop.f32.mrf.mxu0
      %v1614 = vadd.f32 0.0, %v1613
      %v1615 = vpop.f32.mrf.mxu0
      %1616 = vdwg.mxu0
      %v1617 = vadd.f32 %v1439, %v1587
      %v1618 = vadd.f32 %v1440, %v1590
      %v1619 = vadd.f32 %v1441, %v1595
      %v1620 = vadd.f32 %v1442, %v1598
      %v1621 = vadd.f32 %v1443, %v1603
      %v1622 = vadd.f32 %v1444, %v1606
      %v1623 = vadd.f32 %v1445, %v1611
      %v1624 = vadd.f32 %v1446, %v1614
      %v1625 = vld [vmem:[%s1268 + $0x2] sm:$0xff]
      %v1626 = vld [vmem:[%s1268 + $0x12] sm:$0xff]
      %v1627 = vld [vmem:[%s1268 + $0x22] sm:$0xff]
      %v1628 = vld [vmem:[%s1268 + $0x32] sm:$0xff]
      %v1629 = vld [vmem:[%s1268 + $0x42] sm:$0xff]
      %v1630 = vld [vmem:[%s1268 + $0x52] sm:$0xff]
      %v1631 = vld [vmem:[%s1268 + $0x62] sm:$0xff]
      %v1632 = vld [vmem:[%s1268 + $0x72] sm:$0xff]
      %v1633 = vpack.c.bf16 %v1625, %v1625
      %v1634 = vpack.c.bf16 %v1626, %v1626
      %v1635 = vpack.c.bf16 %v1627, %v1627
      %v1636 = vpack.c.bf16 %v1628, %v1628
      %v1637 = vpack.c.bf16 %v1629, %v1629
      %v1638 = vpack.c.bf16 %v1630, %v1630
      %v1639 = vpack.c.bf16 %v1631, %v1631
      %v1640 = vpack.c.bf16 %v1632, %v1632
      %s1641 = scalar_lea.vmem %s1, 512
      %v1642 = vld [vmem:[%s1641] sm:$0xf]
      %v1643 = vld [vmem:[%s1641 + $0x4] sm:$0xf]
      %v1644 = vld [vmem:[%s1641 + $0x8] sm:$0xf]
      %v1645 = vld [vmem:[%s1641 + $0xc] sm:$0xf]
      %v1646 = vld [vmem:[%s1641 + $0x10] sm:$0xf]
      %v1647 = vld [vmem:[%s1641 + $0x14] sm:$0xf]
      %v1648 = vld [vmem:[%s1641 + $0x18] sm:$0xf]
      %v1649 = vld [vmem:[%s1641 + $0x1c] sm:$0xf]
      %v1650 = vld [vmem:[%s1641 + $0x20] sm:$0xf]
      %v1651 = vld [vmem:[%s1641 + $0x24] sm:$0xf]
      %v1652 = vld [vmem:[%s1641 + $0x28] sm:$0xf]
      %v1653 = vld [vmem:[%s1641 + $0x2c] sm:$0xf]
      %v1654 = vld [vmem:[%s1641 + $0x30] sm:$0xf]
      %v1655 = vld [vmem:[%s1641 + $0x34] sm:$0xf]
      %v1656 = vld [vmem:[%s1641 + $0x38] sm:$0xf]
      %v1657 = vld [vmem:[%s1641 + $0x3c] sm:$0xf]
      %v1666 = vunpack.c.l.b16 %v1633
      %v1667 = vunpack.c.l.b16 %v1634
      %v1668 = vunpack.c.l.b16 %v1635
      %v1669 = vunpack.c.l.b16 %v1636
      %v1670 = vunpack.c.l.b16 %v1637
      %v1671 = vunpack.c.l.b16 %v1638
      %v1672 = vunpack.c.l.b16 %v1639
      %v1673 = vunpack.c.l.b16 %v1640
      %v1674 = vpack.c.b16 %v1667, %v1666
      %v1675 = vpack.c.b16 %v1669, %v1668
      %v1676 = vpack.c.b16 %v1671, %v1670
      %v1677 = vpack.c.b16 %v1673, %v1672
      %v1698 = vunpack.c.l.b16 %v1642
      %v1699 = vunpack.c.l.b16 %v1643
      %v1700 = vunpack.c.l.b16 %v1644
      %v1701 = vunpack.c.l.b16 %v1645
      %v1702 = vunpack.c.l.b16 %v1646
      %v1703 = vunpack.c.l.b16 %v1647
      %v1704 = vunpack.c.l.b16 %v1648
      %v1705 = vunpack.c.l.b16 %v1649
      %v1706 = vunpack.c.l.b16 %v1650
      %v1707 = vunpack.c.l.b16 %v1651
      %v1708 = vunpack.c.l.b16 %v1652
      %v1709 = vunpack.c.l.b16 %v1653
      %v1710 = vunpack.c.l.b16 %v1654
      %v1711 = vunpack.c.l.b16 %v1655
      %v1712 = vunpack.c.l.b16 %v1656
      %v1713 = vunpack.c.l.b16 %v1657
      %v1714 = vpack.c.b16 %v1699, %v1698
      %v1715 = vpack.c.b16 %v1701, %v1700
      %v1716 = vpack.c.b16 %v1703, %v1702
      %v1717 = vpack.c.b16 %v1705, %v1704
      %v1718 = vpack.c.b16 %v1707, %v1706
      %v1719 = vpack.c.b16 %v1709, %v1708
      %v1720 = vpack.c.b16 %v1711, %v1710
      %v1721 = vpack.c.b16 %v1713, %v1712
      %1730 = vmatprep.subr.bf16.mxu0 0
      %1731 = vmatpush1.bf16.msra.mxu0 %v1721
      %1732 = vmatprep.subr.bf16.mxu0 0
      %1733 = vmatpush1.bf16.msra.mxu0 %v1720
      %1734 = vmatprep.subr.bf16.mxu0 0
      %1735 = vmatpush1.bf16.msra.mxu0 %v1719
      %1736 = vmatprep.subr.bf16.mxu0 0
      %1737 = vmatpush1.bf16.msra.mxu0 %v1718
      %1738 = vmatprep.subr.bf16.mxu0 0
      %1739 = vmatpush1.bf16.msra.mxu0 %v1717
      %1740 = vmatprep.subr.bf16.mxu0 0
      %1741 = vmatpush1.bf16.msra.mxu0 %v1716
      %1742 = vmatprep.subr.bf16.mxu0 0
      %1743 = vmatpush1.bf16.msra.mxu0 %v1715
      %1744 = vmatprep.subr.bf16.mxu0 0
      %1745 = vmatpush1.bf16.msra.mxu0 %v1714
      %1746 = vmatprep.subr.bf16.mxu0 0
      %1747 = vmatpush2.bf16.msra.mxu0 0
      %1748 = vmatprep.subr.bf16.mxu0 0
      %1749 = vmatpush2.bf16.msra.mxu0 0
      %1750 = vmatprep.subr.bf16.mxu0 0
      %1751 = vmatpush2.bf16.msra.mxu0 0
      %1752 = vmatprep.subr.bf16.mxu0 0
      %1753 = vmatpush2.bf16.msra.mxu0 0
      %1754 = vmatprep.subr.bf16.mxu0 0
      %1755 = vmatpush2.bf16.msra.mxu0 0
      %1756 = vmatprep.subr.bf16.mxu0 0
      %1757 = vmatpush2.bf16.msra.mxu0 0
      %1758 = vmatprep.subr.bf16.mxu0 0
      %1759 = vmatpush2.bf16.msra.mxu0 0
      %1760 = vmatprep.subr.bf16.mxu0 0
      %1761 = vmatpush2.bf16.msra.mxu0 0
      %1762 = vmatprep.mubr.bf16.mxu0 0
      %1763 = vmatmul.mubr.bf16.gmra.mxu0 %v1674
      %v1764 = vpop.f32.mrf.mxu0
      %v1765 = vadd.f32 0.0, %v1764
      %v1766 = vpop.f32.mrf.mxu0
      %v1767 = vpop.f32.mrf.mxu0
      %v1768 = vadd.f32 0.0, %v1767
      %v1769 = vpop.f32.mrf.mxu0
      %1770 = vmatprep.mubr.bf16.mxu0 0
      %1771 = vmatmul.mubr.bf16.gmra.mxu0 %v1675
      %v1772 = vpop.f32.mrf.mxu0
      %v1773 = vadd.f32 0.0, %v1772
      %v1774 = vpop.f32.mrf.mxu0
      %v1775 = vpop.f32.mrf.mxu0
      %v1776 = vadd.f32 0.0, %v1775
      %v1777 = vpop.f32.mrf.mxu0
      %1778 = vmatprep.mubr.bf16.mxu0 0
      %1779 = vmatmul.mubr.bf16.gmra.mxu0 %v1676
      %v1780 = vpop.f32.mrf.mxu0
      %v1781 = vadd.f32 0.0, %v1780
      %v1782 = vpop.f32.mrf.mxu0
      %v1783 = vpop.f32.mrf.mxu0
      %v1784 = vadd.f32 0.0, %v1783
      %v1785 = vpop.f32.mrf.mxu0
      %1786 = vmatprep.mubr.bf16.mxu0 0
      %1787 = vmatmul.mubr.bf16.gmra.mxu0 %v1677
      %v1788 = vpop.f32.mrf.mxu0
      %v1789 = vadd.f32 0.0, %v1788
      %v1790 = vpop.f32.mrf.mxu0
      %v1791 = vpop.f32.mrf.mxu0
      %v1792 = vadd.f32 0.0, %v1791
      %v1793 = vpop.f32.mrf.mxu0
      %1794 = vdwg.mxu0
      %v1795 = vadd.f32 %v1617, %v1765
      %v1796 = vadd.f32 %v1618, %v1768
      %v1797 = vadd.f32 %v1619, %v1773
      %v1798 = vadd.f32 %v1620, %v1776
      %v1799 = vadd.f32 %v1621, %v1781
      %v1800 = vadd.f32 %v1622, %v1784
      %v1801 = vadd.f32 %v1623, %v1789
      %v1802 = vadd.f32 %v1624, %v1792
      %v1803 = vld [vmem:[%s2] sm:$0x1]
      %v1805 = vlaneseq
      %v1806 = vshrl.u32 %v1805, 7
      %v1807 = vsub.s32 0, %v1806
      %v1808 = vrot.slane %v1803, %v1807
      %v1810 = vadd.f32 %v1795, %v1808
      %v1811 = vadd.f32 %v1796, %v1808
      %v1812 = vadd.f32 %v1797, %v1808
      %v1813 = vadd.f32 %v1798, %v1808
      %v1814 = vadd.f32 %v1799, %v1808
      %v1815 = vadd.f32 %v1800, %v1808
      %v1816 = vadd.f32 %v1801, %v1808
      %v1817 = vadd.f32 %v1802, %v1808
      %v1818 = vmax.f32 %v1810, 0.0
      %v1819 = vmax.f32 %v1811, 0.0
      %v1820 = vmax.f32 %v1812, 0.0
      %v1821 = vmax.f32 %v1813, 0.0
      %v1822 = vmax.f32 %v1814, 0.0
      %v1823 = vmax.f32 %v1815, 0.0
      %v1824 = vmax.f32 %v1816, 0.0
      %v1825 = vmax.f32 %v1817, 0.0
      %v1826 = vmax.f32 %v1818, %v1819
      %v1828 = vrot.slane %v1826, 1
      %v1830 = vmax.f32 %v1826, %v1828
      %v1831 = vpack.c.bf16 %v1830, %v1830
      %vm1832 = vcmask 516096
      %vm1833 = vsmask.f32 256
      %vm1834 = vmand %vm1832, %vm1833
      %v1835 = vld [vmem:[%s170] sm:$0x1]
      %v1836 = vsel %vm1834, %v1831, %v1835
      %1837 = vst [vmem:[%s170] sm:$0x1] %v1836
      %v1840 = vunpack.c.l.s4 1983009808
      %v1841 = vunpack.c.0.s8 %v1840
      %v1842 = vlaneseq
      %v1843 = vshrl.u32 %v1842, 7
      %v1844 = vsub.s32 %v1841, %v1843
      %v1845 = vrot.slane %v1831, %v1844
      %v1847 = vshll.u32 %v1845, 16
      %v1849 = vrot.slane %v1847, 7
      %v1850 = vrot.slane %v1849, 2
      %vm1852 = vsmask.f32 7938
      %vm1853 = vmand %vm1832, %vm1852
      %v1854 = vld [vmem:[%s170] sm:$0x1]
      %v1855 = vsel %vm1853, %v1850, %v1854
      %1856 = vst [vmem:[%s170] sm:$0x1] %v1855
      %v1857 = vcombine.high %v1845, %v1845
      %v1858 = vrot.slane %v1857, 7
      %vm1860 = vcmask 517121
      %vm1861 = vsmask.f32 1280
      %vm1862 = vmand %vm1860, %vm1861
      %v1863 = vld [vmem:[%s170] sm:$0x2]
      %v1864 = vsel %vm1862, %v1858, %v1863
      %1865 = vst [vmem:[%s170] sm:$0x2] %v1864
      %v1867 = vshll.u32 %v1857, 16
      %vm1870 = vsmask.f32 7942
      %vm1871 = vmand %vm1860, %vm1870
      %v1872 = vld [vmem:[%s170] sm:$0x2]
      %v1873 = vsel %vm1871, %v1867, %v1872
      %1874 = vst [vmem:[%s170] sm:$0x2] %v1873
      %v1875 = vmax.f32 %v1820, %v1821
      %v1877 = vrot.slane %v1875, 1
      %v1879 = vmax.f32 %v1875, %v1877
      %v1880 = vpack.c.bf16 %v1879, %v1879
      %s1881 = scalar_lea.vmem %s170, 2
      %v1882 = vld [vmem:[%s1881] sm:$0x1]
      %v1883 = vsel %vm1834, %v1880, %v1882
      %1884 = vst [vmem:[%s1881] sm:$0x1] %v1883
      %v1887 = vunpack.c.l.s4 1983009808
      %v1888 = vunpack.c.0.s8 %v1887
      %v1889 = vlaneseq
      %v1890 = vshrl.u32 %v1889, 7
      %v1891 = vsub.s32 %v1888, %v1890
      %v1892 = vrot.slane %v1880, %v1891
      %v1894 = vshll.u32 %v1892, 16
      %v1896 = vrot.slane %v1894, 7
      %v1897 = vrot.slane %v1896, 2
      %v1899 = vld [vmem:[%s1881] sm:$0x1]
      %v1900 = vsel %vm1853, %v1897, %v1899
      %1901 = vst [vmem:[%s1881] sm:$0x1] %v1900
      %v1902 = vcombine.high %v1892, %v1892
      %v1903 = vrot.slane %v1902, 7
      %v1905 = vld [vmem:[%s1881] sm:$0x2]
      %v1906 = vsel %vm1862, %v1903, %v1905
      %1907 = vst [vmem:[%s1881] sm:$0x2] %v1906
      %v1909 = vshll.u32 %v1902, 16
      %v1912 = vld [vmem:[%s1881] sm:$0x2]
      %v1913 = vsel %vm1871, %v1909, %v1912
      %1914 = vst [vmem:[%s1881] sm:$0x2] %v1913
      %v1915 = vmax.f32 %v1822, %v1823
      %v1917 = vrot.slane %v1915, 1
      %v1919 = vmax.f32 %v1915, %v1917
      %v1920 = vpack.c.bf16 %v1919, %v1919
      %s1921 = scalar_lea.vmem %s170, 4
      %v1922 = vld [vmem:[%s1921] sm:$0x1]
      %v1923 = vsel %vm1834, %v1920, %v1922
      %1924 = vst [vmem:[%s1921] sm:$0x1] %v1923
      %v1927 = vunpack.c.l.s4 1983009808
      %v1928 = vunpack.c.0.s8 %v1927
      %v1929 = vlaneseq
      %v1930 = vshrl.u32 %v1929, 7
      %v1931 = vsub.s32 %v1928, %v1930
      %v1932 = vrot.slane %v1920, %v1931
      %v1934 = vshll.u32 %v1932, 16
      %v1936 = vrot.slane %v1934, 7
      %v1937 = vrot.slane %v1936, 2
      %v1939 = vld [vmem:[%s1921] sm:$0x1]
      %v1940 = vsel %vm1853, %v1937, %v1939
      %1941 = vst [vmem:[%s1921] sm:$0x1] %v1940
      %v1942 = vcombine.high %v1932, %v1932
      %v1943 = vrot.slane %v1942, 7
      %v1945 = vld [vmem:[%s1921] sm:$0x2]
      %v1946 = vsel %vm1862, %v1943, %v1945
      %1947 = vst [vmem:[%s1921] sm:$0x2] %v1946
      %v1949 = vshll.u32 %v1942, 16
      %v1952 = vld [vmem:[%s1921] sm:$0x2]
      %v1953 = vsel %vm1871, %v1949, %v1952
      %1954 = vst [vmem:[%s1921] sm:$0x2] %v1953
      %v1955 = vmax.f32 %v1824, %v1825
      %v1957 = vrot.slane %v1955, 1
      %v1959 = vmax.f32 %v1955, %v1957
      %v1960 = vpack.c.bf16 %v1959, %v1959
      %s1961 = scalar_lea.vmem %s170, 6
      %v1962 = vld [vmem:[%s1961] sm:$0x1]
      %v1963 = vsel %vm1834, %v1960, %v1962
      %1964 = vst [vmem:[%s1961] sm:$0x1] %v1963
      %v1967 = vunpack.c.l.s4 1983009808
      %v1968 = vunpack.c.0.s8 %v1967
      %v1969 = vlaneseq
      %v1970 = vshrl.u32 %v1969, 7
      %v1971 = vsub.s32 %v1968, %v1970
      %v1972 = vrot.slane %v1960, %v1971
      %v1974 = vshll.u32 %v1972, 16
      %v1976 = vrot.slane %v1974, 7
      %v1977 = vrot.slane %v1976, 2
      %v1979 = vld [vmem:[%s1961] sm:$0x1]
      %v1980 = vsel %vm1853, %v1977, %v1979
      %1981 = vst [vmem:[%s1961] sm:$0x1] %v1980
      %v1982 = vcombine.high %v1972, %v1972
      %v1983 = vrot.slane %v1982, 7
      %v1985 = vld [vmem:[%s1961] sm:$0x2]
      %v1986 = vsel %vm1862, %v1983, %v1985
      %1987 = vst [vmem:[%s1961] sm:$0x2] %v1986
      %v1989 = vshll.u32 %v1982, 16
      %v1992 = vld [vmem:[%s1961] sm:$0x2]
      %v1993 = vsel %vm1871, %v1989, %v1992
      %1994 = vst [vmem:[%s1961] sm:$0x2] %v1993
      %p1995 = scmp.lt.s32.totalorder %s14, 1
      %s1996 = scalar_select %p1995, %s14, 1
      %s1997 = smul.addr %s1996, 4
      %s1998 = smul.addr %s1997, 2
      %s1999 = scalar_lea.vmem %s3, %s1998
      // Predicated region
      $region33: #{captcha_forward.9} parent=31 // pred_check
        %p2000 = pneg %p100
      $region34: #{captcha_forward.9} parent=31 // pred_check_branch
        %2002 = sbr.rel (%p2000) target = $region36
      $region35: #{captcha_forward.9} parent=31 // pred_region
        _
      $region36: #{captcha_forward.9} parent=31 // pred_fallthru
        _
    $region32: #{captcha_forward.9} parent=5 // pred_fallthru
      _
    %p2003 = scmp.le.s32.totalorder 2, %s9
    // Predicated region
    $region37: #{captcha_forward.9} parent=5 // pred_check
      %p2004 = pneg %p2003
    $region38: #{captcha_forward.9} parent=5 // pred_check_branch
      %2006 = sbr.rel (%p2004) target = $region40
    $region39: #{captcha_forward.9} parent=5 // pred_region
      %s2007 = ssub.s32 %s9, 2
      // Predicated region
      $region41: #{captcha_forward.9} parent=39 // pred_check
        %p2008 = pneg %p106
      $region42: #{captcha_forward.9} parent=39 // pred_check_branch
        %2010 = sbr.rel (%p2008) target = $region44
      $region43: #{captcha_forward.9} parent=39 // pred_region
        %p2011 = scmp.lt.s32.totalorder %s15, 1
        %s2012 = scalar_select %p2011, %s15, 1
        %s2013 = smul.addr %s2012, 4
        %s2014 = smul.addr %s2013, 2
        %s2015 = scalar_lea.vmem %s3, %s2014
      $region44: #{captcha_forward.9} parent=39 // pred_fallthru
        _
    $region40: #{captcha_forward.9} parent=5 // pred_fallthru
      _
  $region6: #{captcha_forward.9} parent=0 // loop_footer
    %s13 = sadd.s32 1, %s9
  $region7: #{captcha_forward.9} parent=0 // loop_footer_branch
    %8 = sbr.rel target = $region3
  $region8: #{captcha_forward.9} parent=0 // loop_exit
    _

// kernel: captcha_forward.10
$region0: #{captcha_forward.10}
  #allocation0 [shape = 'u32[]', space=smem, size = 0x4, offset = 0x4, fixed_abs, tag = 'smem constant byte address 0x4 - core index']
  #allocation1 [shape = 'u32[144,128]{1,0:T(1,128)}', space=vmem, size = 0x12000, scoped, tag = 'internal scratch']
  %s0 = inlined_call_operand.vmem [shape: bf16[8,256], index: 0, kind: input, shape index: {}]
  %s1 = inlined_call_operand.vmem [shape: bf16[256,128], index: 1, kind: input, shape index: {}]
  %s2 = inlined_call_operand.vmem [shape: f32[1,128], index: 2, kind: input, shape index: {}]
  %s3 = inlined_call_operand.vmem [shape: bf16[8,128], index: 3, kind: output, shape index: {}]
  %s4 = sld [smem:[#allocation0]]
  $region22: #{captcha_forward.10} parent=0
    _
  %s6 = ssub.s32 1, %s4
  %s7 = scalar_select 0, %s6, %s4
  // Predicated region
  $region2: #{captcha_forward.10} parent=0 // pred_check
    _
  $region3: #{captcha_forward.10} parent=0 // pred_check_branch
    %9 = sbr.rel (0) target = $region5
  $region4: #{captcha_forward.10} parent=0 // pred_region
    _
  $region5: #{captcha_forward.10} parent=0 // pred_fallthru
    _
  // Predicated region
  $region6: #{captcha_forward.10} parent=0 // pred_check
    _
  $region7: #{captcha_forward.10} parent=0 // pred_check_branch
    %11 = sbr.rel (0) target = $region9
  $region8: #{captcha_forward.10} parent=0 // pred_region
    _
  $region9: #{captcha_forward.10} parent=0 // pred_fallthru
    _
  // Predicated region
  $region10: #{captcha_forward.10} parent=0 // pred_check
    _
  $region11: #{captcha_forward.10} parent=0 // pred_check_branch
    %13 = sbr.rel (0) target = $region13
  $region12: #{captcha_forward.10} parent=0 // pred_region
    _
  $region13: #{captcha_forward.10} parent=0 // pred_fallthru
    _
  %v15 = vld [vmem:[%s0] sm:$0xff]
  %v16 = vld [vmem:[%s1] sm:$0xf]
  %v17 = vld [vmem:[%s1 + $0x4] sm:$0xf]
  %v18 = vld [vmem:[%s1 + $0x8] sm:$0xf]
  %v19 = vld [vmem:[%s1 + $0xc] sm:$0xf]
  %v20 = vld [vmem:[%s1 + $0x10] sm:$0xf]
  %v21 = vld [vmem:[%s1 + $0x14] sm:$0xf]
  %v22 = vld [vmem:[%s1 + $0x18] sm:$0xf]
  %v23 = vld [vmem:[%s1 + $0x1c] sm:$0xf]
  %v24 = vld [vmem:[%s1 + $0x20] sm:$0xf]
  %v25 = vld [vmem:[%s1 + $0x24] sm:$0xf]
  %v26 = vld [vmem:[%s1 + $0x28] sm:$0xf]
  %v27 = vld [vmem:[%s1 + $0x2c] sm:$0xf]
  %v28 = vld [vmem:[%s1 + $0x30] sm:$0xf]
  %v29 = vld [vmem:[%s1 + $0x34] sm:$0xf]
  %v30 = vld [vmem:[%s1 + $0x38] sm:$0xf]
  %v31 = vld [vmem:[%s1 + $0x3c] sm:$0xf]
  %v32 = vld [vmem:[%s1 + $0x40] sm:$0xf]
  %v33 = vld [vmem:[%s1 + $0x44] sm:$0xf]
  %v34 = vld [vmem:[%s1 + $0x48] sm:$0xf]
  %v35 = vld [vmem:[%s1 + $0x4c] sm:$0xf]
  %v36 = vld [vmem:[%s1 + $0x50] sm:$0xf]
  %v37 = vld [vmem:[%s1 + $0x54] sm:$0xf]
  %v38 = vld [vmem:[%s1 + $0x58] sm:$0xf]
  %v39 = vld [vmem:[%s1 + $0x5c] sm:$0xf]
  %v40 = vld [vmem:[%s1 + $0x60] sm:$0xf]
  %v41 = vld [vmem:[%s1 + $0x64] sm:$0xf]
  %v42 = vld [vmem:[%s1 + $0x68] sm:$0xf]
  %v43 = vld [vmem:[%s1 + $0x6c] sm:$0xf]
  %v44 = vld [vmem:[%s1 + $0x70] sm:$0xf]
  %v45 = vld [vmem:[%s1 + $0x74] sm:$0xf]
  %v46 = vld [vmem:[%s1 + $0x78] sm:$0xf]
  %v47 = vld [vmem:[%s1 + $0x7c] sm:$0xf]
  %v48 = vld [vmem:[%s2] sm:$0x1]
  %v50 = vlaneseq
  %v51 = vshrl.u32 %v50, 7
  %v52 = vsub.s32 0, %v51
  %v53 = vrot.slane %v48, %v52
  %v56 = vunpack.c.l.b16 %v15
  %v57 = vunpack.c.h.b16 %v15
  %v58 = vpack.c.b16 %v56, %v56
  %v59 = vpack.c.b16 %v57, %v57
  %v94 = vunpack.c.l.b16 %v16
  %v95 = vunpack.c.l.b16 %v17
  %v96 = vunpack.c.l.b16 %v18
  %v97 = vunpack.c.l.b16 %v19
  %v98 = vunpack.c.l.b16 %v20
  %v99 = vunpack.c.l.b16 %v21
  %v100 = vunpack.c.l.b16 %v22
  %v101 = vunpack.c.l.b16 %v23
  %v102 = vunpack.c.l.b16 %v24
  %v103 = vunpack.c.l.b16 %v25
  %v104 = vunpack.c.l.b16 %v26
  %v105 = vunpack.c.l.b16 %v27
  %v106 = vunpack.c.l.b16 %v28
  %v107 = vunpack.c.l.b16 %v29
  %v108 = vunpack.c.l.b16 %v30
  %v109 = vunpack.c.l.b16 %v31
  %v110 = vunpack.c.l.b16 %v32
  %v111 = vunpack.c.l.b16 %v33
  %v112 = vunpack.c.l.b16 %v34
  %v113 = vunpack.c.l.b16 %v35
  %v114 = vunpack.c.l.b16 %v36
  %v115 = vunpack.c.l.b16 %v37
  %v116 = vunpack.c.l.b16 %v38
  %v117 = vunpack.c.l.b16 %v39
  %v118 = vunpack.c.l.b16 %v40
  %v119 = vunpack.c.l.b16 %v41
  %v120 = vunpack.c.l.b16 %v42
  %v121 = vunpack.c.l.b16 %v43
  %v122 = vunpack.c.l.b16 %v44
  %v123 = vunpack.c.l.b16 %v45
  %v124 = vunpack.c.l.b16 %v46
  %v125 = vunpack.c.l.b16 %v47
  %v126 = vpack.c.b16 %v95, %v94
  %v127 = vpack.c.b16 %v97, %v96
  %v128 = vpack.c.b16 %v99, %v98
  %v129 = vpack.c.b16 %v101, %v100
  %v130 = vpack.c.b16 %v103, %v102
  %v131 = vpack.c.b16 %v105, %v104
  %v132 = vpack.c.b16 %v107, %v106
  %v133 = vpack.c.b16 %v109, %v108
  %v134 = vpack.c.b16 %v111, %v110
  %v135 = vpack.c.b16 %v113, %v112
  %v136 = vpack.c.b16 %v115, %v114
  %v137 = vpack.c.b16 %v117, %v116
  %v138 = vpack.c.b16 %v119, %v118
  %v139 = vpack.c.b16 %v121, %v120
  %v140 = vpack.c.b16 %v123, %v122
  %v141 = vpack.c.b16 %v125, %v124
  %158 = vmatprep.subr.bf16.mxu0 0
  %159 = vmatpush1.bf16.msra.mxu0 %v133
  %160 = vmatprep.subr.bf16.mxu0 0
  %161 = vmatpush1.bf16.msra.mxu0 %v132
  %162 = vmatprep.subr.bf16.mxu0 0
  %163 = vmatpush1.bf16.msra.mxu0 %v131
  %164 = vmatprep.subr.bf16.mxu0 0
  %165 = vmatpush1.bf16.msra.mxu0 %v130
  %166 = vmatprep.subr.bf16.mxu0 0
  %167 = vmatpush1.bf16.msra.mxu0 %v129
  %168 = vmatprep.subr.bf16.mxu0 0
  %169 = vmatpush1.bf16.msra.mxu0 %v128
  %170 = vmatprep.subr.bf16.mxu0 0
  %171 = vmatpush1.bf16.msra.mxu0 %v127
  %172 = vmatprep.subr.bf16.mxu0 0
  %173 = vmatpush1.bf16.msra.mxu0 %v126
  %174 = vmatprep.subr.bf16.mxu0 0
  %175 = vmatpush2.bf16.msra.mxu0 %v141
  %176 = vmatprep.subr.bf16.mxu0 0
  %177 = vmatpush2.bf16.msra.mxu0 %v140
  %178 = vmatprep.subr.bf16.mxu0 0
  %179 = vmatpush2.bf16.msra.mxu0 %v139
  %180 = vmatprep.subr.bf16.mxu0 0
  %181 = vmatpush2.bf16.msra.mxu0 %v138
  %182 = vmatprep.subr.bf16.mxu0 0
  %183 = vmatpush2.bf16.msra.mxu0 %v137
  %184 = vmatprep.subr.bf16.mxu0 0
  %185 = vmatpush2.bf16.msra.mxu0 %v136
  %186 = vmatprep.subr.bf16.mxu0 0
  %187 = vmatpush2.bf16.msra.mxu0 %v135
  %188 = vmatprep.subr.bf16.mxu0 0
  %189 = vmatpush2.bf16.msra.mxu0 %v134
  %190 = vmatprep.mubr.bf16.mxu0 %v59
  %191 = vmatmul.mubr.bf16.gmra.mxu0 %v58
  %v192 = vpop.f32.mrf.mxu0
  %v193 = vadd.f32 %v53, %v192
  %v194 = vpop.f32.mrf.mxu0
  %v195 = vpop.f32.mrf.mxu0
  %v196 = vpop.f32.mrf.mxu0
  %197 = vdwg.mxu0
  %v198 = vpack.c.bf16 %v193, %v193
  %199 = vst [vmem:[%s3] sm:$0xf] %v198
  // Predicated region
  $region14: #{captcha_forward.10} parent=0 // pred_check
    _
  $region15: #{captcha_forward.10} parent=0 // pred_check_branch
    %201 = sbr.rel (0) target = $region17
  $region16: #{captcha_forward.10} parent=0 // pred_region
    _
  $region17: #{captcha_forward.10} parent=0 // pred_fallthru
    _
  // Predicated region
  $region18: #{captcha_forward.10} parent=0 // pred_check
    _
  $region19: #{captcha_forward.10} parent=0 // pred_check_branch
    %203 = sbr.rel (0) target = $region21
  $region20: #{captcha_forward.10} parent=0 // pred_region
    _
  $region21: #{captcha_forward.10} parent=0 // pred_fallthru
    _

// kernel: captcha_forward.11
$region0: #{captcha_forward.11}
  #allocation0 [shape = 'u32[]', space=smem, size = 0x4, offset = 0x4, fixed_abs, tag = 'smem constant byte address 0x4 - core index']
  #allocation1 [shape = 'u32[144,128]{1,0:T(1,128)}', space=vmem, size = 0x12000, scoped, tag = 'internal scratch']
  %s0 = inlined_call_operand.vmem [shape: bf16[8,64], index: 0, kind: input, shape index: {}]
  %s1 = inlined_call_operand.vmem [shape: bf16[64,256], index: 1, kind: input, shape index: {}]
  %s2 = inlined_call_operand.vmem [shape: f32[1,256], index: 2, kind: input, shape index: {}]
  %s3 = inlined_call_operand.vmem [shape: f32[8,256], index: 3, kind: output, shape index: {}]
  %s4 = sld [smem:[#allocation0]]
  $region22: #{captcha_forward.11} parent=0
    _
  %s6 = ssub.s32 1, %s4
  %s7 = scalar_select 0, %s6, %s4
  // Predicated region
  $region2: #{captcha_forward.11} parent=0 // pred_check
    _
  $region3: #{captcha_forward.11} parent=0 // pred_check_branch
    %9 = sbr.rel (0) target = $region5
  $region4: #{captcha_forward.11} parent=0 // pred_region
    _
  $region5: #{captcha_forward.11} parent=0 // pred_fallthru
    _
  // Predicated region
  $region6: #{captcha_forward.11} parent=0 // pred_check
    _
  $region7: #{captcha_forward.11} parent=0 // pred_check_branch
    %11 = sbr.rel (0) target = $region9
  $region8: #{captcha_forward.11} parent=0 // pred_region
    _
  $region9: #{captcha_forward.11} parent=0 // pred_fallthru
    _
  // Predicated region
  $region10: #{captcha_forward.11} parent=0 // pred_check
    _
  $region11: #{captcha_forward.11} parent=0 // pred_check_branch
    %13 = sbr.rel (0) target = $region13
  $region12: #{captcha_forward.11} parent=0 // pred_region
    _
  $region13: #{captcha_forward.11} parent=0 // pred_fallthru
    _
  %v15 = vld [vmem:[%s0] sm:$0xf]
  %v16 = vld [vmem:[%s1] sm:$0xff]
  %v17 = vld [vmem:[%s1 + $0x8] sm:$0xff]
  %v18 = vld [vmem:[%s1 + $0x10] sm:$0xff]
  %v19 = vld [vmem:[%s1 + $0x18] sm:$0xff]
  %v20 = vld [vmem:[%s1 + $0x20] sm:$0xff]
  %v21 = vld [vmem:[%s1 + $0x28] sm:$0xff]
  %v22 = vld [vmem:[%s1 + $0x30] sm:$0xff]
  %v23 = vld [vmem:[%s1 + $0x38] sm:$0xff]
  %v24 = vld [vmem:[%s2] sm:$0x3]
  %v26 = vlaneseq
  %v27 = vshrl.u32 %v26, 7
  %v28 = vsub.s32 0, %v27
  %v29 = vrot.slane %v24, %v28
  %v30 = vlaneseq
  %v31 = vshrl.u32 %v30, 7
  %v32 = vsub.s32 1, %v31
  %v33 = vrot.slane %v24, %v32
  %v44 = vunpack.c.l.b16 %v16
  %v45 = vunpack.c.h.b16 %v16
  %v46 = vunpack.c.l.b16 %v17
  %v47 = vunpack.c.h.b16 %v17
  %v48 = vunpack.c.l.b16 %v18
  %v49 = vunpack.c.h.b16 %v18
  %v50 = vunpack.c.l.b16 %v19
  %v51 = vunpack.c.h.b16 %v19
  %v52 = vunpack.c.l.b16 %v20
  %v53 = vunpack.c.h.b16 %v20
  %v54 = vunpack.c.l.b16 %v21
  %v55 = vunpack.c.h.b16 %v21
  %v56 = vunpack.c.l.b16 %v22
  %v57 = vunpack.c.h.b16 %v22
  %v58 = vunpack.c.l.b16 %v23
  %v59 = vunpack.c.h.b16 %v23
  %v60 = vpack.c.b16 %v46, %v44
  %v61 = vpack.c.b16 %v47, %v45
  %v62 = vpack.c.b16 %v50, %v48
  %v63 = vpack.c.b16 %v51, %v49
  %v64 = vpack.c.b16 %v54, %v52
  %v65 = vpack.c.b16 %v55, %v53
  %v66 = vpack.c.b16 %v58, %v56
  %v67 = vpack.c.b16 %v59, %v57
  %vm76 = vcmask 523264
  %v78 = vsel %vm76, %v15, 0
  %80 = vmatprep.subr.bf16.mxu0 0
  %81 = vmatpush1.bf16.msra.mxu0 0
  %82 = vmatprep.subr.bf16.mxu0 0
  %83 = vmatpush1.bf16.msra.mxu0 0
  %84 = vmatprep.subr.bf16.mxu0 0
  %85 = vmatpush1.bf16.msra.mxu0 0
  %86 = vmatprep.subr.bf16.mxu0 0
  %87 = vmatpush1.bf16.msra.mxu0 0
  %88 = vmatprep.subr.bf16.mxu0 %v67
  %89 = vmatpush1.bf16.msra.mxu0 %v66
  %90 = vmatprep.subr.bf16.mxu0 %v65
  %91 = vmatpush1.bf16.msra.mxu0 %v64
  %92 = vmatprep.subr.bf16.mxu0 %v63
  %93 = vmatpush1.bf16.msra.mxu0 %v62
  %94 = vmatprep.subr.bf16.mxu0 %v61
  %95 = vmatpush1.bf16.msra.mxu0 %v60
  %96 = vmatprep.subr.bf16.mxu0 0
  %97 = vmatpush2.bf16.msra.mxu0 0
  %98 = vmatprep.subr.bf16.mxu0 0
  %99 = vmatpush2.bf16.msra.mxu0 0
  %100 = vmatprep.subr.bf16.mxu0 0
  %101 = vmatpush2.bf16.msra.mxu0 0
  %102 = vmatprep.subr.bf16.mxu0 0
  %103 = vmatpush2.bf16.msra.mxu0 0
  %104 = vmatprep.subr.bf16.mxu0 0
  %105 = vmatpush2.bf16.msra.mxu0 0
  %106 = vmatprep.subr.bf16.mxu0 0
  %107 = vmatpush2.bf16.msra.mxu0 0
  %108 = vmatprep.subr.bf16.mxu0 0
  %109 = vmatpush2.bf16.msra.mxu0 0
  %110 = vmatprep.subr.bf16.mxu0 0
  %111 = vmatpush2.bf16.msra.mxu0 0
  %112 = vmatprep.mubr.bf16.mxu0 0
  %113 = vmatmul.mubr.bf16.gmra.mxu0 %v78
  %v114 = vpop.f32.mrf.mxu0
  %v115 = vadd.f32 %v29, %v114
  %v116 = vpop.f32.mrf.mxu0
  %v117 = vadd.f32 %v33, %v116
  %v118 = vpop.f32.mrf.mxu0
  %v119 = vpop.f32.mrf.mxu0
  %120 = vdwg.mxu0
  %121 = vst [vmem:[%s3] sm:$0xff] %v115
  %122 = vst [vmem:[%s3 + $0x8] sm:$0xff] %v117
  // Predicated region
  $region14: #{captcha_forward.11} parent=0 // pred_check
    _
  $region15: #{captcha_forward.11} parent=0 // pred_check_branch
    %124 = sbr.rel (0) target = $region17
  $region16: #{captcha_forward.11} parent=0 // pred_region
    _
  $region17: #{captcha_forward.11} parent=0 // pred_fallthru
    _
  // Predicated region
  $region18: #{captcha_forward.11} parent=0 // pred_check
    _
  $region19: #{captcha_forward.11} parent=0 // pred_check_branch
    %126 = sbr.rel (0) target = $region21
  $region20: #{captcha_forward.11} parent=0 // pred_region
    _
  $region21: #{captcha_forward.11} parent=0 // pred_fallthru
    _

// kernel: captcha_forward.8
$region0: #{captcha_forward.8}
  #allocation0 [shape = 'u32[]', space=smem, size = 0x4, offset = 0x4, fixed_abs, tag = 'smem constant byte address 0x4 - core index']
  #allocation1 [shape = 'u32[144,128]{1,0:T(1,128)}', space=vmem, size = 0x12000, scoped, tag = 'internal scratch']
  #allocation2 [shape = 'f32[18,18,3]{2,1,0:T(8,128)}', space=vmem, size = 0x36000, scoped, tag = 'scratch operand']
  %s0 = inlined_call_operand.vmem [shape: f32[2,16,16,3], index: 0, kind: input, shape index: {}]
  %s1 = inlined_call_operand.vmem [shape: bf16[9,3,128], index: 1, kind: input, shape index: {}]
  %s2 = inlined_call_operand.vmem [shape: f32[1,128], index: 2, kind: input, shape index: {}]
  %s3 = inlined_call_operand.vmem [shape: bf16[2,8,8,128], index: 3, kind: output, shape index: {}]
  %s4 = sld [smem:[#allocation0]]
  $region45: #{captcha_forward.8} parent=0
    _
  %s6 = ssub.s32 1, %s4
  %s7 = scalar_select 0, %s6, %s4
  loop: start=0, step=1, limit=4
  $region2: #{captcha_forward.8} parent=0 // loop_pre_header
    _
  $region3: #{captcha_forward.8} parent=0 // loop_header
    %s9 = sphi 0, %s13
    %p10 = scmp.ge.s32.totalorder %s9, 4
    %s19 = sphi 0, %s21
    %s22 = sphi 0, %s19
    %s23 = sphi 0, %s22
    %s39 = sphi 0, %s23
    %s43 = sphi 0, %s43
    %s45 = sphi 0, %s43
    %s46 = sphi 0, %s45
    %s60 = sphi 0, %s46
    %s64 = sphi 0, %s64
    %s66 = sphi 0, %s64
    %s67 = sphi 0, %s66
    %s81 = sphi 0, %s67
    %s87 = sphi 0, %s89
    %s90 = sphi 0, %s87
    %s91 = sphi 0, %s90
    %s107 = sphi 0, %s91
  $region4: #{captcha_forward.8} parent=0 // loop_header_branch
    %12 = sbr.rel (%p10) target = $region8
  $region5: #{captcha_forward.8} parent=0 // loop_body
    %s14 = ssub.s32 %s9, 1
    %s15 = ssub.s32 %s9, 2
    %s16 = sadd.s32 %s9, 1
    %s17 = ssub.s32 %s9, %s16
    %p18 = scmp.eq.s32.totalorder %s17, 0
    %s20 = sadd.s32 %s19, 1
    %s21 = scalar_select %p18, %s19, %s20
    %p24 = pneg %p18
    %p25 = scmp.eq.s32.totalorder %s9, 1
    %p26 = por %p24, %p25
    %p27 = scmp.ne.s32.totalorder %s19, %s22
    %p28 = scmp.eq.s32.totalorder %s9, 0
    %p29 = por %p27, %p28
    %p30 = scmp.ne.s32.totalorder %s19, %s22
    %p31 = scmp.eq.s32.totalorder %s14, 1
    %p32 = por %p30, %p31
    %p33 = scmp.ne.s32.totalorder %s22, %s23
    %p34 = scmp.eq.s32.totalorder %s14, 0
    %p35 = por %p33, %p34
    %p36 = scmp.ne.s32.totalorder %s22, %s23
    %p37 = scmp.eq.s32.totalorder %s15, 1
    %p38 = por %p36, %p37
    %p40 = scmp.ne.s32.totalorder %s23, %s39
    %p41 = scmp.eq.s32.totalorder %s15, 0
    %p42 = por %p40, %p41
    %s44 = sadd.s32 %s43, 1
    %p47 = scmp.eq.s32.totalorder %s9, 1
    %p48 = scmp.ne.s32.totalorder %s43, %s45
    %p49 = scmp.eq.s32.totalorder %s9, 0
    %p50 = por %p48, %p49
    %p51 = scmp.ne.s32.totalorder %s43, %s45
    %p52 = scmp.eq.s32.totalorder %s14, 1
    %p53 = por %p51, %p52
    %p54 = scmp.ne.s32.totalorder %s45, %s46
    %p55 = scmp.eq.s32.totalorder %s14, 0
    %p56 = por %p54, %p55
    %p57 = scmp.ne.s32.totalorder %s45, %s46
    %p58 = scmp.eq.s32.totalorder %s15, 1
    %p59 = por %p57, %p58
    %p61 = scmp.ne.s32.totalorder %s46, %s60
    %p62 = scmp.eq.s32.totalorder %s15, 0
    %p63 = por %p61, %p62
    %s65 = sadd.s32 %s64, 1
    %p68 = scmp.eq.s32.totalorder %s9, 1
    %p69 = scmp.ne.s32.totalorder %s64, %s66
    %p70 = scmp.eq.s32.totalorder %s9, 0
    %p71 = por %p69, %p70
    %p72 = scmp.ne.s32.totalorder %s64, %s66
    %p73 = scmp.eq.s32.totalorder %s14, 1
    %p74 = por %p72, %p73
    %p75 = scmp.ne.s32.totalorder %s66, %s67
    %p76 = scmp.eq.s32.totalorder %s14, 0
    %p77 = por %p75, %p76
    %p78 = scmp.ne.s32.totalorder %s66, %s67
    %p79 = scmp.eq.s32.totalorder %s15, 1
    %p80 = por %p78, %p79
    %p82 = scmp.ne.s32.totalorder %s67, %s81
    %p83 = scmp.eq.s32.totalorder %s15, 0
    %p84 = por %p82, %p83
    %s85 = ssub.s32 %s9, %s16
    %p86 = scmp.eq.s32.totalorder %s85, 0
    %s88 = sadd.s32 %s87, 1
    %s89 = scalar_select %p86, %s87, %s88
    %p92 = pneg %p86
    %p93 = scmp.eq.s32.totalorder %s9, 1
    %p94 = por %p92, %p93
    %p95 = scmp.ne.s32.totalorder %s87, %s90
    %p96 = scmp.eq.s32.totalorder %s9, 0
    %p97 = por %p95, %p96
    %p98 = scmp.ne.s32.totalorder %s87, %s90
    %p99 = scmp.eq.s32.totalorder %s14, 1
    %p100 = por %p98, %p99
    %p101 = scmp.ne.s32.totalorder %s90, %s91
    %p102 = scmp.eq.s32.totalorder %s14, 0
    %p103 = por %p101, %p102
    %p104 = scmp.ne.s32.totalorder %s90, %s91
    %p105 = scmp.eq.s32.totalorder %s15, 1
    %p106 = por %p104, %p105
    %p108 = scmp.ne.s32.totalorder %s91, %s107
    %p109 = scmp.eq.s32.totalorder %s15, 0
    %p110 = por %p108, %p109
    %p111 = scmp.le.s32.totalorder 1, %s9
    %p112 = scmp.lt.s32.totalorder %s9, 3
    %p113 = pnand %p111, %p112
    %p114 = pneg %p113
    // Predicated region
    $region9: #{captcha_forward.8} parent=5 // pred_check
      _
    $region10: #{captcha_forward.8} parent=5 // pred_check_branch
      %116 = sbr.rel (%p113) target = $region12
    $region11: #{captcha_forward.8} parent=5 // pred_region
      %s117 = ssub.s32 %s9, 1
      // Predicated region
      $region13: #{captcha_forward.8} parent=11 // pred_check
        %p118 = pneg %p56
      $region14: #{captcha_forward.8} parent=11 // pred_check_branch
        %120 = sbr.rel (%p118) target = $region16
      $region15: #{captcha_forward.8} parent=11 // pred_region
        _
      $region16: #{captcha_forward.8} parent=11 // pred_fallthru
        _
      // Predicated region
      $region17: #{captcha_forward.8} parent=11 // pred_check
        %p121 = pneg %p77
      $region18: #{captcha_forward.8} parent=11 // pred_check_branch
        %123 = sbr.rel (%p121) target = $region20
      $region19: #{captcha_forward.8} parent=11 // pred_region
        _
      $region20: #{captcha_forward.8} parent=11 // pred_fallthru
        _
    $region12: #{captcha_forward.8} parent=5 // pred_fallthru
      _
    %p124 = scmp.lt.s32.totalorder %s9, 2
    // Predicated region
    $region21: #{captcha_forward.8} parent=5 // pred_check
      %p125 = pneg %p124
    $region22: #{captcha_forward.8} parent=5 // pred_check_branch
      %127 = sbr.rel (%p125) target = $region24
    $region23: #{captcha_forward.8} parent=5 // pred_region
      // Predicated region
      $region25: #{captcha_forward.8} parent=23 // pred_check
        %p128 = pneg %p29
      $region26: #{captcha_forward.8} parent=23 // pred_check_branch
        %130 = sbr.rel (%p128) target = $region28
      $region27: #{captcha_forward.8} parent=23 // pred_region
        %p131 = scmp.lt.s32.totalorder %s9, 1
        %s132 = scalar_select %p131, %s9, 1
        %s133 = smul.addr %s132, 32
        %s134 = smul.addr %s133, 8
        %s135 = scalar_lea.vmem %s0, %s134
      $region28: #{captcha_forward.8} parent=23 // pred_fallthru
        _
    $region24: #{captcha_forward.8} parent=5 // pred_fallthru
      _
    %p136 = scmp.le.s32.totalorder 1, %s9
    %p137 = scmp.lt.s32.totalorder %s9, 3
    %p138 = pnand %p136, %p137
    %p139 = pneg %p138
    // Predicated region
    $region29: #{captcha_forward.8} parent=5 // pred_check
      _
    $region30: #{captcha_forward.8} parent=5 // pred_check_branch
      %141 = sbr.rel (%p138) target = $region32
    $region31: #{captcha_forward.8} parent=5 // pred_region
      %s142 = ssub.s32 %s9, 1
      %p143 = scmp.lt.s32.totalorder %s14, 1
      %s144 = scalar_select %p143, %s14, 1
      %s145 = smul.addr %s144, 32
      %s146 = smul.addr %s145, 8
      %s147 = scalar_lea.vmem %s0, %s146
      %p148 = pneg %p35
      %p149 = pneg %p32
      %p150 = pneg %p56
      %p151 = pneg %p53
      %p152 = pneg %p77
      %p153 = pneg %p74
      %p154 = pneg %p103
      %p155 = pneg %p100
      %p156 = scmp.lt.s32.totalorder %s14, 1
      %s157 = scalar_select %p156, %s14, 1
      %s158 = smul.addr %s157, 8
      %s159 = smul.addr %s158, 4
      %s160 = scalar_lea.vmem %s3, %s159
      %p161 = scmp.lt.s32.totalorder %s14, 1
      %s162 = scalar_select %p161, %s14, 1
      %s163 = smul.addr %s162, 32
      %s164 = smul.addr %s163, 8
      %s165 = scalar_lea.vmem %s0, %s164
      %p166 = scmp.lt.s32.totalorder %s14, 1
      %s167 = scalar_select %p166, %s14, 1
      %s168 = smul.addr %s167, 8
      %s169 = smul.addr %s168, 4
      %s170 = scalar_lea.vmem %s3, %s169
      %vm172 = vcmask 23552
      %173 = vst.msk [vmem:[#allocation2] sm:$0xff] %vm172, 0.0
      %174 = vst.msk [vmem:[#allocation2 + $0x8] sm:$0xff] %vm172, 0.0
      %vm175 = vcmask 17408
      %176 = vst.msk [vmem:[#allocation2 + $0x10] sm:$0x3] %vm175, 0.0
      %177 = vst.msk [vmem:[#allocation2 + $0x18] sm:$0xff] %vm172, 0.0
      %178 = vst.msk [vmem:[#allocation2 + $0x20] sm:$0xff] %vm172, 0.0
      %179 = vst.msk [vmem:[#allocation2 + $0x28] sm:$0x3] %vm175, 0.0
      %180 = vst.msk [vmem:[#allocation2 + $0x30] sm:$0xff] %vm172, 0.0
      %181 = vst.msk [vmem:[#allocation2 + $0x38] sm:$0xff] %vm172, 0.0
      %182 = vst.msk [vmem:[#allocation2 + $0x40] sm:$0x3] %vm175, 0.0
      %183 = vst.msk [vmem:[#allocation2 + $0x48] sm:$0xff] %vm172, 0.0
      %184 = vst.msk [vmem:[#allocation2 + $0x50] sm:$0xff] %vm172, 0.0
      %185 = vst.msk [vmem:[#allocation2 + $0x58] sm:$0x3] %vm175, 0.0
      %186 = vst.msk [vmem:[#allocation2 + $0x60] sm:$0xff] %vm172, 0.0
      %187 = vst.msk [vmem:[#allocation2 + $0x68] sm:$0xff] %vm172, 0.0
      %188 = vst.msk [vmem:[#allocation2 + $0x70] sm:$0x3] %vm175, 0.0
      %189 = vst.msk [vmem:[#allocation2 + $0x78] sm:$0xff] %vm172, 0.0
      %190 = vst.msk [vmem:[#allocation2 + $0x80] sm:$0xff] %vm172, 0.0
      %191 = vst.msk [vmem:[#allocation2 + $0x88] sm:$0x3] %vm175, 0.0
      %192 = vst.msk [vmem:[#allocation2 + $0x90] sm:$0xff] %vm172, 0.0
      %193 = vst.msk [vmem:[#allocation2 + $0x98] sm:$0xff] %vm172, 0.0
      %194 = vst.msk [vmem:[#allocation2 + $0xa0] sm:$0x3] %vm175, 0.0
      %195 = vst.msk [vmem:[#allocation2 + $0xa8] sm:$0xff] %vm172, 0.0
      %196 = vst.msk [vmem:[#allocation2 + $0xb0] sm:$0xff] %vm172, 0.0
      %197 = vst.msk [vmem:[#allocation2 + $0xb8] sm:$0x3] %vm175, 0.0
      %198 = vst.msk [vmem:[#allocation2 + $0xc0] sm:$0xff] %vm172, 0.0
      %199 = vst.msk [vmem:[#allocation2 + $0xc8] sm:$0xff] %vm172, 0.0
      %200 = vst.msk [vmem:[#allocation2 + $0xd0] sm:$0x3] %vm175, 0.0
      %201 = vst.msk [vmem:[#allocation2 + $0xd8] sm:$0xff] %vm172, 0.0
      %202 = vst.msk [vmem:[#allocation2 + $0xe0] sm:$0xff] %vm172, 0.0
      %203 = vst.msk [vmem:[#allocation2 + $0xe8] sm:$0x3] %vm175, 0.0
      %204 = vst.msk [vmem:[#allocation2 + $0xf0] sm:$0xff] %vm172, 0.0
      %205 = vst.msk [vmem:[#allocation2 + $0xf8] sm:$0xff] %vm172, 0.0
      %206 = vst.msk [vmem:[#allocation2 + $0x100] sm:$0x3] %vm175, 0.0
      %207 = vst.msk [vmem:[#allocation2 + $0x108] sm:$0xff] %vm172, 0.0
      %208 = vst.msk [vmem:[#allocation2 + $0x110] sm:$0xff] %vm172, 0.0
      %209 = vst.msk [vmem:[#allocation2 + $0x118] sm:$0x3] %vm175, 0.0
      %210 = vst.msk [vmem:[#allocation2 + $0x120] sm:$0xff] %vm172, 0.0
      %211 = vst.msk [vmem:[#allocation2 + $0x128] sm:$0xff] %vm172, 0.0
      %212 = vst.msk [vmem:[#allocation2 + $0x130] sm:$0x3] %vm175, 0.0
      %213 = vst.msk [vmem:[#allocation2 + $0x138] sm:$0xff] %vm172, 0.0
      %214 = vst.msk [vmem:[#allocation2 + $0x140] sm:$0xff] %vm172, 0.0
      %215 = vst.msk [vmem:[#allocation2 + $0x148] sm:$0x3] %vm175, 0.0
      %216 = vst.msk [vmem:[#allocation2 + $0x150] sm:$0xff] %vm172, 0.0
      %217 = vst.msk [vmem:[#allocation2 + $0x158] sm:$0xff] %vm172, 0.0
      %218 = vst.msk [vmem:[#allocation2 + $0x160] sm:$0x3] %vm175, 0.0
      %219 = vst.msk [vmem:[#allocation2 + $0x168] sm:$0xff] %vm172, 0.0
      %220 = vst.msk [vmem:[#allocation2 + $0x170] sm:$0xff] %vm172, 0.0
      %221 = vst.msk [vmem:[#allocation2 + $0x178] sm:$0x3] %vm175, 0.0
      %222 = vst.msk [vmem:[#allocation2 + $0x180] sm:$0xff] %vm172, 0.0
      %223 = vst.msk [vmem:[#allocation2 + $0x188] sm:$0xff] %vm172, 0.0
      %224 = vst.msk [vmem:[#allocation2 + $0x190] sm:$0x3] %vm175, 0.0
      %225 = vst.msk [vmem:[#allocation2 + $0x198] sm:$0xff] %vm172, 0.0
      %226 = vst.msk [vmem:[#allocation2 + $0x1a0] sm:$0xff] %vm172, 0.0
      %227 = vst.msk [vmem:[#allocation2 + $0x1a8] sm:$0x3] %vm175, 0.0
      %v228 = vld [vmem:[%s165] sm:$0xff]
      %v229 = vld [vmem:[%s165 + $0x8] sm:$0xff]
      %v230 = vld [vmem:[%s165 + $0x10] sm:$0xff]
      %v231 = vld [vmem:[%s165 + $0x18] sm:$0xff]
      %v232 = vld [vmem:[%s165 + $0x20] sm:$0xff]
      %v233 = vld [vmem:[%s165 + $0x28] sm:$0xff]
      %v234 = vld [vmem:[%s165 + $0x30] sm:$0xff]
      %v235 = vld [vmem:[%s165 + $0x38] sm:$0xff]
      %v236 = vld [vmem:[%s165 + $0x40] sm:$0xff]
      %v237 = vld [vmem:[%s165 + $0x48] sm:$0xff]
      %v238 = vld [vmem:[%s165 + $0x50] sm:$0xff]
      %v239 = vld [vmem:[%s165 + $0x58] sm:$0xff]
      %v240 = vld [vmem:[%s165 + $0x60] sm:$0xff]
      %v241 = vld [vmem:[%s165 + $0x68] sm:$0xff]
      %v242 = vld [vmem:[%s165 + $0x70] sm:$0xff]
      %v243 = vld [vmem:[%s165 + $0x78] sm:$0xff]
      %v244 = vld [vmem:[%s165 + $0x80] sm:$0xff]
      %v245 = vld [vmem:[%s165 + $0x88] sm:$0xff]
      %v246 = vld [vmem:[%s165 + $0x90] sm:$0xff]
      %v247 = vld [vmem:[%s165 + $0x98] sm:$0xff]
      %v248 = vld [vmem:[%s165 + $0xa0] sm:$0xff]
      %v249 = vld [vmem:[%s165 + $0xa8] sm:$0xff]
      %v250 = vld [vmem:[%s165 + $0xb0] sm:$0xff]
      %v251 = vld [vmem:[%s165 + $0xb8] sm:$0xff]
      %v252 = vld [vmem:[%s165 + $0xc0] sm:$0xff]
      %v253 = vld [vmem:[%s165 + $0xc8] sm:$0xff]
      %v254 = vld [vmem:[%s165 + $0xd0] sm:$0xff]
      %v255 = vld [vmem:[%s165 + $0xd8] sm:$0xff]
      %v256 = vld [vmem:[%s165 + $0xe0] sm:$0xff]
      %v257 = vld [vmem:[%s165 + $0xe8] sm:$0xff]
      %v258 = vld [vmem:[%s165 + $0xf0] sm:$0xff]
      %v259 = vld [vmem:[%s165 + $0xf8] sm:$0xff]
      %s260 = scalar_lea.vmem [#allocation2], 24
      %261 = vst.msk [vmem:[%s260 + $0x1] sm:$0xff] %vm172, %v228
      %262 = vst.msk [vmem:[%s260 + $0x9] sm:$0xff] %vm172, %v229
      %263 = vst.msk [vmem:[%s260 + $0x19] sm:$0xff] %vm172, %v230
      %264 = vst.msk [vmem:[%s260 + $0x21] sm:$0xff] %vm172, %v231
      %265 = vst.msk [vmem:[%s260 + $0x31] sm:$0xff] %vm172, %v232
      %266 = vst.msk [vmem:[%s260 + $0x39] sm:$0xff] %vm172, %v233
      %267 = vst.msk [vmem:[%s260 + $0x49] sm:$0xff] %vm172, %v234
      %268 = vst.msk [vmem:[%s260 + $0x51] sm:$0xff] %vm172, %v235
      %269 = vst.msk [vmem:[%s260 + $0x61] sm:$0xff] %vm172, %v236
      %270 = vst.msk [vmem:[%s260 + $0x69] sm:$0xff] %vm172, %v237
      %271 = vst.msk [vmem:[%s260 + $0x79] sm:$0xff] %vm172, %v238
      %272 = vst.msk [vmem:[%s260 + $0x81] sm:$0xff] %vm172, %v239
      %273 = vst.msk [vmem:[%s260 + $0x91] sm:$0xff] %vm172, %v240
      %274 = vst.msk [vmem:[%s260 + $0x99] sm:$0xff] %vm172, %v241
      %275 = vst.msk [vmem:[%s260 + $0xa9] sm:$0xff] %vm172, %v242
      %276 = vst.msk [vmem:[%s260 + $0xb1] sm:$0xff] %vm172, %v243
      %277 = vst.msk [vmem:[%s260 + $0xc1] sm:$0xff] %vm172, %v244
      %278 = vst.msk [vmem:[%s260 + $0xc9] sm:$0xff] %vm172, %v245
      %279 = vst.msk [vmem:[%s260 + $0xd9] sm:$0xff] %vm172, %v246
      %280 = vst.msk [vmem:[%s260 + $0xe1] sm:$0xff] %vm172, %v247
      %281 = vst.msk [vmem:[%s260 + $0xf1] sm:$0xff] %vm172, %v248
      %282 = vst.msk [vmem:[%s260 + $0xf9] sm:$0xff] %vm172, %v249
      %283 = vst.msk [vmem:[%s260 + $0x109] sm:$0xff] %vm172, %v250
      %284 = vst.msk [vmem:[%s260 + $0x111] sm:$0xff] %vm172, %v251
      %285 = vst.msk [vmem:[%s260 + $0x121] sm:$0xff] %vm172, %v252
      %286 = vst.msk [vmem:[%s260 + $0x129] sm:$0xff] %vm172, %v253
      %287 = vst.msk [vmem:[%s260 + $0x139] sm:$0xff] %vm172, %v254
      %288 = vst.msk [vmem:[%s260 + $0x141] sm:$0xff] %vm172, %v255
      %289 = vst.msk [vmem:[%s260 + $0x151] sm:$0xff] %vm172, %v256
      %290 = vst.msk [vmem:[%s260 + $0x159] sm:$0xff] %vm172, %v257
      %291 = vst.msk [vmem:[%s260 + $0x169] sm:$0xff] %vm172, %v258
      %292 = vst.msk [vmem:[%s260 + $0x171] sm:$0xff] %vm172, %v259
      %v293 = vld [vmem:[#allocation2] sm:$0xff]
      %v294 = vld [vmem:[#allocation2 + $0x8] sm:$0xff]
      %v295 = vld [vmem:[#allocation2 + $0x18] sm:$0xff]
      %v296 = vld [vmem:[#allocation2 + $0x20] sm:$0xff]
      %v297 = vld [vmem:[#allocation2 + $0x30] sm:$0xff]
      %v298 = vld [vmem:[#allocation2 + $0x38] sm:$0xff]
      %v299 = vld [vmem:[#allocation2 + $0x48] sm:$0xff]
      %v300 = vld [vmem:[#allocation2 + $0x50] sm:$0xff]
      %v301 = vld [vmem:[#allocation2 + $0x60] sm:$0xff]
      %v302 = vld [vmem:[#allocation2 + $0x68] sm:$0xff]
      %v303 = vld [vmem:[#allocation2 + $0x78] sm:$0xff]
      %v304 = vld [vmem:[#allocation2 + $0x80] sm:$0xff]
      %v305 = vld [vmem:[#allocation2 + $0x90] sm:$0xff]
      %v306 = vld [vmem:[#allocation2 + $0x98] sm:$0xff]
      %v307 = vld [vmem:[#allocation2 + $0xa8] sm:$0xff]
      %v308 = vld [vmem:[#allocation2 + $0xb0] sm:$0xff]
      %v309 = vld [vmem:[#allocation2 + $0xc0] sm:$0xff]
      %v310 = vld [vmem:[#allocation2 + $0xc8] sm:$0xff]
      %v311 = vld [vmem:[#allocation2 + $0xd8] sm:$0xff]
      %v312 = vld [vmem:[#allocation2 + $0xe0] sm:$0xff]
      %v313 = vld [vmem:[#allocation2 + $0xf0] sm:$0xff]
      %v314 = vld [vmem:[#allocation2 + $0xf8] sm:$0xff]
      %v315 = vld [vmem:[#allocation2 + $0x108] sm:$0xff]
      %v316 = vld [vmem:[#allocation2 + $0x110] sm:$0xff]
      %v317 = vld [vmem:[#allocation2 + $0x120] sm:$0xff]
      %v318 = vld [vmem:[#allocation2 + $0x128] sm:$0xff]
      %v319 = vld [vmem:[#allocation2 + $0x138] sm:$0xff]
      %v320 = vld [vmem:[#allocation2 + $0x140] sm:$0xff]
      %v321 = vld [vmem:[#allocation2 + $0x150] sm:$0xff]
      %v322 = vld [vmem:[#allocation2 + $0x158] sm:$0xff]
      %v323 = vld [vmem:[#allocation2 + $0x168] sm:$0xff]
      %v324 = vld [vmem:[#allocation2 + $0x170] sm:$0xff]
      %v325 = vpack.c.bf16 %v294, %v293
      %v326 = vpack.c.bf16 %v296, %v295
      %v327 = vpack.c.bf16 %v298, %v297
      %v328 = vpack.c.bf16 %v300, %v299
      %v329 = vpack.c.bf16 %v302, %v301
      %v330 = vpack.c.bf16 %v304, %v303
      %v331 = vpack.c.bf16 %v306, %v305
      %v332 = vpack.c.bf16 %v308, %v307
      %v333 = vpack.c.bf16 %v310, %v309
      %v334 = vpack.c.bf16 %v312, %v311
      %v335 = vpack.c.bf16 %v314, %v313
      %v336 = vpack.c.bf16 %v316, %v315
      %v337 = vpack.c.bf16 %v318, %v317
      %v338 = vpack.c.bf16 %v320, %v319
      %v339 = vpack.c.bf16 %v322, %v321
      %v340 = vpack.c.bf16 %v324, %v323
      %v341 = vld [vmem:[%s1] sm:$0x3]
      %v342 = vld [vmem:[#allocation2 + $0x1] sm:$0xff]
      %v343 = vld [vmem:[#allocation2 + $0x9] sm:$0xff]
      %v344 = vld [vmem:[#allocation2 + $0x19] sm:$0xff]
      %v345 = vld [vmem:[#allocation2 + $0x21] sm:$0xff]
      %v346 = vld [vmem:[#allocation2 + $0x31] sm:$0xff]
      %v347 = vld [vmem:[#allocation2 + $0x39] sm:$0xff]
      %v348 = vld [vmem:[#allocation2 + $0x49] sm:$0xff]
      %v349 = vld [vmem:[#allocation2 + $0x51] sm:$0xff]
      %v350 = vld [vmem:[#allocation2 + $0x61] sm:$0xff]
      %v351 = vld [vmem:[#allocation2 + $0x69] sm:$0xff]
      %v352 = vld [vmem:[#allocation2 + $0x79] sm:$0xff]
      %v353 = vld [vmem:[#allocation2 + $0x81] sm:$0xff]
      %v354 = vld [vmem:[#allocation2 + $0x91] sm:$0xff]
      %v355 = vld [vmem:[#allocation2 + $0x99] sm:$0xff]
      %v356 = vld [vmem:[#allocation2 + $0xa9] sm:$0xff]
      %v357 = vld [vmem:[#allocation2 + $0xb1] sm:$0xff]
      %v358 = vld [vmem:[#allocation2 + $0xc1] sm:$0xff]
      %v359 = vld [vmem:[#allocation2 + $0xc9] sm:$0xff]
      %v360 = vld [vmem:[#allocation2 + $0xd9] sm:$0xff]
      %v361 = vld [vmem:[#allocation2 + $0xe1] sm:$0xff]
      %v362 = vld [vmem:[#allocation2 + $0xf1] sm:$0xff]
      %v363 = vld [vmem:[#allocation2 + $0xf9] sm:$0xff]
      %v364 = vld [vmem:[#allocation2 + $0x109] sm:$0xff]
      %v365 = vld [vmem:[#allocation2 + $0x111] sm:$0xff]
      %v366 = vld [vmem:[#allocation2 + $0x121] sm:$0xff]
      %v367 = vld [vmem:[#allocation2 + $0x129] sm:$0xff]
      %v368 = vld [vmem:[#allocation2 + $0x139] sm:$0xff]
      %v369 = vld [vmem:[#allocation2 + $0x141] sm:$0xff]
      %v370 = vld [vmem:[#allocation2 + $0x151] sm:$0xff]
      %v371 = vld [vmem:[#allocation2 + $0x159] sm:$0xff]
      %v372 = vld [vmem:[#allocation2 + $0x169] sm:$0xff]
      %v373 = vld [vmem:[#allocation2 + $0x171] sm:$0xff]
      %v374 = vpack.c.bf16 %v343, %v342
      %v375 = vpack.c.bf16 %v345, %v344
      %v376 = vpack.c.bf16 %v347, %v346
      %v377 = vpack.c.bf16 %v349, %v348
      %v378 = vpack.c.bf16 %v351, %v350
      %v379 = vpack.c.bf16 %v353, %v352
      %v380 = vpack.c.bf16 %v355, %v354
      %v381 = vpack.c.bf16 %v357, %v356
      %v382 = vpack.c.bf16 %v359, %v358
      %v383 = vpack.c.bf16 %v361, %v360
      %v384 = vpack.c.bf16 %v363, %v362
      %v385 = vpack.c.bf16 %v365, %v364
      %v386 = vpack.c.bf16 %v367, %v366
      %v387 = vpack.c.bf16 %v369, %v368
      %v388 = vpack.c.bf16 %v371, %v370
      %v389 = vpack.c.bf16 %v373, %v372
      %s390 = scalar_lea.vmem %s1, 2
      %v391 = vld [vmem:[%s390] sm:$0x3]
      %v393 = vsel %vm172, %v374, 0
      %v396 = vsel %vm172, %v375, 0
      %v399 = vsel %vm172, %v376, 0
      %v402 = vsel %vm172, %v377, 0
      %v405 = vsel %vm172, %v378, 0
      %v408 = vsel %vm172, %v379, 0
      %v411 = vsel %vm172, %v380, 0
      %v414 = vsel %vm172, %v381, 0
      %v417 = vsel %vm172, %v382, 0
      %v420 = vsel %vm172, %v383, 0
      %v423 = vsel %vm172, %v384, 0
      %v426 = vsel %vm172, %v385, 0
      %v429 = vsel %vm172, %v386, 0
      %v432 = vsel %vm172, %v387, 0
      %v435 = vsel %vm172, %v388, 0
      %v438 = vsel %vm172, %v389, 0
      %vm440 = vcmask 1040384
      %vm441 = vcmask 1041408
      %v442 = vsel %vm440, 4294967295, 65535
      %v443 = vsel %vm441, %v442, 0
      %v445 = vand.u32 %v391, %v443
      %447 = vmatprep.subr.bf16.mxu0 0
      %448 = vmatpush1.bf16.msra.mxu0 0
      %449 = vmatprep.subr.bf16.mxu0 0
      %450 = vmatpush1.bf16.msra.mxu0 0
      %451 = vmatprep.subr.bf16.mxu0 0
      %452 = vmatpush1.bf16.msra.mxu0 0
      %453 = vmatprep.subr.bf16.mxu0 0
      %454 = vmatpush1.bf16.msra.mxu0 0
      %455 = vmatprep.subr.bf16.mxu0 0
      %456 = vmatpush1.bf16.msra.mxu0 0
      %457 = vmatprep.subr.bf16.mxu0 0
      %458 = vmatpush1.bf16.msra.mxu0 0
      %459 = vmatprep.subr.bf16.mxu0 0
      %460 = vmatpush1.bf16.msra.mxu0 0
      %461 = vmatprep.subr.bf16.mxu0 0
      %462 = vmatpush1.bf16.msra.mxu0 %v445
      %463 = vmatprep.subr.bf16.mxu0 0
      %464 = vmatpush2.bf16.msra.mxu0 0
      %465 = vmatprep.subr.bf16.mxu0 0
      %466 = vmatpush2.bf16.msra.mxu0 0
      %467 = vmatprep.subr.bf16.mxu0 0
      %468 = vmatpush2.bf16.msra.mxu0 0
      %469 = vmatprep.subr.bf16.mxu0 0
      %470 = vmatpush2.bf16.msra.mxu0 0
      %471 = vmatprep.subr.bf16.mxu0 0
      %472 = vmatpush2.bf16.msra.mxu0 0
      %473 = vmatprep.subr.bf16.mxu0 0
      %474 = vmatpush2.bf16.msra.mxu0 0
      %475 = vmatprep.subr.bf16.mxu0 0
      %476 = vmatpush2.bf16.msra.mxu0 0
      %477 = vmatprep.subr.bf16.mxu0 0
      %478 = vmatpush2.bf16.msra.mxu0 0
      %479 = vmatprep.mubr.bf16.mxu0 0
      %480 = vmatmul.mubr.bf16.gmra.mxu0 %v393
      %v481 = vpop.f32.mrf.mxu0
      %v482 = vadd.f32 0.0, %v481
      %v483 = vpop.f32.mrf.mxu0
      %v484 = vpop.f32.mrf.mxu0
      %v485 = vadd.f32 0.0, %v484
      %v486 = vpop.f32.mrf.mxu0
      %487 = vmatprep.mubr.bf16.mxu0 0
      %488 = vmatmul.mubr.bf16.gmra.mxu0 %v396
      %v489 = vpop.f32.mrf.mxu0
      %v490 = vadd.f32 0.0, %v489
      %v491 = vpop.f32.mrf.mxu0
      %v492 = vpop.f32.mrf.mxu0
      %v493 = vadd.f32 0.0, %v492
      %v494 = vpop.f32.mrf.mxu0
      %495 = vmatprep.mubr.bf16.mxu0 0
      %496 = vmatmul.mubr.bf16.gmra.mxu0 %v399
      %v497 = vpop.f32.mrf.mxu0
      %v498 = vadd.f32 0.0, %v497
      %v499 = vpop.f32.mrf.mxu0
      %v500 = vpop.f32.mrf.mxu0
      %v501 = vadd.f32 0.0, %v500
      %v502 = vpop.f32.mrf.mxu0
      %503 = vmatprep.mubr.bf16.mxu0 0
      %504 = vmatmul.mubr.bf16.gmra.mxu0 %v402
      %v505 = vpop.f32.mrf.mxu0
      %v506 = vadd.f32 0.0, %v505
      %v507 = vpop.f32.mrf.mxu0
      %v508 = vpop.f32.mrf.mxu0
      %v509 = vadd.f32 0.0, %v508
      %v510 = vpop.f32.mrf.mxu0
      %511 = vmatprep.mubr.bf16.mxu0 0
      %512 = vmatmul.mubr.bf16.gmra.mxu0 %v405
      %v513 = vpop.f32.mrf.mxu0
      %v514 = vadd.f32 0.0, %v513
      %v515 = vpop.f32.mrf.mxu0
      %v516 = vpop.f32.mrf.mxu0
      %v517 = vadd.f32 0.0, %v516
      %v518 = vpop.f32.mrf.mxu0
      %519 = vmatprep.mubr.bf16.mxu0 0
      %520 = vmatmul.mubr.bf16.gmra.mxu0 %v408
      %v521 = vpop.f32.mrf.mxu0
      %v522 = vadd.f32 0.0, %v521
      %v523 = vpop.f32.mrf.mxu0
      %v524 = vpop.f32.mrf.mxu0
      %v525 = vadd.f32 0.0, %v524
      %v526 = vpop.f32.mrf.mxu0
      %527 = vmatprep.mubr.bf16.mxu0 0
      %528 = vmatmul.mubr.bf16.gmra.mxu0 %v411
      %v529 = vpop.f32.mrf.mxu0
      %v530 = vadd.f32 0.0, %v529
      %v531 = vpop.f32.mrf.mxu0
      %v532 = vpop.f32.mrf.mxu0
      %v533 = vadd.f32 0.0, %v532
      %v534 = vpop.f32.mrf.mxu0
      %535 = vmatprep.mubr.bf16.mxu0 0
      %536 = vmatmul.mubr.bf16.gmra.mxu0 %v414
      %v537 = vpop.f32.mrf.mxu0
      %v538 = vadd.f32 0.0, %v537
      %v539 = vpop.f32.mrf.mxu0
      %v540 = vpop.f32.mrf.mxu0
      %v541 = vadd.f32 0.0, %v540
      %v542 = vpop.f32.mrf.mxu0
      %543 = vmatprep.mubr.bf16.mxu0 0
      %544 = vmatmul.mubr.bf16.gmra.mxu0 %v417
      %v545 = vpop.f32.mrf.mxu0
      %v546 = vadd.f32 0.0, %v545
      %v547 = vpop.f32.mrf.mxu0
      %v548 = vpop.f32.mrf.mxu0
      %v549 = vadd.f32 0.0, %v548
      %v550 = vpop.f32.mrf.mxu0
      %551 = vmatprep.mubr.bf16.mxu0 0
      %552 = vmatmul.mubr.bf16.gmra.mxu0 %v420
      %v553 = vpop.f32.mrf.mxu0
      %v554 = vadd.f32 0.0, %v553
      %v555 = vpop.f32.mrf.mxu0
      %v556 = vpop.f32.mrf.mxu0
      %v557 = vadd.f32 0.0, %v556
      %v558 = vpop.f32.mrf.mxu0
      %559 = vmatprep.mubr.bf16.mxu0 0
      %560 = vmatmul.mubr.bf16.gmra.mxu0 %v423
      %v561 = vpop.f32.mrf.mxu0
      %v562 = vadd.f32 0.0, %v561
      %v563 = vpop.f32.mrf.mxu0
      %v564 = vpop.f32.mrf.mxu0
      %v565 = vadd.f32 0.0, %v564
      %v566 = vpop.f32.mrf.mxu0
      %567 = vmatprep.mubr.bf16.mxu0 0
      %568 = vmatmul.mubr.bf16.gmra.mxu0 %v426
      %v569 = vpop.f32.mrf.mxu0
      %v570 = vadd.f32 0.0, %v569
      %v571 = vpop.f32.mrf.mxu0
      %v572 = vpop.f32.mrf.mxu0
      %v573 = vadd.f32 0.0, %v572
      %v574 = vpop.f32.mrf.mxu0
      %575 = vmatprep.mubr.bf16.mxu0 0
      %576 = vmatmul.mubr.bf16.gmra.mxu0 %v429
      %v577 = vpop.f32.mrf.mxu0
      %v578 = vadd.f32 0.0, %v577
      %v579 = vpop.f32.mrf.mxu0
      %v580 = vpop.f32.mrf.mxu0
      %v581 = vadd.f32 0.0, %v580
      %v582 = vpop.f32.mrf.mxu0
      %583 = vmatprep.mubr.bf16.mxu0 0
      %584 = vmatmul.mubr.bf16.gmra.mxu0 %v432
      %v585 = vpop.f32.mrf.mxu0
      %v586 = vadd.f32 0.0, %v585
      %v587 = vpop.f32.mrf.mxu0
      %v588 = vpop.f32.mrf.mxu0
      %v589 = vadd.f32 0.0, %v588
      %v590 = vpop.f32.mrf.mxu0
      %591 = vmatprep.mubr.bf16.mxu0 0
      %592 = vmatmul.mubr.bf16.gmra.mxu0 %v435
      %v593 = vpop.f32.mrf.mxu0
      %v594 = vadd.f32 0.0, %v593
      %v595 = vpop.f32.mrf.mxu0
      %v596 = vpop.f32.mrf.mxu0
      %v597 = vadd.f32 0.0, %v596
      %v598 = vpop.f32.mrf.mxu0
      %599 = vmatprep.mubr.bf16.mxu0 0
      %600 = vmatmul.mubr.bf16.gmra.mxu0 %v438
      %v601 = vpop.f32.mrf.mxu0
      %v602 = vadd.f32 0.0, %v601
      %v603 = vpop.f32.mrf.mxu0
      %v604 = vpop.f32.mrf.mxu0
      %v605 = vadd.f32 0.0, %v604
      %v606 = vpop.f32.mrf.mxu0
      %607 = vdwg.mxu0
      %v609 = vsel %vm172, %v325, 0
      %v612 = vsel %vm172, %v326, 0
      %v615 = vsel %vm172, %v327, 0
      %v618 = vsel %vm172, %v328, 0
      %v621 = vsel %vm172, %v329, 0
      %v624 = vsel %vm172, %v330, 0
      %v627 = vsel %vm172, %v331, 0
      %v630 = vsel %vm172, %v332, 0
      %v633 = vsel %vm172, %v333, 0
      %v636 = vsel %vm172, %v334, 0
      %v639 = vsel %vm172, %v335, 0
      %v642 = vsel %vm172, %v336, 0
      %v645 = vsel %vm172, %v337, 0
      %v648 = vsel %vm172, %v338, 0
      %v651 = vsel %vm172, %v339, 0
      %v654 = vsel %vm172, %v340, 0
      %v657 = vand.u32 %v341, %v443
      %659 = vmatprep.subr.bf16.mxu0 0
      %660 = vmatpush1.bf16.msra.mxu0 0
      %661 = vmatprep.subr.bf16.mxu0 0
      %662 = vmatpush1.bf16.msra.mxu0 0
      %663 = vmatprep.subr.bf16.mxu0 0
      %664 = vmatpush1.bf16.msra.mxu0 0
      %665 = vmatprep.subr.bf16.mxu0 0
      %666 = vmatpush1.bf16.msra.mxu0 0
      %667 = vmatprep.subr.bf16.mxu0 0
      %668 = vmatpush1.bf16.msra.mxu0 0
      %669 = vmatprep.subr.bf16.mxu0 0
      %670 = vmatpush1.bf16.msra.mxu0 0
      %671 = vmatprep.subr.bf16.mxu0 0
      %672 = vmatpush1.bf16.msra.mxu0 0
      %673 = vmatprep.subr.bf16.mxu0 0
      %674 = vmatpush1.bf16.msra.mxu0 %v657
      %675 = vmatprep.subr.bf16.mxu0 0
      %676 = vmatpush2.bf16.msra.mxu0 0
      %677 = vmatprep.subr.bf16.mxu0 0
      %678 = vmatpush2.bf16.msra.mxu0 0
      %679 = vmatprep.subr.bf16.mxu0 0
      %680 = vmatpush2.bf16.msra.mxu0 0
      %681 = vmatprep.subr.bf16.mxu0 0
      %682 = vmatpush2.bf16.msra.mxu0 0
      %683 = vmatprep.subr.bf16.mxu0 0
      %684 = vmatpush2.bf16.msra.mxu0 0
      %685 = vmatprep.subr.bf16.mxu0 0
      %686 = vmatpush2.bf16.msra.mxu0 0
      %687 = vmatprep.subr.bf16.mxu0 0
      %688 = vmatpush2.bf16.msra.mxu0 0
      %689 = vmatprep.subr.bf16.mxu0 0
      %690 = vmatpush2.bf16.msra.mxu0 0
      %691 = vmatprep.mubr.bf16.mxu0 0
      %692 = vmatmul.mubr.bf16.gmra.mxu0 %v609
      %v693 = vpop.f32.mrf.mxu0
      %v694 = vadd.f32 %v482, %v693
      %v695 = vpop.f32.mrf.mxu0
      %v696 = vpop.f32.mrf.mxu0
      %v697 = vadd.f32 %v485, %v696
      %v698 = vpop.f32.mrf.mxu0
      %699 = vmatprep.mubr.bf16.mxu0 0
      %700 = vmatmul.mubr.bf16.gmra.mxu0 %v612
      %v701 = vpop.f32.mrf.mxu0
      %v702 = vadd.f32 %v490, %v701
      %v703 = vpop.f32.mrf.mxu0
      %v704 = vpop.f32.mrf.mxu0
      %v705 = vadd.f32 %v493, %v704
      %v706 = vpop.f32.mrf.mxu0
      %707 = vmatprep.mubr.bf16.mxu0 0
      %708 = vmatmul.mubr.bf16.gmra.mxu0 %v615
      %v709 = vpop.f32.mrf.mxu0
      %v710 = vadd.f32 %v498, %v709
      %v711 = vpop.f32.mrf.mxu0
      %v712 = vpop.f32.mrf.mxu0
      %v713 = vadd.f32 %v501, %v712
      %v714 = vpop.f32.mrf.mxu0
      %715 = vmatprep.mubr.bf16.mxu0 0
      %716 = vmatmul.mubr.bf16.gmra.mxu0 %v618
      %v717 = vpop.f32.mrf.mxu0
      %v718 = vadd.f32 %v506, %v717
      %v719 = vpop.f32.mrf.mxu0
      %v720 = vpop.f32.mrf.mxu0
      %v721 = vadd.f32 %v509, %v720
      %v722 = vpop.f32.mrf.mxu0
      %723 = vmatprep.mubr.bf16.mxu0 0
      %724 = vmatmul.mubr.bf16.gmra.mxu0 %v621
      %v725 = vpop.f32.mrf.mxu0
      %v726 = vadd.f32 %v514, %v725
      %v727 = vpop.f32.mrf.mxu0
      %v728 = vpop.f32.mrf.mxu0
      %v729 = vadd.f32 %v517, %v728
      %v730 = vpop.f32.mrf.mxu0
      %731 = vmatprep.mubr.bf16.mxu0 0
      %732 = vmatmul.mubr.bf16.gmra.mxu0 %v624
      %v733 = vpop.f32.mrf.mxu0
      %v734 = vadd.f32 %v522, %v733
      %v735 = vpop.f32.mrf.mxu0
      %v736 = vpop.f32.mrf.mxu0
      %v737 = vadd.f32 %v525, %v736
      %v738 = vpop.f32.mrf.mxu0
      %739 = vmatprep.mubr.bf16.mxu0 0
      %740 = vmatmul.mubr.bf16.gmra.mxu0 %v627
      %v741 = vpop.f32.mrf.mxu0
      %v742 = vadd.f32 %v530, %v741
      %v743 = vpop.f32.mrf.mxu0
      %v744 = vpop.f32.mrf.mxu0
      %v745 = vadd.f32 %v533, %v744
      %v746 = vpop.f32.mrf.mxu0
      %747 = vmatprep.mubr.bf16.mxu0 0
      %748 = vmatmul.mubr.bf16.gmra.mxu0 %v630
      %v749 = vpop.f32.mrf.mxu0
      %v750 = vadd.f32 %v538, %v749
      %v751 = vpop.f32.mrf.mxu0
      %v752 = vpop.f32.mrf.mxu0
      %v753 = vadd.f32 %v541, %v752
      %v754 = vpop.f32.mrf.mxu0
      %755 = vmatprep.mubr.bf16.mxu0 0
      %756 = vmatmul.mubr.bf16.gmra.mxu0 %v633
      %v757 = vpop.f32.mrf.mxu0
      %v758 = vadd.f32 %v546, %v757
      %v759 = vpop.f32.mrf.mxu0
      %v760 = vpop.f32.mrf.mxu0
      %v761 = vadd.f32 %v549, %v760
      %v762 = vpop.f32.mrf.mxu0
      %763 = vmatprep.mubr.bf16.mxu0 0
      %764 = vmatmul.mubr.bf16.gmra.mxu0 %v636
      %v765 = vpop.f32.mrf.mxu0
      %v766 = vadd.f32 %v554, %v765
      %v767 = vpop.f32.mrf.mxu0
      %v768 = vpop.f32.mrf.mxu0
      %v769 = vadd.f32 %v557, %v768
      %v770 = vpop.f32.mrf.mxu0
      %771 = vmatprep.mubr.bf16.mxu0 0
      %772 = vmatmul.mubr.bf16.gmra.mxu0 %v639
      %v773 = vpop.f32.mrf.mxu0
      %v774 = vadd.f32 %v562, %v773
      %v775 = vpop.f32.mrf.mxu0
      %v776 = vpop.f32.mrf.mxu0
      %v777 = vadd.f32 %v565, %v776
      %v778 = vpop.f32.mrf.mxu0
      %779 = vmatprep.mubr.bf16.mxu0 0
      %780 = vmatmul.mubr.bf16.gmra.mxu0 %v642
      %v781 = vpop.f32.mrf.mxu0
      %v782 = vadd.f32 %v570, %v781
      %v783 = vpop.f32.mrf.mxu0
      %v784 = vpop.f32.mrf.mxu0
      %v785 = vadd.f32 %v573, %v784
      %v786 = vpop.f32.mrf.mxu0
      %787 = vmatprep.mubr.bf16.mxu0 0
      %788 = vmatmul.mubr.bf16.gmra.mxu0 %v645
      %v789 = vpop.f32.mrf.mxu0
      %v790 = vadd.f32 %v578, %v789
      %v791 = vpop.f32.mrf.mxu0
      %v792 = vpop.f32.mrf.mxu0
      %v793 = vadd.f32 %v581, %v792
      %v794 = vpop.f32.mrf.mxu0
      %795 = vmatprep.mubr.bf16.mxu0 0
      %796 = vmatmul.mubr.bf16.gmra.mxu0 %v648
      %v797 = vpop.f32.mrf.mxu0
      %v798 = vadd.f32 %v586, %v797
      %v799 = vpop.f32.mrf.mxu0
      %v800 = vpop.f32.mrf.mxu0
      %v801 = vadd.f32 %v589, %v800
      %v802 = vpop.f32.mrf.mxu0
      %803 = vmatprep.mubr.bf16.mxu0 0
      %804 = vmatmul.mubr.bf16.gmra.mxu0 %v651
      %v805 = vpop.f32.mrf.mxu0
      %v806 = vadd.f32 %v594, %v805
      %v807 = vpop.f32.mrf.mxu0
      %v808 = vpop.f32.mrf.mxu0
      %v809 = vadd.f32 %v597, %v808
      %v810 = vpop.f32.mrf.mxu0
      %811 = vmatprep.mubr.bf16.mxu0 0
      %812 = vmatmul.mubr.bf16.gmra.mxu0 %v654
      %v813 = vpop.f32.mrf.mxu0
      %v814 = vadd.f32 %v602, %v813
      %v815 = vpop.f32.mrf.mxu0
      %v816 = vpop.f32.mrf.mxu0
      %v817 = vadd.f32 %v605, %v816
      %v818 = vpop.f32.mrf.mxu0
      %819 = vdwg.mxu0
      %v820 = vld [vmem:[#allocation2 + $0x2] sm:$0xff]
      %v821 = vld [vmem:[#allocation2 + $0xa] sm:$0xff]
      %v822 = vld [vmem:[#allocation2 + $0x1a] sm:$0xff]
      %v823 = vld [vmem:[#allocation2 + $0x22] sm:$0xff]
      %v824 = vld [vmem:[#allocation2 + $0x32] sm:$0xff]
      %v825 = vld [vmem:[#allocation2 + $0x3a] sm:$0xff]
      %v826 = vld [vmem:[#allocation2 + $0x4a] sm:$0xff]
      %v827 = vld [vmem:[#allocation2 + $0x52] sm:$0xff]
      %v828 = vld [vmem:[#allocation2 + $0x62] sm:$0xff]
      %v829 = vld [vmem:[#allocation2 + $0x6a] sm:$0xff]
      %v830 = vld [vmem:[#allocation2 + $0x7a] sm:$0xff]
      %v831 = vld [vmem:[#allocation2 + $0x82] sm:$0xff]
      %v832 = vld [vmem:[#allocation2 + $0x92] sm:$0xff]
      %v833 = vld [vmem:[#allocation2 + $0x9a] sm:$0xff]
      %v834 = vld [vmem:[#allocation2 + $0xaa] sm:$0xff]
      %v835 = vld [vmem:[#allocation2 + $0xb2] sm:$0xff]
      %v836 = vld [vmem:[#allocation2 + $0xc2] sm:$0xff]
      %v837 = vld [vmem:[#allocation2 + $0xca] sm:$0xff]
      %v838 = vld [vmem:[#allocation2 + $0xda] sm:$0xff]
      %v839 = vld [vmem:[#allocation2 + $0xe2] sm:$0xff]
      %v840 = vld [vmem:[#allocation2 + $0xf2] sm:$0xff]
      %v841 = vld [vmem:[#allocation2 + $0xfa] sm:$0xff]
      %v842 = vld [vmem:[#allocation2 + $0x10a] sm:$0xff]
      %v843 = vld [vmem:[#allocation2 + $0x112] sm:$0xff]
      %v844 = vld [vmem:[#allocation2 + $0x122] sm:$0xff]
      %v845 = vld [vmem:[#allocation2 + $0x12a] sm:$0xff]
      %v846 = vld [vmem:[#allocation2 + $0x13a] sm:$0xff]
      %v847 = vld [vmem:[#allocation2 + $0x142] sm:$0xff]
      %v848 = vld [vmem:[#allocation2 + $0x152] sm:$0xff]
      %v849 = vld [vmem:[#allocation2 + $0x15a] sm:$0xff]
      %v850 = vld [vmem:[#allocation2 + $0x16a] sm:$0xff]
      %v851 = vld [vmem:[#allocation2 + $0x172] sm:$0xff]
      %v852 = vpack.c.bf16 %v821, %v820
      %v853 = vpack.c.bf16 %v823, %v822
      %v854 = vpack.c.bf16 %v825, %v824
      %v855 = vpack.c.bf16 %v827, %v826
      %v856 = vpack.c.bf16 %v829, %v828
      %v857 = vpack.c.bf16 %v831, %v830
      %v858 = vpack.c.bf16 %v833, %v832
      %v859 = vpack.c.bf16 %v835, %v834
      %v860 = vpack.c.bf16 %v837, %v836
      %v861 = vpack.c.bf16 %v839, %v838
      %v862 = vpack.c.bf16 %v841, %v840
      %v863 = vpack.c.bf16 %v843, %v842
      %v864 = vpack.c.bf16 %v845, %v844
      %v865 = vpack.c.bf16 %v847, %v846
      %v866 = vpack.c.bf16 %v849, %v848
      %v867 = vpack.c.bf16 %v851, %v850
      %s868 = scalar_lea.vmem %s1, 4
      %v869 = vld [vmem:[%s868] sm:$0x3]
      %v871 = vsel %vm172, %v852, 0
      %v874 = vsel %vm172, %v853, 0
      %v877 = vsel %vm172, %v854, 0
      %v880 = vsel %vm172, %v855, 0
      %v883 = vsel %vm172, %v856, 0
      %v886 = vsel %vm172, %v857, 0
      %v889 = vsel %vm172, %v858, 0
      %v892 = vsel %vm172, %v859, 0
      %v895 = vsel %vm172, %v860, 0
      %v898 = vsel %vm172, %v861, 0
      %v901 = vsel %vm172, %v862, 0
      %v904 = vsel %vm172, %v863, 0
      %v907 = vsel %vm172, %v864, 0
      %v910 = vsel %vm172, %v865, 0
      %v913 = vsel %vm172, %v866, 0
      %v916 = vsel %vm172, %v867, 0
      %v919 = vand.u32 %v869, %v443
      %921 = vmatprep.subr.bf16.mxu0 0
      %922 = vmatpush1.bf16.msra.mxu0 0
      %923 = vmatprep.subr.bf16.mxu0 0
      %924 = vmatpush1.bf16.msra.mxu0 0
      %925 = vmatprep.subr.bf16.mxu0 0
      %926 = vmatpush1.bf16.msra.mxu0 0
      %927 = vmatprep.subr.bf16.mxu0 0
      %928 = vmatpush1.bf16.msra.mxu0 0
      %929 = vmatprep.subr.bf16.mxu0 0
      %930 = vmatpush1.bf16.msra.mxu0 0
      %931 = vmatprep.subr.bf16.mxu0 0
      %932 = vmatpush1.bf16.msra.mxu0 0
      %933 = vmatprep.subr.bf16.mxu0 0
      %934 = vmatpush1.bf16.msra.mxu0 0
      %935 = vmatprep.subr.bf16.mxu0 0
      %936 = vmatpush1.bf16.msra.mxu0 %v919
      %937 = vmatprep.subr.bf16.mxu0 0
      %938 = vmatpush2.bf16.msra.mxu0 0
      %939 = vmatprep.subr.bf16.mxu0 0
      %940 = vmatpush2.bf16.msra.mxu0 0
      %941 = vmatprep.subr.bf16.mxu0 0
      %942 = vmatpush2.bf16.msra.mxu0 0
      %943 = vmatprep.subr.bf16.mxu0 0
      %944 = vmatpush2.bf16.msra.mxu0 0
      %945 = vmatprep.subr.bf16.mxu0 0
      %946 = vmatpush2.bf16.msra.mxu0 0
      %947 = vmatprep.subr.bf16.mxu0 0
      %948 = vmatpush2.bf16.msra.mxu0 0
      %949 = vmatprep.subr.bf16.mxu0 0
      %950 = vmatpush2.bf16.msra.mxu0 0
      %951 = vmatprep.subr.bf16.mxu0 0
      %952 = vmatpush2.bf16.msra.mxu0 0
      %953 = vmatprep.mubr.bf16.mxu0 0
      %954 = vmatmul.mubr.bf16.gmra.mxu0 %v871
      %v955 = vpop.f32.mrf.mxu0
      %v956 = vadd.f32 0.0, %v955
      %v957 = vpop.f32.mrf.mxu0
      %v958 = vpop.f32.mrf.mxu0
      %v959 = vadd.f32 0.0, %v958
      %v960 = vpop.f32.mrf.mxu0
      %961 = vmatprep.mubr.bf16.mxu0 0
      %962 = vmatmul.mubr.bf16.gmra.mxu0 %v874
      %v963 = vpop.f32.mrf.mxu0
      %v964 = vadd.f32 0.0, %v963
      %v965 = vpop.f32.mrf.mxu0
      %v966 = vpop.f32.mrf.mxu0
      %v967 = vadd.f32 0.0, %v966
      %v968 = vpop.f32.mrf.mxu0
      %969 = vmatprep.mubr.bf16.mxu0 0
      %970 = vmatmul.mubr.bf16.gmra.mxu0 %v877
      %v971 = vpop.f32.mrf.mxu0
      %v972 = vadd.f32 0.0, %v971
      %v973 = vpop.f32.mrf.mxu0
      %v974 = vpop.f32.mrf.mxu0
      %v975 = vadd.f32 0.0, %v974
      %v976 = vpop.f32.mrf.mxu0
      %977 = vmatprep.mubr.bf16.mxu0 0
      %978 = vmatmul.mubr.bf16.gmra.mxu0 %v880
      %v979 = vpop.f32.mrf.mxu0
      %v980 = vadd.f32 0.0, %v979
      %v981 = vpop.f32.mrf.mxu0
      %v982 = vpop.f32.mrf.mxu0
      %v983 = vadd.f32 0.0, %v982
      %v984 = vpop.f32.mrf.mxu0
      %985 = vmatprep.mubr.bf16.mxu0 0
      %986 = vmatmul.mubr.bf16.gmra.mxu0 %v883
      %v987 = vpop.f32.mrf.mxu0
      %v988 = vadd.f32 0.0, %v987
      %v989 = vpop.f32.mrf.mxu0
      %v990 = vpop.f32.mrf.mxu0
      %v991 = vadd.f32 0.0, %v990
      %v992 = vpop.f32.mrf.mxu0
      %993 = vmatprep.mubr.bf16.mxu0 0
      %994 = vmatmul.mubr.bf16.gmra.mxu0 %v886
      %v995 = vpop.f32.mrf.mxu0
      %v996 = vadd.f32 0.0, %v995
      %v997 = vpop.f32.mrf.mxu0
      %v998 = vpop.f32.mrf.mxu0
      %v999 = vadd.f32 0.0, %v998
      %v1000 = vpop.f32.mrf.mxu0
      %1001 = vmatprep.mubr.bf16.mxu0 0
      %1002 = vmatmul.mubr.bf16.gmra.mxu0 %v889
      %v1003 = vpop.f32.mrf.mxu0
      %v1004 = vadd.f32 0.0, %v1003
      %v1005 = vpop.f32.mrf.mxu0
      %v1006 = vpop.f32.mrf.mxu0
      %v1007 = vadd.f32 0.0, %v1006
      %v1008 = vpop.f32.mrf.mxu0
      %1009 = vmatprep.mubr.bf16.mxu0 0
      %1010 = vmatmul.mubr.bf16.gmra.mxu0 %v892
      %v1011 = vpop.f32.mrf.mxu0
      %v1012 = vadd.f32 0.0, %v1011
      %v1013 = vpop.f32.mrf.mxu0
      %v1014 = vpop.f32.mrf.mxu0
      %v1015 = vadd.f32 0.0, %v1014
      %v1016 = vpop.f32.mrf.mxu0
      %1017 = vmatprep.mubr.bf16.mxu0 0
      %1018 = vmatmul.mubr.bf16.gmra.mxu0 %v895
      %v1019 = vpop.f32.mrf.mxu0
      %v1020 = vadd.f32 0.0, %v1019
      %v1021 = vpop.f32.mrf.mxu0
      %v1022 = vpop.f32.mrf.mxu0
      %v1023 = vadd.f32 0.0, %v1022
      %v1024 = vpop.f32.mrf.mxu0
      %1025 = vmatprep.mubr.bf16.mxu0 0
      %1026 = vmatmul.mubr.bf16.gmra.mxu0 %v898
      %v1027 = vpop.f32.mrf.mxu0
      %v1028 = vadd.f32 0.0, %v1027
      %v1029 = vpop.f32.mrf.mxu0
      %v1030 = vpop.f32.mrf.mxu0
      %v1031 = vadd.f32 0.0, %v1030
      %v1032 = vpop.f32.mrf.mxu0
      %1033 = vmatprep.mubr.bf16.mxu0 0
      %1034 = vmatmul.mubr.bf16.gmra.mxu0 %v901
      %v1035 = vpop.f32.mrf.mxu0
      %v1036 = vadd.f32 0.0, %v1035
      %v1037 = vpop.f32.mrf.mxu0
      %v1038 = vpop.f32.mrf.mxu0
      %v1039 = vadd.f32 0.0, %v1038
      %v1040 = vpop.f32.mrf.mxu0
      %1041 = vmatprep.mubr.bf16.mxu0 0
      %1042 = vmatmul.mubr.bf16.gmra.mxu0 %v904
      %v1043 = vpop.f32.mrf.mxu0
      %v1044 = vadd.f32 0.0, %v1043
      %v1045 = vpop.f32.mrf.mxu0
      %v1046 = vpop.f32.mrf.mxu0
      %v1047 = vadd.f32 0.0, %v1046
      %v1048 = vpop.f32.mrf.mxu0
      %1049 = vmatprep.mubr.bf16.mxu0 0
      %1050 = vmatmul.mubr.bf16.gmra.mxu0 %v907
      %v1051 = vpop.f32.mrf.mxu0
      %v1052 = vadd.f32 0.0, %v1051
      %v1053 = vpop.f32.mrf.mxu0
      %v1054 = vpop.f32.mrf.mxu0
      %v1055 = vadd.f32 0.0, %v1054
      %v1056 = vpop.f32.mrf.mxu0
      %1057 = vmatprep.mubr.bf16.mxu0 0
      %1058 = vmatmul.mubr.bf16.gmra.mxu0 %v910
      %v1059 = vpop.f32.mrf.mxu0
      %v1060 = vadd.f32 0.0, %v1059
      %v1061 = vpop.f32.mrf.mxu0
      %v1062 = vpop.f32.mrf.mxu0
      %v1063 = vadd.f32 0.0, %v1062
      %v1064 = vpop.f32.mrf.mxu0
      %1065 = vmatprep.mubr.bf16.mxu0 0
      %1066 = vmatmul.mubr.bf16.gmra.mxu0 %v913
      %v1067 = vpop.f32.mrf.mxu0
      %v1068 = vadd.f32 0.0, %v1067
      %v1069 = vpop.f32.mrf.mxu0
      %v1070 = vpop.f32.mrf.mxu0
      %v1071 = vadd.f32 0.0, %v1070
      %v1072 = vpop.f32.mrf.mxu0
      %1073 = vmatprep.mubr.bf16.mxu0 0
      %1074 = vmatmul.mubr.bf16.gmra.mxu0 %v916
      %v1075 = vpop.f32.mrf.mxu0
      %v1076 = vadd.f32 0.0, %v1075
      %v1077 = vpop.f32.mrf.mxu0
      %v1078 = vpop.f32.mrf.mxu0
      %v1079 = vadd.f32 0.0, %v1078
      %v1080 = vpop.f32.mrf.mxu0
      %1081 = vdwg.mxu0
      %v1082 = vadd.f32 %v694, %v956
      %v1083 = vadd.f32 %v697, %v959
      %v1084 = vadd.f32 %v702, %v964
      %v1085 = vadd.f32 %v705, %v967
      %v1086 = vadd.f32 %v710, %v972
      %v1087 = vadd.f32 %v713, %v975
      %v1088 = vadd.f32 %v718, %v980
      %v1089 = vadd.f32 %v721, %v983
      %v1090 = vadd.f32 %v726, %v988
      %v1091 = vadd.f32 %v729, %v991
      %v1092 = vadd.f32 %v734, %v996
      %v1093 = vadd.f32 %v737, %v999
      %v1094 = vadd.f32 %v742, %v1004
      %v1095 = vadd.f32 %v745, %v1007
      %v1096 = vadd.f32 %v750, %v1012
      %v1097 = vadd.f32 %v753, %v1015
      %v1098 = vadd.f32 %v758, %v1020
      %v1099 = vadd.f32 %v761, %v1023
      %v1100 = vadd.f32 %v766, %v1028
      %v1101 = vadd.f32 %v769, %v1031
      %v1102 = vadd.f32 %v774, %v1036
      %v1103 = vadd.f32 %v777, %v1039
      %v1104 = vadd.f32 %v782, %v1044
      %v1105 = vadd.f32 %v785, %v1047
      %v1106 = vadd.f32 %v790, %v1052
      %v1107 = vadd.f32 %v793, %v1055
      %v1108 = vadd.f32 %v798, %v1060
      %v1109 = vadd.f32 %v801, %v1063
      %v1110 = vadd.f32 %v806, %v1068
      %v1111 = vadd.f32 %v809, %v1071
      %v1112 = vadd.f32 %v814, %v1076
      %v1113 = vadd.f32 %v817, %v1079
      %v1114 = vld [vmem:[%s260] sm:$0xff]
      %v1115 = vld [vmem:[%s260 + $0x8] sm:$0xff]
      %v1116 = vld [vmem:[%s260 + $0x18] sm:$0xff]
      %v1117 = vld [vmem:[%s260 + $0x20] sm:$0xff]
      %v1118 = vld [vmem:[%s260 + $0x30] sm:$0xff]
      %v1119 = vld [vmem:[%s260 + $0x38] sm:$0xff]
      %v1120 = vld [vmem:[%s260 + $0x48] sm:$0xff]
      %v1121 = vld [vmem:[%s260 + $0x50] sm:$0xff]
      %v1122 = vld [vmem:[%s260 + $0x60] sm:$0xff]
      %v1123 = vld [vmem:[%s260 + $0x68] sm:$0xff]
      %v1124 = vld [vmem:[%s260 + $0x78] sm:$0xff]
      %v1125 = vld [vmem:[%s260 + $0x80] sm:$0xff]
      %v1126 = vld [vmem:[%s260 + $0x90] sm:$0xff]
      %v1127 = vld [vmem:[%s260 + $0x98] sm:$0xff]
      %v1128 = vld [vmem:[%s260 + $0xa8] sm:$0xff]
      %v1129 = vld [vmem:[%s260 + $0xb0] sm:$0xff]
      %v1130 = vld [vmem:[%s260 + $0xc0] sm:$0xff]
      %v1131 = vld [vmem:[%s260 + $0xc8] sm:$0xff]
      %v1132 = vld [vmem:[%s260 + $0xd8] sm:$0xff]
      %v1133 = vld [vmem:[%s260 + $0xe0] sm:$0xff]
      %v1134 = vld [vmem:[%s260 + $0xf0] sm:$0xff]
      %v1135 = vld [vmem:[%s260 + $0xf8] sm:$0xff]
      %v1136 = vld [vmem:[%s260 + $0x108] sm:$0xff]
      %v1137 = vld [vmem:[%s260 + $0x110] sm:$0xff]
      %v1138 = vld [vmem:[%s260 + $0x120] sm:$0xff]
      %v1139 = vld [vmem:[%s260 + $0x128] sm:$0xff]
      %v1140 = vld [vmem:[%s260 + $0x138] sm:$0xff]
      %v1141 = vld [vmem:[%s260 + $0x140] sm:$0xff]
      %v1142 = vld [vmem:[%s260 + $0x150] sm:$0xff]
      %v1143 = vld [vmem:[%s260 + $0x158] sm:$0xff]
      %v1144 = vld [vmem:[%s260 + $0x168] sm:$0xff]
      %v1145 = vld [vmem:[%s260 + $0x170] sm:$0xff]
      %v1146 = vpack.c.bf16 %v1115, %v1114
      %v1147 = vpack.c.bf16 %v1117, %v1116
      %v1148 = vpack.c.bf16 %v1119, %v1118
      %v1149 = vpack.c.bf16 %v1121, %v1120
      %v1150 = vpack.c.bf16 %v1123, %v1122
      %v1151 = vpack.c.bf16 %v1125, %v1124
      %v1152 = vpack.c.bf16 %v1127, %v1126
      %v1153 = vpack.c.bf16 %v1129, %v1128
      %v1154 = vpack.c.bf16 %v1131, %v1130
      %v1155 = vpack.c.bf16 %v1133, %v1132
      %v1156 = vpack.c.bf16 %v1135, %v1134
      %v1157 = vpack.c.bf16 %v1137, %v1136
      %v1158 = vpack.c.bf16 %v1139, %v1138
      %v1159 = vpack.c.bf16 %v1141, %v1140
      %v1160 = vpack.c.bf16 %v1143, %v1142
      %v1161 = vpack.c.bf16 %v1145, %v1144
      %s1162 = scalar_lea.vmem %s1, 6
      %v1163 = vld [vmem:[%s1162] sm:$0x3]
      %v1165 = vsel %vm172, %v1146, 0
      %v1168 = vsel %vm172, %v1147, 0
      %v1171 = vsel %vm172, %v1148, 0
      %v1174 = vsel %vm172, %v1149, 0
      %v1177 = vsel %vm172, %v1150, 0
      %v1180 = vsel %vm172, %v1151, 0
      %v1183 = vsel %vm172, %v1152, 0
      %v1186 = vsel %vm172, %v1153, 0
      %v1189 = vsel %vm172, %v1154, 0
      %v1192 = vsel %vm172, %v1155, 0
      %v1195 = vsel %vm172, %v1156, 0
      %v1198 = vsel %vm172, %v1157, 0
      %v1201 = vsel %vm172, %v1158, 0
      %v1204 = vsel %vm172, %v1159, 0
      %v1207 = vsel %vm172, %v1160, 0
      %v1210 = vsel %vm172, %v1161, 0
      %v1213 = vand.u32 %v1163, %v443
      %1215 = vmatprep.subr.bf16.mxu0 0
      %1216 = vmatpush1.bf16.msra.mxu0 0
      %1217 = vmatprep.subr.bf16.mxu0 0
      %1218 = vmatpush1.bf16.msra.mxu0 0
      %1219 = vmatprep.subr.bf16.mxu0 0
      %1220 = vmatpush1.bf16.msra.mxu0 0
      %1221 = vmatprep.subr.bf16.mxu0 0
      %1222 = vmatpush1.bf16.msra.mxu0 0
      %1223 = vmatprep.subr.bf16.mxu0 0
      %1224 = vmatpush1.bf16.msra.mxu0 0
      %1225 = vmatprep.subr.bf16.mxu0 0
      %1226 = vmatpush1.bf16.msra.mxu0 0
      %1227 = vmatprep.subr.bf16.mxu0 0
      %1228 = vmatpush1.bf16.msra.mxu0 0
      %1229 = vmatprep.subr.bf16.mxu0 0
      %1230 = vmatpush1.bf16.msra.mxu0 %v1213
      %1231 = vmatprep.subr.bf16.mxu0 0
      %1232 = vmatpush2.bf16.msra.mxu0 0
      %1233 = vmatprep.subr.bf16.mxu0 0
      %1234 = vmatpush2.bf16.msra.mxu0 0
      %1235 = vmatprep.subr.bf16.mxu0 0
      %1236 = vmatpush2.bf16.msra.mxu0 0
      %1237 = vmatprep.subr.bf16.mxu0 0
      %1238 = vmatpush2.bf16.msra.mxu0 0
      %1239 = vmatprep.subr.bf16.mxu0 0
      %1240 = vmatpush2.bf16.msra.mxu0 0
      %1241 = vmatprep.subr.bf16.mxu0 0
      %1242 = vmatpush2.bf16.msra.mxu0 0
      %1243 = vmatprep.subr.bf16.mxu0 0
      %1244 = vmatpush2.bf16.msra.mxu0 0
      %1245 = vmatprep.subr.bf16.mxu0 0
      %1246 = vmatpush2.bf16.msra.mxu0 0
      %1247 = vmatprep.mubr.bf16.mxu0 0
      %1248 = vmatmul.mubr.bf16.gmra.mxu0 %v1165
      %v1249 = vpop.f32.mrf.mxu0
      %v1250 = vadd.f32 0.0, %v1249
      %v1251 = vpop.f32.mrf.mxu0
      %v1252 = vpop.f32.mrf.mxu0
      %v1253 = vadd.f32 0.0, %v1252
      %v1254 = vpop.f32.mrf.mxu0
      %1255 = vmatprep.mubr.bf16.mxu0 0
      %1256 = vmatmul.mubr.bf16.gmra.mxu0 %v1168
      %v1257 = vpop.f32.mrf.mxu0
      %v1258 = vadd.f32 0.0, %v1257
      %v1259 = vpop.f32.mrf.mxu0
      %v1260 = vpop.f32.mrf.mxu0
      %v1261 = vadd.f32 0.0, %v1260
      %v1262 = vpop.f32.mrf.mxu0
      %1263 = vmatprep.mubr.bf16.mxu0 0
      %1264 = vmatmul.mubr.bf16.gmra.mxu0 %v1171
      %v1265 = vpop.f32.mrf.mxu0
      %v1266 = vadd.f32 0.0, %v1265
      %v1267 = vpop.f32.mrf.mxu0
      %v1268 = vpop.f32.mrf.mxu0
      %v1269 = vadd.f32 0.0, %v1268
      %v1270 = vpop.f32.mrf.mxu0
      %1271 = vmatprep.mubr.bf16.mxu0 0
      %1272 = vmatmul.mubr.bf16.gmra.mxu0 %v1174
      %v1273 = vpop.f32.mrf.mxu0
      %v1274 = vadd.f32 0.0, %v1273
      %v1275 = vpop.f32.mrf.mxu0
      %v1276 = vpop.f32.mrf.mxu0
      %v1277 = vadd.f32 0.0, %v1276
      %v1278 = vpop.f32.mrf.mxu0
      %1279 = vmatprep.mubr.bf16.mxu0 0
      %1280 = vmatmul.mubr.bf16.gmra.mxu0 %v1177
      %v1281 = vpop.f32.mrf.mxu0
      %v1282 = vadd.f32 0.0, %v1281
      %v1283 = vpop.f32.mrf.mxu0
      %v1284 = vpop.f32.mrf.mxu0
      %v1285 = vadd.f32 0.0, %v1284
      %v1286 = vpop.f32.mrf.mxu0
      %1287 = vmatprep.mubr.bf16.mxu0 0
      %1288 = vmatmul.mubr.bf16.gmra.mxu0 %v1180
      %v1289 = vpop.f32.mrf.mxu0
      %v1290 = vadd.f32 0.0, %v1289
      %v1291 = vpop.f32.mrf.mxu0
      %v1292 = vpop.f32.mrf.mxu0
      %v1293 = vadd.f32 0.0, %v1292
      %v1294 = vpop.f32.mrf.mxu0
      %1295 = vmatprep.mubr.bf16.mxu0 0
      %1296 = vmatmul.mubr.bf16.gmra.mxu0 %v1183
      %v1297 = vpop.f32.mrf.mxu0
      %v1298 = vadd.f32 0.0, %v1297
      %v1299 = vpop.f32.mrf.mxu0
      %v1300 = vpop.f32.mrf.mxu0
      %v1301 = vadd.f32 0.0, %v1300
      %v1302 = vpop.f32.mrf.mxu0
      %1303 = vmatprep.mubr.bf16.mxu0 0
      %1304 = vmatmul.mubr.bf16.gmra.mxu0 %v1186
      %v1305 = vpop.f32.mrf.mxu0
      %v1306 = vadd.f32 0.0, %v1305
      %v1307 = vpop.f32.mrf.mxu0
      %v1308 = vpop.f32.mrf.mxu0
      %v1309 = vadd.f32 0.0, %v1308
      %v1310 = vpop.f32.mrf.mxu0
      %1311 = vmatprep.mubr.bf16.mxu0 0
      %1312 = vmatmul.mubr.bf16.gmra.mxu0 %v1189
      %v1313 = vpop.f32.mrf.mxu0
      %v1314 = vadd.f32 0.0, %v1313
      %v1315 = vpop.f32.mrf.mxu0
      %v1316 = vpop.f32.mrf.mxu0
      %v1317 = vadd.f32 0.0, %v1316
      %v1318 = vpop.f32.mrf.mxu0
      %1319 = vmatprep.mubr.bf16.mxu0 0
      %1320 = vmatmul.mubr.bf16.gmra.mxu0 %v1192
      %v1321 = vpop.f32.mrf.mxu0
      %v1322 = vadd.f32 0.0, %v1321
      %v1323 = vpop.f32.mrf.mxu0
      %v1324 = vpop.f32.mrf.mxu0
      %v1325 = vadd.f32 0.0, %v1324
      %v1326 = vpop.f32.mrf.mxu0
      %1327 = vmatprep.mubr.bf16.mxu0 0
      %1328 = vmatmul.mubr.bf16.gmra.mxu0 %v1195
      %v1329 = vpop.f32.mrf.mxu0
      %v1330 = vadd.f32 0.0, %v1329
      %v1331 = vpop.f32.mrf.mxu0
      %v1332 = vpop.f32.mrf.mxu0
      %v1333 = vadd.f32 0.0, %v1332
      %v1334 = vpop.f32.mrf.mxu0
      %1335 = vmatprep.mubr.bf16.mxu0 0
      %1336 = vmatmul.mubr.bf16.gmra.mxu0 %v1198
      %v1337 = vpop.f32.mrf.mxu0
      %v1338 = vadd.f32 0.0, %v1337
      %v1339 = vpop.f32.mrf.mxu0
      %v1340 = vpop.f32.mrf.mxu0
      %v1341 = vadd.f32 0.0, %v1340
      %v1342 = vpop.f32.mrf.mxu0
      %1343 = vmatprep.mubr.bf16.mxu0 0
      %1344 = vmatmul.mubr.bf16.gmra.mxu0 %v1201
      %v1345 = vpop.f32.mrf.mxu0
      %v1346 = vadd.f32 0.0, %v1345
      %v1347 = vpop.f32.mrf.mxu0
      %v1348 = vpop.f32.mrf.mxu0
      %v1349 = vadd.f32 0.0, %v1348
      %v1350 = vpop.f32.mrf.mxu0
      %1351 = vmatprep.mubr.bf16.mxu0 0
      %1352 = vmatmul.mubr.bf16.gmra.mxu0 %v1204
      %v1353 = vpop.f32.mrf.mxu0
      %v1354 = vadd.f32 0.0, %v1353
      %v1355 = vpop.f32.mrf.mxu0
      %v1356 = vpop.f32.mrf.mxu0
      %v1357 = vadd.f32 0.0, %v1356
      %v1358 = vpop.f32.mrf.mxu0
      %1359 = vmatprep.mubr.bf16.mxu0 0
      %1360 = vmatmul.mubr.bf16.gmra.mxu0 %v1207
      %v1361 = vpop.f32.mrf.mxu0
      %v1362 = vadd.f32 0.0, %v1361
      %v1363 = vpop.f32.mrf.mxu0
      %v1364 = vpop.f32.mrf.mxu0
      %v1365 = vadd.f32 0.0, %v1364
      %v1366 = vpop.f32.mrf.mxu0
      %1367 = vmatprep.mubr.bf16.mxu0 0
      %1368 = vmatmul.mubr.bf16.gmra.mxu0 %v1210
      %v1369 = vpop.f32.mrf.mxu0
      %v1370 = vadd.f32 0.0, %v1369
      %v1371 = vpop.f32.mrf.mxu0
      %v1372 = vpop.f32.mrf.mxu0
      %v1373 = vadd.f32 0.0, %v1372
      %v1374 = vpop.f32.mrf.mxu0
      %1375 = vdwg.mxu0
      %v1376 = vadd.f32 %v1082, %v1250
      %v1377 = vadd.f32 %v1083, %v1253
      %v1378 = vadd.f32 %v1084, %v1258
      %v1379 = vadd.f32 %v1085, %v1261
      %v1380 = vadd.f32 %v1086, %v1266
      %v1381 = vadd.f32 %v1087, %v1269
      %v1382 = vadd.f32 %v1088, %v1274
      %v1383 = vadd.f32 %v1089, %v1277
      %v1384 = vadd.f32 %v1090, %v1282
      %v1385 = vadd.f32 %v1091, %v1285
      %v1386 = vadd.f32 %v1092, %v1290
      %v1387 = vadd.f32 %v1093, %v1293
      %v1388 = vadd.f32 %v1094, %v1298
      %v1389 = vadd.f32 %v1095, %v1301
      %v1390 = vadd.f32 %v1096, %v1306
      %v1391 = vadd.f32 %v1097, %v1309
      %v1392 = vadd.f32 %v1098, %v1314
      %v1393 = vadd.f32 %v1099, %v1317
      %v1394 = vadd.f32 %v1100, %v1322
      %v1395 = vadd.f32 %v1101, %v1325
      %v1396 = vadd.f32 %v1102, %v1330
      %v1397 = vadd.f32 %v1103, %v1333
      %v1398 = vadd.f32 %v1104, %v1338
      %v1399 = vadd.f32 %v1105, %v1341
      %v1400 = vadd.f32 %v1106, %v1346
      %v1401 = vadd.f32 %v1107, %v1349
      %v1402 = vadd.f32 %v1108, %v1354
      %v1403 = vadd.f32 %v1109, %v1357
      %v1404 = vadd.f32 %v1110, %v1362
      %v1405 = vadd.f32 %v1111, %v1365
      %v1406 = vadd.f32 %v1112, %v1370
      %v1407 = vadd.f32 %v1113, %v1373
      %v1408 = vld [vmem:[%s260 + $0x1] sm:$0xff]
      %v1409 = vld [vmem:[%s260 + $0x9] sm:$0xff]
      %v1410 = vld [vmem:[%s260 + $0x19] sm:$0xff]
      %v1411 = vld [vmem:[%s260 + $0x21] sm:$0xff]
      %v1412 = vld [vmem:[%s260 + $0x31] sm:$0xff]
      %v1413 = vld [vmem:[%s260 + $0x39] sm:$0xff]
      %v1414 = vld [vmem:[%s260 + $0x49] sm:$0xff]
      %v1415 = vld [vmem:[%s260 + $0x51] sm:$0xff]
      %v1416 = vld [vmem:[%s260 + $0x61] sm:$0xff]
      %v1417 = vld [vmem:[%s260 + $0x69] sm:$0xff]
      %v1418 = vld [vmem:[%s260 + $0x79] sm:$0xff]
      %v1419 = vld [vmem:[%s260 + $0x81] sm:$0xff]
      %v1420 = vld [vmem:[%s260 + $0x91] sm:$0xff]
      %v1421 = vld [vmem:[%s260 + $0x99] sm:$0xff]
      %v1422 = vld [vmem:[%s260 + $0xa9] sm:$0xff]
      %v1423 = vld [vmem:[%s260 + $0xb1] sm:$0xff]
      %v1424 = vld [vmem:[%s260 + $0xc1] sm:$0xff]
      %v1425 = vld [vmem:[%s260 + $0xc9] sm:$0xff]
      %v1426 = vld [vmem:[%s260 + $0xd9] sm:$0xff]
      %v1427 = vld [vmem:[%s260 + $0xe1] sm:$0xff]
      %v1428 = vld [vmem:[%s260 + $0xf1] sm:$0xff]
      %v1429 = vld [vmem:[%s260 + $0xf9] sm:$0xff]
      %v1430 = vld [vmem:[%s260 + $0x109] sm:$0xff]
      %v1431 = vld [vmem:[%s260 + $0x111] sm:$0xff]
      %v1432 = vld [vmem:[%s260 + $0x121] sm:$0xff]
      %v1433 = vld [vmem:[%s260 + $0x129] sm:$0xff]
      %v1434 = vld [vmem:[%s260 + $0x139] sm:$0xff]
      %v1435 = vld [vmem:[%s260 + $0x141] sm:$0xff]
      %v1436 = vld [vmem:[%s260 + $0x151] sm:$0xff]
      %v1437 = vld [vmem:[%s260 + $0x159] sm:$0xff]
      %v1438 = vld [vmem:[%s260 + $0x169] sm:$0xff]
      %v1439 = vld [vmem:[%s260 + $0x171] sm:$0xff]
      %v1440 = vpack.c.bf16 %v1409, %v1408
      %v1441 = vpack.c.bf16 %v1411, %v1410
      %v1442 = vpack.c.bf16 %v1413, %v1412
      %v1443 = vpack.c.bf16 %v1415, %v1414
      %v1444 = vpack.c.bf16 %v1417, %v1416
      %v1445 = vpack.c.bf16 %v1419, %v1418
      %v1446 = vpack.c.bf16 %v1421, %v1420
      %v1447 = vpack.c.bf16 %v1423, %v1422
      %v1448 = vpack.c.bf16 %v1425, %v1424
      %v1449 = vpack.c.bf16 %v1427, %v1426
      %v1450 = vpack.c.bf16 %v1429, %v1428
      %v1451 = vpack.c.bf16 %v1431, %v1430
      %v1452 = vpack.c.bf16 %v1433, %v1432
      %v1453 = vpack.c.bf16 %v1435, %v1434
      %v1454 = vpack.c.bf16 %v1437, %v1436
      %v1455 = vpack.c.bf16 %v1439, %v1438
      %s1456 = scalar_lea.vmem %s1, 8
      %v1457 = vld [vmem:[%s1456] sm:$0x3]
      %v1459 = vsel %vm172, %v1440, 0
      %v1462 = vsel %vm172, %v1441, 0
      %v1465 = vsel %vm172, %v1442, 0
      %v1468 = vsel %vm172, %v1443, 0
      %v1471 = vsel %vm172, %v1444, 0
      %v1474 = vsel %vm172, %v1445, 0
      %v1477 = vsel %vm172, %v1446, 0
      %v1480 = vsel %vm172, %v1447, 0
      %v1483 = vsel %vm172, %v1448, 0
      %v1486 = vsel %vm172, %v1449, 0
      %v1489 = vsel %vm172, %v1450, 0
      %v1492 = vsel %vm172, %v1451, 0
      %v1495 = vsel %vm172, %v1452, 0
      %v1498 = vsel %vm172, %v1453, 0
      %v1501 = vsel %vm172, %v1454, 0
      %v1504 = vsel %vm172, %v1455, 0
      %v1507 = vand.u32 %v1457, %v443
      %1509 = vmatprep.subr.bf16.mxu0 0
      %1510 = vmatpush1.bf16.msra.mxu0 0
      %1511 = vmatprep.subr.bf16.mxu0 0
      %1512 = vmatpush1.bf16.msra.mxu0 0
      %1513 = vmatprep.subr.bf16.mxu0 0
      %1514 = vmatpush1.bf16.msra.mxu0 0
      %1515 = vmatprep.subr.bf16.mxu0 0
      %1516 = vmatpush1.bf16.msra.mxu0 0
      %1517 = vmatprep.subr.bf16.mxu0 0
      %1518 = vmatpush1.bf16.msra.mxu0 0
      %1519 = vmatprep.subr.bf16.mxu0 0
      %1520 = vmatpush1.bf16.msra.mxu0 0
      %1521 = vmatprep.subr.bf16.mxu0 0
      %1522 = vmatpush1.bf16.msra.mxu0 0
      %1523 = vmatprep.subr.bf16.mxu0 0
      %1524 = vmatpush1.bf16.msra.mxu0 %v1507
      %1525 = vmatprep.subr.bf16.mxu0 0
      %1526 = vmatpush2.bf16.msra.mxu0 0
      %1527 = vmatprep.subr.bf16.mxu0 0
      %1528 = vmatpush2.bf16.msra.mxu0 0
      %1529 = vmatprep.subr.bf16.mxu0 0
      %1530 = vmatpush2.bf16.msra.mxu0 0
      %1531 = vmatprep.subr.bf16.mxu0 0
      %1532 = vmatpush2.bf16.msra.mxu0 0
      %1533 = vmatprep.subr.bf16.mxu0 0
      %1534 = vmatpush2.bf16.msra.mxu0 0
      %1535 = vmatprep.subr.bf16.mxu0 0
      %1536 = vmatpush2.bf16.msra.mxu0 0
      %1537 = vmatprep.subr.bf16.mxu0 0
      %1538 = vmatpush2.bf16.msra.mxu0 0
      %1539 = vmatprep.subr.bf16.mxu0 0
      %1540 = vmatpush2.bf16.msra.mxu0 0
      %1541 = vmatprep.mubr.bf16.mxu0 0
      %1542 = vmatmul.mubr.bf16.gmra.mxu0 %v1459
      %v1543 = vpop.f32.mrf.mxu0
      %v1544 = vadd.f32 0.0, %v1543
      %v1545 = vpop.f32.mrf.mxu0
      %v1546 = vpop.f32.mrf.mxu0
      %v1547 = vadd.f32 0.0, %v1546
      %v1548 = vpop.f32.mrf.mxu0
      %1549 = vmatprep.mubr.bf16.mxu0 0
      %1550 = vmatmul.mubr.bf16.gmra.mxu0 %v1462
      %v1551 = vpop.f32.mrf.mxu0
      %v1552 = vadd.f32 0.0, %v1551
      %v1553 = vpop.f32.mrf.mxu0
      %v1554 = vpop.f32.mrf.mxu0
      %v1555 = vadd.f32 0.0, %v1554
      %v1556 = vpop.f32.mrf.mxu0
      %1557 = vmatprep.mubr.bf16.mxu0 0
      %1558 = vmatmul.mubr.bf16.gmra.mxu0 %v1465
      %v1559 = vpop.f32.mrf.mxu0
      %v1560 = vadd.f32 0.0, %v1559
      %v1561 = vpop.f32.mrf.mxu0
      %v1562 = vpop.f32.mrf.mxu0
      %v1563 = vadd.f32 0.0, %v1562
      %v1564 = vpop.f32.mrf.mxu0
      %1565 = vmatprep.mubr.bf16.mxu0 0
      %1566 = vmatmul.mubr.bf16.gmra.mxu0 %v1468
      %v1567 = vpop.f32.mrf.mxu0
      %v1568 = vadd.f32 0.0, %v1567
      %v1569 = vpop.f32.mrf.mxu0
      %v1570 = vpop.f32.mrf.mxu0
      %v1571 = vadd.f32 0.0, %v1570
      %v1572 = vpop.f32.mrf.mxu0
      %1573 = vmatprep.mubr.bf16.mxu0 0
      %1574 = vmatmul.mubr.bf16.gmra.mxu0 %v1471
      %v1575 = vpop.f32.mrf.mxu0
      %v1576 = vadd.f32 0.0, %v1575
      %v1577 = vpop.f32.mrf.mxu0
      %v1578 = vpop.f32.mrf.mxu0
      %v1579 = vadd.f32 0.0, %v1578
      %v1580 = vpop.f32.mrf.mxu0
      %1581 = vmatprep.mubr.bf16.mxu0 0
      %1582 = vmatmul.mubr.bf16.gmra.mxu0 %v1474
      %v1583 = vpop.f32.mrf.mxu0
      %v1584 = vadd.f32 0.0, %v1583
      %v1585 = vpop.f32.mrf.mxu0
      %v1586 = vpop.f32.mrf.mxu0
      %v1587 = vadd.f32 0.0, %v1586
      %v1588 = vpop.f32.mrf.mxu0
      %1589 = vmatprep.mubr.bf16.mxu0 0
      %1590 = vmatmul.mubr.bf16.gmra.mxu0 %v1477
      %v1591 = vpop.f32.mrf.mxu0
      %v1592 = vadd.f32 0.0, %v1591
      %v1593 = vpop.f32.mrf.mxu0
      %v1594 = vpop.f32.mrf.mxu0
      %v1595 = vadd.f32 0.0, %v1594
      %v1596 = vpop.f32.mrf.mxu0
      %1597 = vmatprep.mubr.bf16.mxu0 0
      %1598 = vmatmul.mubr.bf16.gmra.mxu0 %v1480
      %v1599 = vpop.f32.mrf.mxu0
      %v1600 = vadd.f32 0.0, %v1599
      %v1601 = vpop.f32.mrf.mxu0
      %v1602 = vpop.f32.mrf.mxu0
      %v1603 = vadd.f32 0.0, %v1602
      %v1604 = vpop.f32.mrf.mxu0
      %1605 = vmatprep.mubr.bf16.mxu0 0
      %1606 = vmatmul.mubr.bf16.gmra.mxu0 %v1483
      %v1607 = vpop.f32.mrf.mxu0
      %v1608 = vadd.f32 0.0, %v1607
      %v1609 = vpop.f32.mrf.mxu0
      %v1610 = vpop.f32.mrf.mxu0
      %v1611 = vadd.f32 0.0, %v1610
      %v1612 = vpop.f32.mrf.mxu0
      %1613 = vmatprep.mubr.bf16.mxu0 0
      %1614 = vmatmul.mubr.bf16.gmra.mxu0 %v1486
      %v1615 = vpop.f32.mrf.mxu0
      %v1616 = vadd.f32 0.0, %v1615
      %v1617 = vpop.f32.mrf.mxu0
      %v1618 = vpop.f32.mrf.mxu0
      %v1619 = vadd.f32 0.0, %v1618
      %v1620 = vpop.f32.mrf.mxu0
      %1621 = vmatprep.mubr.bf16.mxu0 0
      %1622 = vmatmul.mubr.bf16.gmra.mxu0 %v1489
      %v1623 = vpop.f32.mrf.mxu0
      %v1624 = vadd.f32 0.0, %v1623
      %v1625 = vpop.f32.mrf.mxu0
      %v1626 = vpop.f32.mrf.mxu0
      %v1627 = vadd.f32 0.0, %v1626
      %v1628 = vpop.f32.mrf.mxu0
      %1629 = vmatprep.mubr.bf16.mxu0 0
      %1630 = vmatmul.mubr.bf16.gmra.mxu0 %v1492
      %v1631 = vpop.f32.mrf.mxu0
      %v1632 = vadd.f32 0.0, %v1631
      %v1633 = vpop.f32.mrf.mxu0
      %v1634 = vpop.f32.mrf.mxu0
      %v1635 = vadd.f32 0.0, %v1634
      %v1636 = vpop.f32.mrf.mxu0
      %1637 = vmatprep.mubr.bf16.mxu0 0
      %1638 = vmatmul.mubr.bf16.gmra.mxu0 %v1495
      %v1639 = vpop.f32.mrf.mxu0
      %v1640 = vadd.f32 0.0, %v1639
      %v1641 = vpop.f32.mrf.mxu0
      %v1642 = vpop.f32.mrf.mxu0
      %v1643 = vadd.f32 0.0, %v1642
      %v1644 = vpop.f32.mrf.mxu0
      %1645 = vmatprep.mubr.bf16.mxu0 0
      %1646 = vmatmul.mubr.bf16.gmra.mxu0 %v1498
      %v1647 = vpop.f32.mrf.mxu0
      %v1648 = vadd.f32 0.0, %v1647
      %v1649 = vpop.f32.mrf.mxu0
      %v1650 = vpop.f32.mrf.mxu0
      %v1651 = vadd.f32 0.0, %v1650
      %v1652 = vpop.f32.mrf.mxu0
      %1653 = vmatprep.mubr.bf16.mxu0 0
      %1654 = vmatmul.mubr.bf16.gmra.mxu0 %v1501
      %v1655 = vpop.f32.mrf.mxu0
      %v1656 = vadd.f32 0.0, %v1655
      %v1657 = vpop.f32.mrf.mxu0
      %v1658 = vpop.f32.mrf.mxu0
      %v1659 = vadd.f32 0.0, %v1658
      %v1660 = vpop.f32.mrf.mxu0
      %1661 = vmatprep.mubr.bf16.mxu0 0
      %1662 = vmatmul.mubr.bf16.gmra.mxu0 %v1504
      %v1663 = vpop.f32.mrf.mxu0
      %v1664 = vadd.f32 0.0, %v1663
      %v1665 = vpop.f32.mrf.mxu0
      %v1666 = vpop.f32.mrf.mxu0
      %v1667 = vadd.f32 0.0, %v1666
      %v1668 = vpop.f32.mrf.mxu0
      %1669 = vdwg.mxu0
      %v1670 = vadd.f32 %v1376, %v1544
      %v1671 = vadd.f32 %v1377, %v1547
      %v1672 = vadd.f32 %v1378, %v1552
      %v1673 = vadd.f32 %v1379, %v1555
      %v1674 = vadd.f32 %v1380, %v1560
      %v1675 = vadd.f32 %v1381, %v1563
      %v1676 = vadd.f32 %v1382, %v1568
      %v1677 = vadd.f32 %v1383, %v1571
      %v1678 = vadd.f32 %v1384, %v1576
      %v1679 = vadd.f32 %v1385, %v1579
      %v1680 = vadd.f32 %v1386, %v1584
      %v1681 = vadd.f32 %v1387, %v1587
      %v1682 = vadd.f32 %v1388, %v1592
      %v1683 = vadd.f32 %v1389, %v1595
      %v1684 = vadd.f32 %v1390, %v1600
      %v1685 = vadd.f32 %v1391, %v1603
      %v1686 = vadd.f32 %v1392, %v1608
      %v1687 = vadd.f32 %v1393, %v1611
      %v1688 = vadd.f32 %v1394, %v1616
      %v1689 = vadd.f32 %v1395, %v1619
      %v1690 = vadd.f32 %v1396, %v1624
      %v1691 = vadd.f32 %v1397, %v1627
      %v1692 = vadd.f32 %v1398, %v1632
      %v1693 = vadd.f32 %v1399, %v1635
      %v1694 = vadd.f32 %v1400, %v1640
      %v1695 = vadd.f32 %v1401, %v1643
      %v1696 = vadd.f32 %v1402, %v1648
      %v1697 = vadd.f32 %v1403, %v1651
      %v1698 = vadd.f32 %v1404, %v1656
      %v1699 = vadd.f32 %v1405, %v1659
      %v1700 = vadd.f32 %v1406, %v1664
      %v1701 = vadd.f32 %v1407, %v1667
      %v1702 = vld [vmem:[%s260 + $0x2] sm:$0xff]
      %v1703 = vld [vmem:[%s260 + $0xa] sm:$0xff]
      %v1704 = vld [vmem:[%s260 + $0x1a] sm:$0xff]
      %v1705 = vld [vmem:[%s260 + $0x22] sm:$0xff]
      %v1706 = vld [vmem:[%s260 + $0x32] sm:$0xff]
      %v1707 = vld [vmem:[%s260 + $0x3a] sm:$0xff]
      %v1708 = vld [vmem:[%s260 + $0x4a] sm:$0xff]
      %v1709 = vld [vmem:[%s260 + $0x52] sm:$0xff]
      %v1710 = vld [vmem:[%s260 + $0x62] sm:$0xff]
      %v1711 = vld [vmem:[%s260 + $0x6a] sm:$0xff]
      %v1712 = vld [vmem:[%s260 + $0x7a] sm:$0xff]
      %v1713 = vld [vmem:[%s260 + $0x82] sm:$0xff]
      %v1714 = vld [vmem:[%s260 + $0x92] sm:$0xff]
      %v1715 = vld [vmem:[%s260 + $0x9a] sm:$0xff]
      %v1716 = vld [vmem:[%s260 + $0xaa] sm:$0xff]
      %v1717 = vld [vmem:[%s260 + $0xb2] sm:$0xff]
      %v1718 = vld [vmem:[%s260 + $0xc2] sm:$0xff]
      %v1719 = vld [vmem:[%s260 + $0xca] sm:$0xff]
      %v1720 = vld [vmem:[%s260 + $0xda] sm:$0xff]
      %v1721 = vld [vmem:[%s260 + $0xe2] sm:$0xff]
      %v1722 = vld [vmem:[%s260 + $0xf2] sm:$0xff]
      %v1723 = vld [vmem:[%s260 + $0xfa] sm:$0xff]
      %v1724 = vld [vmem:[%s260 + $0x10a] sm:$0xff]
      %v1725 = vld [vmem:[%s260 + $0x112] sm:$0xff]
      %v1726 = vld [vmem:[%s260 + $0x122] sm:$0xff]
      %v1727 = vld [vmem:[%s260 + $0x12a] sm:$0xff]
      %v1728 = vld [vmem:[%s260 + $0x13a] sm:$0xff]
      %v1729 = vld [vmem:[%s260 + $0x142] sm:$0xff]
      %v1730 = vld [vmem:[%s260 + $0x152] sm:$0xff]
      %v1731 = vld [vmem:[%s260 + $0x15a] sm:$0xff]
      %v1732 = vld [vmem:[%s260 + $0x16a] sm:$0xff]
      %v1733 = vld [vmem:[%s260 + $0x172] sm:$0xff]
      %v1734 = vpack.c.bf16 %v1703, %v1702
      %v1735 = vpack.c.bf16 %v1705, %v1704
      %v1736 = vpack.c.bf16 %v1707, %v1706
      %v1737 = vpack.c.bf16 %v1709, %v1708
      %v1738 = vpack.c.bf16 %v1711, %v1710
      %v1739 = vpack.c.bf16 %v1713, %v1712
      %v1740 = vpack.c.bf16 %v1715, %v1714
      %v1741 = vpack.c.bf16 %v1717, %v1716
      %v1742 = vpack.c.bf16 %v1719, %v1718
      %v1743 = vpack.c.bf16 %v1721, %v1720
      %v1744 = vpack.c.bf16 %v1723, %v1722
      %v1745 = vpack.c.bf16 %v1725, %v1724
      %v1746 = vpack.c.bf16 %v1727, %v1726
      %v1747 = vpack.c.bf16 %v1729, %v1728
      %v1748 = vpack.c.bf16 %v1731, %v1730
      %v1749 = vpack.c.bf16 %v1733, %v1732
      %s1750 = scalar_lea.vmem %s1, 10
      %v1751 = vld [vmem:[%s1750] sm:$0x3]
      %v1753 = vsel %vm172, %v1734, 0
      %v1756 = vsel %vm172, %v1735, 0
      %v1759 = vsel %vm172, %v1736, 0
      %v1762 = vsel %vm172, %v1737, 0
      %v1765 = vsel %vm172, %v1738, 0
      %v1768 = vsel %vm172, %v1739, 0
      %v1771 = vsel %vm172, %v1740, 0
      %v1774 = vsel %vm172, %v1741, 0
      %v1777 = vsel %vm172, %v1742, 0
      %v1780 = vsel %vm172, %v1743, 0
      %v1783 = vsel %vm172, %v1744, 0
      %v1786 = vsel %vm172, %v1745, 0
      %v1789 = vsel %vm172, %v1746, 0
      %v1792 = vsel %vm172, %v1747, 0
      %v1795 = vsel %vm172, %v1748, 0
      %v1798 = vsel %vm172, %v1749, 0
      %v1801 = vand.u32 %v1751, %v443
      %1803 = vmatprep.subr.bf16.mxu0 0
      %1804 = vmatpush1.bf16.msra.mxu0 0
      %1805 = vmatprep.subr.bf16.mxu0 0
      %1806 = vmatpush1.bf16.msra.mxu0 0
      %1807 = vmatprep.subr.bf16.mxu0 0
      %1808 = vmatpush1.bf16.msra.mxu0 0
      %1809 = vmatprep.subr.bf16.mxu0 0
      %1810 = vmatpush1.bf16.msra.mxu0 0
      %1811 = vmatprep.subr.bf16.mxu0 0
      %1812 = vmatpush1.bf16.msra.mxu0 0
      %1813 = vmatprep.subr.bf16.mxu0 0
      %1814 = vmatpush1.bf16.msra.mxu0 0
      %1815 = vmatprep.subr.bf16.mxu0 0
      %1816 = vmatpush1.bf16.msra.mxu0 0
      %1817 = vmatprep.subr.bf16.mxu0 0
      %1818 = vmatpush1.bf16.msra.mxu0 %v1801
      %1819 = vmatprep.subr.bf16.mxu0 0
      %1820 = vmatpush2.bf16.msra.mxu0 0
      %1821 = vmatprep.subr.bf16.mxu0 0
      %1822 = vmatpush2.bf16.msra.mxu0 0
      %1823 = vmatprep.subr.bf16.mxu0 0
      %1824 = vmatpush2.bf16.msra.mxu0 0
      %1825 = vmatprep.subr.bf16.mxu0 0
      %1826 = vmatpush2.bf16.msra.mxu0 0
      %1827 = vmatprep.subr.bf16.mxu0 0
      %1828 = vmatpush2.bf16.msra.mxu0 0
      %1829 = vmatprep.subr.bf16.mxu0 0
      %1830 = vmatpush2.bf16.msra.mxu0 0
      %1831 = vmatprep.subr.bf16.mxu0 0
      %1832 = vmatpush2.bf16.msra.mxu0 0
      %1833 = vmatprep.subr.bf16.mxu0 0
      %1834 = vmatpush2.bf16.msra.mxu0 0
      %1835 = vmatprep.mubr.bf16.mxu0 0
      %1836 = vmatmul.mubr.bf16.gmra.mxu0 %v1753
      %v1837 = vpop.f32.mrf.mxu0
      %v1838 = vadd.f32 0.0, %v1837
      %v1839 = vpop.f32.mrf.mxu0
      %v1840 = vpop.f32.mrf.mxu0
      %v1841 = vadd.f32 0.0, %v1840
      %v1842 = vpop.f32.mrf.mxu0
      %1843 = vmatprep.mubr.bf16.mxu0 0
      %1844 = vmatmul.mubr.bf16.gmra.mxu0 %v1756
      %v1845 = vpop.f32.mrf.mxu0
      %v1846 = vadd.f32 0.0, %v1845
      %v1847 = vpop.f32.mrf.mxu0
      %v1848 = vpop.f32.mrf.mxu0
      %v1849 = vadd.f32 0.0, %v1848
      %v1850 = vpop.f32.mrf.mxu0
      %1851 = vmatprep.mubr.bf16.mxu0 0
      %1852 = vmatmul.mubr.bf16.gmra.mxu0 %v1759
      %v1853 = vpop.f32.mrf.mxu0
      %v1854 = vadd.f32 0.0, %v1853
      %v1855 = vpop.f32.mrf.mxu0
      %v1856 = vpop.f32.mrf.mxu0
      %v1857 = vadd.f32 0.0, %v1856
      %v1858 = vpop.f32.mrf.mxu0
      %1859 = vmatprep.mubr.bf16.mxu0 0
      %1860 = vmatmul.mubr.bf16.gmra.mxu0 %v1762
      %v1861 = vpop.f32.mrf.mxu0
      %v1862 = vadd.f32 0.0, %v1861
      %v1863 = vpop.f32.mrf.mxu0
      %v1864 = vpop.f32.mrf.mxu0
      %v1865 = vadd.f32 0.0, %v1864
      %v1866 = vpop.f32.mrf.mxu0
      %1867 = vmatprep.mubr.bf16.mxu0 0
      %1868 = vmatmul.mubr.bf16.gmra.mxu0 %v1765
      %v1869 = vpop.f32.mrf.mxu0
      %v1870 = vadd.f32 0.0, %v1869
      %v1871 = vpop.f32.mrf.mxu0
      %v1872 = vpop.f32.mrf.mxu0
      %v1873 = vadd.f32 0.0, %v1872
      %v1874 = vpop.f32.mrf.mxu0
      %1875 = vmatprep.mubr.bf16.mxu0 0
      %1876 = vmatmul.mubr.bf16.gmra.mxu0 %v1768
      %v1877 = vpop.f32.mrf.mxu0
      %v1878 = vadd.f32 0.0, %v1877
      %v1879 = vpop.f32.mrf.mxu0
      %v1880 = vpop.f32.mrf.mxu0
      %v1881 = vadd.f32 0.0, %v1880
      %v1882 = vpop.f32.mrf.mxu0
      %1883 = vmatprep.mubr.bf16.mxu0 0
      %1884 = vmatmul.mubr.bf16.gmra.mxu0 %v1771
      %v1885 = vpop.f32.mrf.mxu0
      %v1886 = vadd.f32 0.0, %v1885
      %v1887 = vpop.f32.mrf.mxu0
      %v1888 = vpop.f32.mrf.mxu0
      %v1889 = vadd.f32 0.0, %v1888
      %v1890 = vpop.f32.mrf.mxu0
      %1891 = vmatprep.mubr.bf16.mxu0 0
      %1892 = vmatmul.mubr.bf16.gmra.mxu0 %v1774
      %v1893 = vpop.f32.mrf.mxu0
      %v1894 = vadd.f32 0.0, %v1893
      %v1895 = vpop.f32.mrf.mxu0
      %v1896 = vpop.f32.mrf.mxu0
      %v1897 = vadd.f32 0.0, %v1896
      %v1898 = vpop.f32.mrf.mxu0
      %1899 = vmatprep.mubr.bf16.mxu0 0
      %1900 = vmatmul.mubr.bf16.gmra.mxu0 %v1777
      %v1901 = vpop.f32.mrf.mxu0
      %v1902 = vadd.f32 0.0, %v1901
      %v1903 = vpop.f32.mrf.mxu0
      %v1904 = vpop.f32.mrf.mxu0
      %v1905 = vadd.f32 0.0, %v1904
      %v1906 = vpop.f32.mrf.mxu0
      %1907 = vmatprep.mubr.bf16.mxu0 0
      %1908 = vmatmul.mubr.bf16.gmra.mxu0 %v1780
      %v1909 = vpop.f32.mrf.mxu0
      %v1910 = vadd.f32 0.0, %v1909
      %v1911 = vpop.f32.mrf.mxu0
      %v1912 = vpop.f32.mrf.mxu0
      %v1913 = vadd.f32 0.0, %v1912
      %v1914 = vpop.f32.mrf.mxu0
      %1915 = vmatprep.mubr.bf16.mxu0 0
      %1916 = vmatmul.mubr.bf16.gmra.mxu0 %v1783
      %v1917 = vpop.f32.mrf.mxu0
      %v1918 = vadd.f32 0.0, %v1917
      %v1919 = vpop.f32.mrf.mxu0
      %v1920 = vpop.f32.mrf.mxu0
      %v1921 = vadd.f32 0.0, %v1920
      %v1922 = vpop.f32.mrf.mxu0
      %1923 = vmatprep.mubr.bf16.mxu0 0
      %1924 = vmatmul.mubr.bf16.gmra.mxu0 %v1786
      %v1925 = vpop.f32.mrf.mxu0
      %v1926 = vadd.f32 0.0, %v1925
      %v1927 = vpop.f32.mrf.mxu0
      %v1928 = vpop.f32.mrf.mxu0
      %v1929 = vadd.f32 0.0, %v1928
      %v1930 = vpop.f32.mrf.mxu0
      %1931 = vmatprep.mubr.bf16.mxu0 0
      %1932 = vmatmul.mubr.bf16.gmra.mxu0 %v1789
      %v1933 = vpop.f32.mrf.mxu0
      %v1934 = vadd.f32 0.0, %v1933
      %v1935 = vpop.f32.mrf.mxu0
      %v1936 = vpop.f32.mrf.mxu0
      %v1937 = vadd.f32 0.0, %v1936
      %v1938 = vpop.f32.mrf.mxu0
      %1939 = vmatprep.mubr.bf16.mxu0 0
      %1940 = vmatmul.mubr.bf16.gmra.mxu0 %v1792
      %v1941 = vpop.f32.mrf.mxu0
      %v1942 = vadd.f32 0.0, %v1941
      %v1943 = vpop.f32.mrf.mxu0
      %v1944 = vpop.f32.mrf.mxu0
      %v1945 = vadd.f32 0.0, %v1944
      %v1946 = vpop.f32.mrf.mxu0
      %1947 = vmatprep.mubr.bf16.mxu0 0
      %1948 = vmatmul.mubr.bf16.gmra.mxu0 %v1795
      %v1949 = vpop.f32.mrf.mxu0
      %v1950 = vadd.f32 0.0, %v1949
      %v1951 = vpop.f32.mrf.mxu0
      %v1952 = vpop.f32.mrf.mxu0
      %v1953 = vadd.f32 0.0, %v1952
      %v1954 = vpop.f32.mrf.mxu0
      %1955 = vmatprep.mubr.bf16.mxu0 0
      %1956 = vmatmul.mubr.bf16.gmra.mxu0 %v1798
      %v1957 = vpop.f32.mrf.mxu0
      %v1958 = vadd.f32 0.0, %v1957
      %v1959 = vpop.f32.mrf.mxu0
      %v1960 = vpop.f32.mrf.mxu0
      %v1961 = vadd.f32 0.0, %v1960
      %v1962 = vpop.f32.mrf.mxu0
      %1963 = vdwg.mxu0
      %v1964 = vadd.f32 %v1670, %v1838
      %v1965 = vadd.f32 %v1671, %v1841
      %v1966 = vadd.f32 %v1672, %v1846
      %v1967 = vadd.f32 %v1673, %v1849
      %v1968 = vadd.f32 %v1674, %v1854
      %v1969 = vadd.f32 %v1675, %v1857
      %v1970 = vadd.f32 %v1676, %v1862
      %v1971 = vadd.f32 %v1677, %v1865
      %v1972 = vadd.f32 %v1678, %v1870
      %v1973 = vadd.f32 %v1679, %v1873
      %v1974 = vadd.f32 %v1680, %v1878
      %v1975 = vadd.f32 %v1681, %v1881
      %v1976 = vadd.f32 %v1682, %v1886
      %v1977 = vadd.f32 %v1683, %v1889
      %v1978 = vadd.f32 %v1684, %v1894
      %v1979 = vadd.f32 %v1685, %v1897
      %v1980 = vadd.f32 %v1686, %v1902
      %v1981 = vadd.f32 %v1687, %v1905
      %v1982 = vadd.f32 %v1688, %v1910
      %v1983 = vadd.f32 %v1689, %v1913
      %v1984 = vadd.f32 %v1690, %v1918
      %v1985 = vadd.f32 %v1691, %v1921
      %v1986 = vadd.f32 %v1692, %v1926
      %v1987 = vadd.f32 %v1693, %v1929
      %v1988 = vadd.f32 %v1694, %v1934
      %v1989 = vadd.f32 %v1695, %v1937
      %v1990 = vadd.f32 %v1696, %v1942
      %v1991 = vadd.f32 %v1697, %v1945
      %v1992 = vadd.f32 %v1698, %v1950
      %v1993 = vadd.f32 %v1699, %v1953
      %v1994 = vadd.f32 %v1700, %v1958
      %v1995 = vadd.f32 %v1701, %v1961
      %s1996 = scalar_lea.vmem [#allocation2], 48
      %v1997 = vld [vmem:[%s1996] sm:$0xff]
      %v1998 = vld [vmem:[%s1996 + $0x8] sm:$0xff]
      %v1999 = vld [vmem:[%s1996 + $0x18] sm:$0xff]
      %v2000 = vld [vmem:[%s1996 + $0x20] sm:$0xff]
      %v2001 = vld [vmem:[%s1996 + $0x30] sm:$0xff]
      %v2002 = vld [vmem:[%s1996 + $0x38] sm:$0xff]
      %v2003 = vld [vmem:[%s1996 + $0x48] sm:$0xff]
      %v2004 = vld [vmem:[%s1996 + $0x50] sm:$0xff]
      %v2005 = vld [vmem:[%s1996 + $0x60] sm:$0xff]
      %v2006 = vld [vmem:[%s1996 + $0x68] sm:$0xff]
      %v2007 = vld [vmem:[%s1996 + $0x78] sm:$0xff]
      %v2008 = vld [vmem:[%s1996 + $0x80] sm:$0xff]
      %v2009 = vld [vmem:[%s1996 + $0x90] sm:$0xff]
      %v2010 = vld [vmem:[%s1996 + $0x98] sm:$0xff]
      %v2011 = vld [vmem:[%s1996 + $0xa8] sm:$0xff]
      %v2012 = vld [vmem:[%s1996 + $0xb0] sm:$0xff]
      %v2013 = vld [vmem:[%s1996 + $0xc0] sm:$0xff]
      %v2014 = vld [vmem:[%s1996 + $0xc8] sm:$0xff]
      %v2015 = vld [vmem:[%s1996 + $0xd8] sm:$0xff]
      %v2016 = vld [vmem:[%s1996 + $0xe0] sm:$0xff]
      %v2017 = vld [vmem:[%s1996 + $0xf0] sm:$0xff]
      %v2018 = vld [vmem:[%s1996 + $0xf8] sm:$0xff]
      %v2019 = vld [vmem:[%s1996 + $0x108] sm:$0xff]
      %v2020 = vld [vmem:[%s1996 + $0x110] sm:$0xff]
      %v2021 = vld [vmem:[%s1996 + $0x120] sm:$0xff]
      %v2022 = vld [vmem:[%s1996 + $0x128] sm:$0xff]
      %v2023 = vld [vmem:[%s1996 + $0x138] sm:$0xff]
      %v2024 = vld [vmem:[%s1996 + $0x140] sm:$0xff]
      %v2025 = vld [vmem:[%s1996 + $0x150] sm:$0xff]
      %v2026 = vld [vmem:[%s1996 + $0x158] sm:$0xff]
      %v2027 = vld [vmem:[%s1996 + $0x168] sm:$0xff]
      %v2028 = vld [vmem:[%s1996 + $0x170] sm:$0xff]
      %v2029 = vpack.c.bf16 %v1998, %v1997
      %v2030 = vpack.c.bf16 %v2000, %v1999
      %v2031 = vpack.c.bf16 %v2002, %v2001
      %v2032 = vpack.c.bf16 %v2004, %v2003
      %v2033 = vpack.c.bf16 %v2006, %v2005
      %v2034 = vpack.c.bf16 %v2008, %v2007
      %v2035 = vpack.c.bf16 %v2010, %v2009
      %v2036 = vpack.c.bf16 %v2012, %v2011
      %v2037 = vpack.c.bf16 %v2014, %v2013
      %v2038 = vpack.c.bf16 %v2016, %v2015
      %v2039 = vpack.c.bf16 %v2018, %v2017
      %v2040 = vpack.c.bf16 %v2020, %v2019
      %v2041 = vpack.c.bf16 %v2022, %v2021
      %v2042 = vpack.c.bf16 %v2024, %v2023
      %v2043 = vpack.c.bf16 %v2026, %v2025
      %v2044 = vpack.c.bf16 %v2028, %v2027
      %s2045 = scalar_lea.vmem %s1, 12
      %v2046 = vld [vmem:[%s2045] sm:$0x3]
      %v2048 = vsel %vm172, %v2029, 0
      %v2051 = vsel %vm172, %v2030, 0
      %v2054 = vsel %vm172, %v2031, 0
      %v2057 = vsel %vm172, %v2032, 0
      %v2060 = vsel %vm172, %v2033, 0
      %v2063 = vsel %vm172, %v2034, 0
      %v2066 = vsel %vm172, %v2035, 0
      %v2069 = vsel %vm172, %v2036, 0
      %v2072 = vsel %vm172, %v2037, 0
      %v2075 = vsel %vm172, %v2038, 0
      %v2078 = vsel %vm172, %v2039, 0
      %v2081 = vsel %vm172, %v2040, 0
      %v2084 = vsel %vm172, %v2041, 0
      %v2087 = vsel %vm172, %v2042, 0
      %v2090 = vsel %vm172, %v2043, 0
      %v2093 = vsel %vm172, %v2044, 0
      %v2096 = vand.u32 %v2046, %v443
      %2098 = vmatprep.subr.bf16.mxu0 0
      %2099 = vmatpush1.bf16.msra.mxu0 0
      %2100 = vmatprep.subr.bf16.mxu0 0
      %2101 = vmatpush1.bf16.msra.mxu0 0
      %2102 = vmatprep.subr.bf16.mxu0 0
      %2103 = vmatpush1.bf16.msra.mxu0 0
      %2104 = vmatprep.subr.bf16.mxu0 0
      %2105 = vmatpush1.bf16.msra.mxu0 0
      %2106 = vmatprep.subr.bf16.mxu0 0
      %2107 = vmatpush1.bf16.msra.mxu0 0
      %2108 = vmatprep.subr.bf16.mxu0 0
      %2109 = vmatpush1.bf16.msra.mxu0 0
      %2110 = vmatprep.subr.bf16.mxu0 0
      %2111 = vmatpush1.bf16.msra.mxu0 0
      %2112 = vmatprep.subr.bf16.mxu0 0
      %2113 = vmatpush1.bf16.msra.mxu0 %v2096
      %2114 = vmatprep.subr.bf16.mxu0 0
      %2115 = vmatpush2.bf16.msra.mxu0 0
      %2116 = vmatprep.subr.bf16.mxu0 0
      %2117 = vmatpush2.bf16.msra.mxu0 0
      %2118 = vmatprep.subr.bf16.mxu0 0
      %2119 = vmatpush2.bf16.msra.mxu0 0
      %2120 = vmatprep.subr.bf16.mxu0 0
      %2121 = vmatpush2.bf16.msra.mxu0 0
      %2122 = vmatprep.subr.bf16.mxu0 0
      %2123 = vmatpush2.bf16.msra.mxu0 0
      %2124 = vmatprep.subr.bf16.mxu0 0
      %2125 = vmatpush2.bf16.msra.mxu0 0
      %2126 = vmatprep.subr.bf16.mxu0 0
      %2127 = vmatpush2.bf16.msra.mxu0 0
      %2128 = vmatprep.subr.bf16.mxu0 0
      %2129 = vmatpush2.bf16.msra.mxu0 0
      %2130 = vmatprep.mubr.bf16.mxu0 0
      %2131 = vmatmul.mubr.bf16.gmra.mxu0 %v2048
      %v2132 = vpop.f32.mrf.mxu0
      %v2133 = vadd.f32 0.0, %v2132
      %v2134 = vpop.f32.mrf.mxu0
      %v2135 = vpop.f32.mrf.mxu0
      %v2136 = vadd.f32 0.0, %v2135
      %v2137 = vpop.f32.mrf.mxu0
      %2138 = vmatprep.mubr.bf16.mxu0 0
      %2139 = vmatmul.mubr.bf16.gmra.mxu0 %v2051
      %v2140 = vpop.f32.mrf.mxu0
      %v2141 = vadd.f32 0.0, %v2140
      %v2142 = vpop.f32.mrf.mxu0
      %v2143 = vpop.f32.mrf.mxu0
      %v2144 = vadd.f32 0.0, %v2143
      %v2145 = vpop.f32.mrf.mxu0
      %2146 = vmatprep.mubr.bf16.mxu0 0
      %2147 = vmatmul.mubr.bf16.gmra.mxu0 %v2054
      %v2148 = vpop.f32.mrf.mxu0
      %v2149 = vadd.f32 0.0, %v2148
      %v2150 = vpop.f32.mrf.mxu0
      %v2151 = vpop.f32.mrf.mxu0
      %v2152 = vadd.f32 0.0, %v2151
      %v2153 = vpop.f32.mrf.mxu0
      %2154 = vmatprep.mubr.bf16.mxu0 0
      %2155 = vmatmul.mubr.bf16.gmra.mxu0 %v2057
      %v2156 = vpop.f32.mrf.mxu0
      %v2157 = vadd.f32 0.0, %v2156
      %v2158 = vpop.f32.mrf.mxu0
      %v2159 = vpop.f32.mrf.mxu0
      %v2160 = vadd.f32 0.0, %v2159
      %v2161 = vpop.f32.mrf.mxu0
      %2162 = vmatprep.mubr.bf16.mxu0 0
      %2163 = vmatmul.mubr.bf16.gmra.mxu0 %v2060
      %v2164 = vpop.f32.mrf.mxu0
      %v2165 = vadd.f32 0.0, %v2164
      %v2166 = vpop.f32.mrf.mxu0
      %v2167 = vpop.f32.mrf.mxu0
      %v2168 = vadd.f32 0.0, %v2167
      %v2169 = vpop.f32.mrf.mxu0
      %2170 = vmatprep.mubr.bf16.mxu0 0
      %2171 = vmatmul.mubr.bf16.gmra.mxu0 %v2063
      %v2172 = vpop.f32.mrf.mxu0
      %v2173 = vadd.f32 0.0, %v2172
      %v2174 = vpop.f32.mrf.mxu0
      %v2175 = vpop.f32.mrf.mxu0
      %v2176 = vadd.f32 0.0, %v2175
      %v2177 = vpop.f32.mrf.mxu0
      %2178 = vmatprep.mubr.bf16.mxu0 0
      %2179 = vmatmul.mubr.bf16.gmra.mxu0 %v2066
      %v2180 = vpop.f32.mrf.mxu0
      %v2181 = vadd.f32 0.0, %v2180
      %v2182 = vpop.f32.mrf.mxu0
      %v2183 = vpop.f32.mrf.mxu0
      %v2184 = vadd.f32 0.0, %v2183
      %v2185 = vpop.f32.mrf.mxu0
      %2186 = vmatprep.mubr.bf16.mxu0 0
      %2187 = vmatmul.mubr.bf16.gmra.mxu0 %v2069
      %v2188 = vpop.f32.mrf.mxu0
      %v2189 = vadd.f32 0.0, %v2188
      %v2190 = vpop.f32.mrf.mxu0
      %v2191 = vpop.f32.mrf.mxu0
      %v2192 = vadd.f32 0.0, %v2191
      %v2193 = vpop.f32.mrf.mxu0
      %2194 = vmatprep.mubr.bf16.mxu0 0
      %2195 = vmatmul.mubr.bf16.gmra.mxu0 %v2072
      %v2196 = vpop.f32.mrf.mxu0
      %v2197 = vadd.f32 0.0, %v2196
      %v2198 = vpop.f32.mrf.mxu0
      %v2199 = vpop.f32.mrf.mxu0
      %v2200 = vadd.f32 0.0, %v2199
      %v2201 = vpop.f32.mrf.mxu0
      %2202 = vmatprep.mubr.bf16.mxu0 0
      %2203 = vmatmul.mubr.bf16.gmra.mxu0 %v2075
      %v2204 = vpop.f32.mrf.mxu0
      %v2205 = vadd.f32 0.0, %v2204
      %v2206 = vpop.f32.mrf.mxu0
      %v2207 = vpop.f32.mrf.mxu0
      %v2208 = vadd.f32 0.0, %v2207
      %v2209 = vpop.f32.mrf.mxu0
      %2210 = vmatprep.mubr.bf16.mxu0 0
      %2211 = vmatmul.mubr.bf16.gmra.mxu0 %v2078
      %v2212 = vpop.f32.mrf.mxu0
      %v2213 = vadd.f32 0.0, %v2212
      %v2214 = vpop.f32.mrf.mxu0
      %v2215 = vpop.f32.mrf.mxu0
      %v2216 = vadd.f32 0.0, %v2215
      %v2217 = vpop.f32.mrf.mxu0
      %2218 = vmatprep.mubr.bf16.mxu0 0
      %2219 = vmatmul.mubr.bf16.gmra.mxu0 %v2081
      %v2220 = vpop.f32.mrf.mxu0
      %v2221 = vadd.f32 0.0, %v2220
      %v2222 = vpop.f32.mrf.mxu0
      %v2223 = vpop.f32.mrf.mxu0
      %v2224 = vadd.f32 0.0, %v2223
      %v2225 = vpop.f32.mrf.mxu0
      %2226 = vmatprep.mubr.bf16.mxu0 0
      %2227 = vmatmul.mubr.bf16.gmra.mxu0 %v2084
      %v2228 = vpop.f32.mrf.mxu0
      %v2229 = vadd.f32 0.0, %v2228
      %v2230 = vpop.f32.mrf.mxu0
      %v2231 = vpop.f32.mrf.mxu0
      %v2232 = vadd.f32 0.0, %v2231
      %v2233 = vpop.f32.mrf.mxu0
      %2234 = vmatprep.mubr.bf16.mxu0 0
      %2235 = vmatmul.mubr.bf16.gmra.mxu0 %v2087
      %v2236 = vpop.f32.mrf.mxu0
      %v2237 = vadd.f32 0.0, %v2236
      %v2238 = vpop.f32.mrf.mxu0
      %v2239 = vpop.f32.mrf.mxu0
      %v2240 = vadd.f32 0.0, %v2239
      %v2241 = vpop.f32.mrf.mxu0
      %2242 = vmatprep.mubr.bf16.mxu0 0
      %2243 = vmatmul.mubr.bf16.gmra.mxu0 %v2090
      %v2244 = vpop.f32.mrf.mxu0
      %v2245 = vadd.f32 0.0, %v2244
      %v2246 = vpop.f32.mrf.mxu0
      %v2247 = vpop.f32.mrf.mxu0
      %v2248 = vadd.f32 0.0, %v2247
      %v2249 = vpop.f32.mrf.mxu0
      %2250 = vmatprep.mubr.bf16.mxu0 0
      %2251 = vmatmul.mubr.bf16.gmra.mxu0 %v2093
      %v2252 = vpop.f32.mrf.mxu0
      %v2253 = vadd.f32 0.0, %v2252
      %v2254 = vpop.f32.mrf.mxu0
      %v2255 = vpop.f32.mrf.mxu0
      %v2256 = vadd.f32 0.0, %v2255
      %v2257 = vpop.f32.mrf.mxu0
      %2258 = vdwg.mxu0
      %v2259 = vadd.f32 %v1964, %v2133
      %v2260 = vadd.f32 %v1965, %v2136
      %v2261 = vadd.f32 %v1966, %v2141
      %v2262 = vadd.f32 %v1967, %v2144
      %v2263 = vadd.f32 %v1968, %v2149
      %v2264 = vadd.f32 %v1969, %v2152
      %v2265 = vadd.f32 %v1970, %v2157
      %v2266 = vadd.f32 %v1971, %v2160
      %v2267 = vadd.f32 %v1972, %v2165
      %v2268 = vadd.f32 %v1973, %v2168
      %v2269 = vadd.f32 %v1974, %v2173
      %v2270 = vadd.f32 %v1975, %v2176
      %v2271 = vadd.f32 %v1976, %v2181
      %v2272 = vadd.f32 %v1977, %v2184
      %v2273 = vadd.f32 %v1978, %v2189
      %v2274 = vadd.f32 %v1979, %v2192
      %v2275 = vadd.f32 %v1980, %v2197
      %v2276 = vadd.f32 %v1981, %v2200
      %v2277 = vadd.f32 %v1982, %v2205
      %v2278 = vadd.f32 %v1983, %v2208
      %v2279 = vadd.f32 %v1984, %v2213
      %v2280 = vadd.f32 %v1985, %v2216
      %v2281 = vadd.f32 %v1986, %v2221
      %v2282 = vadd.f32 %v1987, %v2224
      %v2283 = vadd.f32 %v1988, %v2229
      %v2284 = vadd.f32 %v1989, %v2232
      %v2285 = vadd.f32 %v1990, %v2237
      %v2286 = vadd.f32 %v1991, %v2240
      %v2287 = vadd.f32 %v1992, %v2245
      %v2288 = vadd.f32 %v1993, %v2248
      %v2289 = vadd.f32 %v1994, %v2253
      %v2290 = vadd.f32 %v1995, %v2256
      %v2291 = vld [vmem:[%s1996 + $0x1] sm:$0xff]
      %v2292 = vld [vmem:[%s1996 + $0x9] sm:$0xff]
      %v2293 = vld [vmem:[%s1996 + $0x19] sm:$0xff]
      %v2294 = vld [vmem:[%s1996 + $0x21] sm:$0xff]
      %v2295 = vld [vmem:[%s1996 + $0x31] sm:$0xff]
      %v2296 = vld [vmem:[%s1996 + $0x39] sm:$0xff]
      %v2297 = vld [vmem:[%s1996 + $0x49] sm:$0xff]
      %v2298 = vld [vmem:[%s1996 + $0x51] sm:$0xff]
      %v2299 = vld [vmem:[%s1996 + $0x61] sm:$0xff]
      %v2300 = vld [vmem:[%s1996 + $0x69] sm:$0xff]
      %v2301 = vld [vmem:[%s1996 + $0x79] sm:$0xff]
      %v2302 = vld [vmem:[%s1996 + $0x81] sm:$0xff]
      %v2303 = vld [vmem:[%s1996 + $0x91] sm:$0xff]
      %v2304 = vld [vmem:[%s1996 + $0x99] sm:$0xff]
      %v2305 = vld [vmem:[%s1996 + $0xa9] sm:$0xff]
      %v2306 = vld [vmem:[%s1996 + $0xb1] sm:$0xff]
      %v2307 = vld [vmem:[%s1996 + $0xc1] sm:$0xff]
      %v2308 = vld [vmem:[%s1996 + $0xc9] sm:$0xff]
      %v2309 = vld [vmem:[%s1996 + $0xd9] sm:$0xff]
      %v2310 = vld [vmem:[%s1996 + $0xe1] sm:$0xff]
      %v2311 = vld [vmem:[%s1996 + $0xf1] sm:$0xff]
      %v2312 = vld [vmem:[%s1996 + $0xf9] sm:$0xff]
      %v2313 = vld [vmem:[%s1996 + $0x109] sm:$0xff]
      %v2314 = vld [vmem:[%s1996 + $0x111] sm:$0xff]
      %v2315 = vld [vmem:[%s1996 + $0x121] sm:$0xff]
      %v2316 = vld [vmem:[%s1996 + $0x129] sm:$0xff]
      %v2317 = vld [vmem:[%s1996 + $0x139] sm:$0xff]
      %v2318 = vld [vmem:[%s1996 + $0x141] sm:$0xff]
      %v2319 = vld [vmem:[%s1996 + $0x151] sm:$0xff]
      %v2320 = vld [vmem:[%s1996 + $0x159] sm:$0xff]
      %v2321 = vld [vmem:[%s1996 + $0x169] sm:$0xff]
      %v2322 = vld [vmem:[%s1996 + $0x171] sm:$0xff]
      %v2323 = vpack.c.bf16 %v2292, %v2291
      %v2324 = vpack.c.bf16 %v2294, %v2293
      %v2325 = vpack.c.bf16 %v2296, %v2295
      %v2326 = vpack.c.bf16 %v2298, %v2297
      %v2327 = vpack.c.bf16 %v2300, %v2299
      %v2328 = vpack.c.bf16 %v2302, %v2301
      %v2329 = vpack.c.bf16 %v2304, %v2303
      %v2330 = vpack.c.bf16 %v2306, %v2305
      %v2331 = vpack.c.bf16 %v2308, %v2307
      %v2332 = vpack.c.bf16 %v2310, %v2309
      %v2333 = vpack.c.bf16 %v2312, %v2311
      %v2334 = vpack.c.bf16 %v2314, %v2313
      %v2335 = vpack.c.bf16 %v2316, %v2315
      %v2336 = vpack.c.bf16 %v2318, %v2317
      %v2337 = vpack.c.bf16 %v2320, %v2319
      %v2338 = vpack.c.bf16 %v2322, %v2321
      %s2339 = scalar_lea.vmem %s1, 14
      %v2340 = vld [vmem:[%s2339] sm:$0x3]
      %v2342 = vsel %vm172, %v2323, 0
      %v2345 = vsel %vm172, %v2324, 0
      %v2348 = vsel %vm172, %v2325, 0
      %v2351 = vsel %vm172, %v2326, 0
      %v2354 = vsel %vm172, %v2327, 0
      %v2357 = vsel %vm172, %v2328, 0
      %v2360 = vsel %vm172, %v2329, 0
      %v2363 = vsel %vm172, %v2330, 0
      %v2366 = vsel %vm172, %v2331, 0
      %v2369 = vsel %vm172, %v2332, 0
      %v2372 = vsel %vm172, %v2333, 0
      %v2375 = vsel %vm172, %v2334, 0
      %v2378 = vsel %vm172, %v2335, 0
      %v2381 = vsel %vm172, %v2336, 0
      %v2384 = vsel %vm172, %v2337, 0
      %v2387 = vsel %vm172, %v2338, 0
      %v2390 = vand.u32 %v2340, %v443
      %2392 = vmatprep.subr.bf16.mxu0 0
      %2393 = vmatpush1.bf16.msra.mxu0 0
      %2394 = vmatprep.subr.bf16.mxu0 0
      %2395 = vmatpush1.bf16.msra.mxu0 0
      %2396 = vmatprep.subr.bf16.mxu0 0
      %2397 = vmatpush1.bf16.msra.mxu0 0
      %2398 = vmatprep.subr.bf16.mxu0 0
      %2399 = vmatpush1.bf16.msra.mxu0 0
      %2400 = vmatprep.subr.bf16.mxu0 0
      %2401 = vmatpush1.bf16.msra.mxu0 0
      %2402 = vmatprep.subr.bf16.mxu0 0
      %2403 = vmatpush1.bf16.msra.mxu0 0
      %2404 = vmatprep.subr.bf16.mxu0 0
      %2405 = vmatpush1.bf16.msra.mxu0 0
      %2406 = vmatprep.subr.bf16.mxu0 0
      %2407 = vmatpush1.bf16.msra.mxu0 %v2390
      %2408 = vmatprep.subr.bf16.mxu0 0
      %2409 = vmatpush2.bf16.msra.mxu0 0
      %2410 = vmatprep.subr.bf16.mxu0 0
      %2411 = vmatpush2.bf16.msra.mxu0 0
      %2412 = vmatprep.subr.bf16.mxu0 0
      %2413 = vmatpush2.bf16.msra.mxu0 0
      %2414 = vmatprep.subr.bf16.mxu0 0
      %2415 = vmatpush2.bf16.msra.mxu0 0
      %2416 = vmatprep.subr.bf16.mxu0 0
      %2417 = vmatpush2.bf16.msra.mxu0 0
      %2418 = vmatprep.subr.bf16.mxu0 0
      %2419 = vmatpush2.bf16.msra.mxu0 0
      %2420 = vmatprep.subr.bf16.mxu0 0
      %2421 = vmatpush2.bf16.msra.mxu0 0
      %2422 = vmatprep.subr.bf16.mxu0 0
      %2423 = vmatpush2.bf16.msra.mxu0 0
      %2424 = vmatprep.mubr.bf16.mxu0 0
      %2425 = vmatmul.mubr.bf16.gmra.mxu0 %v2342
      %v2426 = vpop.f32.mrf.mxu0
      %v2427 = vadd.f32 0.0, %v2426
      %v2428 = vpop.f32.mrf.mxu0
      %v2429 = vpop.f32.mrf.mxu0
      %v2430 = vadd.f32 0.0, %v2429
      %v2431 = vpop.f32.mrf.mxu0
      %2432 = vmatprep.mubr.bf16.mxu0 0
      %2433 = vmatmul.mubr.bf16.gmra.mxu0 %v2345
      %v2434 = vpop.f32.mrf.mxu0
      %v2435 = vadd.f32 0.0, %v2434
      %v2436 = vpop.f32.mrf.mxu0
      %v2437 = vpop.f32.mrf.mxu0
      %v2438 = vadd.f32 0.0, %v2437
      %v2439 = vpop.f32.mrf.mxu0
      %2440 = vmatprep.mubr.bf16.mxu0 0
      %2441 = vmatmul.mubr.bf16.gmra.mxu0 %v2348
      %v2442 = vpop.f32.mrf.mxu0
      %v2443 = vadd.f32 0.0, %v2442
      %v2444 = vpop.f32.mrf.mxu0
      %v2445 = vpop.f32.mrf.mxu0
      %v2446 = vadd.f32 0.0, %v2445
      %v2447 = vpop.f32.mrf.mxu0
      %2448 = vmatprep.mubr.bf16.mxu0 0
      %2449 = vmatmul.mubr.bf16.gmra.mxu0 %v2351
      %v2450 = vpop.f32.mrf.mxu0
      %v2451 = vadd.f32 0.0, %v2450
      %v2452 = vpop.f32.mrf.mxu0
      %v2453 = vpop.f32.mrf.mxu0
      %v2454 = vadd.f32 0.0, %v2453
      %v2455 = vpop.f32.mrf.mxu0
      %2456 = vmatprep.mubr.bf16.mxu0 0
      %2457 = vmatmul.mubr.bf16.gmra.mxu0 %v2354
      %v2458 = vpop.f32.mrf.mxu0
      %v2459 = vadd.f32 0.0, %v2458
      %v2460 = vpop.f32.mrf.mxu0
      %v2461 = vpop.f32.mrf.mxu0
      %v2462 = vadd.f32 0.0, %v2461
      %v2463 = vpop.f32.mrf.mxu0
      %2464 = vmatprep.mubr.bf16.mxu0 0
      %2465 = vmatmul.mubr.bf16.gmra.mxu0 %v2357
      %v2466 = vpop.f32.mrf.mxu0
      %v2467 = vadd.f32 0.0, %v2466
      %v2468 = vpop.f32.mrf.mxu0
      %v2469 = vpop.f32.mrf.mxu0
      %v2470 = vadd.f32 0.0, %v2469
      %v2471 = vpop.f32.mrf.mxu0
      %2472 = vmatprep.mubr.bf16.mxu0 0
      %2473 = vmatmul.mubr.bf16.gmra.mxu0 %v2360
      %v2474 = vpop.f32.mrf.mxu0
      %v2475 = vadd.f32 0.0, %v2474
      %v2476 = vpop.f32.mrf.mxu0
      %v2477 = vpop.f32.mrf.mxu0
      %v2478 = vadd.f32 0.0, %v2477
      %v2479 = vpop.f32.mrf.mxu0
      %2480 = vmatprep.mubr.bf16.mxu0 0
      %2481 = vmatmul.mubr.bf16.gmra.mxu0 %v2363
      %v2482 = vpop.f32.mrf.mxu0
      %v2483 = vadd.f32 0.0, %v2482
      %v2484 = vpop.f32.mrf.mxu0
      %v2485 = vpop.f32.mrf.mxu0
      %v2486 = vadd.f32 0.0, %v2485
      %v2487 = vpop.f32.mrf.mxu0
      %2488 = vmatprep.mubr.bf16.mxu0 0
      %2489 = vmatmul.mubr.bf16.gmra.mxu0 %v2366
      %v2490 = vpop.f32.mrf.mxu0
      %v2491 = vadd.f32 0.0, %v2490
      %v2492 = vpop.f32.mrf.mxu0
      %v2493 = vpop.f32.mrf.mxu0
      %v2494 = vadd.f32 0.0, %v2493
      %v2495 = vpop.f32.mrf.mxu0
      %2496 = vmatprep.mubr.bf16.mxu0 0
      %2497 = vmatmul.mubr.bf16.gmra.mxu0 %v2369
      %v2498 = vpop.f32.mrf.mxu0
      %v2499 = vadd.f32 0.0, %v2498
      %v2500 = vpop.f32.mrf.mxu0
      %v2501 = vpop.f32.mrf.mxu0
      %v2502 = vadd.f32 0.0, %v2501
      %v2503 = vpop.f32.mrf.mxu0
      %2504 = vmatprep.mubr.bf16.mxu0 0
      %2505 = vmatmul.mubr.bf16.gmra.mxu0 %v2372
      %v2506 = vpop.f32.mrf.mxu0
      %v2507 = vadd.f32 0.0, %v2506
      %v2508 = vpop.f32.mrf.mxu0
      %v2509 = vpop.f32.mrf.mxu0
      %v2510 = vadd.f32 0.0, %v2509
      %v2511 = vpop.f32.mrf.mxu0
      %2512 = vmatprep.mubr.bf16.mxu0 0
      %2513 = vmatmul.mubr.bf16.gmra.mxu0 %v2375
      %v2514 = vpop.f32.mrf.mxu0
      %v2515 = vadd.f32 0.0, %v2514
      %v2516 = vpop.f32.mrf.mxu0
      %v2517 = vpop.f32.mrf.mxu0
      %v2518 = vadd.f32 0.0, %v2517
      %v2519 = vpop.f32.mrf.mxu0
      %2520 = vmatprep.mubr.bf16.mxu0 0
      %2521 = vmatmul.mubr.bf16.gmra.mxu0 %v2378
      %v2522 = vpop.f32.mrf.mxu0
      %v2523 = vadd.f32 0.0, %v2522
      %v2524 = vpop.f32.mrf.mxu0
      %v2525 = vpop.f32.mrf.mxu0
      %v2526 = vadd.f32 0.0, %v2525
      %v2527 = vpop.f32.mrf.mxu0
      %2528 = vmatprep.mubr.bf16.mxu0 0
      %2529 = vmatmul.mubr.bf16.gmra.mxu0 %v2381
      %v2530 = vpop.f32.mrf.mxu0
      %v2531 = vadd.f32 0.0, %v2530
      %v2532 = vpop.f32.mrf.mxu0
      %v2533 = vpop.f32.mrf.mxu0
      %v2534 = vadd.f32 0.0, %v2533
      %v2535 = vpop.f32.mrf.mxu0
      %2536 = vmatprep.mubr.bf16.mxu0 0
      %2537 = vmatmul.mubr.bf16.gmra.mxu0 %v2384
      %v2538 = vpop.f32.mrf.mxu0
      %v2539 = vadd.f32 0.0, %v2538
      %v2540 = vpop.f32.mrf.mxu0
      %v2541 = vpop.f32.mrf.mxu0
      %v2542 = vadd.f32 0.0, %v2541
      %v2543 = vpop.f32.mrf.mxu0
      %2544 = vmatprep.mubr.bf16.mxu0 0
      %2545 = vmatmul.mubr.bf16.gmra.mxu0 %v2387
      %v2546 = vpop.f32.mrf.mxu0
      %v2547 = vadd.f32 0.0, %v2546
      %v2548 = vpop.f32.mrf.mxu0
      %v2549 = vpop.f32.mrf.mxu0
      %v2550 = vadd.f32 0.0, %v2549
      %v2551 = vpop.f32.mrf.mxu0
      %2552 = vdwg.mxu0
      %v2553 = vadd.f32 %v2259, %v2427
      %v2554 = vadd.f32 %v2260, %v2430
      %v2555 = vadd.f32 %v2261, %v2435
      %v2556 = vadd.f32 %v2262, %v2438
      %v2557 = vadd.f32 %v2263, %v2443
      %v2558 = vadd.f32 %v2264, %v2446
      %v2559 = vadd.f32 %v2265, %v2451
      %v2560 = vadd.f32 %v2266, %v2454
      %v2561 = vadd.f32 %v2267, %v2459
      %v2562 = vadd.f32 %v2268, %v2462
      %v2563 = vadd.f32 %v2269, %v2467
      %v2564 = vadd.f32 %v2270, %v2470
      %v2565 = vadd.f32 %v2271, %v2475
      %v2566 = vadd.f32 %v2272, %v2478
      %v2567 = vadd.f32 %v2273, %v2483
      %v2568 = vadd.f32 %v2274, %v2486
      %v2569 = vadd.f32 %v2275, %v2491
      %v2570 = vadd.f32 %v2276, %v2494
      %v2571 = vadd.f32 %v2277, %v2499
      %v2572 = vadd.f32 %v2278, %v2502
      %v2573 = vadd.f32 %v2279, %v2507
      %v2574 = vadd.f32 %v2280, %v2510
      %v2575 = vadd.f32 %v2281, %v2515
      %v2576 = vadd.f32 %v2282, %v2518
      %v2577 = vadd.f32 %v2283, %v2523
      %v2578 = vadd.f32 %v2284, %v2526
      %v2579 = vadd.f32 %v2285, %v2531
      %v2580 = vadd.f32 %v2286, %v2534
      %v2581 = vadd.f32 %v2287, %v2539
      %v2582 = vadd.f32 %v2288, %v2542
      %v2583 = vadd.f32 %v2289, %v2547
      %v2584 = vadd.f32 %v2290, %v2550
      %v2585 = vld [vmem:[%s1996 + $0x2] sm:$0xff]
      %v2586 = vld [vmem:[%s1996 + $0xa] sm:$0xff]
      %v2587 = vld [vmem:[%s1996 + $0x1a] sm:$0xff]
      %v2588 = vld [vmem:[%s1996 + $0x22] sm:$0xff]
      %v2589 = vld [vmem:[%s1996 + $0x32] sm:$0xff]
      %v2590 = vld [vmem:[%s1996 + $0x3a] sm:$0xff]
      %v2591 = vld [vmem:[%s1996 + $0x4a] sm:$0xff]
      %v2592 = vld [vmem:[%s1996 + $0x52] sm:$0xff]
      %v2593 = vld [vmem:[%s1996 + $0x62] sm:$0xff]
      %v2594 = vld [vmem:[%s1996 + $0x6a] sm:$0xff]
      %v2595 = vld [vmem:[%s1996 + $0x7a] sm:$0xff]
      %v2596 = vld [vmem:[%s1996 + $0x82] sm:$0xff]
      %v2597 = vld [vmem:[%s1996 + $0x92] sm:$0xff]
      %v2598 = vld [vmem:[%s1996 + $0x9a] sm:$0xff]
      %v2599 = vld [vmem:[%s1996 + $0xaa] sm:$0xff]
      %v2600 = vld [vmem:[%s1996 + $0xb2] sm:$0xff]
      %v2601 = vld [vmem:[%s1996 + $0xc2] sm:$0xff]
      %v2602 = vld [vmem:[%s1996 + $0xca] sm:$0xff]
      %v2603 = vld [vmem:[%s1996 + $0xda] sm:$0xff]
      %v2604 = vld [vmem:[%s1996 + $0xe2] sm:$0xff]
      %v2605 = vld [vmem:[%s1996 + $0xf2] sm:$0xff]
      %v2606 = vld [vmem:[%s1996 + $0xfa] sm:$0xff]
      %v2607 = vld [vmem:[%s1996 + $0x10a] sm:$0xff]
      %v2608 = vld [vmem:[%s1996 + $0x112] sm:$0xff]
      %v2609 = vld [vmem:[%s1996 + $0x122] sm:$0xff]
      %v2610 = vld [vmem:[%s1996 + $0x12a] sm:$0xff]
      %v2611 = vld [vmem:[%s1996 + $0x13a] sm:$0xff]
      %v2612 = vld [vmem:[%s1996 + $0x142] sm:$0xff]
      %v2613 = vld [vmem:[%s1996 + $0x152] sm:$0xff]
      %v2614 = vld [vmem:[%s1996 + $0x15a] sm:$0xff]
      %v2615 = vld [vmem:[%s1996 + $0x16a] sm:$0xff]
      %v2616 = vld [vmem:[%s1996 + $0x172] sm:$0xff]
      %v2617 = vpack.c.bf16 %v2586, %v2585
      %v2618 = vpack.c.bf16 %v2588, %v2587
      %v2619 = vpack.c.bf16 %v2590, %v2589
      %v2620 = vpack.c.bf16 %v2592, %v2591
      %v2621 = vpack.c.bf16 %v2594, %v2593
      %v2622 = vpack.c.bf16 %v2596, %v2595
      %v2623 = vpack.c.bf16 %v2598, %v2597
      %v2624 = vpack.c.bf16 %v2600, %v2599
      %v2625 = vpack.c.bf16 %v2602, %v2601
      %v2626 = vpack.c.bf16 %v2604, %v2603
      %v2627 = vpack.c.bf16 %v2606, %v2605
      %v2628 = vpack.c.bf16 %v2608, %v2607
      %v2629 = vpack.c.bf16 %v2610, %v2609
      %v2630 = vpack.c.bf16 %v2612, %v2611
      %v2631 = vpack.c.bf16 %v2614, %v2613
      %v2632 = vpack.c.bf16 %v2616, %v2615
      %s2633 = scalar_lea.vmem %s1, 16
      %v2634 = vld [vmem:[%s2633] sm:$0x3]
      %v2636 = vsel %vm172, %v2617, 0
      %v2639 = vsel %vm172, %v2618, 0
      %v2642 = vsel %vm172, %v2619, 0
      %v2645 = vsel %vm172, %v2620, 0
      %v2648 = vsel %vm172, %v2621, 0
      %v2651 = vsel %vm172, %v2622, 0
      %v2654 = vsel %vm172, %v2623, 0
      %v2657 = vsel %vm172, %v2624, 0
      %v2660 = vsel %vm172, %v2625, 0
      %v2663 = vsel %vm172, %v2626, 0
      %v2666 = vsel %vm172, %v2627, 0
      %v2669 = vsel %vm172, %v2628, 0
      %v2672 = vsel %vm172, %v2629, 0
      %v2675 = vsel %vm172, %v2630, 0
      %v2678 = vsel %vm172, %v2631, 0
      %v2681 = vsel %vm172, %v2632, 0
      %v2684 = vand.u32 %v2634, %v443
      %2686 = vmatprep.subr.bf16.mxu0 0
      %2687 = vmatpush1.bf16.msra.mxu0 0
      %2688 = vmatprep.subr.bf16.mxu0 0
      %2689 = vmatpush1.bf16.msra.mxu0 0
      %2690 = vmatprep.subr.bf16.mxu0 0
      %2691 = vmatpush1.bf16.msra.mxu0 0
      %2692 = vmatprep.subr.bf16.mxu0 0
      %2693 = vmatpush1.bf16.msra.mxu0 0
      %2694 = vmatprep.subr.bf16.mxu0 0
      %2695 = vmatpush1.bf16.msra.mxu0 0
      %2696 = vmatprep.subr.bf16.mxu0 0
      %2697 = vmatpush1.bf16.msra.mxu0 0
      %2698 = vmatprep.subr.bf16.mxu0 0
      %2699 = vmatpush1.bf16.msra.mxu0 0
      %2700 = vmatprep.subr.bf16.mxu0 0
      %2701 = vmatpush1.bf16.msra.mxu0 %v2684
      %2702 = vmatprep.subr.bf16.mxu0 0
      %2703 = vmatpush2.bf16.msra.mxu0 0
      %2704 = vmatprep.subr.bf16.mxu0 0
      %2705 = vmatpush2.bf16.msra.mxu0 0
      %2706 = vmatprep.subr.bf16.mxu0 0
      %2707 = vmatpush2.bf16.msra.mxu0 0
      %2708 = vmatprep.subr.bf16.mxu0 0
      %2709 = vmatpush2.bf16.msra.mxu0 0
      %2710 = vmatprep.subr.bf16.mxu0 0
      %2711 = vmatpush2.bf16.msra.mxu0 0
      %2712 = vmatprep.subr.bf16.mxu0 0
      %2713 = vmatpush2.bf16.msra.mxu0 0
      %2714 = vmatprep.subr.bf16.mxu0 0
      %2715 = vmatpush2.bf16.msra.mxu0 0
      %2716 = vmatprep.subr.bf16.mxu0 0
      %2717 = vmatpush2.bf16.msra.mxu0 0
      %2718 = vmatprep.mubr.bf16.mxu0 0
      %2719 = vmatmul.mubr.bf16.gmra.mxu0 %v2636
      %v2720 = vpop.f32.mrf.mxu0
      %v2721 = vadd.f32 0.0, %v2720
      %v2722 = vpop.f32.mrf.mxu0
      %v2723 = vpop.f32.mrf.mxu0
      %v2724 = vadd.f32 0.0, %v2723
      %v2725 = vpop.f32.mrf.mxu0
      %2726 = vmatprep.mubr.bf16.mxu0 0
      %2727 = vmatmul.mubr.bf16.gmra.mxu0 %v2639
      %v2728 = vpop.f32.mrf.mxu0
      %v2729 = vadd.f32 0.0, %v2728
      %v2730 = vpop.f32.mrf.mxu0
      %v2731 = vpop.f32.mrf.mxu0
      %v2732 = vadd.f32 0.0, %v2731
      %v2733 = vpop.f32.mrf.mxu0
      %2734 = vmatprep.mubr.bf16.mxu0 0
      %2735 = vmatmul.mubr.bf16.gmra.mxu0 %v2642
      %v2736 = vpop.f32.mrf.mxu0
      %v2737 = vadd.f32 0.0, %v2736
      %v2738 = vpop.f32.mrf.mxu0
      %v2739 = vpop.f32.mrf.mxu0
      %v2740 = vadd.f32 0.0, %v2739
      %v2741 = vpop.f32.mrf.mxu0
      %2742 = vmatprep.mubr.bf16.mxu0 0
      %2743 = vmatmul.mubr.bf16.gmra.mxu0 %v2645
      %v2744 = vpop.f32.mrf.mxu0
      %v2745 = vadd.f32 0.0, %v2744
      %v2746 = vpop.f32.mrf.mxu0
      %v2747 = vpop.f32.mrf.mxu0
      %v2748 = vadd.f32 0.0, %v2747
      %v2749 = vpop.f32.mrf.mxu0
      %2750 = vmatprep.mubr.bf16.mxu0 0
      %2751 = vmatmul.mubr.bf16.gmra.mxu0 %v2648
      %v2752 = vpop.f32.mrf.mxu0
      %v2753 = vadd.f32 0.0, %v2752
      %v2754 = vpop.f32.mrf.mxu0
      %v2755 = vpop.f32.mrf.mxu0
      %v2756 = vadd.f32 0.0, %v2755
      %v2757 = vpop.f32.mrf.mxu0
      %2758 = vmatprep.mubr.bf16.mxu0 0
      %2759 = vmatmul.mubr.bf16.gmra.mxu0 %v2651
      %v2760 = vpop.f32.mrf.mxu0
      %v2761 = vadd.f32 0.0, %v2760
      %v2762 = vpop.f32.mrf.mxu0
      %v2763 = vpop.f32.mrf.mxu0
      %v2764 = vadd.f32 0.0, %v2763
      %v2765 = vpop.f32.mrf.mxu0
      %2766 = vmatprep.mubr.bf16.mxu0 0
      %2767 = vmatmul.mubr.bf16.gmra.mxu0 %v2654
      %v2768 = vpop.f32.mrf.mxu0
      %v2769 = vadd.f32 0.0, %v2768
      %v2770 = vpop.f32.mrf.mxu0
      %v2771 = vpop.f32.mrf.mxu0
      %v2772 = vadd.f32 0.0, %v2771
      %v2773 = vpop.f32.mrf.mxu0
      %2774 = vmatprep.mubr.bf16.mxu0 0
      %2775 = vmatmul.mubr.bf16.gmra.mxu0 %v2657
      %v2776 = vpop.f32.mrf.mxu0
      %v2777 = vadd.f32 0.0, %v2776
      %v2778 = vpop.f32.mrf.mxu0
      %v2779 = vpop.f32.mrf.mxu0
      %v2780 = vadd.f32 0.0, %v2779
      %v2781 = vpop.f32.mrf.mxu0
      %2782 = vmatprep.mubr.bf16.mxu0 0
      %2783 = vmatmul.mubr.bf16.gmra.mxu0 %v2660
      %v2784 = vpop.f32.mrf.mxu0
      %v2785 = vadd.f32 0.0, %v2784
      %v2786 = vpop.f32.mrf.mxu0
      %v2787 = vpop.f32.mrf.mxu0
      %v2788 = vadd.f32 0.0, %v2787
      %v2789 = vpop.f32.mrf.mxu0
      %2790 = vmatprep.mubr.bf16.mxu0 0
      %2791 = vmatmul.mubr.bf16.gmra.mxu0 %v2663
      %v2792 = vpop.f32.mrf.mxu0
      %v2793 = vadd.f32 0.0, %v2792
      %v2794 = vpop.f32.mrf.mxu0
      %v2795 = vpop.f32.mrf.mxu0
      %v2796 = vadd.f32 0.0, %v2795
      %v2797 = vpop.f32.mrf.mxu0
      %2798 = vmatprep.mubr.bf16.mxu0 0
      %2799 = vmatmul.mubr.bf16.gmra.mxu0 %v2666
      %v2800 = vpop.f32.mrf.mxu0
      %v2801 = vadd.f32 0.0, %v2800
      %v2802 = vpop.f32.mrf.mxu0
      %v2803 = vpop.f32.mrf.mxu0
      %v2804 = vadd.f32 0.0, %v2803
      %v2805 = vpop.f32.mrf.mxu0
      %2806 = vmatprep.mubr.bf16.mxu0 0
      %2807 = vmatmul.mubr.bf16.gmra.mxu0 %v2669
      %v2808 = vpop.f32.mrf.mxu0
      %v2809 = vadd.f32 0.0, %v2808
      %v2810 = vpop.f32.mrf.mxu0
      %v2811 = vpop.f32.mrf.mxu0
      %v2812 = vadd.f32 0.0, %v2811
      %v2813 = vpop.f32.mrf.mxu0
      %2814 = vmatprep.mubr.bf16.mxu0 0
      %2815 = vmatmul.mubr.bf16.gmra.mxu0 %v2672
      %v2816 = vpop.f32.mrf.mxu0
      %v2817 = vadd.f32 0.0, %v2816
      %v2818 = vpop.f32.mrf.mxu0
      %v2819 = vpop.f32.mrf.mxu0
      %v2820 = vadd.f32 0.0, %v2819
      %v2821 = vpop.f32.mrf.mxu0
      %2822 = vmatprep.mubr.bf16.mxu0 0
      %2823 = vmatmul.mubr.bf16.gmra.mxu0 %v2675
      %v2824 = vpop.f32.mrf.mxu0
      %v2825 = vadd.f32 0.0, %v2824
      %v2826 = vpop.f32.mrf.mxu0
      %v2827 = vpop.f32.mrf.mxu0
      %v2828 = vadd.f32 0.0, %v2827
      %v2829 = vpop.f32.mrf.mxu0
      %2830 = vmatprep.mubr.bf16.mxu0 0
      %2831 = vmatmul.mubr.bf16.gmra.mxu0 %v2678
      %v2832 = vpop.f32.mrf.mxu0
      %v2833 = vadd.f32 0.0, %v2832
      %v2834 = vpop.f32.mrf.mxu0
      %v2835 = vpop.f32.mrf.mxu0
      %v2836 = vadd.f32 0.0, %v2835
      %v2837 = vpop.f32.mrf.mxu0
      %2838 = vmatprep.mubr.bf16.mxu0 0
      %2839 = vmatmul.mubr.bf16.gmra.mxu0 %v2681
      %v2840 = vpop.f32.mrf.mxu0
      %v2841 = vadd.f32 0.0, %v2840
      %v2842 = vpop.f32.mrf.mxu0
      %v2843 = vpop.f32.mrf.mxu0
      %v2844 = vadd.f32 0.0, %v2843
      %v2845 = vpop.f32.mrf.mxu0
      %2846 = vdwg.mxu0
      %v2847 = vadd.f32 %v2553, %v2721
      %v2848 = vadd.f32 %v2554, %v2724
      %v2849 = vadd.f32 %v2555, %v2729
      %v2850 = vadd.f32 %v2556, %v2732
      %v2851 = vadd.f32 %v2557, %v2737
      %v2852 = vadd.f32 %v2558, %v2740
      %v2853 = vadd.f32 %v2559, %v2745
      %v2854 = vadd.f32 %v2560, %v2748
      %v2855 = vadd.f32 %v2561, %v2753
      %v2856 = vadd.f32 %v2562, %v2756
      %v2857 = vadd.f32 %v2563, %v2761
      %v2858 = vadd.f32 %v2564, %v2764
      %v2859 = vadd.f32 %v2565, %v2769
      %v2860 = vadd.f32 %v2566, %v2772
      %v2861 = vadd.f32 %v2567, %v2777
      %v2862 = vadd.f32 %v2568, %v2780
      %v2863 = vadd.f32 %v2569, %v2785
      %v2864 = vadd.f32 %v2570, %v2788
      %v2865 = vadd.f32 %v2571, %v2793
      %v2866 = vadd.f32 %v2572, %v2796
      %v2867 = vadd.f32 %v2573, %v2801
      %v2868 = vadd.f32 %v2574, %v2804
      %v2869 = vadd.f32 %v2575, %v2809
      %v2870 = vadd.f32 %v2576, %v2812
      %v2871 = vadd.f32 %v2577, %v2817
      %v2872 = vadd.f32 %v2578, %v2820
      %v2873 = vadd.f32 %v2579, %v2825
      %v2874 = vadd.f32 %v2580, %v2828
      %v2875 = vadd.f32 %v2581, %v2833
      %v2876 = vadd.f32 %v2582, %v2836
      %v2877 = vadd.f32 %v2583, %v2841
      %v2878 = vadd.f32 %v2584, %v2844
      %v2879 = vld [vmem:[%s2] sm:$0x1]
      %v2881 = vlaneseq
      %v2882 = vshrl.u32 %v2881, 7
      %v2883 = vsub.s32 0, %v2882
      %v2884 = vrot.slane %v2879, %v2883
      %v2886 = vadd.f32 %v2847, %v2884
      %v2887 = vadd.f32 %v2848, %v2884
      %v2888 = vadd.f32 %v2849, %v2884
      %v2889 = vadd.f32 %v2850, %v2884
      %v2890 = vadd.f32 %v2851, %v2884
      %v2891 = vadd.f32 %v2852, %v2884
      %v2892 = vadd.f32 %v2853, %v2884
      %v2893 = vadd.f32 %v2854, %v2884
      %v2894 = vadd.f32 %v2855, %v2884
      %v2895 = vadd.f32 %v2856, %v2884
      %v2896 = vadd.f32 %v2857, %v2884
      %v2897 = vadd.f32 %v2858, %v2884
      %v2898 = vadd.f32 %v2859, %v2884
      %v2899 = vadd.f32 %v2860, %v2884
      %v2900 = vadd.f32 %v2861, %v2884
      %v2901 = vadd.f32 %v2862, %v2884
      %v2902 = vadd.f32 %v2863, %v2884
      %v2903 = vadd.f32 %v2864, %v2884
      %v2904 = vadd.f32 %v2865, %v2884
      %v2905 = vadd.f32 %v2866, %v2884
      %v2906 = vadd.f32 %v2867, %v2884
      %v2907 = vadd.f32 %v2868, %v2884
      %v2908 = vadd.f32 %v2869, %v2884
      %v2909 = vadd.f32 %v2870, %v2884
      %v2910 = vadd.f32 %v2871, %v2884
      %v2911 = vadd.f32 %v2872, %v2884
      %v2912 = vadd.f32 %v2873, %v2884
      %v2913 = vadd.f32 %v2874, %v2884
      %v2914 = vadd.f32 %v2875, %v2884
      %v2915 = vadd.f32 %v2876, %v2884
      %v2916 = vadd.f32 %v2877, %v2884
      %v2917 = vadd.f32 %v2878, %v2884
      %v2918 = vmax.f32 %v2886, 0.0
      %v2919 = vmax.f32 %v2887, 0.0
      %v2920 = vmax.f32 %v2888, 0.0
      %v2921 = vmax.f32 %v2889, 0.0
      %v2922 = vmax.f32 %v2890, 0.0
      %v2923 = vmax.f32 %v2891, 0.0
      %v2924 = vmax.f32 %v2892, 0.0
      %v2925 = vmax.f32 %v2893, 0.0
      %v2926 = vmax.f32 %v2894, 0.0
      %v2927 = vmax.f32 %v2895, 0.0
      %v2928 = vmax.f32 %v2896, 0.0
      %v2929 = vmax.f32 %v2897, 0.0
      %v2930 = vmax.f32 %v2898, 0.0
      %v2931 = vmax.f32 %v2899, 0.0
      %v2932 = vmax.f32 %v2900, 0.0
      %v2933 = vmax.f32 %v2901, 0.0
      %v2934 = vmax.f32 %v2902, 0.0
      %v2935 = vmax.f32 %v2903, 0.0
      %v2936 = vmax.f32 %v2904, 0.0
      %v2937 = vmax.f32 %v2905, 0.0
      %v2938 = vmax.f32 %v2906, 0.0
      %v2939 = vmax.f32 %v2907, 0.0
      %v2940 = vmax.f32 %v2908, 0.0
      %v2941 = vmax.f32 %v2909, 0.0
      %v2942 = vmax.f32 %v2910, 0.0
      %v2943 = vmax.f32 %v2911, 0.0
      %v2944 = vmax.f32 %v2912, 0.0
      %v2945 = vmax.f32 %v2913, 0.0
      %v2946 = vmax.f32 %v2914, 0.0
      %v2947 = vmax.f32 %v2915, 0.0
      %v2948 = vmax.f32 %v2916, 0.0
      %v2949 = vmax.f32 %v2917, 0.0
      %v2950 = vmax.f32 %v2918, %v2920
      %v2951 = vmax.f32 %v2919, %v2921
      %v2953 = vrot.slane %v2950, 1
      %v2955 = vmax.f32 %v2950, %v2953
      %v2956 = vpack.c.bf16 %v2955, %v2955
      %vm2957 = vcmask 1040384
      %vm2958 = vsmask.f32 256
      %vm2959 = vmand %vm2957, %vm2958
      %v2960 = vld [vmem:[%s170] sm:$0x1]
      %v2961 = vsel %vm2959, %v2956, %v2960
      %2962 = vst [vmem:[%s170] sm:$0x1] %v2961
      %v2964 = vunpack.c.l.b16 %v2956
      %v2965 = vpack.c.b16 %v2964, %v2964
      %v2967 = vshll.u32 %v2965, 16
      %v2969 = vrot.slane %v2967, 5
      %v2970 = vrot.slane %v2969, 4
      %vm2972 = vsmask.f32 7938
      %vm2973 = vmand %vm2957, %vm2972
      %v2974 = vld [vmem:[%s170] sm:$0x1]
      %v2975 = vsel %vm2973, %v2970, %v2974
      %2976 = vst [vmem:[%s170] sm:$0x1] %v2975
      %v2977 = vrot.slane %v2965, 5
      %v2978 = vrot.slane %v2977, 4
      %vm2980 = vcmask 1041409
      %vm2981 = vsmask.f32 1280
      %vm2982 = vmand %vm2980, %vm2981
      %v2983 = vld [vmem:[%s170] sm:$0x2]
      %v2984 = vsel %vm2982, %v2978, %v2983
      %2985 = vst [vmem:[%s170] sm:$0x2] %v2984
      %v2986 = vrot.slane %v2967, 6
      %v2987 = vrot.slane %v2986, 4
      %vm2989 = vsmask.f32 7942
      %vm2990 = vmand %vm2980, %vm2989
      %v2991 = vld [vmem:[%s170] sm:$0x2]
      %v2992 = vsel %vm2990, %v2987, %v2991
      %2993 = vst [vmem:[%s170] sm:$0x2] %v2992
      %v2995 = vrot.slane %v2951, 1
      %v2997 = vmax.f32 %v2951, %v2995
      %v2998 = vpack.c.bf16 %v2997, %v2997
      %v3000 = vunpack.c.l.b16 %v2998
      %v3001 = vpack.c.b16 %v3000, %v3000
      %v3002 = vrot.slane %v3001, 6
      %vm3004 = vcmask 1042434
      %vm3005 = vsmask.f32 2304
      %vm3006 = vmand %vm3004, %vm3005
      %v3007 = vld [vmem:[%s170] sm:$0x4]
      %v3008 = vsel %vm3006, %v3002, %v3007
      %3009 = vst [vmem:[%s170] sm:$0x4] %v3008
      %v3011 = vshll.u32 %v3001, 16
      %v3013 = vrot.slane %v3011, 7
      %vm3015 = vsmask.f32 7946
      %vm3016 = vmand %vm3004, %vm3015
      %v3017 = vld [vmem:[%s170] sm:$0x4]
      %v3018 = vsel %vm3016, %v3013, %v3017
      %3019 = vst [vmem:[%s170] sm:$0x4] %v3018
      %v3020 = vrot.slane %v3001, 7
      %vm3022 = vcmask 1043459
      %vm3023 = vsmask.f32 3328
      %vm3024 = vmand %vm3022, %vm3023
      %v3025 = vld [vmem:[%s170] sm:$0x8]
      %v3026 = vsel %vm3024, %v3020, %v3025
      %3027 = vst [vmem:[%s170] sm:$0x8] %v3026
      %vm3029 = vsmask.f32 7950
      %vm3030 = vmand %vm3022, %vm3029
      %v3031 = vld [vmem:[%s170] sm:$0x8]
      %v3032 = vsel %vm3030, %v3011, %v3031
      %3033 = vst [vmem:[%s170] sm:$0x8] %v3032
      %v3034 = vmax.f32 %v2922, %v2924
      %v3035 = vmax.f32 %v2923, %v2925
      %v3037 = vrot.slane %v3034, 1
      %v3039 = vmax.f32 %v3034, %v3037
      %v3040 = vpack.c.bf16 %v3039, %v3039
      %s3041 = scalar_lea.vmem %s170, 4
      %v3042 = vld [vmem:[%s3041] sm:$0x1]
      %v3043 = vsel %vm2959, %v3040, %v3042
      %3044 = vst [vmem:[%s3041] sm:$0x1] %v3043
      %v3046 = vunpack.c.l.b16 %v3040
      %v3047 = vpack.c.b16 %v3046, %v3046
      %v3049 = vshll.u32 %v3047, 16
      %v3051 = vrot.slane %v3049, 5
      %v3052 = vrot.slane %v3051, 4
      %v3054 = vld [vmem:[%s3041] sm:$0x1]
      %v3055 = vsel %vm2973, %v3052, %v3054
      %3056 = vst [vmem:[%s3041] sm:$0x1] %v3055
      %v3057 = vrot.slane %v3047, 5
      %v3058 = vrot.slane %v3057, 4
      %v3060 = vld [vmem:[%s3041] sm:$0x2]
      %v3061 = vsel %vm2982, %v3058, %v3060
      %3062 = vst [vmem:[%s3041] sm:$0x2] %v3061
      %v3063 = vrot.slane %v3049, 6
      %v3064 = vrot.slane %v3063, 4
      %v3066 = vld [vmem:[%s3041] sm:$0x2]
      %v3067 = vsel %vm2990, %v3064, %v3066
      %3068 = vst [vmem:[%s3041] sm:$0x2] %v3067
      %v3070 = vrot.slane %v3035, 1
      %v3072 = vmax.f32 %v3035, %v3070
      %v3073 = vpack.c.bf16 %v3072, %v3072
      %v3075 = vunpack.c.l.b16 %v3073
      %v3076 = vpack.c.b16 %v3075, %v3075
      %v3077 = vrot.slane %v3076, 6
      %v3079 = vld [vmem:[%s3041] sm:$0x4]
      %v3080 = vsel %vm3006, %v3077, %v3079
      %3081 = vst [vmem:[%s3041] sm:$0x4] %v3080
      %v3083 = vshll.u32 %v3076, 16
      %v3085 = vrot.slane %v3083, 7
      %v3087 = vld [vmem:[%s3041] sm:$0x4]
      %v3088 = vsel %vm3016, %v3085, %v3087
      %3089 = vst [vmem:[%s3041] sm:$0x4] %v3088
      %v3090 = vrot.slane %v3076, 7
      %v3092 = vld [vmem:[%s3041] sm:$0x8]
      %v3093 = vsel %vm3024, %v3090, %v3092
      %3094 = vst [vmem:[%s3041] sm:$0x8] %v3093
      %v3096 = vld [vmem:[%s3041] sm:$0x8]
      %v3097 = vsel %vm3030, %v3083, %v3096
      %3098 = vst [vmem:[%s3041] sm:$0x8] %v3097
      %v3099 = vmax.f32 %v2926, %v2928
      %v3100 = vmax.f32 %v2927, %v2929
      %v3102 = vrot.slane %v3099, 1
      %v3104 = vmax.f32 %v3099, %v3102
      %v3105 = vpack.c.bf16 %v3104, %v3104
      %s3106 = scalar_lea.vmem %s170, 8
      %v3107 = vld [vmem:[%s3106] sm:$0x1]
      %v3108 = vsel %vm2959, %v3105, %v3107
      %3109 = vst [vmem:[%s3106] sm:$0x1] %v3108
      %v3111 = vunpack.c.l.b16 %v3105
      %v3112 = vpack.c.b16 %v3111, %v3111
      %v3114 = vshll.u32 %v3112, 16
      %v3116 = vrot.slane %v3114, 5
      %v3117 = vrot.slane %v3116, 4
      %v3119 = vld [vmem:[%s3106] sm:$0x1]
      %v3120 = vsel %vm2973, %v3117, %v3119
      %3121 = vst [vmem:[%s3106] sm:$0x1] %v3120
      %v3122 = vrot.slane %v3112, 5
      %v3123 = vrot.slane %v3122, 4
      %v3125 = vld [vmem:[%s3106] sm:$0x2]
      %v3126 = vsel %vm2982, %v3123, %v3125
      %3127 = vst [vmem:[%s3106] sm:$0x2] %v3126
      %v3128 = vrot.slane %v3114, 6
      %v3129 = vrot.slane %v3128, 4
      %v3131 = vld [vmem:[%s3106] sm:$0x2]
      %v3132 = vsel %vm2990, %v3129, %v3131
      %3133 = vst [vmem:[%s3106] sm:$0x2] %v3132
      %v3135 = vrot.slane %v3100, 1
      %v3137 = vmax.f32 %v3100, %v3135
      %v3138 = vpack.c.bf16 %v3137, %v3137
      %v3140 = vunpack.c.l.b16 %v3138
      %v3141 = vpack.c.b16 %v3140, %v3140
      %v3142 = vrot.slane %v3141, 6
      %v3144 = vld [vmem:[%s3106] sm:$0x4]
      %v3145 = vsel %vm3006, %v3142, %v3144
      %3146 = vst [vmem:[%s3106] sm:$0x4] %v3145
      %v3148 = vshll.u32 %v3141, 16
      %v3150 = vrot.slane %v3148, 7
      %v3152 = vld [vmem:[%s3106] sm:$0x4]
      %v3153 = vsel %vm3016, %v3150, %v3152
      %3154 = vst [vmem:[%s3106] sm:$0x4] %v3153
      %v3155 = vrot.slane %v3141, 7
      %v3157 = vld [vmem:[%s3106] sm:$0x8]
      %v3158 = vsel %vm3024, %v3155, %v3157
      %3159 = vst [vmem:[%s3106] sm:$0x8] %v3158
      %v3161 = vld [vmem:[%s3106] sm:$0x8]
      %v3162 = vsel %vm3030, %v3148, %v3161
      %3163 = vst [vmem:[%s3106] sm:$0x8] %v3162
      %v3164 = vmax.f32 %v2930, %v2932
      %v3165 = vmax.f32 %v2931, %v2933
      %v3167 = vrot.slane %v3164, 1
      %v3169 = vmax.f32 %v3164, %v3167
      %v3170 = vpack.c.bf16 %v3169, %v3169
      %s3171 = scalar_lea.vmem %s170, 12
      %v3172 = vld [vmem:[%s3171] sm:$0x1]
      %v3173 = vsel %vm2959, %v3170, %v3172
      %3174 = vst [vmem:[%s3171] sm:$0x1] %v3173
      %v3176 = vunpack.c.l.b16 %v3170
      %v3177 = vpack.c.b16 %v3176, %v3176
      %v3179 = vshll.u32 %v3177, 16
      %v3181 = vrot.slane %v3179, 5
      %v3182 = vrot.slane %v3181, 4
      %v3184 = vld [vmem:[%s3171] sm:$0x1]
      %v3185 = vsel %vm2973, %v3182, %v3184
      %3186 = vst [vmem:[%s3171] sm:$0x1] %v3185
      %v3187 = vrot.slane %v3177, 5
      %v3188 = vrot.slane %v3187, 4
      %v3190 = vld [vmem:[%s3171] sm:$0x2]
      %v3191 = vsel %vm2982, %v3188, %v3190
      %3192 = vst [vmem:[%s3171] sm:$0x2] %v3191
      %v3193 = vrot.slane %v3179, 6
      %v3194 = vrot.slane %v3193, 4
      %v3196 = vld [vmem:[%s3171] sm:$0x2]
      %v3197 = vsel %vm2990, %v3194, %v3196
      %3198 = vst [vmem:[%s3171] sm:$0x2] %v3197
      %v3200 = vrot.slane %v3165, 1
      %v3202 = vmax.f32 %v3165, %v3200
      %v3203 = vpack.c.bf16 %v3202, %v3202
      %v3205 = vunpack.c.l.b16 %v3203
      %v3206 = vpack.c.b16 %v3205, %v3205
      %v3207 = vrot.slane %v3206, 6
      %v3209 = vld [vmem:[%s3171] sm:$0x4]
      %v3210 = vsel %vm3006, %v3207, %v3209
      %3211 = vst [vmem:[%s3171] sm:$0x4] %v3210
      %v3213 = vshll.u32 %v3206, 16
      %v3215 = vrot.slane %v3213, 7
      %v3217 = vld [vmem:[%s3171] sm:$0x4]
      %v3218 = vsel %vm3016, %v3215, %v3217
      %3219 = vst [vmem:[%s3171] sm:$0x4] %v3218
      %v3220 = vrot.slane %v3206, 7
      %v3222 = vld [vmem:[%s3171] sm:$0x8]
      %v3223 = vsel %vm3024, %v3220, %v3222
      %3224 = vst [vmem:[%s3171] sm:$0x8] %v3223
      %v3226 = vld [vmem:[%s3171] sm:$0x8]
      %v3227 = vsel %vm3030, %v3213, %v3226
      %3228 = vst [vmem:[%s3171] sm:$0x8] %v3227
      %v3229 = vmax.f32 %v2934, %v2936
      %v3230 = vmax.f32 %v2935, %v2937
      %v3232 = vrot.slane %v3229, 1
      %v3234 = vmax.f32 %v3229, %v3232
      %v3235 = vpack.c.bf16 %v3234, %v3234
      %s3236 = scalar_lea.vmem %s170, 16
      %v3237 = vld [vmem:[%s3236] sm:$0x1]
      %v3238 = vsel %vm2959, %v3235, %v3237
      %3239 = vst [vmem:[%s3236] sm:$0x1] %v3238
      %v3241 = vunpack.c.l.b16 %v3235
      %v3242 = vpack.c.b16 %v3241, %v3241
      %v3244 = vshll.u32 %v3242, 16
      %v3246 = vrot.slane %v3244, 5
      %v3247 = vrot.slane %v3246, 4
      %v3249 = vld [vmem:[%s3236] sm:$0x1]
      %v3250 = vsel %vm2973, %v3247, %v3249
      %3251 = vst [vmem:[%s3236] sm:$0x1] %v3250
      %v3252 = vrot.slane %v3242, 5
      %v3253 = vrot.slane %v3252, 4
      %v3255 = vld [vmem:[%s3236] sm:$0x2]
      %v3256 = vsel %vm2982, %v3253, %v3255
      %3257 = vst [vmem:[%s3236] sm:$0x2] %v3256
      %v3258 = vrot.slane %v3244, 6
      %v3259 = vrot.slane %v3258, 4
      %v3261 = vld [vmem:[%s3236] sm:$0x2]
      %v3262 = vsel %vm2990, %v3259, %v3261
      %3263 = vst [vmem:[%s3236] sm:$0x2] %v3262
      %v3265 = vrot.slane %v3230, 1
      %v3267 = vmax.f32 %v3230, %v3265
      %v3268 = vpack.c.bf16 %v3267, %v3267
      %v3270 = vunpack.c.l.b16 %v3268
      %v3271 = vpack.c.b16 %v3270, %v3270
      %v3272 = vrot.slane %v3271, 6
      %v3274 = vld [vmem:[%s3236] sm:$0x4]
      %v3275 = vsel %vm3006, %v3272, %v3274
      %3276 = vst [vmem:[%s3236] sm:$0x4] %v3275
      %v3278 = vshll.u32 %v3271, 16
      %v3280 = vrot.slane %v3278, 7
      %v3282 = vld [vmem:[%s3236] sm:$0x4]
      %v3283 = vsel %vm3016, %v3280, %v3282
      %3284 = vst [vmem:[%s3236] sm:$0x4] %v3283
      %v3285 = vrot.slane %v3271, 7
      %v3287 = vld [vmem:[%s3236] sm:$0x8]
      %v3288 = vsel %vm3024, %v3285, %v3287
      %3289 = vst [vmem:[%s3236] sm:$0x8] %v3288
      %v3291 = vld [vmem:[%s3236] sm:$0x8]
      %v3292 = vsel %vm3030, %v3278, %v3291
      %3293 = vst [vmem:[%s3236] sm:$0x8] %v3292
      %v3294 = vmax.f32 %v2938, %v2940
      %v3295 = vmax.f32 %v2939, %v2941
      %v3297 = vrot.slane %v3294, 1
      %v3299 = vmax.f32 %v3294, %v3297
      %v3300 = vpack.c.bf16 %v3299, %v3299
      %s3301 = scalar_lea.vmem %s170, 20
      %v3302 = vld [vmem:[%s3301] sm:$0x1]
      %v3303 = vsel %vm2959, %v3300, %v3302
      %3304 = vst [vmem:[%s3301] sm:$0x1] %v3303
      %v3306 = vunpack.c.l.b16 %v3300
      %v3307 = vpack.c.b16 %v3306, %v3306
      %v3309 = vshll.u32 %v3307, 16
      %v3311 = vrot.slane %v3309, 5
      %v3312 = vrot.slane %v3311, 4
      %v3314 = vld [vmem:[%s3301] sm:$0x1]
      %v3315 = vsel %vm2973, %v3312, %v3314
      %3316 = vst [vmem:[%s3301] sm:$0x1] %v3315
      %v3317 = vrot.slane %v3307, 5
      %v3318 = vrot.slane %v3317, 4
      %v3320 = vld [vmem:[%s3301] sm:$0x2]
      %v3321 = vsel %vm2982, %v3318, %v3320
      %3322 = vst [vmem:[%s3301] sm:$0x2] %v3321
      %v3323 = vrot.slane %v3309, 6
      %v3324 = vrot.slane %v3323, 4
      %v3326 = vld [vmem:[%s3301] sm:$0x2]
      %v3327 = vsel %vm2990, %v3324, %v3326
      %3328 = vst [vmem:[%s3301] sm:$0x2] %v3327
      %v3330 = vrot.slane %v3295, 1
      %v3332 = vmax.f32 %v3295, %v3330
      %v3333 = vpack.c.bf16 %v3332, %v3332
      %v3335 = vunpack.c.l.b16 %v3333
      %v3336 = vpack.c.b16 %v3335, %v3335
      %v3337 = vrot.slane %v3336, 6
      %v3339 = vld [vmem:[%s3301] sm:$0x4]
      %v3340 = vsel %vm3006, %v3337, %v3339
      %3341 = vst [vmem:[%s3301] sm:$0x4] %v3340
      %v3343 = vshll.u32 %v3336, 16
      %v3345 = vrot.slane %v3343, 7
      %v3347 = vld [vmem:[%s3301] sm:$0x4]
      %v3348 = vsel %vm3016, %v3345, %v3347
      %3349 = vst [vmem:[%s3301] sm:$0x4] %v3348
      %v3350 = vrot.slane %v3336, 7
      %v3352 = vld [vmem:[%s3301] sm:$0x8]
      %v3353 = vsel %vm3024, %v3350, %v3352
      %3354 = vst [vmem:[%s3301] sm:$0x8] %v3353
      %v3356 = vld [vmem:[%s3301] sm:$0x8]
      %v3357 = vsel %vm3030, %v3343, %v3356
      %3358 = vst [vmem:[%s3301] sm:$0x8] %v3357
      %v3359 = vmax.f32 %v2942, %v2944
      %v3360 = vmax.f32 %v2943, %v2945
      %v3362 = vrot.slane %v3359, 1
      %v3364 = vmax.f32 %v3359, %v3362
      %v3365 = vpack.c.bf16 %v3364, %v3364
      %s3366 = scalar_lea.vmem %s170, 24
      %v3367 = vld [vmem:[%s3366] sm:$0x1]
      %v3368 = vsel %vm2959, %v3365, %v3367
      %3369 = vst [vmem:[%s3366] sm:$0x1] %v3368
      %v3371 = vunpack.c.l.b16 %v3365
      %v3372 = vpack.c.b16 %v3371, %v3371
      %v3374 = vshll.u32 %v3372, 16
      %v3376 = vrot.slane %v3374, 5
      %v3377 = vrot.slane %v3376, 4
      %v3379 = vld [vmem:[%s3366] sm:$0x1]
      %v3380 = vsel %vm2973, %v3377, %v3379
      %3381 = vst [vmem:[%s3366] sm:$0x1] %v3380
      %v3382 = vrot.slane %v3372, 5
      %v3383 = vrot.slane %v3382, 4
      %v3385 = vld [vmem:[%s3366] sm:$0x2]
      %v3386 = vsel %vm2982, %v3383, %v3385
      %3387 = vst [vmem:[%s3366] sm:$0x2] %v3386
      %v3388 = vrot.slane %v3374, 6
      %v3389 = vrot.slane %v3388, 4
      %v3391 = vld [vmem:[%s3366] sm:$0x2]
      %v3392 = vsel %vm2990, %v3389, %v3391
      %3393 = vst [vmem:[%s3366] sm:$0x2] %v3392
      %v3395 = vrot.slane %v3360, 1
      %v3397 = vmax.f32 %v3360, %v3395
      %v3398 = vpack.c.bf16 %v3397, %v3397
      %v3400 = vunpack.c.l.b16 %v3398
      %v3401 = vpack.c.b16 %v3400, %v3400
      %v3402 = vrot.slane %v3401, 6
      %v3404 = vld [vmem:[%s3366] sm:$0x4]
      %v3405 = vsel %vm3006, %v3402, %v3404
      %3406 = vst [vmem:[%s3366] sm:$0x4] %v3405
      %v3408 = vshll.u32 %v3401, 16
      %v3410 = vrot.slane %v3408, 7
      %v3412 = vld [vmem:[%s3366] sm:$0x4]
      %v3413 = vsel %vm3016, %v3410, %v3412
      %3414 = vst [vmem:[%s3366] sm:$0x4] %v3413
      %v3415 = vrot.slane %v3401, 7
      %v3417 = vld [vmem:[%s3366] sm:$0x8]
      %v3418 = vsel %vm3024, %v3415, %v3417
      %3419 = vst [vmem:[%s3366] sm:$0x8] %v3418
      %v3421 = vld [vmem:[%s3366] sm:$0x8]
      %v3422 = vsel %vm3030, %v3408, %v3421
      %3423 = vst [vmem:[%s3366] sm:$0x8] %v3422
      %v3424 = vmax.f32 %v2946, %v2948
      %v3425 = vmax.f32 %v2947, %v2949
      %v3427 = vrot.slane %v3424, 1
      %v3429 = vmax.f32 %v3424, %v3427
      %v3430 = vpack.c.bf16 %v3429, %v3429
      %s3431 = scalar_lea.vmem %s170, 28
      %v3432 = vld [vmem:[%s3431] sm:$0x1]
      %v3433 = vsel %vm2959, %v3430, %v3432
      %3434 = vst [vmem:[%s3431] sm:$0x1] %v3433
      %v3436 = vunpack.c.l.b16 %v3430
      %v3437 = vpack.c.b16 %v3436, %v3436
      %v3439 = vshll.u32 %v3437, 16
      %v3441 = vrot.slane %v3439, 5
      %v3442 = vrot.slane %v3441, 4
      %v3444 = vld [vmem:[%s3431] sm:$0x1]
      %v3445 = vsel %vm2973, %v3442, %v3444
      %3446 = vst [vmem:[%s3431] sm:$0x1] %v3445
      %v3447 = vrot.slane %v3437, 5
      %v3448 = vrot.slane %v3447, 4
      %v3450 = vld [vmem:[%s3431] sm:$0x2]
      %v3451 = vsel %vm2982, %v3448, %v3450
      %3452 = vst [vmem:[%s3431] sm:$0x2] %v3451
      %v3453 = vrot.slane %v3439, 6
      %v3454 = vrot.slane %v3453, 4
      %v3456 = vld [vmem:[%s3431] sm:$0x2]
      %v3457 = vsel %vm2990, %v3454, %v3456
      %3458 = vst [vmem:[%s3431] sm:$0x2] %v3457
      %v3460 = vrot.slane %v3425, 1
      %v3462 = vmax.f32 %v3425, %v3460
      %v3463 = vpack.c.bf16 %v3462, %v3462
      %v3465 = vunpack.c.l.b16 %v3463
      %v3466 = vpack.c.b16 %v3465, %v3465
      %v3467 = vrot.slane %v3466, 6
      %v3469 = vld [vmem:[%s3431] sm:$0x4]
      %v3470 = vsel %vm3006, %v3467, %v3469
      %3471 = vst [vmem:[%s3431] sm:$0x4] %v3470
      %v3473 = vshll.u32 %v3466, 16
      %v3475 = vrot.slane %v3473, 7
      %v3477 = vld [vmem:[%s3431] sm:$0x4]
      %v3478 = vsel %vm3016, %v3475, %v3477
      %3479 = vst [vmem:[%s3431] sm:$0x4] %v3478
      %v3480 = vrot.slane %v3466, 7
      %v3482 = vld [vmem:[%s3431] sm:$0x8]
      %v3483 = vsel %vm3024, %v3480, %v3482
      %3484 = vst [vmem:[%s3431] sm:$0x8] %v3483
      %v3486 = vld [vmem:[%s3431] sm:$0x8]
      %v3487 = vsel %vm3030, %v3473, %v3486
      %3488 = vst [vmem:[%s3431] sm:$0x8] %v3487
      %p3489 = scmp.lt.s32.totalorder %s14, 1
      %s3490 = scalar_select %p3489, %s14, 1
      %s3491 = smul.addr %s3490, 8
      %s3492 = smul.addr %s3491, 4
      %s3493 = scalar_lea.vmem %s3, %s3492
      // Predicated region
      $region33: #{captcha_forward.8} parent=31 // pred_check
        %p3494 = pneg %p100
      $region34: #{captcha_forward.8} parent=31 // pred_check_branch
        %3496 = sbr.rel (%p3494) target = $region36
      $region35: #{captcha_forward.8} parent=31 // pred_region
        _
      $region36: #{captcha_forward.8} parent=31 // pred_fallthru
        _
    $region32: #{captcha_forward.8} parent=5 // pred_fallthru
      _
    %p3497 = scmp.le.s32.totalorder 2, %s9
    // Predicated region
    $region37: #{captcha_forward.8} parent=5 // pred_check
      %p3498 = pneg %p3497
    $region38: #{captcha_forward.8} parent=5 // pred_check_branch
      %3500 = sbr.rel (%p3498) target = $region40
    $region39: #{captcha_forward.8} parent=5 // pred_region
      %s3501 = ssub.s32 %s9, 2
      // Predicated region
      $region41: #{captcha_forward.8} parent=39 // pred_check
        %p3502 = pneg %p106
      $region42: #{captcha_forward.8} parent=39 // pred_check_branch
        %3504 = sbr.rel (%p3502) target = $region44
      $region43: #{captcha_forward.8} parent=39 // pred_region
        %p3505 = scmp.lt.s32.totalorder %s15, 1
        %s3506 = scalar_select %p3505, %s15, 1
        %s3507 = smul.addr %s3506, 8
        %s3508 = smul.addr %s3507, 4
        %s3509 = scalar_lea.vmem %s3, %s3508
      $region44: #{captcha_forward.8} parent=39 // pred_fallthru
        _
    $region40: #{captcha_forward.8} parent=5 // pred_fallthru
      _
  $region6: #{captcha_forward.8} parent=0 // loop_footer
    %s13 = sadd.s32 1, %s9
  $region7: #{captcha_forward.8} parent=0 // loop_footer_branch
    %8 = sbr.rel target = $region3
  $region8: #{captcha_forward.8} parent=0 // loop_exit
    _

// kernel: captcha_forward.12
$region0: #{captcha_forward.12}
  #allocation0 [shape = 'u32[]', space=smem, size = 0x4, offset = 0x4, fixed_abs, tag = 'smem constant byte address 0x4 - core index']
  #allocation1 [shape = 'u32[144,128]{1,0:T(1,128)}', space=vmem, size = 0x12000, scoped, tag = 'internal scratch']
  %s0 = inlined_call_operand.vmem [shape: f32[4,2,96], index: 0, kind: input, shape index: {}]
  %s1 = inlined_call_operand.vmem [shape: f32[4,2,96], index: 1, kind: input, shape index: {}]
  %s2 = inlined_call_operand.vmem [shape: bf16[64,192], index: 2, kind: input, shape index: {}]
  %s3 = inlined_call_operand.vmem [shape: f32[1,64], index: 3, kind: input, shape index: {}]
  %s4 = inlined_call_operand.vmem [shape: bf16[4,2,32], index: 4, kind: output, shape index: {0}]
  %s5 = inlined_call_operand.vmem [shape: bf16[4,2,32], index: 5, kind: output, shape index: {1}]
  %6 = xla_tuple %s4, %s5
  %s7 = sld [smem:[#allocation0]]
  $region34: #{captcha_forward.12} parent=0
    _
  %s9 = ssub.s32 1, %s7
  %s10 = scalar_select 0, %s9, %s7
  // Predicated region
  $region2: #{captcha_forward.12} parent=0 // pred_check
    _
  $region3: #{captcha_forward.12} parent=0 // pred_check_branch
    %12 = sbr.rel (0) target = $region5
  $region4: #{captcha_forward.12} parent=0 // pred_region
    _
  $region5: #{captcha_forward.12} parent=0 // pred_fallthru
    _
  // Predicated region
  $region6: #{captcha_forward.12} parent=0 // pred_check
    _
  $region7: #{captcha_forward.12} parent=0 // pred_check_branch
    %14 = sbr.rel (0) target = $region9
  $region8: #{captcha_forward.12} parent=0 // pred_region
    _
  $region9: #{captcha_forward.12} parent=0 // pred_fallthru
    _
  // Predicated region
  $region10: #{captcha_forward.12} parent=0 // pred_check
    _
  $region11: #{captcha_forward.12} parent=0 // pred_check_branch
    %16 = sbr.rel (0) target = $region13
  $region12: #{captcha_forward.12} parent=0 // pred_region
    _
  $region13: #{captcha_forward.12} parent=0 // pred_fallthru
    _
  // Predicated region
  $region14: #{captcha_forward.12} parent=0 // pred_check
    _
  $region15: #{captcha_forward.12} parent=0 // pred_check_branch
    %18 = sbr.rel (0) target = $region17
  $region16: #{captcha_forward.12} parent=0 // pred_region
    _
  $region17: #{captcha_forward.12} parent=0 // pred_fallthru
    _
  %v20 = vld [vmem:[%s2] sm:$0xff]
  %v21 = vld [vmem:[%s2 + $0x8] sm:$0xff]
  %v22 = vld [vmem:[%s2 + $0x10] sm:$0xff]
  %v23 = vld [vmem:[%s2 + $0x18] sm:$0xff]
  %v24 = vld [vmem:[%s2 + $0x20] sm:$0xff]
  %v25 = vld [vmem:[%s2 + $0x28] sm:$0xff]
  %v26 = vld [vmem:[%s2 + $0x30] sm:$0xff]
  %v27 = vld [vmem:[%s2 + $0x38] sm:$0xff]
  %v28 = vld [vmem:[%s3] sm:$0x1]
  %v37 = vunpack.c.l.b16 %v20
  %v38 = vunpack.c.h.b16 %v20
  %v39 = vunpack.c.l.b16 %v21
  %v40 = vunpack.c.h.b16 %v21
  %v41 = vunpack.c.l.b16 %v22
  %v42 = vunpack.c.h.b16 %v22
  %v43 = vunpack.c.l.b16 %v23
  %v44 = vunpack.c.h.b16 %v23
  %v45 = vunpack.c.l.b16 %v24
  %v46 = vunpack.c.h.b16 %v24
  %v47 = vunpack.c.l.b16 %v25
  %v48 = vunpack.c.h.b16 %v25
  %v49 = vunpack.c.l.b16 %v26
  %v50 = vunpack.c.h.b16 %v26
  %v51 = vunpack.c.l.b16 %v27
  %v52 = vunpack.c.h.b16 %v27
  %v53 = vpack.c.b16 %v39, %v37
  %v54 = vpack.c.b16 %v40, %v38
  %v55 = vpack.c.b16 %v43, %v41
  %v56 = vpack.c.b16 %v44, %v42
  %v57 = vpack.c.b16 %v47, %v45
  %v58 = vpack.c.b16 %v48, %v46
  %v59 = vpack.c.b16 %v51, %v49
  %v60 = vpack.c.b16 %v52, %v50
  %vm69 = vcmask 523264
  %v71 = vsel %vm69, 0, 0
  %73 = vmatprep.subr.bf16.mxu0 0
  %74 = vmatpush1.bf16.msra.mxu0 0
  %75 = vmatprep.subr.bf16.mxu0 0
  %76 = vmatpush1.bf16.msra.mxu0 0
  %77 = vmatprep.subr.bf16.mxu0 0
  %78 = vmatpush1.bf16.msra.mxu0 0
  %79 = vmatprep.subr.bf16.mxu0 0
  %80 = vmatpush1.bf16.msra.mxu0 0
  %81 = vmatprep.subr.bf16.mxu0 %v60
  %82 = vmatpush1.bf16.msra.mxu0 %v59
  %83 = vmatprep.subr.bf16.mxu0 %v58
  %84 = vmatpush1.bf16.msra.mxu0 %v57
  %85 = vmatprep.subr.bf16.mxu0 %v56
  %86 = vmatpush1.bf16.msra.mxu0 %v55
  %87 = vmatprep.subr.bf16.mxu0 %v54
  %88 = vmatpush1.bf16.msra.mxu0 %v53
  %89 = vmatprep.subr.bf16.mxu0 0
  %90 = vmatpush2.bf16.msra.mxu0 0
  %91 = vmatprep.subr.bf16.mxu0 0
  %92 = vmatpush2.bf16.msra.mxu0 0
  %93 = vmatprep.subr.bf16.mxu0 0
  %94 = vmatpush2.bf16.msra.mxu0 0
  %95 = vmatprep.subr.bf16.mxu0 0
  %96 = vmatpush2.bf16.msra.mxu0 0
  %97 = vmatprep.subr.bf16.mxu0 0
  %98 = vmatpush2.bf16.msra.mxu0 0
  %99 = vmatprep.subr.bf16.mxu0 0
  %100 = vmatpush2.bf16.msra.mxu0 0
  %101 = vmatprep.subr.bf16.mxu0 0
  %102 = vmatpush2.bf16.msra.mxu0 0
  %103 = vmatprep.subr.bf16.mxu0 0
  %104 = vmatpush2.bf16.msra.mxu0 0
  %105 = vmatprep.mubr.bf16.mxu0 0
  %106 = vmatmul.mubr.bf16.gmra.mxu0 %v71
  %v107 = vpop.f32.mrf.mxu0
  %v108 = vadd.f32 0.0, %v107
  %v109 = vpop.f32.mrf.mxu0
  %v110 = vadd.f32 0.0, %v109
  %v111 = vpop.f32.mrf.mxu0
  %v112 = vpop.f32.mrf.mxu0
  %113 = vdwg.mxu0
  %v114 = vld [vmem:[%s0] sm:$0x3]
  %v116 = vlaneseq
  %v117 = vshrl.u32 %v116, 7
  %v118 = vsub.s32 0, %v117
  %v119 = vrot.slane %v28, %v118
  %v120 = vadd.f32 %v114, %v108
  %v121 = vxor.u32 %v120, 2147483648
  %v122 = vmul.f32 %v121, 1.442695
  %v123 = vpow.pop %v122
  %v124 = vadd.f32 %v123, 1.0
  %v125 = vrcp.pop %v124
  %v126 = vmul.f32 1.0, %v125
  %127 = vrot.lane.b32.xlu0 %v119, 64
  %v128 = vpop.permute.xlu0 %127
  %v130 = vadd.f32 %v108, %v128
  %132 = vrot.lane.b32.xlu0 %v130, 64
  %v133 = vpop.permute.xlu0 %132
  %v135 = vmul.f32 %v126, %v133
  %137 = vrot.lane.b32.xlu0 %v135, 64
  %v138 = vpop.permute.xlu0 %137
  %v140 = vadd.f32 %v114, %v138
  %v141 = vtanh.pop %v140
  %v142 = vsub.f32 1.0, %v126
  %144 = vrot.lane.b32.xlu0 %v141, 96
  %v145 = vpop.permute.xlu0 %144
  %v147 = vmul.f32 %v142, %v145
  %v148 = vmul.f32 %v126, 0.0
  %v149 = vadd.f32 %v147, %v148
  %s150 = scalar_lea.vmem %s1, 6
  %v151 = vld [vmem:[%s150] sm:$0x3]
  %154 = vrot.lane.b32.xlu0 %v108, 32
  %v155 = vpop.permute.xlu0 %154
  %v157 = vadd.f32 %v151, %v155
  %v158 = vxor.u32 %v157, 2147483648
  %v159 = vmul.f32 %v158, 1.442695
  %v160 = vpow.pop %v159
  %v161 = vadd.f32 %v160, 1.0
  %v162 = vrcp.pop %v161
  %v163 = vmul.f32 1.0, %v162
  %165 = vrot.lane.b32.xlu0 %v110, 32
  %v166 = vpop.permute.xlu0 %165
  %v168 = vadd.f32 %v151, %v166
  %v169 = vxor.u32 %v168, 2147483648
  %v170 = vmul.f32 %v169, 1.442695
  %v171 = vpow.pop %v170
  %v172 = vadd.f32 %v171, 1.0
  %v173 = vrcp.pop %v172
  %v174 = vmul.f32 1.0, %v173
  %v175 = vadd.f32 %v110, %v119
  %177 = vrot.lane.b32.xlu0 %v175, 96
  %v178 = vpop.permute.xlu0 %177
  %v180 = vmul.f32 %v163, %v178
  %182 = vrot.lane.b32.xlu0 %v180, 64
  %v183 = vpop.permute.xlu0 %182
  %v185 = vadd.f32 %v151, %v183
  %v186 = vtanh.pop %v185
  %v187 = vsub.f32 1.0, %v174
  %189 = vrot.lane.b32.xlu0 %v186, 96
  %v190 = vpop.permute.xlu0 %189
  %v192 = vmul.f32 %v187, %v190
  %v193 = vmul.f32 %v174, 0.0
  %v194 = vadd.f32 %v192, %v193
  %v195 = vpack.c.bf16 %v149, %v149
  %v198 = vunpack.c.l.s4 1966171168
  %v199 = vunpack.c.0.s8 %v198
  %v200 = vlaneseq
  %v201 = vshrl.u32 %v200, 7
  %v202 = vsub.s32 %v199, %v201
  %v203 = vrot.slane %v195, %v202
  %v205 = vunpack.c.l.s4 1966171168
  %v206 = vunpack.c.0.s8 %v205
  %v207 = vlaneseq
  %v208 = vshrl.u32 %v207, 7
  %v209 = vsub.s32 %v206, %v208
  %v210 = vrot.slane %v203, %v209
  %211 = vrot.lane.b32.xlu0 %v210, 96
  %v212 = vpop.permute.xlu0 %211
  %vm214 = vcmask 253952
  %215 = vst.msk [vmem:[%s4] sm:$0x1] %vm214, %v212
  %v216 = vpack.c.bf16 %v194, %v194
  %v219 = vunpack.c.l.s4 1966171168
  %v220 = vunpack.c.0.s8 %v219
  %v221 = vlaneseq
  %v222 = vshrl.u32 %v221, 7
  %v223 = vsub.s32 %v220, %v222
  %v224 = vrot.slane %v216, %v223
  %v226 = vunpack.c.l.s4 1966171168
  %v227 = vunpack.c.0.s8 %v226
  %v228 = vlaneseq
  %v229 = vshrl.u32 %v228, 7
  %v230 = vsub.s32 %v227, %v229
  %v231 = vrot.slane %v224, %v230
  %232 = vrot.lane.b32.xlu0 %v231, 96
  %v233 = vpop.permute.xlu0 %232
  %s235 = scalar_lea.vmem %s5, 3
  %236 = vst.msk [vmem:[%s235] sm:$0x1] %vm214, %v233
  %238 = vrot.lane.b32.xlu0 %v149, 96
  %v239 = vpop.permute.xlu0 %238
  %vm241 = vcmask 261120
  %v242 = vsel %vm241, %v239, %v194
  %v243 = vpack.c.bf16 %v242, %v242
  %v245 = vsel %vm69, %v243, 0
  %247 = vmatprep.subr.bf16.mxu0 0
  %248 = vmatpush1.bf16.msra.mxu0 0
  %249 = vmatprep.subr.bf16.mxu0 0
  %250 = vmatpush1.bf16.msra.mxu0 0
  %251 = vmatprep.subr.bf16.mxu0 0
  %252 = vmatpush1.bf16.msra.mxu0 0
  %253 = vmatprep.subr.bf16.mxu0 0
  %254 = vmatpush1.bf16.msra.mxu0 0
  %255 = vmatprep.subr.bf16.mxu0 %v60
  %256 = vmatpush1.bf16.msra.mxu0 %v59
  %257 = vmatprep.subr.bf16.mxu0 %v58
  %258 = vmatpush1.bf16.msra.mxu0 %v57
  %259 = vmatprep.subr.bf16.mxu0 %v56
  %260 = vmatpush1.bf16.msra.mxu0 %v55
  %261 = vmatprep.subr.bf16.mxu0 %v54
  %262 = vmatpush1.bf16.msra.mxu0 %v53
  %263 = vmatprep.subr.bf16.mxu0 0
  %264 = vmatpush2.bf16.msra.mxu0 0
  %265 = vmatprep.subr.bf16.mxu0 0
  %266 = vmatpush2.bf16.msra.mxu0 0
  %267 = vmatprep.subr.bf16.mxu0 0
  %268 = vmatpush2.bf16.msra.mxu0 0
  %269 = vmatprep.subr.bf16.mxu0 0
  %270 = vmatpush2.bf16.msra.mxu0 0
  %271 = vmatprep.subr.bf16.mxu0 0
  %272 = vmatpush2.bf16.msra.mxu0 0
  %273 = vmatprep.subr.bf16.mxu0 0
  %274 = vmatpush2.bf16.msra.mxu0 0
  %275 = vmatprep.subr.bf16.mxu0 0
  %276 = vmatpush2.bf16.msra.mxu0 0
  %277 = vmatprep.subr.bf16.mxu0 0
  %278 = vmatpush2.bf16.msra.mxu0 0
  %279 = vmatprep.mubr.bf16.mxu0 0
  %280 = vmatmul.mubr.bf16.gmra.mxu0 %v245
  %v281 = vpop.f32.mrf.mxu0
  %v282 = vadd.f32 0.0, %v281
  %v283 = vpop.f32.mrf.mxu0
  %v284 = vadd.f32 0.0, %v283
  %v285 = vpop.f32.mrf.mxu0
  %v286 = vpop.f32.mrf.mxu0
  %287 = vdwg.mxu0
  %s288 = scalar_lea.vmem %s0, 2
  %v289 = vld [vmem:[%s288] sm:$0x3]
  %v290 = vadd.f32 %v289, %v282
  %v291 = vxor.u32 %v290, 2147483648
  %v292 = vmul.f32 %v291, 1.442695
  %v293 = vpow.pop %v292
  %v294 = vadd.f32 %v293, 1.0
  %v295 = vrcp.pop %v294
  %v296 = vmul.f32 1.0, %v295
  %v297 = vadd.f32 %v282, %v128
  %299 = vrot.lane.b32.xlu0 %v297, 64
  %v300 = vpop.permute.xlu0 %299
  %v302 = vmul.f32 %v296, %v300
  %304 = vrot.lane.b32.xlu0 %v302, 64
  %v305 = vpop.permute.xlu0 %304
  %v307 = vadd.f32 %v289, %v305
  %v308 = vtanh.pop %v307
  %v309 = vsub.f32 1.0, %v296
  %311 = vrot.lane.b32.xlu0 %v308, 96
  %v312 = vpop.permute.xlu0 %311
  %v314 = vmul.f32 %v309, %v312
  %316 = vrot.lane.b32.xlu0 %v242, 32
  %v317 = vpop.permute.xlu0 %316
  %v319 = vmul.f32 %v296, %v317
  %v320 = vadd.f32 %v314, %v319
  %s321 = scalar_lea.vmem %s1, 4
  %v322 = vld [vmem:[%s321] sm:$0x3]
  %324 = vrot.lane.b32.xlu0 %v282, 32
  %v325 = vpop.permute.xlu0 %324
  %v327 = vadd.f32 %v322, %v325
  %v328 = vxor.u32 %v327, 2147483648
  %v329 = vmul.f32 %v328, 1.442695
  %v330 = vpow.pop %v329
  %v331 = vadd.f32 %v330, 1.0
  %v332 = vrcp.pop %v331
  %v333 = vmul.f32 1.0, %v332
  %335 = vrot.lane.b32.xlu0 %v284, 32
  %v336 = vpop.permute.xlu0 %335
  %v338 = vadd.f32 %v322, %v336
  %v339 = vxor.u32 %v338, 2147483648
  %v340 = vmul.f32 %v339, 1.442695
  %v341 = vpow.pop %v340
  %v342 = vadd.f32 %v341, 1.0
  %v343 = vrcp.pop %v342
  %v344 = vmul.f32 1.0, %v343
  %v345 = vadd.f32 %v284, %v119
  %347 = vrot.lane.b32.xlu0 %v345, 96
  %v348 = vpop.permute.xlu0 %347
  %v350 = vmul.f32 %v333, %v348
  %352 = vrot.lane.b32.xlu0 %v350, 64
  %v353 = vpop.permute.xlu0 %352
  %v355 = vadd.f32 %v322, %v353
  %v356 = vtanh.pop %v355
  %v357 = vsub.f32 1.0, %v344
  %359 = vrot.lane.b32.xlu0 %v356, 96
  %v360 = vpop.permute.xlu0 %359
  %v362 = vmul.f32 %v357, %v360
  %v363 = vmul.f32 %v344, %v242
  %v364 = vadd.f32 %v362, %v363
  %v365 = vpack.c.bf16 %v320, %v320
  %v368 = vunpack.c.l.s4 1966171168
  %v369 = vunpack.c.0.s8 %v368
  %v370 = vlaneseq
  %v371 = vshrl.u32 %v370, 7
  %v372 = vsub.s32 %v369, %v371
  %v373 = vrot.slane %v365, %v372
  %v375 = vunpack.c.l.s4 1966171168
  %v376 = vunpack.c.0.s8 %v375
  %v377 = vlaneseq
  %v378 = vshrl.u32 %v377, 7
  %v379 = vsub.s32 %v376, %v378
  %v380 = vrot.slane %v373, %v379
  %381 = vrot.lane.b32.xlu0 %v380, 96
  %v382 = vpop.permute.xlu0 %381
  %s384 = scalar_lea.vmem %s4, 1
  %385 = vst.msk [vmem:[%s384] sm:$0x1] %vm214, %v382
  %v386 = vpack.c.bf16 %v364, %v364
  %v389 = vunpack.c.l.s4 1966171168
  %v390 = vunpack.c.0.s8 %v389
  %v391 = vlaneseq
  %v392 = vshrl.u32 %v391, 7
  %v393 = vsub.s32 %v390, %v392
  %v394 = vrot.slane %v386, %v393
  %v396 = vunpack.c.l.s4 1966171168
  %v397 = vunpack.c.0.s8 %v396
  %v398 = vlaneseq
  %v399 = vshrl.u32 %v398, 7
  %v400 = vsub.s32 %v397, %v399
  %v401 = vrot.slane %v394, %v400
  %402 = vrot.lane.b32.xlu0 %v401, 96
  %v403 = vpop.permute.xlu0 %402
  %s405 = scalar_lea.vmem %s5, 2
  %406 = vst.msk [vmem:[%s405] sm:$0x1] %vm214, %v403
  %408 = vrot.lane.b32.xlu0 %v320, 96
  %v409 = vpop.permute.xlu0 %408
  %v411 = vsel %vm241, %v409, %v364
  %v412 = vpack.c.bf16 %v411, %v411
  %v414 = vsel %vm69, %v412, 0
  %416 = vmatprep.subr.bf16.mxu0 0
  %417 = vmatpush1.bf16.msra.mxu0 0
  %418 = vmatprep.subr.bf16.mxu0 0
  %419 = vmatpush1.bf16.msra.mxu0 0
  %420 = vmatprep.subr.bf16.mxu0 0
  %421 = vmatpush1.bf16.msra.mxu0 0
  %422 = vmatprep.subr.bf16.mxu0 0
  %423 = vmatpush1.bf16.msra.mxu0 0
  %424 = vmatprep.subr.bf16.mxu0 %v60
  %425 = vmatpush1.bf16.msra.mxu0 %v59
  %426 = vmatprep.subr.bf16.mxu0 %v58
  %427 = vmatpush1.bf16.msra.mxu0 %v57
  %428 = vmatprep.subr.bf16.mxu0 %v56
  %429 = vmatpush1.bf16.msra.mxu0 %v55
  %430 = vmatprep.subr.bf16.mxu0 %v54
  %431 = vmatpush1.bf16.msra.mxu0 %v53
  %432 = vmatprep.subr.bf16.mxu0 0
  %433 = vmatpush2.bf16.msra.mxu0 0
  %434 = vmatprep.subr.bf16.mxu0 0
  %435 = vmatpush2.bf16.msra.mxu0 0
  %436 = vmatprep.subr.bf16.mxu0 0
  %437 = vmatpush2.bf16.msra.mxu0 0
  %438 = vmatprep.subr.bf16.mxu0 0
  %439 = vmatpush2.bf16.msra.mxu0 0
  %440 = vmatprep.subr.bf16.mxu0 0
  %441 = vmatpush2.bf16.msra.mxu0 0
  %442 = vmatprep.subr.bf16.mxu0 0
  %443 = vmatpush2.bf16.msra.mxu0 0
  %444 = vmatprep.subr.bf16.mxu0 0
  %445 = vmatpush2.bf16.msra.mxu0 0
  %446 = vmatprep.subr.bf16.mxu0 0
  %447 = vmatpush2.bf16.msra.mxu0 0
  %448 = vmatprep.mubr.bf16.mxu0 0
  %449 = vmatmul.mubr.bf16.gmra.mxu0 %v414
  %v450 = vpop.f32.mrf.mxu0
  %v451 = vadd.f32 0.0, %v450
  %v452 = vpop.f32.mrf.mxu0
  %v453 = vadd.f32 0.0, %v452
  %v454 = vpop.f32.mrf.mxu0
  %v455 = vpop.f32.mrf.mxu0
  %456 = vdwg.mxu0
  %s457 = scalar_lea.vmem %s0, 4
  %v458 = vld [vmem:[%s457] sm:$0x3]
  %v459 = vadd.f32 %v458, %v451
  %v460 = vxor.u32 %v459, 2147483648
  %v461 = vmul.f32 %v460, 1.442695
  %v462 = vpow.pop %v461
  %v463 = vadd.f32 %v462, 1.0
  %v464 = vrcp.pop %v463
  %v465 = vmul.f32 1.0, %v464
  %v466 = vadd.f32 %v451, %v128
  %468 = vrot.lane.b32.xlu0 %v466, 64
  %v469 = vpop.permute.xlu0 %468
  %v471 = vmul.f32 %v465, %v469
  %473 = vrot.lane.b32.xlu0 %v471, 64
  %v474 = vpop.permute.xlu0 %473
  %v476 = vadd.f32 %v458, %v474
  %v477 = vtanh.pop %v476
  %v478 = vsub.f32 1.0, %v465
  %480 = vrot.lane.b32.xlu0 %v477, 96
  %v481 = vpop.permute.xlu0 %480
  %v483 = vmul.f32 %v478, %v481
  %485 = vrot.lane.b32.xlu0 %v411, 32
  %v486 = vpop.permute.xlu0 %485
  %v488 = vmul.f32 %v465, %v486
  %v489 = vadd.f32 %v483, %v488
  %s490 = scalar_lea.vmem %s1, 2
  %v491 = vld [vmem:[%s490] sm:$0x3]
  %493 = vrot.lane.b32.xlu0 %v451, 32
  %v494 = vpop.permute.xlu0 %493
  %v496 = vadd.f32 %v491, %v494
  %v497 = vxor.u32 %v496, 2147483648
  %v498 = vmul.f32 %v497, 1.442695
  %v499 = vpow.pop %v498
  %v500 = vadd.f32 %v499, 1.0
  %v501 = vrcp.pop %v500
  %v502 = vmul.f32 1.0, %v501
  %504 = vrot.lane.b32.xlu0 %v453, 32
  %v505 = vpop.permute.xlu0 %504
  %v507 = vadd.f32 %v491, %v505
  %v508 = vxor.u32 %v507, 2147483648
  %v509 = vmul.f32 %v508, 1.442695
  %v510 = vpow.pop %v509
  %v511 = vadd.f32 %v510, 1.0
  %v512 = vrcp.pop %v511
  %v513 = vmul.f32 1.0, %v512
  %v514 = vadd.f32 %v453, %v119
  %516 = vrot.lane.b32.xlu0 %v514, 96
  %v517 = vpop.permute.xlu0 %516
  %v519 = vmul.f32 %v502, %v517
  %521 = vrot.lane.b32.xlu0 %v519, 64
  %v522 = vpop.permute.xlu0 %521
  %v524 = vadd.f32 %v491, %v522
  %v525 = vtanh.pop %v524
  %v526 = vsub.f32 1.0, %v513
  %528 = vrot.lane.b32.xlu0 %v525, 96
  %v529 = vpop.permute.xlu0 %528
  %v531 = vmul.f32 %v526, %v529
  %v532 = vmul.f32 %v513, %v411
  %v533 = vadd.f32 %v531, %v532
  %v534 = vpack.c.bf16 %v489, %v489
  %v537 = vunpack.c.l.s4 1966171168
  %v538 = vunpack.c.0.s8 %v537
  %v539 = vlaneseq
  %v540 = vshrl.u32 %v539, 7
  %v541 = vsub.s32 %v538, %v540
  %v542 = vrot.slane %v534, %v541
  %v544 = vunpack.c.l.s4 1966171168
  %v545 = vunpack.c.0.s8 %v544
  %v546 = vlaneseq
  %v547 = vshrl.u32 %v546, 7
  %v548 = vsub.s32 %v545, %v547
  %v549 = vrot.slane %v542, %v548
  %550 = vrot.lane.b32.xlu0 %v549, 96
  %v551 = vpop.permute.xlu0 %550
  %s553 = scalar_lea.vmem %s4, 2
  %554 = vst.msk [vmem:[%s553] sm:$0x1] %vm214, %v551
  %v555 = vpack.c.bf16 %v533, %v533
  %v558 = vunpack.c.l.s4 1966171168
  %v559 = vunpack.c.0.s8 %v558
  %v560 = vlaneseq
  %v561 = vshrl.u32 %v560, 7
  %v562 = vsub.s32 %v559, %v561
  %v563 = vrot.slane %v555, %v562
  %v565 = vunpack.c.l.s4 1966171168
  %v566 = vunpack.c.0.s8 %v565
  %v567 = vlaneseq
  %v568 = vshrl.u32 %v567, 7
  %v569 = vsub.s32 %v566, %v568
  %v570 = vrot.slane %v563, %v569
  %571 = vrot.lane.b32.xlu0 %v570, 96
  %v572 = vpop.permute.xlu0 %571
  %s574 = scalar_lea.vmem %s5, 1
  %575 = vst.msk [vmem:[%s574] sm:$0x1] %vm214, %v572
  %577 = vrot.lane.b32.xlu0 %v489, 96
  %v578 = vpop.permute.xlu0 %577
  %v580 = vsel %vm241, %v578, %v533
  %v581 = vpack.c.bf16 %v580, %v580
  %v583 = vsel %vm69, %v581, 0
  %585 = vmatprep.subr.bf16.mxu0 0
  %586 = vmatpush1.bf16.msra.mxu0 0
  %587 = vmatprep.subr.bf16.mxu0 0
  %588 = vmatpush1.bf16.msra.mxu0 0
  %589 = vmatprep.subr.bf16.mxu0 0
  %590 = vmatpush1.bf16.msra.mxu0 0
  %591 = vmatprep.subr.bf16.mxu0 0
  %592 = vmatpush1.bf16.msra.mxu0 0
  %593 = vmatprep.subr.bf16.mxu0 %v60
  %594 = vmatpush1.bf16.msra.mxu0 %v59
  %595 = vmatprep.subr.bf16.mxu0 %v58
  %596 = vmatpush1.bf16.msra.mxu0 %v57
  %597 = vmatprep.subr.bf16.mxu0 %v56
  %598 = vmatpush1.bf16.msra.mxu0 %v55
  %599 = vmatprep.subr.bf16.mxu0 %v54
  %600 = vmatpush1.bf16.msra.mxu0 %v53
  %601 = vmatprep.subr.bf16.mxu0 0
  %602 = vmatpush2.bf16.msra.mxu0 0
  %603 = vmatprep.subr.bf16.mxu0 0
  %604 = vmatpush2.bf16.msra.mxu0 0
  %605 = vmatprep.subr.bf16.mxu0 0
  %606 = vmatpush2.bf16.msra.mxu0 0
  %607 = vmatprep.subr.bf16.mxu0 0
  %608 = vmatpush2.bf16.msra.mxu0 0
  %609 = vmatprep.subr.bf16.mxu0 0
  %610 = vmatpush2.bf16.msra.mxu0 0
  %611 = vmatprep.subr.bf16.mxu0 0
  %612 = vmatpush2.bf16.msra.mxu0 0
  %613 = vmatprep.subr.bf16.mxu0 0
  %614 = vmatpush2.bf16.msra.mxu0 0
  %615 = vmatprep.subr.bf16.mxu0 0
  %616 = vmatpush2.bf16.msra.mxu0 0
  %617 = vmatprep.mubr.bf16.mxu0 0
  %618 = vmatmul.mubr.bf16.gmra.mxu0 %v583
  %v619 = vpop.f32.mrf.mxu0
  %v620 = vadd.f32 0.0, %v619
  %v621 = vpop.f32.mrf.mxu0
  %v622 = vadd.f32 0.0, %v621
  %v623 = vpop.f32.mrf.mxu0
  %v624 = vpop.f32.mrf.mxu0
  %625 = vdwg.mxu0
  %s626 = scalar_lea.vmem %s0, 6
  %v627 = vld [vmem:[%s626] sm:$0x3]
  %v628 = vadd.f32 %v627, %v620
  %v629 = vxor.u32 %v628, 2147483648
  %v630 = vmul.f32 %v629, 1.442695
  %v631 = vpow.pop %v630
  %v632 = vadd.f32 %v631, 1.0
  %v633 = vrcp.pop %v632
  %v634 = vmul.f32 1.0, %v633
  %v635 = vadd.f32 %v620, %v128
  %637 = vrot.lane.b32.xlu0 %v635, 64
  %v638 = vpop.permute.xlu0 %637
  %v640 = vmul.f32 %v634, %v638
  %642 = vrot.lane.b32.xlu0 %v640, 64
  %v643 = vpop.permute.xlu0 %642
  %v645 = vadd.f32 %v627, %v643
  %v646 = vtanh.pop %v645
  %v647 = vsub.f32 1.0, %v634
  %649 = vrot.lane.b32.xlu0 %v646, 96
  %v650 = vpop.permute.xlu0 %649
  %v652 = vmul.f32 %v647, %v650
  %654 = vrot.lane.b32.xlu0 %v580, 32
  %v655 = vpop.permute.xlu0 %654
  %v657 = vmul.f32 %v634, %v655
  %v658 = vadd.f32 %v652, %v657
  %v659 = vld [vmem:[%s1] sm:$0x3]
  %661 = vrot.lane.b32.xlu0 %v620, 32
  %v662 = vpop.permute.xlu0 %661
  %v664 = vadd.f32 %v659, %v662
  %v665 = vxor.u32 %v664, 2147483648
  %v666 = vmul.f32 %v665, 1.442695
  %v667 = vpow.pop %v666
  %v668 = vadd.f32 %v667, 1.0
  %v669 = vrcp.pop %v668
  %v670 = vmul.f32 1.0, %v669
  %672 = vrot.lane.b32.xlu0 %v622, 32
  %v673 = vpop.permute.xlu0 %672
  %v675 = vadd.f32 %v659, %v673
  %v676 = vxor.u32 %v675, 2147483648
  %v677 = vmul.f32 %v676, 1.442695
  %v678 = vpow.pop %v677
  %v679 = vadd.f32 %v678, 1.0
  %v680 = vrcp.pop %v679
  %v681 = vmul.f32 1.0, %v680
  %v682 = vadd.f32 %v622, %v119
  %684 = vrot.lane.b32.xlu0 %v682, 96
  %v685 = vpop.permute.xlu0 %684
  %v687 = vmul.f32 %v670, %v685
  %689 = vrot.lane.b32.xlu0 %v687, 64
  %v690 = vpop.permute.xlu0 %689
  %v692 = vadd.f32 %v659, %v690
  %v693 = vtanh.pop %v692
  %v694 = vsub.f32 1.0, %v681
  %696 = vrot.lane.b32.xlu0 %v693, 96
  %v697 = vpop.permute.xlu0 %696
  %v699 = vmul.f32 %v694, %v697
  %v700 = vmul.f32 %v681, %v580
  %v701 = vadd.f32 %v699, %v700
  %v702 = vpack.c.bf16 %v658, %v658
  %v705 = vunpack.c.l.s4 1966171168
  %v706 = vunpack.c.0.s8 %v705
  %v707 = vlaneseq
  %v708 = vshrl.u32 %v707, 7
  %v709 = vsub.s32 %v706, %v708
  %v710 = vrot.slane %v702, %v709
  %v712 = vunpack.c.l.s4 1966171168
  %v713 = vunpack.c.0.s8 %v712
  %v714 = vlaneseq
  %v715 = vshrl.u32 %v714, 7
  %v716 = vsub.s32 %v713, %v715
  %v717 = vrot.slane %v710, %v716
  %718 = vrot.lane.b32.xlu0 %v717, 96
  %v719 = vpop.permute.xlu0 %718
  %s721 = scalar_lea.vmem %s4, 3
  %722 = vst.msk [vmem:[%s721] sm:$0x1] %vm214, %v719
  %v723 = vpack.c.bf16 %v701, %v701
  %v726 = vunpack.c.l.s4 1966171168
  %v727 = vunpack.c.0.s8 %v726
  %v728 = vlaneseq
  %v729 = vshrl.u32 %v728, 7
  %v730 = vsub.s32 %v727, %v729
  %v731 = vrot.slane %v723, %v730
  %v733 = vunpack.c.l.s4 1966171168
  %v734 = vunpack.c.0.s8 %v733
  %v735 = vlaneseq
  %v736 = vshrl.u32 %v735, 7
  %v737 = vsub.s32 %v734, %v736
  %v738 = vrot.slane %v731, %v737
  %739 = vrot.lane.b32.xlu0 %v738, 96
  %v740 = vpop.permute.xlu0 %739
  %742 = vst.msk [vmem:[%s5] sm:$0x1] %vm214, %v740
  // Predicated region
  $region18: #{captcha_forward.12} parent=0 // pred_check
    _
  $region19: #{captcha_forward.12} parent=0 // pred_check_branch
    %744 = sbr.rel (0) target = $region21
  $region20: #{captcha_forward.12} parent=0 // pred_region
    _
  $region21: #{captcha_forward.12} parent=0 // pred_fallthru
    _
  // Predicated region
  $region22: #{captcha_forward.12} parent=0 // pred_check
    _
  $region23: #{captcha_forward.12} parent=0 // pred_check_branch
    %746 = sbr.rel (0) target = $region25
  $region24: #{captcha_forward.12} parent=0 // pred_region
    _
  $region25: #{captcha_forward.12} parent=0 // pred_fallthru
    _
  // Predicated region
  $region26: #{captcha_forward.12} parent=0 // pred_check
    _
  $region27: #{captcha_forward.12} parent=0 // pred_check_branch
    %748 = sbr.rel (0) target = $region29
  $region28: #{captcha_forward.12} parent=0 // pred_region
    _
  $region29: #{captcha_forward.12} parent=0 // pred_fallthru
    _
  // Predicated region
  $region30: #{captcha_forward.12} parent=0 // pred_check
    _
  $region31: #{captcha_forward.12} parent=0 // pred_check_branch
    %750 = sbr.rel (0) target = $region33
  $region32: #{captcha_forward.12} parent=0 // pred_region
    _
  $region33: #{captcha_forward.12} parent=0 // pred_fallthru
    _

// kernel: captcha_forward.15
$region0: #{captcha_forward.15}
  #allocation0 [shape = 'u32[]', space=smem, size = 0x4, offset = 0x4, fixed_abs, tag = 'smem constant byte address 0x4 - core index']
  #allocation1 [shape = 'u32[144,128]{1,0:T(1,128)}', space=vmem, size = 0x12000, scoped, tag = 'internal scratch']
  %s0 = inlined_call_operand.vmem [shape: bf16[8,64], index: 0, kind: input, shape index: {}]
  %s1 = inlined_call_operand.vmem [shape: bf16[64,128], index: 1, kind: input, shape index: {}]
  %s2 = inlined_call_operand.vmem [shape: f32[1,128], index: 2, kind: input, shape index: {}]
  %s3 = inlined_call_operand.hbm [shape: f32[8,128], index: 3, kind: output, shape index: {}]
  %s4 = sld [smem:[#allocation0]]
  $region22: #{captcha_forward.15} parent=0
    _
  %s6 = ssub.s32 1, %s4
  %s7 = scalar_select 0, %s6, %s4
  $region1: #{captcha_forward.15} parent=0
    #allocation2 [shape = 'u8[4096]{0}', space=vmem, size = 0x1000, scoped, tag = 'output window, operand 0, single buffered']
    #allocation3 [shape = 's32[1]{0}', space=sflag, size = 0x4, scoped, tag = 'scoped memory for captcha_forward.15']
    %8 = vsyncpa [#allocation3], 0
    // Predicated region
    $region2: #{captcha_forward.15} parent=1 // pred_check
      _
    $region3: #{captcha_forward.15} parent=1 // pred_check_branch
      %10 = sbr.rel (0) target = $region5
    $region4: #{captcha_forward.15} parent=1 // pred_region
      _
    $region5: #{captcha_forward.15} parent=1 // pred_fallthru
      _
    // Predicated region
    $region6: #{captcha_forward.15} parent=1 // pred_check
      _
    $region7: #{captcha_forward.15} parent=1 // pred_check_branch
      %12 = sbr.rel (0) target = $region9
    $region8: #{captcha_forward.15} parent=1 // pred_region
      _
    $region9: #{captcha_forward.15} parent=1 // pred_fallthru
      _
    // Predicated region
    $region10: #{captcha_forward.15} parent=1 // pred_check
      _
    $region11: #{captcha_forward.15} parent=1 // pred_check_branch
      %14 = sbr.rel (0) target = $region13
    $region12: #{captcha_forward.15} parent=1 // pred_region
      _
    $region13: #{captcha_forward.15} parent=1 // pred_fallthru
      _
    %v16 = vld [vmem:[%s0] sm:$0xf]
    %v17 = vld [vmem:[%s1] sm:$0xf]
    %v18 = vld [vmem:[%s1 + $0x4] sm:$0xf]
    %v19 = vld [vmem:[%s1 + $0x8] sm:$0xf]
    %v20 = vld [vmem:[%s1 + $0xc] sm:$0xf]
    %v21 = vld [vmem:[%s1 + $0x10] sm:$0xf]
    %v22 = vld [vmem:[%s1 + $0x14] sm:$0xf]
    %v23 = vld [vmem:[%s1 + $0x18] sm:$0xf]
    %v24 = vld [vmem:[%s1 + $0x1c] sm:$0xf]
    %v25 = vld [vmem:[%s2] sm:$0x1]
    %v27 = vlaneseq
    %v28 = vshrl.u32 %v27, 7
    %v29 = vsub.s32 0, %v28
    %v30 = vrot.slane %v25, %v29
    %v40 = vunpack.c.l.b16 %v17
    %v41 = vunpack.c.l.b16 %v18
    %v42 = vunpack.c.l.b16 %v19
    %v43 = vunpack.c.l.b16 %v20
    %v44 = vunpack.c.l.b16 %v21
    %v45 = vunpack.c.l.b16 %v22
    %v46 = vunpack.c.l.b16 %v23
    %v47 = vunpack.c.l.b16 %v24
    %v48 = vpack.c.b16 %v41, %v40
    %v49 = vpack.c.b16 %v43, %v42
    %v50 = vpack.c.b16 %v45, %v44
    %v51 = vpack.c.b16 %v47, %v46
    %vm56 = vcmask 523264
    %v58 = vsel %vm56, %v16, 0
    %60 = vmatprep.subr.bf16.mxu0 0
    %61 = vmatpush1.bf16.msra.mxu0 0
    %62 = vmatprep.subr.bf16.mxu0 0
    %63 = vmatpush1.bf16.msra.mxu0 0
    %64 = vmatprep.subr.bf16.mxu0 0
    %65 = vmatpush1.bf16.msra.mxu0 0
    %66 = vmatprep.subr.bf16.mxu0 0
    %67 = vmatpush1.bf16.msra.mxu0 0
    %68 = vmatprep.subr.bf16.mxu0 0
    %69 = vmatpush1.bf16.msra.mxu0 %v51
    %70 = vmatprep.subr.bf16.mxu0 0
    %71 = vmatpush1.bf16.msra.mxu0 %v50
    %72 = vmatprep.subr.bf16.mxu0 0
    %73 = vmatpush1.bf16.msra.mxu0 %v49
    %74 = vmatprep.subr.bf16.mxu0 0
    %75 = vmatpush1.bf16.msra.mxu0 %v48
    %76 = vmatprep.subr.bf16.mxu0 0
    %77 = vmatpush2.bf16.msra.mxu0 0
    %78 = vmatprep.subr.bf16.mxu0 0
    %79 = vmatpush2.bf16.msra.mxu0 0
    %80 = vmatprep.subr.bf16.mxu0 0
    %81 = vmatpush2.bf16.msra.mxu0 0
    %82 = vmatprep.subr.bf16.mxu0 0
    %83 = vmatpush2.bf16.msra.mxu0 0
    %84 = vmatprep.subr.bf16.mxu0 0
    %85 = vmatpush2.bf16.msra.mxu0 0
    %86 = vmatprep.subr.bf16.mxu0 0
    %87 = vmatpush2.bf16.msra.mxu0 0
    %88 = vmatprep.subr.bf16.mxu0 0
    %89 = vmatpush2.bf16.msra.mxu0 0
    %90 = vmatprep.subr.bf16.mxu0 0
    %91 = vmatpush2.bf16.msra.mxu0 0
    %92 = vmatprep.mubr.bf16.mxu0 0
    %93 = vmatmul.mubr.bf16.gmra.mxu0 %v58
    %v94 = vpop.f32.mrf.mxu0
    %v95 = vadd.f32 %v30, %v94
    %v96 = vpop.f32.mrf.mxu0
    %v97 = vpop.f32.mrf.mxu0
    %v98 = vpop.f32.mrf.mxu0
    %99 = vdwg.mxu0
    %100 = vst [vmem:[#allocation2] sm:$0xff] %v95
    // Predicated region
    $region14: #{captcha_forward.15} parent=1 // pred_check
      _
    $region15: #{captcha_forward.15} parent=1 // pred_check_branch
      %102 = sbr.rel (0) target = $region17
    $region16: #{captcha_forward.15} parent=1 // pred_region
      %s104 = ssub.s32 128, 128
      %105 = vsyncadd [#allocation3], %s104
      %s107 = sshll.u32 [#allocation2], 4
      %s108 = int_to_ptr.vmem [resolvable:$true] %s107
      %110 = dma.vmem_to_hbm [thread:$0]  %s108, 128, %s3, [#allocation3]
    $region17: #{captcha_forward.15} parent=1 // pred_fallthru
      _
    // Predicated region
    $region18: #{captcha_forward.15} parent=1 // pred_check
      _
    $region19: #{captcha_forward.15} parent=1 // pred_check_branch
      %112 = sbr.rel (0) target = $region21
    $region20: #{captcha_forward.15} parent=1 // pred_region
      %113 = dma.done [#allocation3], 128
    $region21: #{captcha_forward.15} parent=1 // pred_fallthru
      _
    %114 = vsyncpa [#allocation3], 1

</llo_original>
